<compile_context>
chip_gen: v6e
topology: v6e:2x2x1
jax: 0.10.0
libtpu: 0.0.40
codegen_flags: <defaults>
</compile_context>

<pallas_src>
import functools

import jax
import jax.numpy as jnp
from jax.experimental import pallas as pl
from jax.experimental.pallas import tpu as pltpu

# Explicit scoped-VMEM limit (v5e's default is only 16 MiB; demo usage is tiny).
_VMEM_LIMIT = 64 * 1024 * 1024


def _largest_divisor_tile(n, pref, align):
    """pref if it divides n; else the largest divisor of n that is a multiple
    of `align` and <= pref; else n (full extent)."""
    if n % pref == 0:
        return pref
    best = None
    d = align
    while d <= min(n, pref):
        if n % d == 0:
            best = d
        d += align
    return best if best is not None else n


def _pick_batch_tile(B, T, target_rows=256):
    """Fold batches per grid step so projection matmuls see up to ~target_rows
    rows, while keeping >= 2 parallel grid steps (megacore / 2-TC chips)."""
    bt = 1
    for c in range(1, B + 1):
        if B % c == 0 and c * T <= target_rows and (B // c) >= min(B, 2):
            bt = c
    return bt


# ----------------------------------------------------------------------------
# Fused attention sub-block: QKV -> batched MHA -> out-proj -> residual -> LN
# ----------------------------------------------------------------------------

def _attn_block_kernel(*refs, num_heads, is_self, eps):
    if is_self:
        (x_ref, wqkv_ref, bqkv_ref,
         wo_ref, bo_ref, g_ref, beta_ref, o_ref) = refs
    else:
        (x_ref, ctx_ref, wq_ref, bq_ref, wkv_ref, bkv_ref,
         wo_ref, bo_ref, g_ref, beta_ref, o_ref) = refs

    Bt, T, D = x_ref.shape
    H = num_heads
    dh = D // H
    scale = float(dh) ** -0.5

    x_bf = x_ref[...].reshape(Bt * T, D)            # bf16 activations
    x32 = x_bf.astype(jnp.float32)                  # f32 residual copy

    if is_self:
        S = T
        qkv = jnp.dot(x_bf, wqkv_ref[...],
                      preferred_element_type=jnp.float32) + bqkv_ref[...]
        q, k, v = qkv[:, :D], qkv[:, D:2 * D], qkv[:, 2 * D:]
    else:
        S = ctx_ref.shape[1]
        c_bf = ctx_ref[...].reshape(Bt * S, D)
        q = jnp.dot(x_bf, wq_ref[...],
                    preferred_element_type=jnp.float32) + bq_ref[...]
        kv = jnp.dot(c_bf, wkv_ref[...],
                     preferred_element_type=jnp.float32) + bkv_ref[...]
        k, v = kv[:, :D], kv[:, D:]

    def split_heads(m, rows):      # (Bt*rows, D) f32 -> (Bt*H, rows, dh) bf16
        mb = m.astype(jnp.bfloat16)
        if Bt == 1:
            return pltpu.einshape("rhd->hrd", mb.reshape(rows, H, dh))
        m4 = mb.reshape(Bt, rows, H, dh)
        return pltpu.einshape("brhd->bhrd", m4).reshape(Bt * H, rows, dh)

    def merge_heads(m, rows):      # (Bt*H, rows, dh) -> (Bt*rows, D)
        if Bt == 1:
            return pltpu.einshape("hrd->rhd", m).reshape(rows, D)
        m4 = m.reshape(Bt, H, rows, dh)
        return pltpu.einshape("bhrd->brhd", m4).reshape(Bt * rows, D)

    qh = split_heads(q, T)         # (Bt*H, T, dh)
    kh = split_heads(k, S)         # (Bt*H, S, dh)
    vh = split_heads(v, S)         # (Bt*H, S, dh)

    # Batched scaled-dot-product attention over the (Bt*H) leading batch dim.
    s = jnp.einsum("bqd,bkd->bqk", qh, kh,
                   preferred_element_type=jnp.float32) * scale
    if is_self:
        # Causal mask generated in-kernel (no (T,T) HBM operand).
        row = jax.lax.broadcasted_iota(jnp.int32, (T, S), 0)
        col = jax.lax.broadcasted_iota(jnp.int32, (T, S), 1)
        s = jnp.where((col <= row)[None, :, :], s, -1e9)   # masked_fill(mask==0, -1e9)
    s = s - jnp.max(s, axis=-1, keepdims=True)
    p = jnp.exp(s)
    p = p * pl.reciprocal(jnp.sum(p, axis=-1, keepdims=True), approx=True)
    o = jnp.einsum("bqk,bkd->bqd", p.astype(jnp.bfloat16), vh,
                   preferred_element_type=jnp.float32)      # (Bt*H, T, dh)
    attn = merge_heads(o.astype(jnp.bfloat16), T)            # (Bt*T, D) bf16

    y = jnp.dot(attn, wo_ref[...],
                preferred_element_type=jnp.float32) + bo_ref[...]

    # Fused residual + LayerNorm (f32).
    z = x32 + y
    mu = jnp.mean(z, axis=-1, keepdims=True)
    var = jnp.mean((z - mu) ** 2, axis=-1, keepdims=True)
    zn = (z - mu) * jax.lax.rsqrt(var + eps)
    out = zn * g_ref[...] + beta_ref[...]
    o_ref[...] = out.reshape(Bt, T, D).astype(o_ref.dtype)


def attn_block(x, p, num_heads, *, ctx=None, eps=1e-5):
    """LayerNorm(x + MHA(x[, ctx])) fused in one pallas_call. bf16 in/out."""
    B, T, D = x.shape
    Bt = _pick_batch_tile(B, T)
    is_self = ctx is None

    in_specs = [pl.BlockSpec((Bt, T, D), lambda i: (i, 0, 0))]
    args = [x]
    if is_self:
        in_specs += [pl.BlockSpec((D, 3 * D), lambda i: (0, 0)),
                     pl.BlockSpec((1, 3 * D), lambda i: (0, 0))]
        args += [p["wqkv"], p["bqkv"]]
    else:
        S = ctx.shape[1]
        in_specs += [pl.BlockSpec((Bt, S, D), lambda i: (i, 0, 0)),
                     pl.BlockSpec((D, D), lambda i: (0, 0)),
                     pl.BlockSpec((1, D), lambda i: (0, 0)),
                     pl.BlockSpec((D, 2 * D), lambda i: (0, 0)),
                     pl.BlockSpec((1, 2 * D), lambda i: (0, 0))]
        args += [ctx, p["wq"], p["bq"], p["wkv"], p["bkv"]]
    in_specs += [pl.BlockSpec((D, D), lambda i: (0, 0)),
                 pl.BlockSpec((1, D), lambda i: (0, 0)),
                 pl.BlockSpec((1, D), lambda i: (0, 0)),
                 pl.BlockSpec((1, D), lambda i: (0, 0))]
    args += [p["wo"], p["bo"], p["ln_g"], p["ln_b"]]

    return pl.pallas_call(
        functools.partial(_attn_block_kernel, num_heads=num_heads,
                          is_self=is_self, eps=eps),
        out_shape=jax.ShapeDtypeStruct((B, T, D), jnp.bfloat16),
        grid=(B // Bt,),
        in_specs=in_specs,
        out_specs=pl.BlockSpec((Bt, T, D), lambda i: (i, 0, 0)),
        compiler_params=pltpu.CompilerParams(
            dimension_semantics=("parallel",),
            vmem_limit_bytes=_VMEM_LIMIT),
    )(*args)


# ----------------------------------------------------------------------------
# Fused FFN sub-block: Linear -> ReLU -> Linear -> residual -> LayerNorm
# ----------------------------------------------------------------------------

def _ffn_block_kernel(x_ref, w1_ref, b1_ref, w2_ref, b2_ref, g_ref, beta_ref,
                      o_ref, *, eps):
    x_bf = x_ref[...]                                        # bf16 (tm, D)
    x32 = x_bf.astype(jnp.float32)
    h = jnp.dot(x_bf, w1_ref[...],
                preferred_element_type=jnp.float32) + b1_ref[...]
    h = jnp.maximum(h, 0.0)                                  # (tm, 4D) stays in VMEM
    y = jnp.dot(h.astype(jnp.bfloat16), w2_ref[...],
                preferred_element_type=jnp.float32) + b2_ref[...]
    z = x32 + y
    mu = jnp.mean(z, axis=-1, keepdims=True)
    var = jnp.mean((z - mu) ** 2, axis=-1, keepdims=True)
    zn = (z - mu) * jax.lax.rsqrt(var + eps)
    o_ref[...] = (zn * g_ref[...] + beta_ref[...]).astype(o_ref.dtype)


def ffn_block(x2d, p, *, eps=1e-5, tm_pref=256):
    """x2d: (M, D) bf16 -> LayerNorm(x + FFN(x)) bf16. Grid over M row tiles."""
    M, D = x2d.shape
    hidden = p["w1"].shape[1]
    tm = _largest_divisor_tile(M, tm_pref, 8)
    if M // tm == 1 and tm % 16 == 0:
        tm //= 2          # keep >= 2 parallel grid steps for megacore chips
    # TODO(synk): for large D (e.g. >= 1024 on v7x) tile the hidden dim with an
    # f32 accumulator instead of keeping both weights fully resident.
    return pl.pallas_call(
        functools.partial(_ffn_block_kernel, eps=eps),
        out_shape=jax.ShapeDtypeStruct((M, D), jnp.bfloat16),
        grid=(M // tm,),
        in_specs=[
            pl.BlockSpec((tm, D), lambda i: (i, 0)),
            pl.BlockSpec((D, hidden), lambda i: (0, 0)),
            pl.BlockSpec((1, hidden), lambda i: (0, 0)),
            pl.BlockSpec((hidden, D), lambda i: (0, 0)),
            pl.BlockSpec((1, D), lambda i: (0, 0)),
            pl.BlockSpec((1, D), lambda i: (0, 0)),
            pl.BlockSpec((1, D), lambda i: (0, 0)),
        ],
        out_specs=pl.BlockSpec((tm, D), lambda i: (i, 0)),
        compiler_params=pltpu.CompilerParams(
            dimension_semantics=("parallel",),
            vmem_limit_bytes=_VMEM_LIMIT),
    )(x2d, p["w1"], p["b1"], p["w2"], p["b2"], p["ln_g"], p["ln_b"])


# ----------------------------------------------------------------------------
# Tiled output projection (vocab matmul) with f32 VMEM accumulator
# ----------------------------------------------------------------------------

def _matmul_bias_kernel(x_ref, w_ref, b_ref, o_ref, acc_ref):
    @pl.when(pl.program_id(2) == 0)
    def _():
        acc_ref[...] = jnp.zeros_like(acc_ref)

    acc_ref[...] += jnp.dot(x_ref[...], w_ref[...],
                            preferred_element_type=jnp.float32)

    @pl.when(pl.program_id(2) == pl.num_programs(2) - 1)
    def _():
        o_ref[...] = (acc_ref[...] + b_ref[...]).astype(o_ref.dtype)


def linear_tiled(x, w, b, *, tm=512, tn=1024, tk=512):
    """x: (M, K) bf16, w: (K, N) bf16, b: (N,) f32 -> (M, N) f32 logits."""
    M, K = x.shape
    N = w.shape[1]
    tm = _largest_divisor_tile(M, tm, 8)
    tn = _largest_divisor_tile(N, tn, 128)
    tk = _largest_divisor_tile(K, tk, 128)
    grid = (M // tm, N // tn, K // tk)
    return pl.pallas_call(
        _matmul_bias_kernel,
        out_shape=jax.ShapeDtypeStruct((M, N), jnp.float32),
        grid_spec=pltpu.PrefetchScalarGridSpec(
            num_scalar_prefetch=0,
            grid=grid,
            in_specs=[
                pl.BlockSpec((tm, tk), lambda i, j, k: (i, k)),
                pl.BlockSpec((tk, tn), lambda i, j, k: (k, j)),
                pl.BlockSpec((1, tn), lambda i, j, k: (0, j)),
            ],
            out_specs=pl.BlockSpec((tm, tn), lambda i, j, k: (i, j)),
            scratch_shapes=[pltpu.VMEM((tm, tn), jnp.float32)],
        ),
        compiler_params=pltpu.CompilerParams(
            dimension_semantics=("parallel", "parallel", "arbitrary"),
            vmem_limit_bytes=_VMEM_LIMIT),
    )(x, w, b.reshape(1, N))


# ------------------------------ Model (glue) --------------------------------

def decoder_block(x, memory_bf, p, num_heads):
    B, T, D = x.shape
    x = attn_block(x, p["self_attn"], num_heads)                   # masked self-attn + norm1
    x = attn_block(x, p["cross_attn"], num_heads, ctx=memory_bf)   # cross-attn + norm2
    x = ffn_block(x.reshape(B * T, D), p["ffn"]).reshape(B, T, D)  # FFN + norm3
    return x


def decoder_forward(tgt_seq, memory, params, num_heads):
    B, T = tgt_seq.shape
    D = params["token_emb"].shape[1]
    vocab = params["out_w"].shape[1]
    # TODO(synk): token/positional embedding gather stays in plain JAX (data-
    # dependent gather; not worth a Pallas kernel at these sizes).
    x = jnp.take(params["token_emb"], tgt_seq, axis=0) + params["pos_emb"][None, :T, :]
    x = x.astype(jnp.bfloat16)                 # bf16 inter-kernel activations
    memory_bf = memory.astype(jnp.bfloat16)
    for bp in params["blocks"]:
        x = decoder_block(x, memory_bf, bp, num_heads)
    logits = linear_tiled(x.reshape(B * T, D), params["out_w"], params["out_b"])
    return logits.reshape(B, T, vocab)


# --------------------------- deterministic init ------------------------------

def _dense(key, fan_in, fan_out):
    w = jax.random.normal(key, (fan_in, fan_out), jnp.float32) * 0.02
    b = jnp.zeros((fan_out,), jnp.float32)
    return w, b


def _init_attn(key, dim, *, fused):
    kq, kk, kv, ko = jax.random.split(key, 4)
    wq, bq = _dense(kq, dim, dim)
    wk, bk = _dense(kk, dim, dim)
    wv, bv = _dense(kv, dim, dim)
    wo, bo = _dense(ko, dim, dim)
    common = dict(wo=wo.astype(jnp.bfloat16), bo=bo.reshape(1, dim),
                  ln_g=jnp.ones((1, dim), jnp.float32),
                  ln_b=jnp.zeros((1, dim), jnp.float32))
    if fused:   # self-attention: single fused (D, 3D) QKV projection
        return dict(wqkv=jnp.concatenate([wq, wk, wv], 1).astype(jnp.bfloat16),
                    bqkv=jnp.concatenate([bq, bk, bv]).reshape(1, 3 * dim),
                    **common)
    # cross-attention: q from x, fused (D, 2D) kv projection from the context
    return dict(wq=wq.astype(jnp.bfloat16), bq=bq.reshape(1, dim),
                wkv=jnp.concatenate([wk, wv], 1).astype(jnp.bfloat16),
                bkv=jnp.concatenate([bk, bv]).reshape(1, 2 * dim),
                **common)


def _init_block(key, dim):
    k_self, k_cross, k1, k2 = jax.random.split(key, 4)
    w1, b1 = _dense(k1, dim, 4 * dim)
    w2, b2 = _dense(k2, 4 * dim, dim)
    return dict(
        self_attn=_init_attn(k_self, dim, fused=True),
        cross_attn=_init_attn(k_cross, dim, fused=False),
        ffn=dict(w1=w1.astype(jnp.bfloat16), b1=b1.reshape(1, 4 * dim),
                 w2=w2.astype(jnp.bfloat16), b2=b2.reshape(1, dim),
                 ln_g=jnp.ones((1, dim), jnp.float32),
                 ln_b=jnp.zeros((1, dim), jnp.float32)),
    )


def init_params(key, vocab_size, dim, num_layers, max_len):
    k_tok, k_pos, k_out, k_blocks = jax.random.split(key, 4)
    out_w, out_b = _dense(k_out, dim, vocab_size)
    block_keys = jax.random.split(k_blocks, num_layers)
    return dict(
        token_emb=jax.random.normal(k_tok, (vocab_size, dim), jnp.float32) * 0.02,
        pos_emb=jax.random.normal(k_pos, (max_len, dim), jnp.float32) * 0.02,
        blocks=[_init_block(bk, dim) for bk in block_keys],
        out_w=out_w.astype(jnp.bfloat16), out_b=out_b,
    )


# ---------------------------------- main -------------------------------------

if __name__ == "__main__":
    # dim / num_heads follow the module defaults (128 / 8); vocab=128 keeps the
    # logits store lane-dense; 2 layers keep the demo small.
    VOCAB, DIM, HEADS, LAYERS, MAX_LEN = 128, 128, 8, 2, 50
    B, T, S = 2, 8, 8

    key = jax.random.PRNGKey(0)
    k_params, k_tgt, k_mem = jax.random.split(key, 3)

    params = init_params(k_params, VOCAB, DIM, LAYERS, MAX_LEN)
    tgt_seq = jax.random.randint(k_tgt, (B, T), 0, VOCAB)
    memory = jax.random.normal(k_mem, (B, S, DIM), jnp.float32)

    fwd = jax.jit(functools.partial(decoder_forward, num_heads=HEADS))
    logits = fwd(tgt_seq, memory, params)
    jax.block_until_ready(logits)
    assert logits.shape == (B, T, VOCAB)
    assert bool(jnp.all(jnp.isfinite(logits)))
    print("KERNEL_OK")
</pallas_src>

<mosaic_0001>
module attributes {stable_mosaic.version = 11 : i64} {
  func.func @_attn_block_kernel(%arg0: i32, %arg1: memref<1x8x128xbf16, #tpu.memory_space<vmem>>, %arg2: memref<128x384xbf16, #tpu.memory_space<vmem>>, %arg3: memref<1x384xf32, #tpu.memory_space<vmem>>, %arg4: memref<128x128xbf16, #tpu.memory_space<vmem>>, %arg5: memref<1x128xf32, #tpu.memory_space<vmem>>, %arg6: memref<1x128xf32, #tpu.memory_space<vmem>>, %arg7: memref<1x128xf32, #tpu.memory_space<vmem>>, %arg8: memref<1x8x128xbf16, #tpu.memory_space<vmem>>) attributes {dimension_semantics = [#tpu.dimension_semantics<parallel>], iteration_bounds = array<i64: 2>, scalar_prefetch = 0 : i64, scratch_operands = 0 : i64, tpu.core_type = #tpu.core_type<tc>, window_params = [{transform_indices = @transform_0, window_bounds = array<i64: 1, 8, 128>}, {pipeline_mode = #tpu.pipeline_mode<synchronous>, transform_indices = @transform_1, window_bounds = array<i64: 128, 384>}, {pipeline_mode = #tpu.pipeline_mode<synchronous>, transform_indices = @transform_2, window_bounds = array<i64: 1, 384>}, {pipeline_mode = #tpu.pipeline_mode<synchronous>, transform_indices = @transform_3, window_bounds = array<i64: 128, 128>}, {pipeline_mode = #tpu.pipeline_mode<synchronous>, transform_indices = @transform_4, window_bounds = array<i64: 1, 128>}, {pipeline_mode = #tpu.pipeline_mode<synchronous>, transform_indices = @transform_5, window_bounds = array<i64: 1, 128>}, {pipeline_mode = #tpu.pipeline_mode<synchronous>, transform_indices = @transform_6, window_bounds = array<i64: 1, 128>}, {transform_indices = @transform_7, window_bounds = array<i64: 1, 8, 128>}]} {
    %c0 = arith.constant 0 : index
    %c0_0 = arith.constant 0 : index
    %c0_1 = arith.constant 0 : index
    %0 = vector.load %arg1[%c0, %c0_0, %c0_1] : memref<1x8x128xbf16, #tpu.memory_space<vmem>>, vector<1x8x128xbf16>
    %1 = vector.shape_cast %0 : vector<1x8x128xbf16> to vector<8x128xbf16>
    %2 = arith.extf %1 : vector<8x128xbf16> to vector<8x128xf32>
    %c0_2 = arith.constant 0 : index
    %c0_3 = arith.constant 0 : index
    %3 = vector.load %arg2[%c0_2, %c0_3] : memref<128x384xbf16, #tpu.memory_space<vmem>>, vector<128x384xbf16>
    %cst = arith.constant dense<0.000000e+00> : vector<8x384xf32>
    %4 = tpu.matmul %1, %3, %cst {dimension_numbers = #tpu.dot_dimension_numbers<[1], [0], [0], [1], [0, 0, 1, 1], [], []>} : vector<8x128xbf16>, vector<128x384xbf16>, vector<8x384xf32> -> vector<8x384xf32>
    %c0_4 = arith.constant 0 : index
    %c0_5 = arith.constant 0 : index
    %5 = vector.load %arg3[%c0_4, %c0_5] : memref<1x384xf32, #tpu.memory_space<vmem>>, vector<1x384xf32>
    %6 = vector.broadcast %5 : vector<1x384xf32> to vector<8x384xf32>
    %7 = arith.addf %4, %6 : vector<8x384xf32>
    %8 = vector.extract_strided_slice %7 {offsets = [0, 0], sizes = [8, 128], strides = [1, 1]} : vector<8x384xf32> to vector<8x128xf32>
    %9 = vector.extract_strided_slice %7 {offsets = [0, 128], sizes = [8, 128], strides = [1, 1]} : vector<8x384xf32> to vector<8x128xf32>
    %10 = vector.extract_strided_slice %7 {offsets = [0, 256], sizes = [8, 128], strides = [1, 1]} : vector<8x384xf32> to vector<8x128xf32>
    %11 = arith.truncf %8 : vector<8x128xf32> to vector<8x128xbf16>
    %12 = vector.shape_cast %11 : vector<8x128xbf16> to vector<8x8x16xbf16>
    %13 = tpu.transpose %12, [1, 0, 2] : vector<8x8x16xbf16> -> vector<8x8x16xbf16>
    %14 = arith.truncf %9 : vector<8x128xf32> to vector<8x128xbf16>
    %15 = vector.shape_cast %14 : vector<8x128xbf16> to vector<8x8x16xbf16>
    %16 = tpu.transpose %15, [1, 0, 2] : vector<8x8x16xbf16> -> vector<8x8x16xbf16>
    %17 = arith.truncf %10 : vector<8x128xf32> to vector<8x128xbf16>
    %18 = vector.shape_cast %17 : vector<8x128xbf16> to vector<8x8x16xbf16>
    %19 = tpu.transpose %18, [1, 0, 2] : vector<8x8x16xbf16> -> vector<8x8x16xbf16>
    "tpu.trace_start"() <{level = 10 : i32, message = "bqd,bkd->bqk"}> : () -> ()
    %cst_6 = arith.constant dense<0.000000e+00> : vector<8x8x8xf32>
    %20 = tpu.matmul %13, %16, %cst_6 {dimension_numbers = #tpu.dot_dimension_numbers<[2], [2], [1], [1], [0, 0, 0, 1, 1, 1], [0], [0]>} : vector<8x8x16xbf16>, vector<8x8x16xbf16>, vector<8x8x8xf32> -> vector<8x8x8xf32>
    "tpu.trace_stop"() : () -> ()
    %cst_7 = arith.constant 2.500000e-01 : f32
    %21 = vector.broadcast %cst_7 : f32 to vector<8x8x8xf32>
    %22 = arith.mulf %20, %21 : vector<8x8x8xf32>
    %23 = tpu.iota {dimensions = array<i32: 0>} : vector<8x8xi32>
    %24 = tpu.iota {dimensions = array<i32: 1>} : vector<8x8xi32>
    %25 = arith.cmpi sle, %24, %23 : vector<8x8xi32>
    %26 = vector.shape_cast %25 : vector<8x8xi1> to vector<1x8x8xi1>
    %cst_8 = arith.constant -1.000000e+09 : f32
    %27 = vector.shape_cast %26 : vector<1x8x8xi1> to vector<1x8x8xi1>
    %28 = vector.broadcast %27 : vector<1x8x8xi1> to vector<8x8x8xi1>
    %29 = vector.broadcast %cst_8 : f32 to vector<8x8x8xf32>
    %30 = arith.select %28, %22, %29 : vector<8x8x8xi1>, vector<8x8x8xf32>
    %cst_9 = arith.constant dense<0xFF800000> : vector<8x8xf32>
    %31 = vector.multi_reduction <maximumf>, %30, %cst_9 [2] : vector<8x8x8xf32> to vector<8x8xf32>
    %32 = vector.shape_cast %31 : vector<8x8xf32> to vector<8x8x1xf32>
    %33 = vector.broadcast %32 : vector<8x8x1xf32> to vector<8x8x8xf32>
    %34 = arith.subf %30, %33 : vector<8x8x8xf32>
    %35 = math.exp %34 : vector<8x8x8xf32>
    %cst_10 = arith.constant dense<0.000000e+00> : vector<8x8xf32>
    %36 = vector.multi_reduction <add>, %35, %cst_10 [2] : vector<8x8x8xf32> to vector<8x8xf32>
    %37 = vector.shape_cast %36 : vector<8x8xf32> to vector<8x8x1xf32>
    %38 = tpu.reciprocal %37 {approx = true} : vector<8x8x1xf32> -> vector<8x8x1xf32>
    %39 = vector.broadcast %38 : vector<8x8x1xf32> to vector<8x8x8xf32>
    %40 = arith.mulf %35, %39 : vector<8x8x8xf32>
    %41 = arith.truncf %40 : vector<8x8x8xf32> to vector<8x8x8xbf16>
    "tpu.trace_start"() <{level = 10 : i32, message = "bqk,bkd->bqd"}> : () -> ()
    %cst_11 = arith.constant dense<0.000000e+00> : vector<8x8x16xf32>
    %42 = tpu.matmul %41, %19, %cst_11 {dimension_numbers = #tpu.dot_dimension_numbers<[2], [1], [1], [2], [0, 0, 0, 1, 1, 2], [0], [0]>} : vector<8x8x8xbf16>, vector<8x8x16xbf16>, vector<8x8x16xf32> -> vector<8x8x16xf32>
    "tpu.trace_stop"() : () -> ()
    %43 = arith.truncf %42 : vector<8x8x16xf32> to vector<8x8x16xbf16>
    %44 = tpu.transpose %43, [1, 0, 2] : vector<8x8x16xbf16> -> vector<8x8x16xbf16>
    %45 = vector.shape_cast %44 : vector<8x8x16xbf16> to vector<8x128xbf16>
    %c0_12 = arith.constant 0 : index
    %c0_13 = arith.constant 0 : index
    %46 = vector.load %arg4[%c0_12, %c0_13] : memref<128x128xbf16, #tpu.memory_space<vmem>>, vector<128x128xbf16>
    %cst_14 = arith.constant dense<0.000000e+00> : vector<8x128xf32>
    %47 = tpu.matmul %45, %46, %cst_14 {dimension_numbers = #tpu.dot_dimension_numbers<[1], [0], [0], [1], [0, 0, 1, 1], [], []>} : vector<8x128xbf16>, vector<128x128xbf16>, vector<8x128xf32> -> vector<8x128xf32>
    %c0_15 = arith.constant 0 : index
    %c0_16 = arith.constant 0 : index
    %48 = vector.load %arg5[%c0_15, %c0_16] : memref<1x128xf32, #tpu.memory_space<vmem>>, vector<1x128xf32>
    %49 = vector.broadcast %48 : vector<1x128xf32> to vector<8x128xf32>
    %50 = arith.addf %47, %49 : vector<8x128xf32>
    %51 = arith.addf %2, %50 : vector<8x128xf32>
    %cst_17 = arith.constant dense<0.000000e+00> : vector<8xf32>
    %52 = vector.multi_reduction <add>, %51, %cst_17 [1] : vector<8x128xf32> to vector<8xf32>
    %53 = vector.shape_cast %52 : vector<8xf32> to vector<8x1xf32>
    %cst_18 = arith.constant 1.280000e+02 : f32
    %54 = vector.broadcast %cst_18 : f32 to vector<8x1xf32>
    %55 = arith.divf %53, %54 : vector<8x1xf32>
    %56 = vector.broadcast %55 : vector<8x1xf32> to vector<8x128xf32>
    %57 = arith.subf %51, %56 : vector<8x128xf32>
    %58 = arith.mulf %57, %57 : vector<8x128xf32>
    %cst_19 = arith.constant dense<0.000000e+00> : vector<8xf32>
    %59 = vector.multi_reduction <add>, %58, %cst_19 [1] : vector<8x128xf32> to vector<8xf32>
    %60 = vector.shape_cast %59 : vector<8xf32> to vector<8x1xf32>
    %cst_20 = arith.constant 1.280000e+02 : f32
    %61 = vector.broadcast %cst_20 : f32 to vector<8x1xf32>
    %62 = arith.divf %60, %61 : vector<8x1xf32>
    %63 = vector.broadcast %55 : vector<8x1xf32> to vector<8x128xf32>
    %64 = arith.subf %51, %63 : vector<8x128xf32>
    %cst_21 = arith.constant 9.99999974E-6 : f32
    %65 = vector.broadcast %cst_21 : f32 to vector<8x1xf32>
    %66 = arith.addf %62, %65 : vector<8x1xf32>
    %67 = math.rsqrt %66 : vector<8x1xf32>
    %68 = vector.broadcast %67 : vector<8x1xf32> to vector<8x128xf32>
    %69 = arith.mulf %64, %68 : vector<8x128xf32>
    %c0_22 = arith.constant 0 : index
    %c0_23 = arith.constant 0 : index
    %70 = vector.load %arg6[%c0_22, %c0_23] : memref<1x128xf32, #tpu.memory_space<vmem>>, vector<1x128xf32>
    %71 = vector.broadcast %70 : vector<1x128xf32> to vector<8x128xf32>
    %72 = arith.mulf %69, %71 : vector<8x128xf32>
    %c0_24 = arith.constant 0 : index
    %c0_25 = arith.constant 0 : index
    %73 = vector.load %arg7[%c0_24, %c0_25] : memref<1x128xf32, #tpu.memory_space<vmem>>, vector<1x128xf32>
    %74 = vector.broadcast %73 : vector<1x128xf32> to vector<8x128xf32>
    %75 = arith.addf %72, %74 : vector<8x128xf32>
    %76 = vector.shape_cast %75 : vector<8x128xf32> to vector<1x8x128xf32>
    %77 = arith.truncf %76 : vector<1x8x128xf32> to vector<1x8x128xbf16>
    %c0_26 = arith.constant 0 : index
    %c0_27 = arith.constant 0 : index
    %c0_28 = arith.constant 0 : index
    %78 = vector.load %arg8[%c0_26, %c0_27, %c0_28] : memref<1x8x128xbf16, #tpu.memory_space<vmem>>, vector<1x8x128xbf16>
    tpu.vector_store %arg8[%c0_26, %c0_27, %c0_28], %77 {strides = array<i32>} : memref<1x8x128xbf16, #tpu.memory_space<vmem>>, vector<1x8x128xbf16>,
    return
  }
  func.func @transform_0(%arg0: i32) -> (i32, i32, i32) {
    %c0_i32 = arith.constant 0 : i32
    %c0_i32_0 = arith.constant 0 : i32
    %c0_i32_1 = arith.constant 0 : i32
    return %arg0, %c0_i32, %c0_i32_0 : i32, i32, i32
  }
  func.func @transform_1(%arg0: i32) -> (i32, i32) {
    %c0_i32 = arith.constant 0 : i32
    %c0_i32_0 = arith.constant 0 : i32
    %c0_i32_1 = arith.constant 0 : i32
    return %c0_i32, %c0_i32_0 : i32, i32
  }
  func.func @transform_2(%arg0: i32) -> (i32, i32) {
    %c0_i32 = arith.constant 0 : i32
    %c0_i32_0 = arith.constant 0 : i32
    %c0_i32_1 = arith.constant 0 : i32
    return %c0_i32, %c0_i32_0 : i32, i32
  }
  func.func @transform_3(%arg0: i32) -> (i32, i32) {
    %c0_i32 = arith.constant 0 : i32
    %c0_i32_0 = arith.constant 0 : i32
    %c0_i32_1 = arith.constant 0 : i32
    return %c0_i32, %c0_i32_0 : i32, i32
  }
  func.func @transform_4(%arg0: i32) -> (i32, i32) {
    %c0_i32 = arith.constant 0 : i32
    %c0_i32_0 = arith.constant 0 : i32
    %c0_i32_1 = arith.constant 0 : i32
    return %c0_i32, %c0_i32_0 : i32, i32
  }
  func.func @transform_5(%arg0: i32) -> (i32, i32) {
    %c0_i32 = arith.constant 0 : i32
    %c0_i32_0 = arith.constant 0 : i32
    %c0_i32_1 = arith.constant 0 : i32
    return %c0_i32, %c0_i32_0 : i32, i32
  }
  func.func @transform_6(%arg0: i32) -> (i32, i32) {
    %c0_i32 = arith.constant 0 : i32
    %c0_i32_0 = arith.constant 0 : i32
    %c0_i32_1 = arith.constant 0 : i32
    return %c0_i32, %c0_i32_0 : i32, i32
  }
  func.func @transform_7(%arg0: i32) -> (i32, i32, i32) {
    %c0_i32 = arith.constant 0 : i32
    %c0_i32_0 = arith.constant 0 : i32
    %c0_i32_1 = arith.constant 0 : i32
    return %arg0, %c0_i32, %c0_i32_0 : i32, i32, i32
  }
}

module attributes {stable_mosaic.version = 11 : i64} {
  func.func @_ffn_block_kernel(%arg0: i32, %arg1: memref<8x128xbf16, #tpu.memory_space<vmem>>, %arg2: memref<128x512xbf16, #tpu.memory_space<vmem>>, %arg3: memref<1x512xf32, #tpu.memory_space<vmem>>, %arg4: memref<512x128xbf16, #tpu.memory_space<vmem>>, %arg5: memref<1x128xf32, #tpu.memory_space<vmem>>, %arg6: memref<1x128xf32, #tpu.memory_space<vmem>>, %arg7: memref<1x128xf32, #tpu.memory_space<vmem>>, %arg8: memref<8x128xbf16, #tpu.memory_space<vmem>>) attributes {dimension_semantics = [#tpu.dimension_semantics<parallel>], iteration_bounds = array<i64: 2>, scalar_prefetch = 0 : i64, scratch_operands = 0 : i64, tpu.core_type = #tpu.core_type<tc>, window_params = [{transform_indices = @transform_0, window_bounds = array<i64: 8, 128>}, {pipeline_mode = #tpu.pipeline_mode<synchronous>, transform_indices = @transform_1, window_bounds = array<i64: 128, 512>}, {pipeline_mode = #tpu.pipeline_mode<synchronous>, transform_indices = @transform_2, window_bounds = array<i64: 1, 512>}, {pipeline_mode = #tpu.pipeline_mode<synchronous>, transform_indices = @transform_3, window_bounds = array<i64: 512, 128>}, {pipeline_mode = #tpu.pipeline_mode<synchronous>, transform_indices = @transform_4, window_bounds = array<i64: 1, 128>}, {pipeline_mode = #tpu.pipeline_mode<synchronous>, transform_indices = @transform_5, window_bounds = array<i64: 1, 128>}, {pipeline_mode = #tpu.pipeline_mode<synchronous>, transform_indices = @transform_6, window_bounds = array<i64: 1, 128>}, {transform_indices = @transform_7, window_bounds = array<i64: 8, 128>}]} {
    %c0 = arith.constant 0 : index
    %c0_0 = arith.constant 0 : index
    %0 = vector.load %arg1[%c0, %c0_0] : memref<8x128xbf16, #tpu.memory_space<vmem>>, vector<8x128xbf16>
    %1 = arith.extf %0 : vector<8x128xbf16> to vector<8x128xf32>
    %c0_1 = arith.constant 0 : index
    %c0_2 = arith.constant 0 : index
    %2 = vector.load %arg2[%c0_1, %c0_2] : memref<128x512xbf16, #tpu.memory_space<vmem>>, vector<128x512xbf16>
    %cst = arith.constant dense<0.000000e+00> : vector<8x512xf32>
    %3 = tpu.matmul %0, %2, %cst {dimension_numbers = #tpu.dot_dimension_numbers<[1], [0], [0], [1], [0, 0, 1, 1], [], []>} : vector<8x128xbf16>, vector<128x512xbf16>, vector<8x512xf32> -> vector<8x512xf32>
    %c0_3 = arith.constant 0 : index
    %c0_4 = arith.constant 0 : index
    %4 = vector.load %arg3[%c0_3, %c0_4] : memref<1x512xf32, #tpu.memory_space<vmem>>, vector<1x512xf32>
    %5 = vector.broadcast %4 : vector<1x512xf32> to vector<8x512xf32>
    %6 = arith.addf %3, %5 : vector<8x512xf32>
    %cst_5 = arith.constant 0.000000e+00 : f32
    %7 = vector.broadcast %cst_5 : f32 to vector<8x512xf32>
    %8 = arith.maximumf %6, %7 : vector<8x512xf32>
    %9 = arith.truncf %8 : vector<8x512xf32> to vector<8x512xbf16>
    %c0_6 = arith.constant 0 : index
    %c0_7 = arith.constant 0 : index
    %10 = vector.load %arg4[%c0_6, %c0_7] : memref<512x128xbf16, #tpu.memory_space<vmem>>, vector<512x128xbf16>
    %cst_8 = arith.constant dense<0.000000e+00> : vector<8x128xf32>
    %11 = tpu.matmul %9, %10, %cst_8 {dimension_numbers = #tpu.dot_dimension_numbers<[1], [0], [0], [1], [0, 0, 1, 1], [], []>} : vector<8x512xbf16>, vector<512x128xbf16>, vector<8x128xf32> -> vector<8x128xf32>
    %c0_9 = arith.constant 0 : index
    %c0_10 = arith.constant 0 : index
    %12 = vector.load %arg5[%c0_9, %c0_10] : memref<1x128xf32, #tpu.memory_space<vmem>>, vector<1x128xf32>
    %13 = vector.broadcast %12 : vector<1x128xf32> to vector<8x128xf32>
    %14 = arith.addf %11, %13 : vector<8x128xf32>
    %15 = arith.addf %1, %14 : vector<8x128xf32>
    %cst_11 = arith.constant dense<0.000000e+00> : vector<8xf32>
    %16 = vector.multi_reduction <add>, %15, %cst_11 [1] : vector<8x128xf32> to vector<8xf32>
    %17 = vector.shape_cast %16 : vector<8xf32> to vector<8x1xf32>
    %cst_12 = arith.constant 1.280000e+02 : f32
    %18 = vector.broadcast %cst_12 : f32 to vector<8x1xf32>
    %19 = arith.divf %17, %18 : vector<8x1xf32>
    %20 = vector.broadcast %19 : vector<8x1xf32> to vector<8x128xf32>
    %21 = arith.subf %15, %20 : vector<8x128xf32>
    %22 = arith.mulf %21, %21 : vector<8x128xf32>
    %cst_13 = arith.constant dense<0.000000e+00> : vector<8xf32>
    %23 = vector.multi_reduction <add>, %22, %cst_13 [1] : vector<8x128xf32> to vector<8xf32>
    %24 = vector.shape_cast %23 : vector<8xf32> to vector<8x1xf32>
    %cst_14 = arith.constant 1.280000e+02 : f32
    %25 = vector.broadcast %cst_14 : f32 to vector<8x1xf32>
    %26 = arith.divf %24, %25 : vector<8x1xf32>
    %27 = vector.broadcast %19 : vector<8x1xf32> to vector<8x128xf32>
    %28 = arith.subf %15, %27 : vector<8x128xf32>
    %cst_15 = arith.constant 9.99999974E-6 : f32
    %29 = vector.broadcast %cst_15 : f32 to vector<8x1xf32>
    %30 = arith.addf %26, %29 : vector<8x1xf32>
    %31 = math.rsqrt %30 : vector<8x1xf32>
    %32 = vector.broadcast %31 : vector<8x1xf32> to vector<8x128xf32>
    %33 = arith.mulf %28, %32 : vector<8x128xf32>
    %c0_16 = arith.constant 0 : index
    %c0_17 = arith.constant 0 : index
    %34 = vector.load %arg6[%c0_16, %c0_17] : memref<1x128xf32, #tpu.memory_space<vmem>>, vector<1x128xf32>
    %35 = vector.broadcast %34 : vector<1x128xf32> to vector<8x128xf32>
    %36 = arith.mulf %33, %35 : vector<8x128xf32>
    %c0_18 = arith.constant 0 : index
    %c0_19 = arith.constant 0 : index
    %37 = vector.load %arg7[%c0_18, %c0_19] : memref<1x128xf32, #tpu.memory_space<vmem>>, vector<1x128xf32>
    %38 = vector.broadcast %37 : vector<1x128xf32> to vector<8x128xf32>
    %39 = arith.addf %36, %38 : vector<8x128xf32>
    %40 = arith.truncf %39 : vector<8x128xf32> to vector<8x128xbf16>
    %c0_20 = arith.constant 0 : index
    %c0_21 = arith.constant 0 : index
    %41 = vector.load %arg8[%c0_20, %c0_21] : memref<8x128xbf16, #tpu.memory_space<vmem>>, vector<8x128xbf16>
    tpu.vector_store %arg8[%c0_20, %c0_21], %40 {strides = array<i32>} : memref<8x128xbf16, #tpu.memory_space<vmem>>, vector<8x128xbf16>,
    return
  }
  func.func @transform_0(%arg0: i32) -> (i32, i32) {
    %c0_i32 = arith.constant 0 : i32
    %c0_i32_0 = arith.constant 0 : i32
    return %arg0, %c0_i32 : i32, i32
  }
  func.func @transform_1(%arg0: i32) -> (i32, i32) {
    %c0_i32 = arith.constant 0 : i32
    %c0_i32_0 = arith.constant 0 : i32
    %c0_i32_1 = arith.constant 0 : i32
    return %c0_i32, %c0_i32_0 : i32, i32
  }
  func.func @transform_2(%arg0: i32) -> (i32, i32) {
    %c0_i32 = arith.constant 0 : i32
    %c0_i32_0 = arith.constant 0 : i32
    %c0_i32_1 = arith.constant 0 : i32
    return %c0_i32, %c0_i32_0 : i32, i32
  }
  func.func @transform_3(%arg0: i32) -> (i32, i32) {
    %c0_i32 = arith.constant 0 : i32
    %c0_i32_0 = arith.constant 0 : i32
    %c0_i32_1 = arith.constant 0 : i32
    return %c0_i32, %c0_i32_0 : i32, i32
  }
  func.func @transform_4(%arg0: i32) -> (i32, i32) {
    %c0_i32 = arith.constant 0 : i32
    %c0_i32_0 = arith.constant 0 : i32
    %c0_i32_1 = arith.constant 0 : i32
    return %c0_i32, %c0_i32_0 : i32, i32
  }
  func.func @transform_5(%arg0: i32) -> (i32, i32) {
    %c0_i32 = arith.constant 0 : i32
    %c0_i32_0 = arith.constant 0 : i32
    %c0_i32_1 = arith.constant 0 : i32
    return %c0_i32, %c0_i32_0 : i32, i32
  }
  func.func @transform_6(%arg0: i32) -> (i32, i32) {
    %c0_i32 = arith.constant 0 : i32
    %c0_i32_0 = arith.constant 0 : i32
    %c0_i32_1 = arith.constant 0 : i32
    return %c0_i32, %c0_i32_0 : i32, i32
  }
  func.func @transform_7(%arg0: i32) -> (i32, i32) {
    %c0_i32 = arith.constant 0 : i32
    %c0_i32_0 = arith.constant 0 : i32
    return %arg0, %c0_i32 : i32, i32
  }
}

module attributes {stable_mosaic.version = 11 : i64} {
  func.func @_attn_block_kernel(%arg0: i32, %arg1: memref<1x8x128xbf16, #tpu.memory_space<vmem>>, %arg2: memref<128x384xbf16, #tpu.memory_space<vmem>>, %arg3: memref<1x384xf32, #tpu.memory_space<vmem>>, %arg4: memref<128x128xbf16, #tpu.memory_space<vmem>>, %arg5: memref<1x128xf32, #tpu.memory_space<vmem>>, %arg6: memref<1x128xf32, #tpu.memory_space<vmem>>, %arg7: memref<1x128xf32, #tpu.memory_space<vmem>>, %arg8: memref<1x8x128xbf16, #tpu.memory_space<vmem>>) attributes {dimension_semantics = [#tpu.dimension_semantics<parallel>], iteration_bounds = array<i64: 2>, scalar_prefetch = 0 : i64, scratch_operands = 0 : i64, tpu.core_type = #tpu.core_type<tc>, window_params = [{transform_indices = @transform_0, window_bounds = array<i64: 1, 8, 128>}, {pipeline_mode = #tpu.pipeline_mode<synchronous>, transform_indices = @transform_1, window_bounds = array<i64: 128, 384>}, {pipeline_mode = #tpu.pipeline_mode<synchronous>, transform_indices = @transform_2, window_bounds = array<i64: 1, 384>}, {pipeline_mode = #tpu.pipeline_mode<synchronous>, transform_indices = @transform_3, window_bounds = array<i64: 128, 128>}, {pipeline_mode = #tpu.pipeline_mode<synchronous>, transform_indices = @transform_4, window_bounds = array<i64: 1, 128>}, {pipeline_mode = #tpu.pipeline_mode<synchronous>, transform_indices = @transform_5, window_bounds = array<i64: 1, 128>}, {pipeline_mode = #tpu.pipeline_mode<synchronous>, transform_indices = @transform_6, window_bounds = array<i64: 1, 128>}, {transform_indices = @transform_7, window_bounds = array<i64: 1, 8, 128>}]} {
    %c0 = arith.constant 0 : index
    %c0_0 = arith.constant 0 : index
    %c0_1 = arith.constant 0 : index
    %0 = vector.load %arg1[%c0, %c0_0, %c0_1] : memref<1x8x128xbf16, #tpu.memory_space<vmem>>, vector<1x8x128xbf16>
    %1 = vector.shape_cast %0 : vector<1x8x128xbf16> to vector<8x128xbf16>
    %2 = arith.extf %1 : vector<8x128xbf16> to vector<8x128xf32>
    %c0_2 = arith.constant 0 : index
    %c0_3 = arith.constant 0 : index
    %3 = vector.load %arg2[%c0_2, %c0_3] : memref<128x384xbf16, #tpu.memory_space<vmem>>, vector<128x384xbf16>
    %cst = arith.constant dense<0.000000e+00> : vector<8x384xf32>
    %4 = tpu.matmul %1, %3, %cst {dimension_numbers = #tpu.dot_dimension_numbers<[1], [0], [0], [1], [0, 0, 1, 1], [], []>} : vector<8x128xbf16>, vector<128x384xbf16>, vector<8x384xf32> -> vector<8x384xf32>
    %c0_4 = arith.constant 0 : index
    %c0_5 = arith.constant 0 : index
    %5 = vector.load %arg3[%c0_4, %c0_5] : memref<1x384xf32, #tpu.memory_space<vmem>>, vector<1x384xf32>
    %6 = vector.broadcast %5 : vector<1x384xf32> to vector<8x384xf32>
    %7 = arith.addf %4, %6 : vector<8x384xf32>
    %8 = vector.extract_strided_slice %7 {offsets = [0, 0], sizes = [8, 128], strides = [1, 1]} : vector<8x384xf32> to vector<8x128xf32>
    %9 = vector.extract_strided_slice %7 {offsets = [0, 128], sizes = [8, 128], strides = [1, 1]} : vector<8x384xf32> to vector<8x128xf32>
    %10 = vector.extract_strided_slice %7 {offsets = [0, 256], sizes = [8, 128], strides = [1, 1]} : vector<8x384xf32> to vector<8x128xf32>
    %11 = arith.truncf %8 : vector<8x128xf32> to vector<8x128xbf16>
    %12 = vector.shape_cast %11 : vector<8x128xbf16> to vector<8x8x16xbf16>
    %13 = tpu.transpose %12, [1, 0, 2] : vector<8x8x16xbf16> -> vector<8x8x16xbf16>
    %14 = arith.truncf %9 : vector<8x128xf32> to vector<8x128xbf16>
    %15 = vector.shape_cast %14 : vector<8x128xbf16> to vector<8x8x16xbf16>
    %16 = tpu.transpose %15, [1, 0, 2] : vector<8x8x16xbf16> -> vector<8x8x16xbf16>
    %17 = arith.truncf %10 : vector<8x128xf32> to vector<8x128xbf16>
    %18 = vector.shape_cast %17 : vector<8x128xbf16> to vector<8x8x16xbf16>
    %19 = tpu.transpose %18, [1, 0, 2] : vector<8x8x16xbf16> -> vector<8x8x16xbf16>
    "tpu.trace_start"() <{level = 10 : i32, message = "bqd,bkd->bqk"}> : () -> ()
    %cst_6 = arith.constant dense<0.000000e+00> : vector<8x8x8xf32>
    %20 = tpu.matmul %13, %16, %cst_6 {dimension_numbers = #tpu.dot_dimension_numbers<[2], [2], [1], [1], [0, 0, 0, 1, 1, 1], [0], [0]>} : vector<8x8x16xbf16>, vector<8x8x16xbf16>, vector<8x8x8xf32> -> vector<8x8x8xf32>
    "tpu.trace_stop"() : () -> ()
    %cst_7 = arith.constant 2.500000e-01 : f32
    %21 = vector.broadcast %cst_7 : f32 to vector<8x8x8xf32>
    %22 = arith.mulf %20, %21 : vector<8x8x8xf32>
    %23 = tpu.iota {dimensions = array<i32: 0>} : vector<8x8xi32>
    %24 = tpu.iota {dimensions = array<i32: 1>} : vector<8x8xi32>
    %25 = arith.cmpi sle, %24, %23 : vector<8x8xi32>
    %26 = vector.shape_cast %25 : vector<8x8xi1> to vector<1x8x8xi1>
    %cst_8 = arith.constant -1.000000e+09 : f32
    %27 = vector.shape_cast %26 : vector<1x8x8xi1> to vector<1x8x8xi1>
    %28 = vector.broadcast %27 : vector<1x8x8xi1> to vector<8x8x8xi1>
    %29 = vector.broadcast %cst_8 : f32 to vector<8x8x8xf32>
    %30 = arith.select %28, %22, %29 : vector<8x8x8xi1>, vector<8x8x8xf32>
    %cst_9 = arith.constant dense<0xFF800000> : vector<8x8xf32>
    %31 = vector.multi_reduction <maximumf>, %30, %cst_9 [2] : vector<8x8x8xf32> to vector<8x8xf32>
    %32 = vector.shape_cast %31 : vector<8x8xf32> to vector<8x8x1xf32>
    %33 = vector.broadcast %32 : vector<8x8x1xf32> to vector<8x8x8xf32>
    %34 = arith.subf %30, %33 : vector<8x8x8xf32>
    %35 = math.exp %34 : vector<8x8x8xf32>
    %cst_10 = arith.constant dense<0.000000e+00> : vector<8x8xf32>
    %36 = vector.multi_reduction <add>, %35, %cst_10 [2] : vector<8x8x8xf32> to vector<8x8xf32>
    %37 = vector.shape_cast %36 : vector<8x8xf32> to vector<8x8x1xf32>
    %38 = tpu.reciprocal %37 {approx = true} : vector<8x8x1xf32> -> vector<8x8x1xf32>
    %39 = vector.broadcast %38 : vector<8x8x1xf32> to vector<8x8x8xf32>
    %40 = arith.mulf %35, %39 : vector<8x8x8xf32>
    %41 = arith.truncf %40 : vector<8x8x8xf32> to vector<8x8x8xbf16>
    "tpu.trace_start"() <{level = 10 : i32, message = "bqk,bkd->bqd"}> : () -> ()
    %cst_11 = arith.constant dense<0.000000e+00> : vector<8x8x16xf32>
    %42 = tpu.matmul %41, %19, %cst_11 {dimension_numbers = #tpu.dot_dimension_numbers<[2], [1], [1], [2], [0, 0, 0, 1, 1, 2], [0], [0]>} : vector<8x8x8xbf16>, vector<8x8x16xbf16>, vector<8x8x16xf32> -> vector<8x8x16xf32>
    "tpu.trace_stop"() : () -> ()
    %43 = arith.truncf %42 : vector<8x8x16xf32> to vector<8x8x16xbf16>
    %44 = tpu.transpose %43, [1, 0, 2] : vector<8x8x16xbf16> -> vector<8x8x16xbf16>
    %45 = vector.shape_cast %44 : vector<8x8x16xbf16> to vector<8x128xbf16>
    %c0_12 = arith.constant 0 : index
    %c0_13 = arith.constant 0 : index
    %46 = vector.load %arg4[%c0_12, %c0_13] : memref<128x128xbf16, #tpu.memory_space<vmem>>, vector<128x128xbf16>
    %cst_14 = arith.constant dense<0.000000e+00> : vector<8x128xf32>
    %47 = tpu.matmul %45, %46, %cst_14 {dimension_numbers = #tpu.dot_dimension_numbers<[1], [0], [0], [1], [0, 0, 1, 1], [], []>} : vector<8x128xbf16>, vector<128x128xbf16>, vector<8x128xf32> -> vector<8x128xf32>
    %c0_15 = arith.constant 0 : index
    %c0_16 = arith.constant 0 : index
    %48 = vector.load %arg5[%c0_15, %c0_16] : memref<1x128xf32, #tpu.memory_space<vmem>>, vector<1x128xf32>
    %49 = vector.broadcast %48 : vector<1x128xf32> to vector<8x128xf32>
    %50 = arith.addf %47, %49 : vector<8x128xf32>
    %51 = arith.addf %2, %50 : vector<8x128xf32>
    %cst_17 = arith.constant dense<0.000000e+00> : vector<8xf32>
    %52 = vector.multi_reduction <add>, %51, %cst_17 [1] : vector<8x128xf32> to vector<8xf32>
    %53 = vector.shape_cast %52 : vector<8xf32> to vector<8x1xf32>
    %cst_18 = arith.constant 1.280000e+02 : f32
    %54 = vector.broadcast %cst_18 : f32 to vector<8x1xf32>
    %55 = arith.divf %53, %54 : vector<8x1xf32>
    %56 = vector.broadcast %55 : vector<8x1xf32> to vector<8x128xf32>
    %57 = arith.subf %51, %56 : vector<8x128xf32>
    %58 = arith.mulf %57, %57 : vector<8x128xf32>
    %cst_19 = arith.constant dense<0.000000e+00> : vector<8xf32>
    %59 = vector.multi_reduction <add>, %58, %cst_19 [1] : vector<8x128xf32> to vector<8xf32>
    %60 = vector.shape_cast %59 : vector<8xf32> to vector<8x1xf32>
    %cst_20 = arith.constant 1.280000e+02 : f32
    %61 = vector.broadcast %cst_20 : f32 to vector<8x1xf32>
    %62 = arith.divf %60, %61 : vector<8x1xf32>
    %63 = vector.broadcast %55 : vector<8x1xf32> to vector<8x128xf32>
    %64 = arith.subf %51, %63 : vector<8x128xf32>
    %cst_21 = arith.constant 9.99999974E-6 : f32
    %65 = vector.broadcast %cst_21 : f32 to vector<8x1xf32>
    %66 = arith.addf %62, %65 : vector<8x1xf32>
    %67 = math.rsqrt %66 : vector<8x1xf32>
    %68 = vector.broadcast %67 : vector<8x1xf32> to vector<8x128xf32>
    %69 = arith.mulf %64, %68 : vector<8x128xf32>
    %c0_22 = arith.constant 0 : index
    %c0_23 = arith.constant 0 : index
    %70 = vector.load %arg6[%c0_22, %c0_23] : memref<1x128xf32, #tpu.memory_space<vmem>>, vector<1x128xf32>
    %71 = vector.broadcast %70 : vector<1x128xf32> to vector<8x128xf32>
    %72 = arith.mulf %69, %71 : vector<8x128xf32>
    %c0_24 = arith.constant 0 : index
    %c0_25 = arith.constant 0 : index
    %73 = vector.load %arg7[%c0_24, %c0_25] : memref<1x128xf32, #tpu.memory_space<vmem>>, vector<1x128xf32>
    %74 = vector.broadcast %73 : vector<1x128xf32> to vector<8x128xf32>
    %75 = arith.addf %72, %74 : vector<8x128xf32>
    %76 = vector.shape_cast %75 : vector<8x128xf32> to vector<1x8x128xf32>
    %77 = arith.truncf %76 : vector<1x8x128xf32> to vector<1x8x128xbf16>
    %c0_26 = arith.constant 0 : index
    %c0_27 = arith.constant 0 : index
    %c0_28 = arith.constant 0 : index
    %78 = vector.load %arg8[%c0_26, %c0_27, %c0_28] : memref<1x8x128xbf16, #tpu.memory_space<vmem>>, vector<1x8x128xbf16>
    tpu.vector_store %arg8[%c0_26, %c0_27, %c0_28], %77 {strides = array<i32>} : memref<1x8x128xbf16, #tpu.memory_space<vmem>>, vector<1x8x128xbf16>,
    return
  }
  func.func @transform_0(%arg0: i32) -> (i32, i32, i32) {
    %c0_i32 = arith.constant 0 : i32
    %c0_i32_0 = arith.constant 0 : i32
    %c0_i32_1 = arith.constant 0 : i32
    return %arg0, %c0_i32, %c0_i32_0 : i32, i32, i32
  }
  func.func @transform_1(%arg0: i32) -> (i32, i32) {
    %c0_i32 = arith.constant 0 : i32
    %c0_i32_0 = arith.constant 0 : i32
    %c0_i32_1 = arith.constant 0 : i32
    return %c0_i32, %c0_i32_0 : i32, i32
  }
  func.func @transform_2(%arg0: i32) -> (i32, i32) {
    %c0_i32 = arith.constant 0 : i32
    %c0_i32_0 = arith.constant 0 : i32
    %c0_i32_1 = arith.constant 0 : i32
    return %c0_i32, %c0_i32_0 : i32, i32
  }
  func.func @transform_3(%arg0: i32) -> (i32, i32) {
    %c0_i32 = arith.constant 0 : i32
    %c0_i32_0 = arith.constant 0 : i32
    %c0_i32_1 = arith.constant 0 : i32
    return %c0_i32, %c0_i32_0 : i32, i32
  }
  func.func @transform_4(%arg0: i32) -> (i32, i32) {
    %c0_i32 = arith.constant 0 : i32
    %c0_i32_0 = arith.constant 0 : i32
    %c0_i32_1 = arith.constant 0 : i32
    return %c0_i32, %c0_i32_0 : i32, i32
  }
  func.func @transform_5(%arg0: i32) -> (i32, i32) {
    %c0_i32 = arith.constant 0 : i32
    %c0_i32_0 = arith.constant 0 : i32
    %c0_i32_1 = arith.constant 0 : i32
    return %c0_i32, %c0_i32_0 : i32, i32
  }
  func.func @transform_6(%arg0: i32) -> (i32, i32) {
    %c0_i32 = arith.constant 0 : i32
    %c0_i32_0 = arith.constant 0 : i32
    %c0_i32_1 = arith.constant 0 : i32
    return %c0_i32, %c0_i32_0 : i32, i32
  }
  func.func @transform_7(%arg0: i32) -> (i32, i32, i32) {
    %c0_i32 = arith.constant 0 : i32
    %c0_i32_0 = arith.constant 0 : i32
    %c0_i32_1 = arith.constant 0 : i32
    return %arg0, %c0_i32, %c0_i32_0 : i32, i32, i32
  }
}

module attributes {stable_mosaic.version = 11 : i64} {
  func.func @_attn_block_kernel(%arg0: i32, %arg1: memref<1x8x128xbf16, #tpu.memory_space<vmem>>, %arg2: memref<1x8x128xbf16, #tpu.memory_space<vmem>>, %arg3: memref<128x128xbf16, #tpu.memory_space<vmem>>, %arg4: memref<1x128xf32, #tpu.memory_space<vmem>>, %arg5: memref<128x256xbf16, #tpu.memory_space<vmem>>, %arg6: memref<1x256xf32, #tpu.memory_space<vmem>>, %arg7: memref<128x128xbf16, #tpu.memory_space<vmem>>, %arg8: memref<1x128xf32, #tpu.memory_space<vmem>>, %arg9: memref<1x128xf32, #tpu.memory_space<vmem>>, %arg10: memref<1x128xf32, #tpu.memory_space<vmem>>, %arg11: memref<1x8x128xbf16, #tpu.memory_space<vmem>>) attributes {dimension_semantics = [#tpu.dimension_semantics<parallel>], iteration_bounds = array<i64: 2>, scalar_prefetch = 0 : i64, scratch_operands = 0 : i64, tpu.core_type = #tpu.core_type<tc>, window_params = [{transform_indices = @transform_0, window_bounds = array<i64: 1, 8, 128>}, {transform_indices = @transform_1, window_bounds = array<i64: 1, 8, 128>}, {pipeline_mode = #tpu.pipeline_mode<synchronous>, transform_indices = @transform_2, window_bounds = array<i64: 128, 128>}, {pipeline_mode = #tpu.pipeline_mode<synchronous>, transform_indices = @transform_3, window_bounds = array<i64: 1, 128>}, {pipeline_mode = #tpu.pipeline_mode<synchronous>, transform_indices = @transform_4, window_bounds = array<i64: 128, 256>}, {pipeline_mode = #tpu.pipeline_mode<synchronous>, transform_indices = @transform_5, window_bounds = array<i64: 1, 256>}, {pipeline_mode = #tpu.pipeline_mode<synchronous>, transform_indices = @transform_6, window_bounds = array<i64: 128, 128>}, {pipeline_mode = #tpu.pipeline_mode<synchronous>, transform_indices = @transform_7, window_bounds = array<i64: 1, 128>}, {pipeline_mode = #tpu.pipeline_mode<synchronous>, transform_indices = @transform_8, window_bounds = array<i64: 1, 128>}, {pipeline_mode = #tpu.pipeline_mode<synchronous>, transform_indices = @transform_9, window_bounds = array<i64: 1, 128>}, {transform_indices = @transform_10, window_bounds = array<i64: 1, 8, 128>}]} {
    %c0 = arith.constant 0 : index
    %c0_0 = arith.constant 0 : index
    %c0_1 = arith.constant 0 : index
    %0 = vector.load %arg1[%c0, %c0_0, %c0_1] : memref<1x8x128xbf16, #tpu.memory_space<vmem>>, vector<1x8x128xbf16>
    %1 = vector.shape_cast %0 : vector<1x8x128xbf16> to vector<8x128xbf16>
    %2 = arith.extf %1 : vector<8x128xbf16> to vector<8x128xf32>
    %c0_2 = arith.constant 0 : index
    %c0_3 = arith.constant 0 : index
    %c0_4 = arith.constant 0 : index
    %3 = vector.load %arg2[%c0_2, %c0_3, %c0_4] : memref<1x8x128xbf16, #tpu.memory_space<vmem>>, vector<1x8x128xbf16>
    %4 = vector.shape_cast %3 : vector<1x8x128xbf16> to vector<8x128xbf16>
    %c0_5 = arith.constant 0 : index
    %c0_6 = arith.constant 0 : index
    %5 = vector.load %arg3[%c0_5, %c0_6] : memref<128x128xbf16, #tpu.memory_space<vmem>>, vector<128x128xbf16>
    %cst = arith.constant dense<0.000000e+00> : vector<8x128xf32>
    %6 = tpu.matmul %1, %5, %cst {dimension_numbers = #tpu.dot_dimension_numbers<[1], [0], [0], [1], [0, 0, 1, 1], [], []>} : vector<8x128xbf16>, vector<128x128xbf16>, vector<8x128xf32> -> vector<8x128xf32>
    %c0_7 = arith.constant 0 : index
    %c0_8 = arith.constant 0 : index
    %7 = vector.load %arg4[%c0_7, %c0_8] : memref<1x128xf32, #tpu.memory_space<vmem>>, vector<1x128xf32>
    %8 = vector.broadcast %7 : vector<1x128xf32> to vector<8x128xf32>
    %9 = arith.addf %6, %8 : vector<8x128xf32>
    %c0_9 = arith.constant 0 : index
    %c0_10 = arith.constant 0 : index
    %10 = vector.load %arg5[%c0_9, %c0_10] : memref<128x256xbf16, #tpu.memory_space<vmem>>, vector<128x256xbf16>
    %cst_11 = arith.constant dense<0.000000e+00> : vector<8x256xf32>
    %11 = tpu.matmul %4, %10, %cst_11 {dimension_numbers = #tpu.dot_dimension_numbers<[1], [0], [0], [1], [0, 0, 1, 1], [], []>} : vector<8x128xbf16>, vector<128x256xbf16>, vector<8x256xf32> -> vector<8x256xf32>
    %c0_12 = arith.constant 0 : index
    %c0_13 = arith.constant 0 : index
    %12 = vector.load %arg6[%c0_12, %c0_13] : memref<1x256xf32, #tpu.memory_space<vmem>>, vector<1x256xf32>
    %13 = vector.broadcast %12 : vector<1x256xf32> to vector<8x256xf32>
    %14 = arith.addf %11, %13 : vector<8x256xf32>
    %15 = vector.extract_strided_slice %14 {offsets = [0, 0], sizes = [8, 128], strides = [1, 1]} : vector<8x256xf32> to vector<8x128xf32>
    %16 = vector.extract_strided_slice %14 {offsets = [0, 128], sizes = [8, 128], strides = [1, 1]} : vector<8x256xf32> to vector<8x128xf32>
    %17 = arith.truncf %9 : vector<8x128xf32> to vector<8x128xbf16>
    %18 = vector.shape_cast %17 : vector<8x128xbf16> to vector<8x8x16xbf16>
    %19 = tpu.transpose %18, [1, 0, 2] : vector<8x8x16xbf16> -> vector<8x8x16xbf16>
    %20 = arith.truncf %15 : vector<8x128xf32> to vector<8x128xbf16>
    %21 = vector.shape_cast %20 : vector<8x128xbf16> to vector<8x8x16xbf16>
    %22 = tpu.transpose %21, [1, 0, 2] : vector<8x8x16xbf16> -> vector<8x8x16xbf16>
    %23 = arith.truncf %16 : vector<8x128xf32> to vector<8x128xbf16>
    %24 = vector.shape_cast %23 : vector<8x128xbf16> to vector<8x8x16xbf16>
    %25 = tpu.transpose %24, [1, 0, 2] : vector<8x8x16xbf16> -> vector<8x8x16xbf16>
    "tpu.trace_start"() <{level = 10 : i32, message = "bqd,bkd->bqk"}> : () -> ()
    %cst_14 = arith.constant dense<0.000000e+00> : vector<8x8x8xf32>
    %26 = tpu.matmul %19, %22, %cst_14 {dimension_numbers = #tpu.dot_dimension_numbers<[2], [2], [1], [1], [0, 0, 0, 1, 1, 1], [0], [0]>} : vector<8x8x16xbf16>, vector<8x8x16xbf16>, vector<8x8x8xf32> -> vector<8x8x8xf32>
    "tpu.trace_stop"() : () -> ()
    %cst_15 = arith.constant 2.500000e-01 : f32
    %27 = vector.broadcast %cst_15 : f32 to vector<8x8x8xf32>
    %28 = arith.mulf %26, %27 : vector<8x8x8xf32>
    %cst_16 = arith.constant dense<0xFF800000> : vector<8x8xf32>
    %29 = vector.multi_reduction <maximumf>, %28, %cst_16 [2] : vector<8x8x8xf32> to vector<8x8xf32>
    %30 = vector.shape_cast %29 : vector<8x8xf32> to vector<8x8x1xf32>
    %31 = vector.broadcast %30 : vector<8x8x1xf32> to vector<8x8x8xf32>
    %32 = arith.subf %28, %31 : vector<8x8x8xf32>
    %33 = math.exp %32 : vector<8x8x8xf32>
    %cst_17 = arith.constant dense<0.000000e+00> : vector<8x8xf32>
    %34 = vector.multi_reduction <add>, %33, %cst_17 [2] : vector<8x8x8xf32> to vector<8x8xf32>
    %35 = vector.shape_cast %34 : vector<8x8xf32> to vector<8x8x1xf32>
    %36 = tpu.reciprocal %35 {approx = true} : vector<8x8x1xf32> -> vector<8x8x1xf32>
    %37 = vector.broadcast %36 : vector<8x8x1xf32> to vector<8x8x8xf32>
    %38 = arith.mulf %33, %37 : vector<8x8x8xf32>
    %39 = arith.truncf %38 : vector<8x8x8xf32> to vector<8x8x8xbf16>
    "tpu.trace_start"() <{level = 10 : i32, message = "bqk,bkd->bqd"}> : () -> ()
    %cst_18 = arith.constant dense<0.000000e+00> : vector<8x8x16xf32>
    %40 = tpu.matmul %39, %25, %cst_18 {dimension_numbers = #tpu.dot_dimension_numbers<[2], [1], [1], [2], [0, 0, 0, 1, 1, 2], [0], [0]>} : vector<8x8x8xbf16>, vector<8x8x16xbf16>, vector<8x8x16xf32> -> vector<8x8x16xf32>
    "tpu.trace_stop"() : () -> ()
    %41 = arith.truncf %40 : vector<8x8x16xf32> to vector<8x8x16xbf16>
    %42 = tpu.transpose %41, [1, 0, 2] : vector<8x8x16xbf16> -> vector<8x8x16xbf16>
    %43 = vector.shape_cast %42 : vector<8x8x16xbf16> to vector<8x128xbf16>
    %c0_19 = arith.constant 0 : index
    %c0_20 = arith.constant 0 : index
    %44 = vector.load %arg7[%c0_19, %c0_20] : memref<128x128xbf16, #tpu.memory_space<vmem>>, vector<128x128xbf16>
    %cst_21 = arith.constant dense<0.000000e+00> : vector<8x128xf32>
    %45 = tpu.matmul %43, %44, %cst_21 {dimension_numbers = #tpu.dot_dimension_numbers<[1], [0], [0], [1], [0, 0, 1, 1], [], []>} : vector<8x128xbf16>, vector<128x128xbf16>, vector<8x128xf32> -> vector<8x128xf32>
    %c0_22 = arith.constant 0 : index
    %c0_23 = arith.constant 0 : index
    %46 = vector.load %arg8[%c0_22, %c0_23] : memref<1x128xf32, #tpu.memory_space<vmem>>, vector<1x128xf32>
    %47 = vector.broadcast %46 : vector<1x128xf32> to vector<8x128xf32>
    %48 = arith.addf %45, %47 : vector<8x128xf32>
    %49 = arith.addf %2, %48 : vector<8x128xf32>
    %cst_24 = arith.constant dense<0.000000e+00> : vector<8xf32>
    %50 = vector.multi_reduction <add>, %49, %cst_24 [1] : vector<8x128xf32> to vector<8xf32>
    %51 = vector.shape_cast %50 : vector<8xf32> to vector<8x1xf32>
    %cst_25 = arith.constant 1.280000e+02 : f32
    %52 = vector.broadcast %cst_25 : f32 to vector<8x1xf32>
    %53 = arith.divf %51, %52 : vector<8x1xf32>
    %54 = vector.broadcast %53 : vector<8x1xf32> to vector<8x128xf32>
    %55 = arith.subf %49, %54 : vector<8x128xf32>
    %56 = arith.mulf %55, %55 : vector<8x128xf32>
    %cst_26 = arith.constant dense<0.000000e+00> : vector<8xf32>
    %57 = vector.multi_reduction <add>, %56, %cst_26 [1] : vector<8x128xf32> to vector<8xf32>
    %58 = vector.shape_cast %57 : vector<8xf32> to vector<8x1xf32>
    %cst_27 = arith.constant 1.280000e+02 : f32
    %59 = vector.broadcast %cst_27 : f32 to vector<8x1xf32>
    %60 = arith.divf %58, %59 : vector<8x1xf32>
    %61 = vector.broadcast %53 : vector<8x1xf32> to vector<8x128xf32>
    %62 = arith.subf %49, %61 : vector<8x128xf32>
    %cst_28 = arith.constant 9.99999974E-6 : f32
    %63 = vector.broadcast %cst_28 : f32 to vector<8x1xf32>
    %64 = arith.addf %60, %63 : vector<8x1xf32>
    %65 = math.rsqrt %64 : vector<8x1xf32>
    %66 = vector.broadcast %65 : vector<8x1xf32> to vector<8x128xf32>
    %67 = arith.mulf %62, %66 : vector<8x128xf32>
    %c0_29 = arith.constant 0 : index
    %c0_30 = arith.constant 0 : index
    %68 = vector.load %arg9[%c0_29, %c0_30] : memref<1x128xf32, #tpu.memory_space<vmem>>, vector<1x128xf32>
    %69 = vector.broadcast %68 : vector<1x128xf32> to vector<8x128xf32>
    %70 = arith.mulf %67, %69 : vector<8x128xf32>
    %c0_31 = arith.constant 0 : index
    %c0_32 = arith.constant 0 : index
    %71 = vector.load %arg10[%c0_31, %c0_32] : memref<1x128xf32, #tpu.memory_space<vmem>>, vector<1x128xf32>
    %72 = vector.broadcast %71 : vector<1x128xf32> to vector<8x128xf32>
    %73 = arith.addf %70, %72 : vector<8x128xf32>
    %74 = vector.shape_cast %73 : vector<8x128xf32> to vector<1x8x128xf32>
    %75 = arith.truncf %74 : vector<1x8x128xf32> to vector<1x8x128xbf16>
    %c0_33 = arith.constant 0 : index
    %c0_34 = arith.constant 0 : index
    %c0_35 = arith.constant 0 : index
    %76 = vector.load %arg11[%c0_33, %c0_34, %c0_35] : memref<1x8x128xbf16, #tpu.memory_space<vmem>>, vector<1x8x128xbf16>
    tpu.vector_store %arg11[%c0_33, %c0_34, %c0_35], %75 {strides = array<i32>} : memref<1x8x128xbf16, #tpu.memory_space<vmem>>, vector<1x8x128xbf16>,
    return
  }
  func.func @transform_0(%arg0: i32) -> (i32, i32, i32) {
    %c0_i32 = arith.constant 0 : i32
    %c0_i32_0 = arith.constant 0 : i32
    %c0_i32_1 = arith.constant 0 : i32
    return %arg0, %c0_i32, %c0_i32_0 : i32, i32, i32
  }
  func.func @transform_1(%arg0: i32) -> (i32, i32, i32) {
    %c0_i32 = arith.constant 0 : i32
    %c0_i32_0 = arith.constant 0 : i32
    %c0_i32_1 = arith.constant 0 : i32
    return %arg0, %c0_i32, %c0_i32_0 : i32, i32, i32
  }
  func.func @transform_2(%arg0: i32) -> (i32, i32) {
    %c0_i32 = arith.constant 0 : i32
    %c0_i32_0 = arith.constant 0 : i32
    %c0_i32_1 = arith.constant 0 : i32
    return %c0_i32, %c0_i32_0 : i32, i32
  }
  func.func @transform_3(%arg0: i32) -> (i32, i32) {
    %c0_i32 = arith.constant 0 : i32
    %c0_i32_0 = arith.constant 0 : i32
    %c0_i32_1 = arith.constant 0 : i32
    return %c0_i32, %c0_i32_0 : i32, i32
  }
  func.func @transform_4(%arg0: i32) -> (i32, i32) {
    %c0_i32 = arith.constant 0 : i32
    %c0_i32_0 = arith.constant 0 : i32
    %c0_i32_1 = arith.constant 0 : i32
    return %c0_i32, %c0_i32_0 : i32, i32
  }
  func.func @transform_5(%arg0: i32) -> (i32, i32) {
    %c0_i32 = arith.constant 0 : i32
    %c0_i32_0 = arith.constant 0 : i32
    %c0_i32_1 = arith.constant 0 : i32
    return %c0_i32, %c0_i32_0 : i32, i32
  }
  func.func @transform_6(%arg0: i32) -> (i32, i32) {
    %c0_i32 = arith.constant 0 : i32
    %c0_i32_0 = arith.constant 0 : i32
    %c0_i32_1 = arith.constant 0 : i32
    return %c0_i32, %c0_i32_0 : i32, i32
  }
  func.func @transform_7(%arg0: i32) -> (i32, i32) {
    %c0_i32 = arith.constant 0 : i32
    %c0_i32_0 = arith.constant 0 : i32
    %c0_i32_1 = arith.constant 0 : i32
    return %c0_i32, %c0_i32_0 : i32, i32
  }
  func.func @transform_8(%arg0: i32) -> (i32, i32) {
    %c0_i32 = arith.constant 0 : i32
    %c0_i32_0 = arith.constant 0 : i32
    %c0_i32_1 = arith.constant 0 : i32
    return %c0_i32, %c0_i32_0 : i32, i32
  }
  func.func @transform_9(%arg0: i32) -> (i32, i32) {
    %c0_i32 = arith.constant 0 : i32
    %c0_i32_0 = arith.constant 0 : i32
    %c0_i32_1 = arith.constant 0 : i32
    return %c0_i32, %c0_i32_0 : i32, i32
  }
  func.func @transform_10(%arg0: i32) -> (i32, i32, i32) {
    %c0_i32 = arith.constant 0 : i32
    %c0_i32_0 = arith.constant 0 : i32
    %c0_i32_1 = arith.constant 0 : i32
    return %arg0, %c0_i32, %c0_i32_0 : i32, i32, i32
  }
}

module attributes {stable_mosaic.version = 11 : i64} {
  func.func @_attn_block_kernel(%arg0: i32, %arg1: memref<1x8x128xbf16, #tpu.memory_space<vmem>>, %arg2: memref<1x8x128xbf16, #tpu.memory_space<vmem>>, %arg3: memref<128x128xbf16, #tpu.memory_space<vmem>>, %arg4: memref<1x128xf32, #tpu.memory_space<vmem>>, %arg5: memref<128x256xbf16, #tpu.memory_space<vmem>>, %arg6: memref<1x256xf32, #tpu.memory_space<vmem>>, %arg7: memref<128x128xbf16, #tpu.memory_space<vmem>>, %arg8: memref<1x128xf32, #tpu.memory_space<vmem>>, %arg9: memref<1x128xf32, #tpu.memory_space<vmem>>, %arg10: memref<1x128xf32, #tpu.memory_space<vmem>>, %arg11: memref<1x8x128xbf16, #tpu.memory_space<vmem>>) attributes {dimension_semantics = [#tpu.dimension_semantics<parallel>], iteration_bounds = array<i64: 2>, scalar_prefetch = 0 : i64, scratch_operands = 0 : i64, tpu.core_type = #tpu.core_type<tc>, window_params = [{transform_indices = @transform_0, window_bounds = array<i64: 1, 8, 128>}, {transform_indices = @transform_1, window_bounds = array<i64: 1, 8, 128>}, {pipeline_mode = #tpu.pipeline_mode<synchronous>, transform_indices = @transform_2, window_bounds = array<i64: 128, 128>}, {pipeline_mode = #tpu.pipeline_mode<synchronous>, transform_indices = @transform_3, window_bounds = array<i64: 1, 128>}, {pipeline_mode = #tpu.pipeline_mode<synchronous>, transform_indices = @transform_4, window_bounds = array<i64: 128, 256>}, {pipeline_mode = #tpu.pipeline_mode<synchronous>, transform_indices = @transform_5, window_bounds = array<i64: 1, 256>}, {pipeline_mode = #tpu.pipeline_mode<synchronous>, transform_indices = @transform_6, window_bounds = array<i64: 128, 128>}, {pipeline_mode = #tpu.pipeline_mode<synchronous>, transform_indices = @transform_7, window_bounds = array<i64: 1, 128>}, {pipeline_mode = #tpu.pipeline_mode<synchronous>, transform_indices = @transform_8, window_bounds = array<i64: 1, 128>}, {pipeline_mode = #tpu.pipeline_mode<synchronous>, transform_indices = @transform_9, window_bounds = array<i64: 1, 128>}, {transform_indices = @transform_10, window_bounds = array<i64: 1, 8, 128>}]} {
    %c0 = arith.constant 0 : index
    %c0_0 = arith.constant 0 : index
    %c0_1 = arith.constant 0 : index
    %0 = vector.load %arg1[%c0, %c0_0, %c0_1] : memref<1x8x128xbf16, #tpu.memory_space<vmem>>, vector<1x8x128xbf16>
    %1 = vector.shape_cast %0 : vector<1x8x128xbf16> to vector<8x128xbf16>
    %2 = arith.extf %1 : vector<8x128xbf16> to vector<8x128xf32>
    %c0_2 = arith.constant 0 : index
    %c0_3 = arith.constant 0 : index
    %c0_4 = arith.constant 0 : index
    %3 = vector.load %arg2[%c0_2, %c0_3, %c0_4] : memref<1x8x128xbf16, #tpu.memory_space<vmem>>, vector<1x8x128xbf16>
    %4 = vector.shape_cast %3 : vector<1x8x128xbf16> to vector<8x128xbf16>
    %c0_5 = arith.constant 0 : index
    %c0_6 = arith.constant 0 : index
    %5 = vector.load %arg3[%c0_5, %c0_6] : memref<128x128xbf16, #tpu.memory_space<vmem>>, vector<128x128xbf16>
    %cst = arith.constant dense<0.000000e+00> : vector<8x128xf32>
    %6 = tpu.matmul %1, %5, %cst {dimension_numbers = #tpu.dot_dimension_numbers<[1], [0], [0], [1], [0, 0, 1, 1], [], []>} : vector<8x128xbf16>, vector<128x128xbf16>, vector<8x128xf32> -> vector<8x128xf32>
    %c0_7 = arith.constant 0 : index
    %c0_8 = arith.constant 0 : index
    %7 = vector.load %arg4[%c0_7, %c0_8] : memref<1x128xf32, #tpu.memory_space<vmem>>, vector<1x128xf32>
    %8 = vector.broadcast %7 : vector<1x128xf32> to vector<8x128xf32>
    %9 = arith.addf %6, %8 : vector<8x128xf32>
    %c0_9 = arith.constant 0 : index
    %c0_10 = arith.constant 0 : index
    %10 = vector.load %arg5[%c0_9, %c0_10] : memref<128x256xbf16, #tpu.memory_space<vmem>>, vector<128x256xbf16>
    %cst_11 = arith.constant dense<0.000000e+00> : vector<8x256xf32>
    %11 = tpu.matmul %4, %10, %cst_11 {dimension_numbers = #tpu.dot_dimension_numbers<[1], [0], [0], [1], [0, 0, 1, 1], [], []>} : vector<8x128xbf16>, vector<128x256xbf16>, vector<8x256xf32> -> vector<8x256xf32>
    %c0_12 = arith.constant 0 : index
    %c0_13 = arith.constant 0 : index
    %12 = vector.load %arg6[%c0_12, %c0_13] : memref<1x256xf32, #tpu.memory_space<vmem>>, vector<1x256xf32>
    %13 = vector.broadcast %12 : vector<1x256xf32> to vector<8x256xf32>
    %14 = arith.addf %11, %13 : vector<8x256xf32>
    %15 = vector.extract_strided_slice %14 {offsets = [0, 0], sizes = [8, 128], strides = [1, 1]} : vector<8x256xf32> to vector<8x128xf32>
    %16 = vector.extract_strided_slice %14 {offsets = [0, 128], sizes = [8, 128], strides = [1, 1]} : vector<8x256xf32> to vector<8x128xf32>
    %17 = arith.truncf %9 : vector<8x128xf32> to vector<8x128xbf16>
    %18 = vector.shape_cast %17 : vector<8x128xbf16> to vector<8x8x16xbf16>
    %19 = tpu.transpose %18, [1, 0, 2] : vector<8x8x16xbf16> -> vector<8x8x16xbf16>
    %20 = arith.truncf %15 : vector<8x128xf32> to vector<8x128xbf16>
    %21 = vector.shape_cast %20 : vector<8x128xbf16> to vector<8x8x16xbf16>
    %22 = tpu.transpose %21, [1, 0, 2] : vector<8x8x16xbf16> -> vector<8x8x16xbf16>
    %23 = arith.truncf %16 : vector<8x128xf32> to vector<8x128xbf16>
    %24 = vector.shape_cast %23 : vector<8x128xbf16> to vector<8x8x16xbf16>
    %25 = tpu.transpose %24, [1, 0, 2] : vector<8x8x16xbf16> -> vector<8x8x16xbf16>
    "tpu.trace_start"() <{level = 10 : i32, message = "bqd,bkd->bqk"}> : () -> ()
    %cst_14 = arith.constant dense<0.000000e+00> : vector<8x8x8xf32>
    %26 = tpu.matmul %19, %22, %cst_14 {dimension_numbers = #tpu.dot_dimension_numbers<[2], [2], [1], [1], [0, 0, 0, 1, 1, 1], [0], [0]>} : vector<8x8x16xbf16>, vector<8x8x16xbf16>, vector<8x8x8xf32> -> vector<8x8x8xf32>
    "tpu.trace_stop"() : () -> ()
    %cst_15 = arith.constant 2.500000e-01 : f32
    %27 = vector.broadcast %cst_15 : f32 to vector<8x8x8xf32>
    %28 = arith.mulf %26, %27 : vector<8x8x8xf32>
    %cst_16 = arith.constant dense<0xFF800000> : vector<8x8xf32>
    %29 = vector.multi_reduction <maximumf>, %28, %cst_16 [2] : vector<8x8x8xf32> to vector<8x8xf32>
    %30 = vector.shape_cast %29 : vector<8x8xf32> to vector<8x8x1xf32>
    %31 = vector.broadcast %30 : vector<8x8x1xf32> to vector<8x8x8xf32>
    %32 = arith.subf %28, %31 : vector<8x8x8xf32>
    %33 = math.exp %32 : vector<8x8x8xf32>
    %cst_17 = arith.constant dense<0.000000e+00> : vector<8x8xf32>
    %34 = vector.multi_reduction <add>, %33, %cst_17 [2] : vector<8x8x8xf32> to vector<8x8xf32>
    %35 = vector.shape_cast %34 : vector<8x8xf32> to vector<8x8x1xf32>
    %36 = tpu.reciprocal %35 {approx = true} : vector<8x8x1xf32> -> vector<8x8x1xf32>
    %37 = vector.broadcast %36 : vector<8x8x1xf32> to vector<8x8x8xf32>
    %38 = arith.mulf %33, %37 : vector<8x8x8xf32>
    %39 = arith.truncf %38 : vector<8x8x8xf32> to vector<8x8x8xbf16>
    "tpu.trace_start"() <{level = 10 : i32, message = "bqk,bkd->bqd"}> : () -> ()
    %cst_18 = arith.constant dense<0.000000e+00> : vector<8x8x16xf32>
    %40 = tpu.matmul %39, %25, %cst_18 {dimension_numbers = #tpu.dot_dimension_numbers<[2], [1], [1], [2], [0, 0, 0, 1, 1, 2], [0], [0]>} : vector<8x8x8xbf16>, vector<8x8x16xbf16>, vector<8x8x16xf32> -> vector<8x8x16xf32>
    "tpu.trace_stop"() : () -> ()
    %41 = arith.truncf %40 : vector<8x8x16xf32> to vector<8x8x16xbf16>
    %42 = tpu.transpose %41, [1, 0, 2] : vector<8x8x16xbf16> -> vector<8x8x16xbf16>
    %43 = vector.shape_cast %42 : vector<8x8x16xbf16> to vector<8x128xbf16>
    %c0_19 = arith.constant 0 : index
    %c0_20 = arith.constant 0 : index
    %44 = vector.load %arg7[%c0_19, %c0_20] : memref<128x128xbf16, #tpu.memory_space<vmem>>, vector<128x128xbf16>
    %cst_21 = arith.constant dense<0.000000e+00> : vector<8x128xf32>
    %45 = tpu.matmul %43, %44, %cst_21 {dimension_numbers = #tpu.dot_dimension_numbers<[1], [0], [0], [1], [0, 0, 1, 1], [], []>} : vector<8x128xbf16>, vector<128x128xbf16>, vector<8x128xf32> -> vector<8x128xf32>
    %c0_22 = arith.constant 0 : index
    %c0_23 = arith.constant 0 : index
    %46 = vector.load %arg8[%c0_22, %c0_23] : memref<1x128xf32, #tpu.memory_space<vmem>>, vector<1x128xf32>
    %47 = vector.broadcast %46 : vector<1x128xf32> to vector<8x128xf32>
    %48 = arith.addf %45, %47 : vector<8x128xf32>
    %49 = arith.addf %2, %48 : vector<8x128xf32>
    %cst_24 = arith.constant dense<0.000000e+00> : vector<8xf32>
    %50 = vector.multi_reduction <add>, %49, %cst_24 [1] : vector<8x128xf32> to vector<8xf32>
    %51 = vector.shape_cast %50 : vector<8xf32> to vector<8x1xf32>
    %cst_25 = arith.constant 1.280000e+02 : f32
    %52 = vector.broadcast %cst_25 : f32 to vector<8x1xf32>
    %53 = arith.divf %51, %52 : vector<8x1xf32>
    %54 = vector.broadcast %53 : vector<8x1xf32> to vector<8x128xf32>
    %55 = arith.subf %49, %54 : vector<8x128xf32>
    %56 = arith.mulf %55, %55 : vector<8x128xf32>
    %cst_26 = arith.constant dense<0.000000e+00> : vector<8xf32>
    %57 = vector.multi_reduction <add>, %56, %cst_26 [1] : vector<8x128xf32> to vector<8xf32>
    %58 = vector.shape_cast %57 : vector<8xf32> to vector<8x1xf32>
    %cst_27 = arith.constant 1.280000e+02 : f32
    %59 = vector.broadcast %cst_27 : f32 to vector<8x1xf32>
    %60 = arith.divf %58, %59 : vector<8x1xf32>
    %61 = vector.broadcast %53 : vector<8x1xf32> to vector<8x128xf32>
    %62 = arith.subf %49, %61 : vector<8x128xf32>
    %cst_28 = arith.constant 9.99999974E-6 : f32
    %63 = vector.broadcast %cst_28 : f32 to vector<8x1xf32>
    %64 = arith.addf %60, %63 : vector<8x1xf32>
    %65 = math.rsqrt %64 : vector<8x1xf32>
    %66 = vector.broadcast %65 : vector<8x1xf32> to vector<8x128xf32>
    %67 = arith.mulf %62, %66 : vector<8x128xf32>
    %c0_29 = arith.constant 0 : index
    %c0_30 = arith.constant 0 : index
    %68 = vector.load %arg9[%c0_29, %c0_30] : memref<1x128xf32, #tpu.memory_space<vmem>>, vector<1x128xf32>
    %69 = vector.broadcast %68 : vector<1x128xf32> to vector<8x128xf32>
    %70 = arith.mulf %67, %69 : vector<8x128xf32>
    %c0_31 = arith.constant 0 : index
    %c0_32 = arith.constant 0 : index
    %71 = vector.load %arg10[%c0_31, %c0_32] : memref<1x128xf32, #tpu.memory_space<vmem>>, vector<1x128xf32>
    %72 = vector.broadcast %71 : vector<1x128xf32> to vector<8x128xf32>
    %73 = arith.addf %70, %72 : vector<8x128xf32>
    %74 = vector.shape_cast %73 : vector<8x128xf32> to vector<1x8x128xf32>
    %75 = arith.truncf %74 : vector<1x8x128xf32> to vector<1x8x128xbf16>
    %c0_33 = arith.constant 0 : index
    %c0_34 = arith.constant 0 : index
    %c0_35 = arith.constant 0 : index
    %76 = vector.load %arg11[%c0_33, %c0_34, %c0_35] : memref<1x8x128xbf16, #tpu.memory_space<vmem>>, vector<1x8x128xbf16>
    tpu.vector_store %arg11[%c0_33, %c0_34, %c0_35], %75 {strides = array<i32>} : memref<1x8x128xbf16, #tpu.memory_space<vmem>>, vector<1x8x128xbf16>,
    return
  }
  func.func @transform_0(%arg0: i32) -> (i32, i32, i32) {
    %c0_i32 = arith.constant 0 : i32
    %c0_i32_0 = arith.constant 0 : i32
    %c0_i32_1 = arith.constant 0 : i32
    return %arg0, %c0_i32, %c0_i32_0 : i32, i32, i32
  }
  func.func @transform_1(%arg0: i32) -> (i32, i32, i32) {
    %c0_i32 = arith.constant 0 : i32
    %c0_i32_0 = arith.constant 0 : i32
    %c0_i32_1 = arith.constant 0 : i32
    return %arg0, %c0_i32, %c0_i32_0 : i32, i32, i32
  }
  func.func @transform_2(%arg0: i32) -> (i32, i32) {
    %c0_i32 = arith.constant 0 : i32
    %c0_i32_0 = arith.constant 0 : i32
    %c0_i32_1 = arith.constant 0 : i32
    return %c0_i32, %c0_i32_0 : i32, i32
  }
  func.func @transform_3(%arg0: i32) -> (i32, i32) {
    %c0_i32 = arith.constant 0 : i32
    %c0_i32_0 = arith.constant 0 : i32
    %c0_i32_1 = arith.constant 0 : i32
    return %c0_i32, %c0_i32_0 : i32, i32
  }
  func.func @transform_4(%arg0: i32) -> (i32, i32) {
    %c0_i32 = arith.constant 0 : i32
    %c0_i32_0 = arith.constant 0 : i32
    %c0_i32_1 = arith.constant 0 : i32
    return %c0_i32, %c0_i32_0 : i32, i32
  }
  func.func @transform_5(%arg0: i32) -> (i32, i32) {
    %c0_i32 = arith.constant 0 : i32
    %c0_i32_0 = arith.constant 0 : i32
    %c0_i32_1 = arith.constant 0 : i32
    return %c0_i32, %c0_i32_0 : i32, i32
  }
  func.func @transform_6(%arg0: i32) -> (i32, i32) {
    %c0_i32 = arith.constant 0 : i32
    %c0_i32_0 = arith.constant 0 : i32
    %c0_i32_1 = arith.constant 0 : i32
    return %c0_i32, %c0_i32_0 : i32, i32
  }
  func.func @transform_7(%arg0: i32) -> (i32, i32) {
    %c0_i32 = arith.constant 0 : i32
    %c0_i32_0 = arith.constant 0 : i32
    %c0_i32_1 = arith.constant 0 : i32
    return %c0_i32, %c0_i32_0 : i32, i32
  }
  func.func @transform_8(%arg0: i32) -> (i32, i32) {
    %c0_i32 = arith.constant 0 : i32
    %c0_i32_0 = arith.constant 0 : i32
    %c0_i32_1 = arith.constant 0 : i32
    return %c0_i32, %c0_i32_0 : i32, i32
  }
  func.func @transform_9(%arg0: i32) -> (i32, i32) {
    %c0_i32 = arith.constant 0 : i32
    %c0_i32_0 = arith.constant 0 : i32
    %c0_i32_1 = arith.constant 0 : i32
    return %c0_i32, %c0_i32_0 : i32, i32
  }
  func.func @transform_10(%arg0: i32) -> (i32, i32, i32) {
    %c0_i32 = arith.constant 0 : i32
    %c0_i32_0 = arith.constant 0 : i32
    %c0_i32_1 = arith.constant 0 : i32
    return %arg0, %c0_i32, %c0_i32_0 : i32, i32, i32
  }
}

module attributes {stable_mosaic.version = 11 : i64} {
  func.func @_matmul_bias_kernel(%arg0: i32, %arg1: i32, %arg2: i32, %arg3: memref<16x128xbf16, #tpu.memory_space<vmem>>, %arg4: memref<128x128xbf16, #tpu.memory_space<vmem>>, %arg5: memref<1x128xf32, #tpu.memory_space<vmem>>, %arg6: memref<16x128xf32, #tpu.memory_space<vmem>>, %arg7: memref<16x128xf32, #tpu.memory_space<vmem>>) attributes {dimension_semantics = [#tpu.dimension_semantics<parallel>, #tpu.dimension_semantics<parallel>, #tpu.dimension_semantics<arbitrary>], iteration_bounds = array<i64: 1, 1, 1>, scalar_prefetch = 0 : i64, scratch_operands = 1 : i64, tpu.core_type = #tpu.core_type<tc>, window_params = [{transform_indices = @transform_0, window_bounds = array<i64: 16, 128>}, {transform_indices = @transform_1, window_bounds = array<i64: 128, 128>}, {transform_indices = @transform_2, window_bounds = array<i64: 1, 128>}, {transform_indices = @transform_3, window_bounds = array<i64: 16, 128>}]} {
    %c0_i32 = arith.constant 0 : i32
    %0 = arith.cmpi eq, %arg2, %c0_i32 : i32
    %1 = arith.extui %0 : i1 to i32
    %c0_i32_0 = arith.constant 0 : i32
    %2 = arith.cmpi ne, %1, %c0_i32_0 : i32
    scf.if %2 {
      %cst_10 = arith.constant 0.000000e+00 : f32
      %12 = vector.broadcast %cst_10 : f32 to vector<16x128xf32>
      %c0_11 = arith.constant 0 : index
      %c0_12 = arith.constant 0 : index
      %13 = vector.load %arg7[%c0_11, %c0_12] : memref<16x128xf32, #tpu.memory_space<vmem>>, vector<16x128xf32>
      tpu.vector_store %arg7[%c0_11, %c0_12], %12 {strides = array<i32>} : memref<16x128xf32, #tpu.memory_space<vmem>>, vector<16x128xf32>,
    } else {
    }
    %c0 = arith.constant 0 : index
    %c0_1 = arith.constant 0 : index
    %3 = vector.load %arg7[%c0, %c0_1] : memref<16x128xf32, #tpu.memory_space<vmem>>, vector<16x128xf32>
    %c0_2 = arith.constant 0 : index
    %c0_3 = arith.constant 0 : index
    %4 = vector.load %arg3[%c0_2, %c0_3] : memref<16x128xbf16, #tpu.memory_space<vmem>>, vector<16x128xbf16>
    %c0_4 = arith.constant 0 : index
    %c0_5 = arith.constant 0 : index
    %5 = vector.load %arg4[%c0_4, %c0_5] : memref<128x128xbf16, #tpu.memory_space<vmem>>, vector<128x128xbf16>
    %cst = arith.constant dense<0.000000e+00> : vector<16x128xf32>
    %6 = tpu.matmul %4, %5, %cst {dimension_numbers = #tpu.dot_dimension_numbers<[1], [0], [0], [1], [0, 0, 1, 1], [], []>} : vector<16x128xbf16>, vector<128x128xbf16>, vector<16x128xf32> -> vector<16x128xf32>
    %7 = arith.addf %3, %6 : vector<16x128xf32>
    %c0_6 = arith.constant 0 : index
    %c0_7 = arith.constant 0 : index
    %8 = vector.load %arg7[%c0_6, %c0_7] : memref<16x128xf32, #tpu.memory_space<vmem>>, vector<16x128xf32>
    tpu.vector_store %arg7[%c0_6, %c0_7], %7 {strides = array<i32>} : memref<16x128xf32, #tpu.memory_space<vmem>>, vector<16x128xf32>,
    %c0_i32_8 = arith.constant 0 : i32
    %9 = arith.cmpi eq, %arg2, %c0_i32_8 : i32
    %10 = arith.extui %9 : i1 to i32
    %c0_i32_9 = arith.constant 0 : i32
    %11 = arith.cmpi ne, %10, %c0_i32_9 : i32
    scf.if %11 {
      %c0_10 = arith.constant 0 : index
      %c0_11 = arith.constant 0 : index
      %12 = vector.load %arg7[%c0_10, %c0_11] : memref<16x128xf32, #tpu.memory_space<vmem>>, vector<16x128xf32>
      %c0_12 = arith.constant 0 : index
      %c0_13 = arith.constant 0 : index
      %13 = vector.load %arg5[%c0_12, %c0_13] : memref<1x128xf32, #tpu.memory_space<vmem>>, vector<1x128xf32>
      %14 = vector.broadcast %13 : vector<1x128xf32> to vector<16x128xf32>
      %15 = arith.addf %12, %14 : vector<16x128xf32>
      %c0_14 = arith.constant 0 : index
      %c0_15 = arith.constant 0 : index
      %16 = vector.load %arg6[%c0_14, %c0_15] : memref<16x128xf32, #tpu.memory_space<vmem>>, vector<16x128xf32>
      tpu.vector_store %arg6[%c0_14, %c0_15], %15 {strides = array<i32>} : memref<16x128xf32, #tpu.memory_space<vmem>>, vector<16x128xf32>,
    } else {
    }
    return
  }
  func.func @transform_0(%arg0: i32, %arg1: i32, %arg2: i32) -> (i32, i32) {
    %c0_i32 = arith.constant 0 : i32
    return %arg0, %arg2 : i32, i32
  }
  func.func @transform_1(%arg0: i32, %arg1: i32, %arg2: i32) -> (i32, i32) {
    %c0_i32 = arith.constant 0 : i32
    return %arg2, %arg1 : i32, i32
  }
  func.func @transform_2(%arg0: i32, %arg1: i32, %arg2: i32) -> (i32, i32) {
    %c0_i32 = arith.constant 0 : i32
    %c0_i32_0 = arith.constant 0 : i32
    return %c0_i32, %arg1 : i32, i32
  }
  func.func @transform_3(%arg0: i32, %arg1: i32, %arg2: i32) -> (i32, i32) {
    %c0_i32 = arith.constant 0 : i32
    return %arg0, %arg1 : i32, i32
  }
}

</mosaic_0001>

<llo_original>
// kernel: decoder_forward.9
$region0: #{decoder_forward.9}
  #allocation0 [shape = 'u32[]', space=smem, size = 0x4, offset = 0x4, fixed_abs, tag = 'smem constant byte address 0x4 - core index']
  #allocation1 [shape = 'u32[144,128]{1,0:T(1,128)}', space=vmem, size = 0x12000, scoped, tag = 'internal scratch']
  %s0 = inlined_call_operand.vmem [shape: bf16[16,128], index: 0, kind: input, shape index: {}]
  %s1 = inlined_call_operand.vmem [shape: bf16[128,512], index: 1, kind: input, shape index: {}]
  %s2 = inlined_call_operand.vmem [shape: f32[1,512], index: 2, kind: input, shape index: {}]
  %s3 = inlined_call_operand.vmem [shape: bf16[512,128], index: 3, kind: input, shape index: {}]
  %s4 = inlined_call_operand.vmem [shape: f32[1,128], index: 4, kind: input, shape index: {}]
  %s5 = inlined_call_operand.vmem [shape: f32[1,128], index: 5, kind: input, shape index: {}]
  %s6 = inlined_call_operand.vmem [shape: f32[1,128], index: 6, kind: input, shape index: {}]
  %s7 = inlined_call_operand.vmem [shape: bf16[16,128], index: 7, kind: output, shape index: {}]
  %s8 = sld [smem:[#allocation0]]
  $region61: #{decoder_forward.9} parent=0
    _
  %s10 = ssub.s32 1, %s8
  %s11 = scalar_select 0, %s10, %s8
  loop: start=0, step=1, limit=4
  $region2: #{decoder_forward.9} parent=0 // loop_pre_header
    _
  $region3: #{decoder_forward.9} parent=0 // loop_header
    %s13 = sphi 0, %s17
    %p14 = scmp.ge.s32.totalorder %s13, 4
    %s23 = sphi 0, %s25
    %s26 = sphi 0, %s23
    %s27 = sphi 0, %s26
    %s43 = sphi 0, %s27
    %s47 = sphi 0, %s47
    %s49 = sphi 0, %s47
    %s50 = sphi 0, %s49
    %s64 = sphi 0, %s50
    %s68 = sphi 0, %s68
    %s70 = sphi 0, %s68
    %s71 = sphi 0, %s70
    %s85 = sphi 0, %s71
    %s89 = sphi 0, %s89
    %s91 = sphi 0, %s89
    %s92 = sphi 0, %s91
    %s106 = sphi 0, %s92
    %s110 = sphi 0, %s110
    %s112 = sphi 0, %s110
    %s113 = sphi 0, %s112
    %s127 = sphi 0, %s113
    %s131 = sphi 0, %s131
    %s133 = sphi 0, %s131
    %s134 = sphi 0, %s133
    %s148 = sphi 0, %s134
    %s152 = sphi 0, %s152
    %s154 = sphi 0, %s152
    %s155 = sphi 0, %s154
    %s169 = sphi 0, %s155
    %s175 = sphi 0, %s177
    %s178 = sphi 0, %s175
    %s179 = sphi 0, %s178
    %s195 = sphi 0, %s179
  $region4: #{decoder_forward.9} parent=0 // loop_header_branch
    %16 = sbr.rel (%p14) target = $region8
  $region5: #{decoder_forward.9} parent=0 // loop_body
    %s18 = ssub.s32 %s13, 1
    %s19 = ssub.s32 %s13, 2
    %s20 = sadd.s32 %s13, 1
    %s21 = ssub.s32 %s13, %s20
    %p22 = scmp.eq.s32.totalorder %s21, 0
    %s24 = sadd.s32 %s23, 1
    %s25 = scalar_select %p22, %s23, %s24
    %p28 = pneg %p22
    %p29 = scmp.eq.s32.totalorder %s13, 1
    %p30 = por %p28, %p29
    %p31 = scmp.ne.s32.totalorder %s23, %s26
    %p32 = scmp.eq.s32.totalorder %s13, 0
    %p33 = por %p31, %p32
    %p34 = scmp.ne.s32.totalorder %s23, %s26
    %p35 = scmp.eq.s32.totalorder %s18, 1
    %p36 = por %p34, %p35
    %p37 = scmp.ne.s32.totalorder %s26, %s27
    %p38 = scmp.eq.s32.totalorder %s18, 0
    %p39 = por %p37, %p38
    %p40 = scmp.ne.s32.totalorder %s26, %s27
    %p41 = scmp.eq.s32.totalorder %s19, 1
    %p42 = por %p40, %p41
    %p44 = scmp.ne.s32.totalorder %s27, %s43
    %p45 = scmp.eq.s32.totalorder %s19, 0
    %p46 = por %p44, %p45
    %s48 = sadd.s32 %s47, 1
    %p51 = scmp.eq.s32.totalorder %s13, 1
    %p52 = scmp.ne.s32.totalorder %s47, %s49
    %p53 = scmp.eq.s32.totalorder %s13, 0
    %p54 = por %p52, %p53
    %p55 = scmp.ne.s32.totalorder %s47, %s49
    %p56 = scmp.eq.s32.totalorder %s18, 1
    %p57 = por %p55, %p56
    %p58 = scmp.ne.s32.totalorder %s49, %s50
    %p59 = scmp.eq.s32.totalorder %s18, 0
    %p60 = por %p58, %p59
    %p61 = scmp.ne.s32.totalorder %s49, %s50
    %p62 = scmp.eq.s32.totalorder %s19, 1
    %p63 = por %p61, %p62
    %p65 = scmp.ne.s32.totalorder %s50, %s64
    %p66 = scmp.eq.s32.totalorder %s19, 0
    %p67 = por %p65, %p66
    %s69 = sadd.s32 %s68, 1
    %p72 = scmp.eq.s32.totalorder %s13, 1
    %p73 = scmp.ne.s32.totalorder %s68, %s70
    %p74 = scmp.eq.s32.totalorder %s13, 0
    %p75 = por %p73, %p74
    %p76 = scmp.ne.s32.totalorder %s68, %s70
    %p77 = scmp.eq.s32.totalorder %s18, 1
    %p78 = por %p76, %p77
    %p79 = scmp.ne.s32.totalorder %s70, %s71
    %p80 = scmp.eq.s32.totalorder %s18, 0
    %p81 = por %p79, %p80
    %p82 = scmp.ne.s32.totalorder %s70, %s71
    %p83 = scmp.eq.s32.totalorder %s19, 1
    %p84 = por %p82, %p83
    %p86 = scmp.ne.s32.totalorder %s71, %s85
    %p87 = scmp.eq.s32.totalorder %s19, 0
    %p88 = por %p86, %p87
    %s90 = sadd.s32 %s89, 1
    %p93 = scmp.eq.s32.totalorder %s13, 1
    %p94 = scmp.ne.s32.totalorder %s89, %s91
    %p95 = scmp.eq.s32.totalorder %s13, 0
    %p96 = por %p94, %p95
    %p97 = scmp.ne.s32.totalorder %s89, %s91
    %p98 = scmp.eq.s32.totalorder %s18, 1
    %p99 = por %p97, %p98
    %p100 = scmp.ne.s32.totalorder %s91, %s92
    %p101 = scmp.eq.s32.totalorder %s18, 0
    %p102 = por %p100, %p101
    %p103 = scmp.ne.s32.totalorder %s91, %s92
    %p104 = scmp.eq.s32.totalorder %s19, 1
    %p105 = por %p103, %p104
    %p107 = scmp.ne.s32.totalorder %s92, %s106
    %p108 = scmp.eq.s32.totalorder %s19, 0
    %p109 = por %p107, %p108
    %s111 = sadd.s32 %s110, 1
    %p114 = scmp.eq.s32.totalorder %s13, 1
    %p115 = scmp.ne.s32.totalorder %s110, %s112
    %p116 = scmp.eq.s32.totalorder %s13, 0
    %p117 = por %p115, %p116
    %p118 = scmp.ne.s32.totalorder %s110, %s112
    %p119 = scmp.eq.s32.totalorder %s18, 1
    %p120 = por %p118, %p119
    %p121 = scmp.ne.s32.totalorder %s112, %s113
    %p122 = scmp.eq.s32.totalorder %s18, 0
    %p123 = por %p121, %p122
    %p124 = scmp.ne.s32.totalorder %s112, %s113
    %p125 = scmp.eq.s32.totalorder %s19, 1
    %p126 = por %p124, %p125
    %p128 = scmp.ne.s32.totalorder %s113, %s127
    %p129 = scmp.eq.s32.totalorder %s19, 0
    %p130 = por %p128, %p129
    %s132 = sadd.s32 %s131, 1
    %p135 = scmp.eq.s32.totalorder %s13, 1
    %p136 = scmp.ne.s32.totalorder %s131, %s133
    %p137 = scmp.eq.s32.totalorder %s13, 0
    %p138 = por %p136, %p137
    %p139 = scmp.ne.s32.totalorder %s131, %s133
    %p140 = scmp.eq.s32.totalorder %s18, 1
    %p141 = por %p139, %p140
    %p142 = scmp.ne.s32.totalorder %s133, %s134
    %p143 = scmp.eq.s32.totalorder %s18, 0
    %p144 = por %p142, %p143
    %p145 = scmp.ne.s32.totalorder %s133, %s134
    %p146 = scmp.eq.s32.totalorder %s19, 1
    %p147 = por %p145, %p146
    %p149 = scmp.ne.s32.totalorder %s134, %s148
    %p150 = scmp.eq.s32.totalorder %s19, 0
    %p151 = por %p149, %p150
    %s153 = sadd.s32 %s152, 1
    %p156 = scmp.eq.s32.totalorder %s13, 1
    %p157 = scmp.ne.s32.totalorder %s152, %s154
    %p158 = scmp.eq.s32.totalorder %s13, 0
    %p159 = por %p157, %p158
    %p160 = scmp.ne.s32.totalorder %s152, %s154
    %p161 = scmp.eq.s32.totalorder %s18, 1
    %p162 = por %p160, %p161
    %p163 = scmp.ne.s32.totalorder %s154, %s155
    %p164 = scmp.eq.s32.totalorder %s18, 0
    %p165 = por %p163, %p164
    %p166 = scmp.ne.s32.totalorder %s154, %s155
    %p167 = scmp.eq.s32.totalorder %s19, 1
    %p168 = por %p166, %p167
    %p170 = scmp.ne.s32.totalorder %s155, %s169
    %p171 = scmp.eq.s32.totalorder %s19, 0
    %p172 = por %p170, %p171
    %s173 = ssub.s32 %s13, %s20
    %p174 = scmp.eq.s32.totalorder %s173, 0
    %s176 = sadd.s32 %s175, 1
    %s177 = scalar_select %p174, %s175, %s176
    %p180 = pneg %p174
    %p181 = scmp.eq.s32.totalorder %s13, 1
    %p182 = por %p180, %p181
    %p183 = scmp.ne.s32.totalorder %s175, %s178
    %p184 = scmp.eq.s32.totalorder %s13, 0
    %p185 = por %p183, %p184
    %p186 = scmp.ne.s32.totalorder %s175, %s178
    %p187 = scmp.eq.s32.totalorder %s18, 1
    %p188 = por %p186, %p187
    %p189 = scmp.ne.s32.totalorder %s178, %s179
    %p190 = scmp.eq.s32.totalorder %s18, 0
    %p191 = por %p189, %p190
    %p192 = scmp.ne.s32.totalorder %s178, %s179
    %p193 = scmp.eq.s32.totalorder %s19, 1
    %p194 = por %p192, %p193
    %p196 = scmp.ne.s32.totalorder %s179, %s195
    %p197 = scmp.eq.s32.totalorder %s19, 0
    %p198 = por %p196, %p197
    %p199 = scmp.le.s32.totalorder 1, %s13
    %p200 = scmp.lt.s32.totalorder %s13, 3
    %p201 = pnand %p199, %p200
    %p202 = pneg %p201
    // Predicated region
    $region9: #{decoder_forward.9} parent=5 // pred_check
      _
    $region10: #{decoder_forward.9} parent=5 // pred_check_branch
      %204 = sbr.rel (%p201) target = $region12
    $region11: #{decoder_forward.9} parent=5 // pred_region
      %s205 = ssub.s32 %s13, 1
      // Predicated region
      $region13: #{decoder_forward.9} parent=11 // pred_check
        %p206 = pneg %p60
      $region14: #{decoder_forward.9} parent=11 // pred_check_branch
        %208 = sbr.rel (%p206) target = $region16
      $region15: #{decoder_forward.9} parent=11 // pred_region
        _
      $region16: #{decoder_forward.9} parent=11 // pred_fallthru
        _
      // Predicated region
      $region17: #{decoder_forward.9} parent=11 // pred_check
        %p209 = pneg %p81
      $region18: #{decoder_forward.9} parent=11 // pred_check_branch
        %211 = sbr.rel (%p209) target = $region20
      $region19: #{decoder_forward.9} parent=11 // pred_region
        _
      $region20: #{decoder_forward.9} parent=11 // pred_fallthru
        _
      // Predicated region
      $region21: #{decoder_forward.9} parent=11 // pred_check
        %p212 = pneg %p102
      $region22: #{decoder_forward.9} parent=11 // pred_check_branch
        %214 = sbr.rel (%p212) target = $region24
      $region23: #{decoder_forward.9} parent=11 // pred_region
        _
      $region24: #{decoder_forward.9} parent=11 // pred_fallthru
        _
      // Predicated region
      $region25: #{decoder_forward.9} parent=11 // pred_check
        %p215 = pneg %p123
      $region26: #{decoder_forward.9} parent=11 // pred_check_branch
        %217 = sbr.rel (%p215) target = $region28
      $region27: #{decoder_forward.9} parent=11 // pred_region
        _
      $region28: #{decoder_forward.9} parent=11 // pred_fallthru
        _
      // Predicated region
      $region29: #{decoder_forward.9} parent=11 // pred_check
        %p218 = pneg %p144
      $region30: #{decoder_forward.9} parent=11 // pred_check_branch
        %220 = sbr.rel (%p218) target = $region32
      $region31: #{decoder_forward.9} parent=11 // pred_region
        _
      $region32: #{decoder_forward.9} parent=11 // pred_fallthru
        _
      // Predicated region
      $region33: #{decoder_forward.9} parent=11 // pred_check
        %p221 = pneg %p165
      $region34: #{decoder_forward.9} parent=11 // pred_check_branch
        %223 = sbr.rel (%p221) target = $region36
      $region35: #{decoder_forward.9} parent=11 // pred_region
        _
      $region36: #{decoder_forward.9} parent=11 // pred_fallthru
        _
    $region12: #{decoder_forward.9} parent=5 // pred_fallthru
      _
    %p224 = scmp.lt.s32.totalorder %s13, 2
    // Predicated region
    $region37: #{decoder_forward.9} parent=5 // pred_check
      %p225 = pneg %p224
    $region38: #{decoder_forward.9} parent=5 // pred_check_branch
      %227 = sbr.rel (%p225) target = $region40
    $region39: #{decoder_forward.9} parent=5 // pred_region
      // Predicated region
      $region41: #{decoder_forward.9} parent=39 // pred_check
        %p228 = pneg %p33
      $region42: #{decoder_forward.9} parent=39 // pred_check_branch
        %230 = sbr.rel (%p228) target = $region44
      $region43: #{decoder_forward.9} parent=39 // pred_region
        %p231 = scmp.lt.s32.totalorder %s13, 1
        %s232 = scalar_select %p231, %s13, 1
        %s233 = smul.addr %s232, 4
        %s234 = scalar_lea.vmem %s0, %s233
      $region44: #{decoder_forward.9} parent=39 // pred_fallthru
        _
    $region40: #{decoder_forward.9} parent=5 // pred_fallthru
      _
    %p235 = scmp.le.s32.totalorder 1, %s13
    %p236 = scmp.lt.s32.totalorder %s13, 3
    %p237 = pnand %p235, %p236
    %p238 = pneg %p237
    // Predicated region
    $region45: #{decoder_forward.9} parent=5 // pred_check
      _
    $region46: #{decoder_forward.9} parent=5 // pred_check_branch
      %240 = sbr.rel (%p237) target = $region48
    $region47: #{decoder_forward.9} parent=5 // pred_region
      %s241 = ssub.s32 %s13, 1
      %p242 = scmp.lt.s32.totalorder %s18, 1
      %s243 = scalar_select %p242, %s18, 1
      %s244 = smul.addr %s243, 4
      %s245 = scalar_lea.vmem %s0, %s244
      %p246 = pneg %p39
      %p247 = pneg %p36
      %p248 = pneg %p60
      %p249 = pneg %p57
      %p250 = pneg %p81
      %p251 = pneg %p78
      %p252 = pneg %p102
      %p253 = pneg %p99
      %p254 = pneg %p123
      %p255 = pneg %p120
      %p256 = pneg %p144
      %p257 = pneg %p141
      %p258 = pneg %p165
      %p259 = pneg %p162
      %p260 = pneg %p191
      %p261 = pneg %p188
      %p262 = scmp.lt.s32.totalorder %s18, 1
      %s263 = scalar_select %p262, %s18, 1
      %s264 = smul.addr %s263, 4
      %s265 = scalar_lea.vmem %s7, %s264
      %p266 = scmp.lt.s32.totalorder %s18, 1
      %s267 = scalar_select %p266, %s18, 1
      %s268 = smul.addr %s267, 4
      %s269 = scalar_lea.vmem %s0, %s268
      %p270 = scmp.lt.s32.totalorder %s18, 1
      %s271 = scalar_select %p270, %s18, 1
      %s272 = smul.addr %s271, 4
      %s273 = scalar_lea.vmem %s7, %s272
      %v275 = vld [vmem:[%s269] sm:$0xf]
      %v276 = vunpack.c.l.bf16 %v275
      %v277 = vld [vmem:[%s1] sm:$0xff]
      %v278 = vld [vmem:[%s1 + $0x8] sm:$0xff]
      %v279 = vld [vmem:[%s1 + $0x10] sm:$0xff]
      %v280 = vld [vmem:[%s1 + $0x18] sm:$0xff]
      %v281 = vld [vmem:[%s1 + $0x20] sm:$0xff]
      %v282 = vld [vmem:[%s1 + $0x28] sm:$0xff]
      %v283 = vld [vmem:[%s1 + $0x30] sm:$0xff]
      %v284 = vld [vmem:[%s1 + $0x38] sm:$0xff]
      %v285 = vld [vmem:[%s1 + $0x40] sm:$0xff]
      %v286 = vld [vmem:[%s1 + $0x48] sm:$0xff]
      %v287 = vld [vmem:[%s1 + $0x50] sm:$0xff]
      %v288 = vld [vmem:[%s1 + $0x58] sm:$0xff]
      %v289 = vld [vmem:[%s1 + $0x60] sm:$0xff]
      %v290 = vld [vmem:[%s1 + $0x68] sm:$0xff]
      %v291 = vld [vmem:[%s1 + $0x70] sm:$0xff]
      %v292 = vld [vmem:[%s1 + $0x78] sm:$0xff]
      %v293 = vld [vmem:[%s1 + $0x80] sm:$0xff]
      %v294 = vld [vmem:[%s1 + $0x88] sm:$0xff]
      %v295 = vld [vmem:[%s1 + $0x90] sm:$0xff]
      %v296 = vld [vmem:[%s1 + $0x98] sm:$0xff]
      %v297 = vld [vmem:[%s1 + $0xa0] sm:$0xff]
      %v298 = vld [vmem:[%s1 + $0xa8] sm:$0xff]
      %v299 = vld [vmem:[%s1 + $0xb0] sm:$0xff]
      %v300 = vld [vmem:[%s1 + $0xb8] sm:$0xff]
      %v301 = vld [vmem:[%s1 + $0xc0] sm:$0xff]
      %v302 = vld [vmem:[%s1 + $0xc8] sm:$0xff]
      %v303 = vld [vmem:[%s1 + $0xd0] sm:$0xff]
      %v304 = vld [vmem:[%s1 + $0xd8] sm:$0xff]
      %v305 = vld [vmem:[%s1 + $0xe0] sm:$0xff]
      %v306 = vld [vmem:[%s1 + $0xe8] sm:$0xff]
      %v307 = vld [vmem:[%s1 + $0xf0] sm:$0xff]
      %v308 = vld [vmem:[%s1 + $0xf8] sm:$0xff]
      %v309 = vld [vmem:[%s2] sm:$0xf]
      %v311 = vlaneseq
      %v312 = vshrl.u32 %v311, 7
      %v313 = vsub.s32 0, %v312
      %v314 = vrot.slane %v309, %v313
      %v315 = vlaneseq
      %v316 = vshrl.u32 %v315, 7
      %v317 = vsub.s32 1, %v316
      %v318 = vrot.slane %v309, %v317
      %v319 = vlaneseq
      %v320 = vshrl.u32 %v319, 7
      %v321 = vsub.s32 2, %v320
      %v322 = vrot.slane %v309, %v321
      %v323 = vlaneseq
      %v324 = vshrl.u32 %v323, 7
      %v325 = vsub.s32 3, %v324
      %v326 = vrot.slane %v309, %v325
      %v363 = vunpack.c.l.b16 %v277
      %v364 = vunpack.c.h.b16 %v277
      %v365 = vunpack.c.l.b16 %v278
      %v366 = vunpack.c.h.b16 %v278
      %v367 = vunpack.c.l.b16 %v279
      %v368 = vunpack.c.h.b16 %v279
      %v369 = vunpack.c.l.b16 %v280
      %v370 = vunpack.c.h.b16 %v280
      %v371 = vunpack.c.l.b16 %v281
      %v372 = vunpack.c.h.b16 %v281
      %v373 = vunpack.c.l.b16 %v282
      %v374 = vunpack.c.h.b16 %v282
      %v375 = vunpack.c.l.b16 %v283
      %v376 = vunpack.c.h.b16 %v283
      %v377 = vunpack.c.l.b16 %v284
      %v378 = vunpack.c.h.b16 %v284
      %v379 = vunpack.c.l.b16 %v285
      %v380 = vunpack.c.h.b16 %v285
      %v381 = vunpack.c.l.b16 %v286
      %v382 = vunpack.c.h.b16 %v286
      %v383 = vunpack.c.l.b16 %v287
      %v384 = vunpack.c.h.b16 %v287
      %v385 = vunpack.c.l.b16 %v288
      %v386 = vunpack.c.h.b16 %v288
      %v387 = vunpack.c.l.b16 %v289
      %v388 = vunpack.c.h.b16 %v289
      %v389 = vunpack.c.l.b16 %v290
      %v390 = vunpack.c.h.b16 %v290
      %v391 = vunpack.c.l.b16 %v291
      %v392 = vunpack.c.h.b16 %v291
      %v393 = vunpack.c.l.b16 %v292
      %v394 = vunpack.c.h.b16 %v292
      %v395 = vunpack.c.l.b16 %v293
      %v396 = vunpack.c.h.b16 %v293
      %v397 = vunpack.c.l.b16 %v294
      %v398 = vunpack.c.h.b16 %v294
      %v399 = vunpack.c.l.b16 %v295
      %v400 = vunpack.c.h.b16 %v295
      %v401 = vunpack.c.l.b16 %v296
      %v402 = vunpack.c.h.b16 %v296
      %v403 = vunpack.c.l.b16 %v297
      %v404 = vunpack.c.h.b16 %v297
      %v405 = vunpack.c.l.b16 %v298
      %v406 = vunpack.c.h.b16 %v298
      %v407 = vunpack.c.l.b16 %v299
      %v408 = vunpack.c.h.b16 %v299
      %v409 = vunpack.c.l.b16 %v300
      %v410 = vunpack.c.h.b16 %v300
      %v411 = vunpack.c.l.b16 %v301
      %v412 = vunpack.c.h.b16 %v301
      %v413 = vunpack.c.l.b16 %v302
      %v414 = vunpack.c.h.b16 %v302
      %v415 = vunpack.c.l.b16 %v303
      %v416 = vunpack.c.h.b16 %v303
      %v417 = vunpack.c.l.b16 %v304
      %v418 = vunpack.c.h.b16 %v304
      %v419 = vunpack.c.l.b16 %v305
      %v420 = vunpack.c.h.b16 %v305
      %v421 = vunpack.c.l.b16 %v306
      %v422 = vunpack.c.h.b16 %v306
      %v423 = vunpack.c.l.b16 %v307
      %v424 = vunpack.c.h.b16 %v307
      %v425 = vunpack.c.l.b16 %v308
      %v426 = vunpack.c.h.b16 %v308
      %v427 = vpack.c.b16 %v367, %v363
      %v428 = vpack.c.b16 %v368, %v364
      %v429 = vpack.c.b16 %v369, %v365
      %v430 = vpack.c.b16 %v370, %v366
      %v431 = vpack.c.b16 %v375, %v371
      %v432 = vpack.c.b16 %v376, %v372
      %v433 = vpack.c.b16 %v377, %v373
      %v434 = vpack.c.b16 %v378, %v374
      %v435 = vpack.c.b16 %v383, %v379
      %v436 = vpack.c.b16 %v384, %v380
      %v437 = vpack.c.b16 %v385, %v381
      %v438 = vpack.c.b16 %v386, %v382
      %v439 = vpack.c.b16 %v391, %v387
      %v440 = vpack.c.b16 %v392, %v388
      %v441 = vpack.c.b16 %v393, %v389
      %v442 = vpack.c.b16 %v394, %v390
      %v443 = vpack.c.b16 %v399, %v395
      %v444 = vpack.c.b16 %v400, %v396
      %v445 = vpack.c.b16 %v401, %v397
      %v446 = vpack.c.b16 %v402, %v398
      %v447 = vpack.c.b16 %v407, %v403
      %v448 = vpack.c.b16 %v408, %v404
      %v449 = vpack.c.b16 %v409, %v405
      %v450 = vpack.c.b16 %v410, %v406
      %v451 = vpack.c.b16 %v415, %v411
      %v452 = vpack.c.b16 %v416, %v412
      %v453 = vpack.c.b16 %v417, %v413
      %v454 = vpack.c.b16 %v418, %v414
      %v455 = vpack.c.b16 %v423, %v419
      %v456 = vpack.c.b16 %v424, %v420
      %v457 = vpack.c.b16 %v425, %v421
      %v458 = vpack.c.b16 %v426, %v422
      %491 = vmatprep.subr.bf16.mxu0 %v456
      %492 = vmatpush1.bf16.msra.mxu0 %v455
      %493 = vmatprep.subr.bf16.mxu0 %v452
      %494 = vmatpush1.bf16.msra.mxu0 %v451
      %495 = vmatprep.subr.bf16.mxu0 %v448
      %496 = vmatpush1.bf16.msra.mxu0 %v447
      %497 = vmatprep.subr.bf16.mxu0 %v444
      %498 = vmatpush1.bf16.msra.mxu0 %v443
      %499 = vmatprep.subr.bf16.mxu0 %v440
      %500 = vmatpush1.bf16.msra.mxu0 %v439
      %501 = vmatprep.subr.bf16.mxu0 %v436
      %502 = vmatpush1.bf16.msra.mxu0 %v435
      %503 = vmatprep.subr.bf16.mxu0 %v432
      %504 = vmatpush1.bf16.msra.mxu0 %v431
      %505 = vmatprep.subr.bf16.mxu0 %v428
      %506 = vmatpush1.bf16.msra.mxu0 %v427
      %507 = vmatprep.subr.bf16.mxu0 0
      %508 = vmatpush2.bf16.msra.mxu0 0
      %509 = vmatprep.subr.bf16.mxu0 0
      %510 = vmatpush2.bf16.msra.mxu0 0
      %511 = vmatprep.subr.bf16.mxu0 0
      %512 = vmatpush2.bf16.msra.mxu0 0
      %513 = vmatprep.subr.bf16.mxu0 0
      %514 = vmatpush2.bf16.msra.mxu0 0
      %515 = vmatprep.subr.bf16.mxu0 0
      %516 = vmatpush2.bf16.msra.mxu0 0
      %517 = vmatprep.subr.bf16.mxu0 0
      %518 = vmatpush2.bf16.msra.mxu0 0
      %519 = vmatprep.subr.bf16.mxu0 0
      %520 = vmatpush2.bf16.msra.mxu0 0
      %521 = vmatprep.subr.bf16.mxu0 0
      %522 = vmatpush2.bf16.msra.mxu0 0
      %523 = vmatprep.mubr.bf16.mxu0 0
      %524 = vmatmul.mubr.bf16.gmra.mxu0 %v275
      %v525 = vpop.f32.mrf.mxu0
      %v526 = vadd.f32 %v314, %v525
      %v527 = vpop.f32.mrf.mxu0
      %v528 = vadd.f32 %v318, %v527
      %v529 = vpop.f32.mrf.mxu0
      %v530 = vpop.f32.mrf.mxu0
      %531 = vdwg.mxu0
      %532 = vmatprep.subr.bf16.mxu0 %v458
      %533 = vmatpush1.bf16.msra.mxu0 %v457
      %534 = vmatprep.subr.bf16.mxu0 %v454
      %535 = vmatpush1.bf16.msra.mxu0 %v453
      %536 = vmatprep.subr.bf16.mxu0 %v450
      %537 = vmatpush1.bf16.msra.mxu0 %v449
      %538 = vmatprep.subr.bf16.mxu0 %v446
      %539 = vmatpush1.bf16.msra.mxu0 %v445
      %540 = vmatprep.subr.bf16.mxu0 %v442
      %541 = vmatpush1.bf16.msra.mxu0 %v441
      %542 = vmatprep.subr.bf16.mxu0 %v438
      %543 = vmatpush1.bf16.msra.mxu0 %v437
      %544 = vmatprep.subr.bf16.mxu0 %v434
      %545 = vmatpush1.bf16.msra.mxu0 %v433
      %546 = vmatprep.subr.bf16.mxu0 %v430
      %547 = vmatpush1.bf16.msra.mxu0 %v429
      %548 = vmatprep.subr.bf16.mxu0 0
      %549 = vmatpush2.bf16.msra.mxu0 0
      %550 = vmatprep.subr.bf16.mxu0 0
      %551 = vmatpush2.bf16.msra.mxu0 0
      %552 = vmatprep.subr.bf16.mxu0 0
      %553 = vmatpush2.bf16.msra.mxu0 0
      %554 = vmatprep.subr.bf16.mxu0 0
      %555 = vmatpush2.bf16.msra.mxu0 0
      %556 = vmatprep.subr.bf16.mxu0 0
      %557 = vmatpush2.bf16.msra.mxu0 0
      %558 = vmatprep.subr.bf16.mxu0 0
      %559 = vmatpush2.bf16.msra.mxu0 0
      %560 = vmatprep.subr.bf16.mxu0 0
      %561 = vmatpush2.bf16.msra.mxu0 0
      %562 = vmatprep.subr.bf16.mxu0 0
      %563 = vmatpush2.bf16.msra.mxu0 0
      %564 = vmatprep.mubr.bf16.mxu0 0
      %565 = vmatmul.mubr.bf16.gmra.mxu0 %v275
      %v566 = vpop.f32.mrf.mxu0
      %v567 = vadd.f32 %v322, %v566
      %v568 = vpop.f32.mrf.mxu0
      %v569 = vadd.f32 %v326, %v568
      %v570 = vpop.f32.mrf.mxu0
      %v571 = vpop.f32.mrf.mxu0
      %572 = vdwg.mxu0
      %v573 = vmax.f32 %v526, 0.0
      %v574 = vmax.f32 %v528, 0.0
      %v575 = vmax.f32 %v567, 0.0
      %v576 = vmax.f32 %v569, 0.0
      %v577 = vpack.c.bf16 %v573, %v573
      %v578 = vpack.c.bf16 %v574, %v574
      %v579 = vpack.c.bf16 %v575, %v575
      %v580 = vpack.c.bf16 %v576, %v576
      %v581 = vld [vmem:[%s3] sm:$0xf]
      %v582 = vld [vmem:[%s3 + $0x4] sm:$0xf]
      %v583 = vld [vmem:[%s3 + $0x8] sm:$0xf]
      %v584 = vld [vmem:[%s3 + $0xc] sm:$0xf]
      %v585 = vld [vmem:[%s3 + $0x10] sm:$0xf]
      %v586 = vld [vmem:[%s3 + $0x14] sm:$0xf]
      %v587 = vld [vmem:[%s3 + $0x18] sm:$0xf]
      %v588 = vld [vmem:[%s3 + $0x1c] sm:$0xf]
      %v589 = vld [vmem:[%s3 + $0x20] sm:$0xf]
      %v590 = vld [vmem:[%s3 + $0x24] sm:$0xf]
      %v591 = vld [vmem:[%s3 + $0x28] sm:$0xf]
      %v592 = vld [vmem:[%s3 + $0x2c] sm:$0xf]
      %v593 = vld [vmem:[%s3 + $0x30] sm:$0xf]
      %v594 = vld [vmem:[%s3 + $0x34] sm:$0xf]
      %v595 = vld [vmem:[%s3 + $0x38] sm:$0xf]
      %v596 = vld [vmem:[%s3 + $0x3c] sm:$0xf]
      %v597 = vld [vmem:[%s3 + $0x40] sm:$0xf]
      %v598 = vld [vmem:[%s3 + $0x44] sm:$0xf]
      %v599 = vld [vmem:[%s3 + $0x48] sm:$0xf]
      %v600 = vld [vmem:[%s3 + $0x4c] sm:$0xf]
      %v601 = vld [vmem:[%s3 + $0x50] sm:$0xf]
      %v602 = vld [vmem:[%s3 + $0x54] sm:$0xf]
      %v603 = vld [vmem:[%s3 + $0x58] sm:$0xf]
      %v604 = vld [vmem:[%s3 + $0x5c] sm:$0xf]
      %v605 = vld [vmem:[%s3 + $0x60] sm:$0xf]
      %v606 = vld [vmem:[%s3 + $0x64] sm:$0xf]
      %v607 = vld [vmem:[%s3 + $0x68] sm:$0xf]
      %v608 = vld [vmem:[%s3 + $0x6c] sm:$0xf]
      %v609 = vld [vmem:[%s3 + $0x70] sm:$0xf]
      %v610 = vld [vmem:[%s3 + $0x74] sm:$0xf]
      %v611 = vld [vmem:[%s3 + $0x78] sm:$0xf]
      %v612 = vld [vmem:[%s3 + $0x7c] sm:$0xf]
      %v613 = vld [vmem:[%s3 + $0x80] sm:$0xf]
      %v614 = vld [vmem:[%s3 + $0x84] sm:$0xf]
      %v615 = vld [vmem:[%s3 + $0x88] sm:$0xf]
      %v616 = vld [vmem:[%s3 + $0x8c] sm:$0xf]
      %v617 = vld [vmem:[%s3 + $0x90] sm:$0xf]
      %v618 = vld [vmem:[%s3 + $0x94] sm:$0xf]
      %v619 = vld [vmem:[%s3 + $0x98] sm:$0xf]
      %v620 = vld [vmem:[%s3 + $0x9c] sm:$0xf]
      %v621 = vld [vmem:[%s3 + $0xa0] sm:$0xf]
      %v622 = vld [vmem:[%s3 + $0xa4] sm:$0xf]
      %v623 = vld [vmem:[%s3 + $0xa8] sm:$0xf]
      %v624 = vld [vmem:[%s3 + $0xac] sm:$0xf]
      %v625 = vld [vmem:[%s3 + $0xb0] sm:$0xf]
      %v626 = vld [vmem:[%s3 + $0xb4] sm:$0xf]
      %v627 = vld [vmem:[%s3 + $0xb8] sm:$0xf]
      %v628 = vld [vmem:[%s3 + $0xbc] sm:$0xf]
      %v629 = vld [vmem:[%s3 + $0xc0] sm:$0xf]
      %v630 = vld [vmem:[%s3 + $0xc4] sm:$0xf]
      %v631 = vld [vmem:[%s3 + $0xc8] sm:$0xf]
      %v632 = vld [vmem:[%s3 + $0xcc] sm:$0xf]
      %v633 = vld [vmem:[%s3 + $0xd0] sm:$0xf]
      %v634 = vld [vmem:[%s3 + $0xd4] sm:$0xf]
      %v635 = vld [vmem:[%s3 + $0xd8] sm:$0xf]
      %v636 = vld [vmem:[%s3 + $0xdc] sm:$0xf]
      %v637 = vld [vmem:[%s3 + $0xe0] sm:$0xf]
      %v638 = vld [vmem:[%s3 + $0xe4] sm:$0xf]
      %v639 = vld [vmem:[%s3 + $0xe8] sm:$0xf]
      %v640 = vld [vmem:[%s3 + $0xec] sm:$0xf]
      %v641 = vld [vmem:[%s3 + $0xf0] sm:$0xf]
      %v642 = vld [vmem:[%s3 + $0xf4] sm:$0xf]
      %v643 = vld [vmem:[%s3 + $0xf8] sm:$0xf]
      %v644 = vld [vmem:[%s3 + $0xfc] sm:$0xf]
      %v645 = vld [vmem:[%s4] sm:$0x1]
      %v647 = vlaneseq
      %v648 = vshrl.u32 %v647, 7
      %v649 = vsub.s32 0, %v648
      %v650 = vrot.slane %v645, %v649
      %v716 = vunpack.c.l.b16 %v581
      %v717 = vunpack.c.l.b16 %v582
      %v718 = vunpack.c.l.b16 %v583
      %v719 = vunpack.c.l.b16 %v584
      %v720 = vunpack.c.l.b16 %v585
      %v721 = vunpack.c.l.b16 %v586
      %v722 = vunpack.c.l.b16 %v587
      %v723 = vunpack.c.l.b16 %v588
      %v724 = vunpack.c.l.b16 %v589
      %v725 = vunpack.c.l.b16 %v590
      %v726 = vunpack.c.l.b16 %v591
      %v727 = vunpack.c.l.b16 %v592
      %v728 = vunpack.c.l.b16 %v593
      %v729 = vunpack.c.l.b16 %v594
      %v730 = vunpack.c.l.b16 %v595
      %v731 = vunpack.c.l.b16 %v596
      %v732 = vunpack.c.l.b16 %v597
      %v733 = vunpack.c.l.b16 %v598
      %v734 = vunpack.c.l.b16 %v599
      %v735 = vunpack.c.l.b16 %v600
      %v736 = vunpack.c.l.b16 %v601
      %v737 = vunpack.c.l.b16 %v602
      %v738 = vunpack.c.l.b16 %v603
      %v739 = vunpack.c.l.b16 %v604
      %v740 = vunpack.c.l.b16 %v605
      %v741 = vunpack.c.l.b16 %v606
      %v742 = vunpack.c.l.b16 %v607
      %v743 = vunpack.c.l.b16 %v608
      %v744 = vunpack.c.l.b16 %v609
      %v745 = vunpack.c.l.b16 %v610
      %v746 = vunpack.c.l.b16 %v611
      %v747 = vunpack.c.l.b16 %v612
      %v748 = vunpack.c.l.b16 %v613
      %v749 = vunpack.c.l.b16 %v614
      %v750 = vunpack.c.l.b16 %v615
      %v751 = vunpack.c.l.b16 %v616
      %v752 = vunpack.c.l.b16 %v617
      %v753 = vunpack.c.l.b16 %v618
      %v754 = vunpack.c.l.b16 %v619
      %v755 = vunpack.c.l.b16 %v620
      %v756 = vunpack.c.l.b16 %v621
      %v757 = vunpack.c.l.b16 %v622
      %v758 = vunpack.c.l.b16 %v623
      %v759 = vunpack.c.l.b16 %v624
      %v760 = vunpack.c.l.b16 %v625
      %v761 = vunpack.c.l.b16 %v626
      %v762 = vunpack.c.l.b16 %v627
      %v763 = vunpack.c.l.b16 %v628
      %v764 = vunpack.c.l.b16 %v629
      %v765 = vunpack.c.l.b16 %v630
      %v766 = vunpack.c.l.b16 %v631
      %v767 = vunpack.c.l.b16 %v632
      %v768 = vunpack.c.l.b16 %v633
      %v769 = vunpack.c.l.b16 %v634
      %v770 = vunpack.c.l.b16 %v635
      %v771 = vunpack.c.l.b16 %v636
      %v772 = vunpack.c.l.b16 %v637
      %v773 = vunpack.c.l.b16 %v638
      %v774 = vunpack.c.l.b16 %v639
      %v775 = vunpack.c.l.b16 %v640
      %v776 = vunpack.c.l.b16 %v641
      %v777 = vunpack.c.l.b16 %v642
      %v778 = vunpack.c.l.b16 %v643
      %v779 = vunpack.c.l.b16 %v644
      %v780 = vpack.c.b16 %v717, %v716
      %v781 = vpack.c.b16 %v719, %v718
      %v782 = vpack.c.b16 %v721, %v720
      %v783 = vpack.c.b16 %v723, %v722
      %v784 = vpack.c.b16 %v725, %v724
      %v785 = vpack.c.b16 %v727, %v726
      %v786 = vpack.c.b16 %v729, %v728
      %v787 = vpack.c.b16 %v731, %v730
      %v788 = vpack.c.b16 %v733, %v732
      %v789 = vpack.c.b16 %v735, %v734
      %v790 = vpack.c.b16 %v737, %v736
      %v791 = vpack.c.b16 %v739, %v738
      %v792 = vpack.c.b16 %v741, %v740
      %v793 = vpack.c.b16 %v743, %v742
      %v794 = vpack.c.b16 %v745, %v744
      %v795 = vpack.c.b16 %v747, %v746
      %v796 = vpack.c.b16 %v749, %v748
      %v797 = vpack.c.b16 %v751, %v750
      %v798 = vpack.c.b16 %v753, %v752
      %v799 = vpack.c.b16 %v755, %v754
      %v800 = vpack.c.b16 %v757, %v756
      %v801 = vpack.c.b16 %v759, %v758
      %v802 = vpack.c.b16 %v761, %v760
      %v803 = vpack.c.b16 %v763, %v762
      %v804 = vpack.c.b16 %v765, %v764
      %v805 = vpack.c.b16 %v767, %v766
      %v806 = vpack.c.b16 %v769, %v768
      %v807 = vpack.c.b16 %v771, %v770
      %v808 = vpack.c.b16 %v773, %v772
      %v809 = vpack.c.b16 %v775, %v774
      %v810 = vpack.c.b16 %v777, %v776
      %v811 = vpack.c.b16 %v779, %v778
      %844 = vmatprep.subr.bf16.mxu0 0
      %845 = vmatpush1.bf16.msra.mxu0 %v787
      %846 = vmatprep.subr.bf16.mxu0 0
      %847 = vmatpush1.bf16.msra.mxu0 %v786
      %848 = vmatprep.subr.bf16.mxu0 0
      %849 = vmatpush1.bf16.msra.mxu0 %v785
      %850 = vmatprep.subr.bf16.mxu0 0
      %851 = vmatpush1.bf16.msra.mxu0 %v784
      %852 = vmatprep.subr.bf16.mxu0 0
      %853 = vmatpush1.bf16.msra.mxu0 %v783
      %854 = vmatprep.subr.bf16.mxu0 0
      %855 = vmatpush1.bf16.msra.mxu0 %v782
      %856 = vmatprep.subr.bf16.mxu0 0
      %857 = vmatpush1.bf16.msra.mxu0 %v781
      %858 = vmatprep.subr.bf16.mxu0 0
      %859 = vmatpush1.bf16.msra.mxu0 %v780
      %860 = vmatprep.subr.bf16.mxu0 0
      %861 = vmatpush2.bf16.msra.mxu0 %v795
      %862 = vmatprep.subr.bf16.mxu0 0
      %863 = vmatpush2.bf16.msra.mxu0 %v794
      %864 = vmatprep.subr.bf16.mxu0 0
      %865 = vmatpush2.bf16.msra.mxu0 %v793
      %866 = vmatprep.subr.bf16.mxu0 0
      %867 = vmatpush2.bf16.msra.mxu0 %v792
      %868 = vmatprep.subr.bf16.mxu0 0
      %869 = vmatpush2.bf16.msra.mxu0 %v791
      %870 = vmatprep.subr.bf16.mxu0 0
      %871 = vmatpush2.bf16.msra.mxu0 %v790
      %872 = vmatprep.subr.bf16.mxu0 0
      %873 = vmatpush2.bf16.msra.mxu0 %v789
      %874 = vmatprep.subr.bf16.mxu0 0
      %875 = vmatpush2.bf16.msra.mxu0 %v788
      %876 = vmatprep.mubr.bf16.mxu0 %v578
      %877 = vmatmul.mubr.bf16.gmra.mxu0 %v577
      %v878 = vpop.f32.mrf.mxu0
      %v879 = vadd.f32 %v650, %v878
      %v880 = vpop.f32.mrf.mxu0
      %v881 = vpop.f32.mrf.mxu0
      %v882 = vpop.f32.mrf.mxu0
      %883 = vdwg.mxu0
      %884 = vmatprep.subr.bf16.mxu0 0
      %885 = vmatpush1.bf16.msra.mxu0 %v803
      %886 = vmatprep.subr.bf16.mxu0 0
      %887 = vmatpush1.bf16.msra.mxu0 %v802
      %888 = vmatprep.subr.bf16.mxu0 0
      %889 = vmatpush1.bf16.msra.mxu0 %v801
      %890 = vmatprep.subr.bf16.mxu0 0
      %891 = vmatpush1.bf16.msra.mxu0 %v800
      %892 = vmatprep.subr.bf16.mxu0 0
      %893 = vmatpush1.bf16.msra.mxu0 %v799
      %894 = vmatprep.subr.bf16.mxu0 0
      %895 = vmatpush1.bf16.msra.mxu0 %v798
      %896 = vmatprep.subr.bf16.mxu0 0
      %897 = vmatpush1.bf16.msra.mxu0 %v797
      %898 = vmatprep.subr.bf16.mxu0 0
      %899 = vmatpush1.bf16.msra.mxu0 %v796
      %900 = vmatprep.subr.bf16.mxu0 0
      %901 = vmatpush2.bf16.msra.mxu0 %v811
      %902 = vmatprep.subr.bf16.mxu0 0
      %903 = vmatpush2.bf16.msra.mxu0 %v810
      %904 = vmatprep.subr.bf16.mxu0 0
      %905 = vmatpush2.bf16.msra.mxu0 %v809
      %906 = vmatprep.subr.bf16.mxu0 0
      %907 = vmatpush2.bf16.msra.mxu0 %v808
      %908 = vmatprep.subr.bf16.mxu0 0
      %909 = vmatpush2.bf16.msra.mxu0 %v807
      %910 = vmatprep.subr.bf16.mxu0 0
      %911 = vmatpush2.bf16.msra.mxu0 %v806
      %912 = vmatprep.subr.bf16.mxu0 0
      %913 = vmatpush2.bf16.msra.mxu0 %v805
      %914 = vmatprep.subr.bf16.mxu0 0
      %915 = vmatpush2.bf16.msra.mxu0 %v804
      %916 = vmatprep.mubr.bf16.mxu0 %v580
      %917 = vmatmul.mubr.bf16.gmra.mxu0 %v579
      %v918 = vpop.f32.mrf.mxu0
      %v919 = vadd.f32 %v879, %v918
      %v920 = vpop.f32.mrf.mxu0
      %v921 = vpop.f32.mrf.mxu0
      %v922 = vpop.f32.mrf.mxu0
      %923 = vdwg.mxu0
      %v924 = vadd.f32 %v276, %v919
      %925 = vadd.xlane.f32.xlu0 %v924
      %v926 = vpop.xlane.xlu0 %925
      %v927 = vrcp.pop 128.0
      %v928 = vmul.f32 %v926, %v927
      %v929 = vsub.f32 %v924, %v928
      %v930 = vmul.f32 %v929, %v929
      %931 = vadd.xlane.f32.xlu0 %v930
      %v932 = vpop.xlane.xlu0 %931
      %v933 = vmul.f32 %v932, %v927
      %v934 = vadd.f32 %v933, 1e-05
      %v935 = vrsqrt.pop %v934
      %v936 = vmul.f32 %v929, %v935
      %v937 = vld [vmem:[%s5] sm:$0x1]
      %v939 = vlaneseq
      %v940 = vshrl.u32 %v939, 7
      %v941 = vsub.s32 0, %v940
      %v942 = vrot.slane %v937, %v941
      %v944 = vmul.f32 %v936, %v942
      %v945 = vld [vmem:[%s6] sm:$0x1]
      %v947 = vlaneseq
      %v948 = vshrl.u32 %v947, 7
      %v949 = vsub.s32 0, %v948
      %v950 = vrot.slane %v945, %v949
      %v952 = vadd.f32 %v944, %v950
      %v953 = vpack.c.bf16 %v952, %v952
      %954 = vst [vmem:[%s273] sm:$0xf] %v953
      %p955 = scmp.lt.s32.totalorder %s18, 1
      %s956 = scalar_select %p955, %s18, 1
      %s957 = smul.addr %s956, 4
      %s958 = scalar_lea.vmem %s7, %s957
      // Predicated region
      $region49: #{decoder_forward.9} parent=47 // pred_check
        %p959 = pneg %p188
      $region50: #{decoder_forward.9} parent=47 // pred_check_branch
        %961 = sbr.rel (%p959) target = $region52
      $region51: #{decoder_forward.9} parent=47 // pred_region
        _
      $region52: #{decoder_forward.9} parent=47 // pred_fallthru
        _
    $region48: #{decoder_forward.9} parent=5 // pred_fallthru
      _
    %p962 = scmp.le.s32.totalorder 2, %s13
    // Predicated region
    $region53: #{decoder_forward.9} parent=5 // pred_check
      %p963 = pneg %p962
    $region54: #{decoder_forward.9} parent=5 // pred_check_branch
      %965 = sbr.rel (%p963) target = $region56
    $region55: #{decoder_forward.9} parent=5 // pred_region
      %s966 = ssub.s32 %s13, 2
      // Predicated region
      $region57: #{decoder_forward.9} parent=55 // pred_check
        %p967 = pneg %p194
      $region58: #{decoder_forward.9} parent=55 // pred_check_branch
        %969 = sbr.rel (%p967) target = $region60
      $region59: #{decoder_forward.9} parent=55 // pred_region
        %p970 = scmp.lt.s32.totalorder %s19, 1
        %s971 = scalar_select %p970, %s19, 1
        %s972 = smul.addr %s971, 4
        %s973 = scalar_lea.vmem %s7, %s972
      $region60: #{decoder_forward.9} parent=55 // pred_fallthru
        _
    $region56: #{decoder_forward.9} parent=5 // pred_fallthru
      _
  $region6: #{decoder_forward.9} parent=0 // loop_footer
    %s17 = sadd.s32 1, %s13
  $region7: #{decoder_forward.9} parent=0 // loop_footer_branch
    %12 = sbr.rel target = $region3
  $region8: #{decoder_forward.9} parent=0 // loop_exit
    _

// kernel: decoder_forward.7
$region0: #{decoder_forward.7}
  #allocation0 [shape = 'u32[]', space=smem, size = 0x4, offset = 0x4, fixed_abs, tag = 'smem constant byte address 0x4 - core index']
  #allocation1 [shape = 'u32[144,128]{1,0:T(1,128)}', space=vmem, size = 0x12000, scoped, tag = 'internal scratch']
  %s0 = inlined_call_operand.vmem [shape: bf16[2,8,128], index: 0, kind: input, shape index: {}]
  %s1 = inlined_call_operand.vmem [shape: bf16[128,384], index: 1, kind: input, shape index: {}]
  %s2 = inlined_call_operand.vmem [shape: f32[1,384], index: 2, kind: input, shape index: {}]
  %s3 = inlined_call_operand.hbm [shape: bf16[128,128], index: 3, kind: input, shape index: {}]
  %s4 = inlined_call_operand.vmem [shape: f32[1,128], index: 4, kind: input, shape index: {}]
  %s5 = inlined_call_operand.vmem [shape: f32[1,128], index: 5, kind: input, shape index: {}]
  %s6 = inlined_call_operand.vmem [shape: f32[1,128], index: 6, kind: input, shape index: {}]
  %s7 = inlined_call_operand.vmem [shape: bf16[2,8,128], index: 7, kind: output, shape index: {}]
  %s8 = sld [smem:[#allocation0]]
  $region65: #{decoder_forward.7} parent=0
    _
  %s10 = ssub.s32 1, %s8
  %s11 = scalar_select 0, %s10, %s8
  $region1: #{decoder_forward.7} parent=0
    #allocation2 [shape = 'u8[32768]{0}', space=vmem, size = 0x8000, scoped, tag = 'input window, operand 3, single buffered']
    #allocation3 [shape = 's32[2]{0}', space=sflag, size = 0x8, scoped, tag = 'scoped memory for decoder_forward.7']
    %12 = vsyncpa [#allocation3], 0
    loop: start=0, step=1, limit=4
    $region2: #{decoder_forward.7} parent=1 // loop_pre_header
      _
    $region3: #{decoder_forward.7} parent=1 // loop_header
      %s14 = sphi 0, %s18
      %p15 = scmp.ge.s32.totalorder %s14, 4
      %s24 = sphi 0, %s26
      %s27 = sphi 0, %s24
      %s28 = sphi 0, %s27
      %s44 = sphi 0, %s28
      %s48 = sphi 0, %s48
      %s50 = sphi 0, %s48
      %s51 = sphi 0, %s50
      %s65 = sphi 0, %s51
      %s69 = sphi 0, %s69
      %s71 = sphi 0, %s69
      %s72 = sphi 0, %s71
      %s86 = sphi 0, %s72
      %s90 = sphi 0, %s90
      %s92 = sphi 0, %s90
      %s93 = sphi 0, %s92
      %s107 = sphi 0, %s93
      %s111 = sphi 0, %s111
      %s113 = sphi 0, %s111
      %s114 = sphi 0, %s113
      %s128 = sphi 0, %s114
      %s132 = sphi 0, %s132
      %s134 = sphi 0, %s132
      %s135 = sphi 0, %s134
      %s149 = sphi 0, %s135
      %s153 = sphi 0, %s153
      %s155 = sphi 0, %s153
      %s156 = sphi 0, %s155
      %s170 = sphi 0, %s156
      %s176 = sphi 0, %s178
      %s179 = sphi 0, %s176
      %s180 = sphi 0, %s179
      %s196 = sphi 0, %s180
    $region4: #{decoder_forward.7} parent=1 // loop_header_branch
      %17 = sbr.rel (%p15) target = $region8
    $region5: #{decoder_forward.7} parent=1 // loop_body
      %s19 = ssub.s32 %s14, 1
      %s20 = ssub.s32 %s14, 2
      %s21 = sadd.s32 %s14, 1
      %s22 = ssub.s32 %s14, %s21
      %p23 = scmp.eq.s32.totalorder %s22, 0
      %s25 = sadd.s32 %s24, 1
      %s26 = scalar_select %p23, %s24, %s25
      %p29 = pneg %p23
      %p30 = scmp.eq.s32.totalorder %s14, 1
      %p31 = por %p29, %p30
      %p32 = scmp.ne.s32.totalorder %s24, %s27
      %p33 = scmp.eq.s32.totalorder %s14, 0
      %p34 = por %p32, %p33
      %p35 = scmp.ne.s32.totalorder %s24, %s27
      %p36 = scmp.eq.s32.totalorder %s19, 1
      %p37 = por %p35, %p36
      %p38 = scmp.ne.s32.totalorder %s27, %s28
      %p39 = scmp.eq.s32.totalorder %s19, 0
      %p40 = por %p38, %p39
      %p41 = scmp.ne.s32.totalorder %s27, %s28
      %p42 = scmp.eq.s32.totalorder %s20, 1
      %p43 = por %p41, %p42
      %p45 = scmp.ne.s32.totalorder %s28, %s44
      %p46 = scmp.eq.s32.totalorder %s20, 0
      %p47 = por %p45, %p46
      %s49 = sadd.s32 %s48, 1
      %p52 = scmp.eq.s32.totalorder %s14, 1
      %p53 = scmp.ne.s32.totalorder %s48, %s50
      %p54 = scmp.eq.s32.totalorder %s14, 0
      %p55 = por %p53, %p54
      %p56 = scmp.ne.s32.totalorder %s48, %s50
      %p57 = scmp.eq.s32.totalorder %s19, 1
      %p58 = por %p56, %p57
      %p59 = scmp.ne.s32.totalorder %s50, %s51
      %p60 = scmp.eq.s32.totalorder %s19, 0
      %p61 = por %p59, %p60
      %p62 = scmp.ne.s32.totalorder %s50, %s51
      %p63 = scmp.eq.s32.totalorder %s20, 1
      %p64 = por %p62, %p63
      %p66 = scmp.ne.s32.totalorder %s51, %s65
      %p67 = scmp.eq.s32.totalorder %s20, 0
      %p68 = por %p66, %p67
      %s70 = sadd.s32 %s69, 1
      %p73 = scmp.eq.s32.totalorder %s14, 1
      %p74 = scmp.ne.s32.totalorder %s69, %s71
      %p75 = scmp.eq.s32.totalorder %s14, 0
      %p76 = por %p74, %p75
      %p77 = scmp.ne.s32.totalorder %s69, %s71
      %p78 = scmp.eq.s32.totalorder %s19, 1
      %p79 = por %p77, %p78
      %p80 = scmp.ne.s32.totalorder %s71, %s72
      %p81 = scmp.eq.s32.totalorder %s19, 0
      %p82 = por %p80, %p81
      %p83 = scmp.ne.s32.totalorder %s71, %s72
      %p84 = scmp.eq.s32.totalorder %s20, 1
      %p85 = por %p83, %p84
      %p87 = scmp.ne.s32.totalorder %s72, %s86
      %p88 = scmp.eq.s32.totalorder %s20, 0
      %p89 = por %p87, %p88
      %s91 = sadd.s32 %s90, 1
      %p94 = scmp.eq.s32.totalorder %s14, 1
      %p95 = scmp.ne.s32.totalorder %s90, %s92
      %p96 = scmp.eq.s32.totalorder %s14, 0
      %p97 = por %p95, %p96
      %p98 = scmp.ne.s32.totalorder %s90, %s92
      %p99 = scmp.eq.s32.totalorder %s19, 1
      %p100 = por %p98, %p99
      %p101 = scmp.ne.s32.totalorder %s92, %s93
      %p102 = scmp.eq.s32.totalorder %s19, 0
      %p103 = por %p101, %p102
      %p104 = scmp.ne.s32.totalorder %s92, %s93
      %p105 = scmp.eq.s32.totalorder %s20, 1
      %p106 = por %p104, %p105
      %p108 = scmp.ne.s32.totalorder %s93, %s107
      %p109 = scmp.eq.s32.totalorder %s20, 0
      %p110 = por %p108, %p109
      %s112 = sadd.s32 %s111, 1
      %p115 = scmp.eq.s32.totalorder %s14, 1
      %p116 = scmp.ne.s32.totalorder %s111, %s113
      %p117 = scmp.eq.s32.totalorder %s14, 0
      %p118 = por %p116, %p117
      %p119 = scmp.ne.s32.totalorder %s111, %s113
      %p120 = scmp.eq.s32.totalorder %s19, 1
      %p121 = por %p119, %p120
      %p122 = scmp.ne.s32.totalorder %s113, %s114
      %p123 = scmp.eq.s32.totalorder %s19, 0
      %p124 = por %p122, %p123
      %p125 = scmp.ne.s32.totalorder %s113, %s114
      %p126 = scmp.eq.s32.totalorder %s20, 1
      %p127 = por %p125, %p126
      %p129 = scmp.ne.s32.totalorder %s114, %s128
      %p130 = scmp.eq.s32.totalorder %s20, 0
      %p131 = por %p129, %p130
      %s133 = sadd.s32 %s132, 1
      %p136 = scmp.eq.s32.totalorder %s14, 1
      %p137 = scmp.ne.s32.totalorder %s132, %s134
      %p138 = scmp.eq.s32.totalorder %s14, 0
      %p139 = por %p137, %p138
      %p140 = scmp.ne.s32.totalorder %s132, %s134
      %p141 = scmp.eq.s32.totalorder %s19, 1
      %p142 = por %p140, %p141
      %p143 = scmp.ne.s32.totalorder %s134, %s135
      %p144 = scmp.eq.s32.totalorder %s19, 0
      %p145 = por %p143, %p144
      %p146 = scmp.ne.s32.totalorder %s134, %s135
      %p147 = scmp.eq.s32.totalorder %s20, 1
      %p148 = por %p146, %p147
      %p150 = scmp.ne.s32.totalorder %s135, %s149
      %p151 = scmp.eq.s32.totalorder %s20, 0
      %p152 = por %p150, %p151
      %s154 = sadd.s32 %s153, 1
      %p157 = scmp.eq.s32.totalorder %s14, 1
      %p158 = scmp.ne.s32.totalorder %s153, %s155
      %p159 = scmp.eq.s32.totalorder %s14, 0
      %p160 = por %p158, %p159
      %p161 = scmp.ne.s32.totalorder %s153, %s155
      %p162 = scmp.eq.s32.totalorder %s19, 1
      %p163 = por %p161, %p162
      %p164 = scmp.ne.s32.totalorder %s155, %s156
      %p165 = scmp.eq.s32.totalorder %s19, 0
      %p166 = por %p164, %p165
      %p167 = scmp.ne.s32.totalorder %s155, %s156
      %p168 = scmp.eq.s32.totalorder %s20, 1
      %p169 = por %p167, %p168
      %p171 = scmp.ne.s32.totalorder %s156, %s170
      %p172 = scmp.eq.s32.totalorder %s20, 0
      %p173 = por %p171, %p172
      %s174 = ssub.s32 %s14, %s21
      %p175 = scmp.eq.s32.totalorder %s174, 0
      %s177 = sadd.s32 %s176, 1
      %s178 = scalar_select %p175, %s176, %s177
      %p181 = pneg %p175
      %p182 = scmp.eq.s32.totalorder %s14, 1
      %p183 = por %p181, %p182
      %p184 = scmp.ne.s32.totalorder %s176, %s179
      %p185 = scmp.eq.s32.totalorder %s14, 0
      %p186 = por %p184, %p185
      %p187 = scmp.ne.s32.totalorder %s176, %s179
      %p188 = scmp.eq.s32.totalorder %s19, 1
      %p189 = por %p187, %p188
      %p190 = scmp.ne.s32.totalorder %s179, %s180
      %p191 = scmp.eq.s32.totalorder %s19, 0
      %p192 = por %p190, %p191
      %p193 = scmp.ne.s32.totalorder %s179, %s180
      %p194 = scmp.eq.s32.totalorder %s20, 1
      %p195 = por %p193, %p194
      %p197 = scmp.ne.s32.totalorder %s180, %s196
      %p198 = scmp.eq.s32.totalorder %s20, 0
      %p199 = por %p197, %p198
      %p200 = scmp.le.s32.totalorder 1, %s14
      %p201 = scmp.lt.s32.totalorder %s14, 3
      %p202 = pnand %p200, %p201
      %p203 = pneg %p202
      // Predicated region
      $region9: #{decoder_forward.7} parent=5 // pred_check
        _
      $region10: #{decoder_forward.7} parent=5 // pred_check_branch
        %205 = sbr.rel (%p202) target = $region12
      $region11: #{decoder_forward.7} parent=5 // pred_region
        %s206 = ssub.s32 %s14, 1
        // Predicated region
        $region13: #{decoder_forward.7} parent=11 // pred_check
          %p207 = pneg %p61
        $region14: #{decoder_forward.7} parent=11 // pred_check_branch
          %209 = sbr.rel (%p207) target = $region16
        $region15: #{decoder_forward.7} parent=11 // pred_region
          _
        $region16: #{decoder_forward.7} parent=11 // pred_fallthru
          _
        // Predicated region
        $region17: #{decoder_forward.7} parent=11 // pred_check
          %p210 = pneg %p82
        $region18: #{decoder_forward.7} parent=11 // pred_check_branch
          %212 = sbr.rel (%p210) target = $region20
        $region19: #{decoder_forward.7} parent=11 // pred_region
          _
        $region20: #{decoder_forward.7} parent=11 // pred_fallthru
          _
        // Predicated region
        $region21: #{decoder_forward.7} parent=11 // pred_check
          %p213 = pneg %p103
        $region22: #{decoder_forward.7} parent=11 // pred_check_branch
          %215 = sbr.rel (%p213) target = $region24
        $region23: #{decoder_forward.7} parent=11 // pred_region
          %s217 = ssub.s32 1024, 1024
          %218 = vsyncadd [#allocation3], %s217
          %s219 = sshll.u32 [#allocation2], 4
          %s220 = int_to_ptr.vmem [resolvable:$true] %s219
          %225 = dma.hbm_to_vmem [thread:$0]  %s3, 1024, %s220, [#allocation3], 64, 64, 4
        $region24: #{decoder_forward.7} parent=11 // pred_fallthru
          _
        // Predicated region
        $region25: #{decoder_forward.7} parent=11 // pred_check
          %p226 = pneg %p124
        $region26: #{decoder_forward.7} parent=11 // pred_check_branch
          %228 = sbr.rel (%p226) target = $region28
        $region27: #{decoder_forward.7} parent=11 // pred_region
          _
        $region28: #{decoder_forward.7} parent=11 // pred_fallthru
          _
        // Predicated region
        $region29: #{decoder_forward.7} parent=11 // pred_check
          %p229 = pneg %p145
        $region30: #{decoder_forward.7} parent=11 // pred_check_branch
          %231 = sbr.rel (%p229) target = $region32
        $region31: #{decoder_forward.7} parent=11 // pred_region
          _
        $region32: #{decoder_forward.7} parent=11 // pred_fallthru
          _
        // Predicated region
        $region33: #{decoder_forward.7} parent=11 // pred_check
          %p232 = pneg %p166
        $region34: #{decoder_forward.7} parent=11 // pred_check_branch
          %234 = sbr.rel (%p232) target = $region36
        $region35: #{decoder_forward.7} parent=11 // pred_region
          _
        $region36: #{decoder_forward.7} parent=11 // pred_fallthru
          _
      $region12: #{decoder_forward.7} parent=5 // pred_fallthru
        _
      %p235 = scmp.lt.s32.totalorder %s14, 2
      // Predicated region
      $region37: #{decoder_forward.7} parent=5 // pred_check
        %p236 = pneg %p235
      $region38: #{decoder_forward.7} parent=5 // pred_check_branch
        %238 = sbr.rel (%p236) target = $region40
      $region39: #{decoder_forward.7} parent=5 // pred_region
        // Predicated region
        $region41: #{decoder_forward.7} parent=39 // pred_check
          %p239 = pneg %p34
        $region42: #{decoder_forward.7} parent=39 // pred_check_branch
          %241 = sbr.rel (%p239) target = $region44
        $region43: #{decoder_forward.7} parent=39 // pred_region
          %p242 = scmp.lt.s32.totalorder %s14, 1
          %s243 = scalar_select %p242, %s14, 1
          %s244 = smul.addr %s243, 4
          %s245 = scalar_lea.vmem %s0, %s244
        $region44: #{decoder_forward.7} parent=39 // pred_fallthru
          _
      $region40: #{decoder_forward.7} parent=5 // pred_fallthru
        _
      %p246 = scmp.le.s32.totalorder 1, %s14
      %p247 = scmp.lt.s32.totalorder %s14, 3
      %p248 = pnand %p246, %p247
      %p249 = pneg %p248
      // Predicated region
      $region45: #{decoder_forward.7} parent=5 // pred_check
        _
      $region46: #{decoder_forward.7} parent=5 // pred_check_branch
        %251 = sbr.rel (%p248) target = $region48
      $region47: #{decoder_forward.7} parent=5 // pred_region
        %s252 = ssub.s32 %s14, 1
        // Predicated region
        $region49: #{decoder_forward.7} parent=47 // pred_check
          %p253 = pneg %p103
        $region50: #{decoder_forward.7} parent=47 // pred_check_branch
          %255 = sbr.rel (%p253) target = $region52
        $region51: #{decoder_forward.7} parent=47 // pred_region
          %256 = dma.done [#allocation3], 1024
        $region52: #{decoder_forward.7} parent=47 // pred_fallthru
          _
        %p257 = scmp.lt.s32.totalorder %s19, 1
        %s258 = scalar_select %p257, %s19, 1
        %s259 = smul.addr %s258, 4
        %s260 = scalar_lea.vmem %s0, %s259
        %p261 = pneg %p40
        %p262 = pneg %p37
        %p263 = pneg %p61
        %p264 = pneg %p58
        %p265 = pneg %p82
        %p266 = pneg %p79
        %p267 = pneg %p103
        %p268 = pneg %p100
        %p269 = pneg %p124
        %p270 = pneg %p121
        %p271 = pneg %p145
        %p272 = pneg %p142
        %p273 = pneg %p166
        %p274 = pneg %p163
        %p275 = pneg %p192
        %p276 = pneg %p189
        %p277 = scmp.lt.s32.totalorder %s19, 1
        %s278 = scalar_select %p277, %s19, 1
        %s279 = smul.addr %s278, 4
        %s280 = scalar_lea.vmem %s7, %s279
        %p281 = scmp.lt.s32.totalorder %s19, 1
        %s282 = scalar_select %p281, %s19, 1
        %s283 = smul.addr %s282, 4
        %s284 = scalar_lea.vmem %s0, %s283
        %p285 = scmp.lt.s32.totalorder %s19, 1
        %s286 = scalar_select %p285, %s19, 1
        %s287 = smul.addr %s286, 4
        %s288 = scalar_lea.vmem %s7, %s287
        %v290 = vld [vmem:[%s284] sm:$0xf]
        %v291 = vunpack.c.l.bf16 %v290
        %v292 = vld [vmem:[%s1] sm:$0xff]
        %v293 = vld [vmem:[%s1 + $0x8] sm:$0xf]
        %v294 = vld [vmem:[%s1 + $0xc] sm:$0xff]
        %v295 = vld [vmem:[%s1 + $0x14] sm:$0xf]
        %v296 = vld [vmem:[%s1 + $0x18] sm:$0xff]
        %v297 = vld [vmem:[%s1 + $0x20] sm:$0xf]
        %v298 = vld [vmem:[%s1 + $0x24] sm:$0xff]
        %v299 = vld [vmem:[%s1 + $0x2c] sm:$0xf]
        %v300 = vld [vmem:[%s1 + $0x30] sm:$0xff]
        %v301 = vld [vmem:[%s1 + $0x38] sm:$0xf]
        %v302 = vld [vmem:[%s1 + $0x3c] sm:$0xff]
        %v303 = vld [vmem:[%s1 + $0x44] sm:$0xf]
        %v304 = vld [vmem:[%s1 + $0x48] sm:$0xff]
        %v305 = vld [vmem:[%s1 + $0x50] sm:$0xf]
        %v306 = vld [vmem:[%s1 + $0x54] sm:$0xff]
        %v307 = vld [vmem:[%s1 + $0x5c] sm:$0xf]
        %v308 = vld [vmem:[%s1 + $0x60] sm:$0xff]
        %v309 = vld [vmem:[%s1 + $0x68] sm:$0xf]
        %v310 = vld [vmem:[%s1 + $0x6c] sm:$0xff]
        %v311 = vld [vmem:[%s1 + $0x74] sm:$0xf]
        %v312 = vld [vmem:[%s1 + $0x78] sm:$0xff]
        %v313 = vld [vmem:[%s1 + $0x80] sm:$0xf]
        %v314 = vld [vmem:[%s1 + $0x84] sm:$0xff]
        %v315 = vld [vmem:[%s1 + $0x8c] sm:$0xf]
        %v316 = vld [vmem:[%s1 + $0x90] sm:$0xff]
        %v317 = vld [vmem:[%s1 + $0x98] sm:$0xf]
        %v318 = vld [vmem:[%s1 + $0x9c] sm:$0xff]
        %v319 = vld [vmem:[%s1 + $0xa4] sm:$0xf]
        %v320 = vld [vmem:[%s1 + $0xa8] sm:$0xff]
        %v321 = vld [vmem:[%s1 + $0xb0] sm:$0xf]
        %v322 = vld [vmem:[%s1 + $0xb4] sm:$0xff]
        %v323 = vld [vmem:[%s1 + $0xbc] sm:$0xf]
        %v324 = vld [vmem:[%s2] sm:$0x7]
        %v326 = vlaneseq
        %v327 = vshrl.u32 %v326, 7
        %v328 = vsub.s32 0, %v327
        %v329 = vrot.slane %v324, %v328
        %v330 = vlaneseq
        %v331 = vshrl.u32 %v330, 7
        %v332 = vsub.s32 1, %v331
        %v333 = vrot.slane %v324, %v332
        %v334 = vlaneseq
        %v335 = vshrl.u32 %v334, 7
        %v336 = vsub.s32 2, %v335
        %v337 = vrot.slane %v324, %v336
        %v373 = vunpack.c.l.b16 %v292
        %v374 = vunpack.c.h.b16 %v292
        %v375 = vunpack.c.l.b16 %v293
        %v376 = vunpack.c.l.b16 %v294
        %v377 = vunpack.c.h.b16 %v294
        %v378 = vunpack.c.l.b16 %v295
        %v379 = vunpack.c.l.b16 %v296
        %v380 = vunpack.c.h.b16 %v296
        %v381 = vunpack.c.l.b16 %v297
        %v382 = vunpack.c.l.b16 %v298
        %v383 = vunpack.c.h.b16 %v298
        %v384 = vunpack.c.l.b16 %v299
        %v385 = vunpack.c.l.b16 %v300
        %v386 = vunpack.c.h.b16 %v300
        %v387 = vunpack.c.l.b16 %v301
        %v388 = vunpack.c.l.b16 %v302
        %v389 = vunpack.c.h.b16 %v302
        %v390 = vunpack.c.l.b16 %v303
        %v391 = vunpack.c.l.b16 %v304
        %v392 = vunpack.c.h.b16 %v304
        %v393 = vunpack.c.l.b16 %v305
        %v394 = vunpack.c.l.b16 %v306
        %v395 = vunpack.c.h.b16 %v306
        %v396 = vunpack.c.l.b16 %v307
        %v397 = vunpack.c.l.b16 %v308
        %v398 = vunpack.c.h.b16 %v308
        %v399 = vunpack.c.l.b16 %v309
        %v400 = vunpack.c.l.b16 %v310
        %v401 = vunpack.c.h.b16 %v310
        %v402 = vunpack.c.l.b16 %v311
        %v403 = vunpack.c.l.b16 %v312
        %v404 = vunpack.c.h.b16 %v312
        %v405 = vunpack.c.l.b16 %v313
        %v406 = vunpack.c.l.b16 %v314
        %v407 = vunpack.c.h.b16 %v314
        %v408 = vunpack.c.l.b16 %v315
        %v409 = vunpack.c.l.b16 %v316
        %v410 = vunpack.c.h.b16 %v316
        %v411 = vunpack.c.l.b16 %v317
        %v412 = vunpack.c.l.b16 %v318
        %v413 = vunpack.c.h.b16 %v318
        %v414 = vunpack.c.l.b16 %v319
        %v415 = vunpack.c.l.b16 %v320
        %v416 = vunpack.c.h.b16 %v320
        %v417 = vunpack.c.l.b16 %v321
        %v418 = vunpack.c.l.b16 %v322
        %v419 = vunpack.c.h.b16 %v322
        %v420 = vunpack.c.l.b16 %v323
        %v421 = vpack.c.b16 %v376, %v373
        %v422 = vpack.c.b16 %v377, %v374
        %v423 = vpack.c.b16 %v378, %v375
        %v424 = vpack.c.b16 %v382, %v379
        %v425 = vpack.c.b16 %v383, %v380
        %v426 = vpack.c.b16 %v384, %v381
        %v427 = vpack.c.b16 %v388, %v385
        %v428 = vpack.c.b16 %v389, %v386
        %v429 = vpack.c.b16 %v390, %v387
        %v430 = vpack.c.b16 %v394, %v391
        %v431 = vpack.c.b16 %v395, %v392
        %v432 = vpack.c.b16 %v396, %v393
        %v433 = vpack.c.b16 %v400, %v397
        %v434 = vpack.c.b16 %v401, %v398
        %v435 = vpack.c.b16 %v402, %v399
        %v436 = vpack.c.b16 %v406, %v403
        %v437 = vpack.c.b16 %v407, %v404
        %v438 = vpack.c.b16 %v408, %v405
        %v439 = vpack.c.b16 %v412, %v409
        %v440 = vpack.c.b16 %v413, %v410
        %v441 = vpack.c.b16 %v414, %v411
        %v442 = vpack.c.b16 %v418, %v415
        %v443 = vpack.c.b16 %v419, %v416
        %v444 = vpack.c.b16 %v420, %v417
        %469 = vmatprep.subr.bf16.mxu0 %v443
        %470 = vmatpush1.bf16.msra.mxu0 %v442
        %471 = vmatprep.subr.bf16.mxu0 %v440
        %472 = vmatpush1.bf16.msra.mxu0 %v439
        %473 = vmatprep.subr.bf16.mxu0 %v437
        %474 = vmatpush1.bf16.msra.mxu0 %v436
        %475 = vmatprep.subr.bf16.mxu0 %v434
        %476 = vmatpush1.bf16.msra.mxu0 %v433
        %477 = vmatprep.subr.bf16.mxu0 %v431
        %478 = vmatpush1.bf16.msra.mxu0 %v430
        %479 = vmatprep.subr.bf16.mxu0 %v428
        %480 = vmatpush1.bf16.msra.mxu0 %v427
        %481 = vmatprep.subr.bf16.mxu0 %v425
        %482 = vmatpush1.bf16.msra.mxu0 %v424
        %483 = vmatprep.subr.bf16.mxu0 %v422
        %484 = vmatpush1.bf16.msra.mxu0 %v421
        %485 = vmatprep.subr.bf16.mxu0 0
        %486 = vmatpush2.bf16.msra.mxu0 0
        %487 = vmatprep.subr.bf16.mxu0 0
        %488 = vmatpush2.bf16.msra.mxu0 0
        %489 = vmatprep.subr.bf16.mxu0 0
        %490 = vmatpush2.bf16.msra.mxu0 0
        %491 = vmatprep.subr.bf16.mxu0 0
        %492 = vmatpush2.bf16.msra.mxu0 0
        %493 = vmatprep.subr.bf16.mxu0 0
        %494 = vmatpush2.bf16.msra.mxu0 0
        %495 = vmatprep.subr.bf16.mxu0 0
        %496 = vmatpush2.bf16.msra.mxu0 0
        %497 = vmatprep.subr.bf16.mxu0 0
        %498 = vmatpush2.bf16.msra.mxu0 0
        %499 = vmatprep.subr.bf16.mxu0 0
        %500 = vmatpush2.bf16.msra.mxu0 0
        %501 = vmatprep.mubr.bf16.mxu0 0
        %502 = vmatmul.mubr.bf16.gmra.mxu0 %v290
        %v503 = vpop.f32.mrf.mxu0
        %v504 = vadd.f32 %v329, %v503
        %v505 = vpop.f32.mrf.mxu0
        %v506 = vadd.f32 %v333, %v505
        %v507 = vpop.f32.mrf.mxu0
        %v508 = vpop.f32.mrf.mxu0
        %509 = vdwg.mxu0
        %510 = vmatprep.subr.bf16.mxu0 0
        %511 = vmatpush1.bf16.msra.mxu0 %v444
        %512 = vmatprep.subr.bf16.mxu0 0
        %513 = vmatpush1.bf16.msra.mxu0 %v441
        %514 = vmatprep.subr.bf16.mxu0 0
        %515 = vmatpush1.bf16.msra.mxu0 %v438
        %516 = vmatprep.subr.bf16.mxu0 0
        %517 = vmatpush1.bf16.msra.mxu0 %v435
        %518 = vmatprep.subr.bf16.mxu0 0
        %519 = vmatpush1.bf16.msra.mxu0 %v432
        %520 = vmatprep.subr.bf16.mxu0 0
        %521 = vmatpush1.bf16.msra.mxu0 %v429
        %522 = vmatprep.subr.bf16.mxu0 0
        %523 = vmatpush1.bf16.msra.mxu0 %v426
        %524 = vmatprep.subr.bf16.mxu0 0
        %525 = vmatpush1.bf16.msra.mxu0 %v423
        %526 = vmatprep.subr.bf16.mxu0 0
        %527 = vmatpush2.bf16.msra.mxu0 0
        %528 = vmatprep.subr.bf16.mxu0 0
        %529 = vmatpush2.bf16.msra.mxu0 0
        %530 = vmatprep.subr.bf16.mxu0 0
        %531 = vmatpush2.bf16.msra.mxu0 0
        %532 = vmatprep.subr.bf16.mxu0 0
        %533 = vmatpush2.bf16.msra.mxu0 0
        %534 = vmatprep.subr.bf16.mxu0 0
        %535 = vmatpush2.bf16.msra.mxu0 0
        %536 = vmatprep.subr.bf16.mxu0 0
        %537 = vmatpush2.bf16.msra.mxu0 0
        %538 = vmatprep.subr.bf16.mxu0 0
        %539 = vmatpush2.bf16.msra.mxu0 0
        %540 = vmatprep.subr.bf16.mxu0 0
        %541 = vmatpush2.bf16.msra.mxu0 0
        %542 = vmatprep.mubr.bf16.mxu0 0
        %543 = vmatmul.mubr.bf16.gmra.mxu0 %v290
        %v544 = vpop.f32.mrf.mxu0
        %v545 = vadd.f32 %v337, %v544
        %v546 = vpop.f32.mrf.mxu0
        %v547 = vpop.f32.mrf.mxu0
        %v548 = vpop.f32.mrf.mxu0
        %549 = vdwg.mxu0
        %v550 = vpack.c.bf16 %v504, %v504
        %552 = vrot.lane.b32.xlu0 %v550, 112
        %v553 = vpop.permute.xlu0 %552
        %555 = vrot.lane.b32.xlu0 %v550, 96
        %v556 = vpop.permute.xlu0 %555
        %558 = vrot.lane.b32.xlu0 %v550, 80
        %v559 = vpop.permute.xlu0 %558
        %561 = vrot.lane.b32.xlu0 %v550, 64
        %v562 = vpop.permute.xlu0 %561
        %564 = vrot.lane.b32.xlu0 %v550, 48
        %v565 = vpop.permute.xlu0 %564
        %567 = vrot.lane.b32.xlu0 %v550, 32
        %v568 = vpop.permute.xlu0 %567
        %570 = vrot.lane.b32.xlu0 %v550, 16
        %v571 = vpop.permute.xlu0 %570
        %v573 = vcombine.low %v550, %v562
        %v575 = vunpack.c.l.s4 1983009808
        %v576 = vunpack.c.0.s8 %v575
        %v577 = vlaneseq
        %v578 = vshrl.u32 %v577, 7
        %v579 = vsub.s32 %v576, %v578
        %v580 = vrot.slane %v573, %v579
        %v581 = vcombine.low %v556, %v568
        %v583 = vunpack.c.l.s4 1983009808
        %v584 = vunpack.c.0.s8 %v583
        %v585 = vlaneseq
        %v586 = vshrl.u32 %v585, 7
        %v587 = vsub.s32 %v584, %v586
        %v588 = vrot.slane %v581, %v587
        %v589 = vcombine.low %v580, %v588
        %v590 = vcombine.high %v580, %v588
        %v592 = vunpack.c.l.s4 1934713408
        %v593 = vunpack.c.0.s8 %v592
        %v594 = vlaneseq
        %v595 = vshrl.u32 %v594, 7
        %v596 = vsub.s32 %v593, %v595
        %v597 = vrot.slane %v589, %v596
        %v599 = vunpack.c.l.s4 1934713408
        %v600 = vunpack.c.0.s8 %v599
        %v601 = vlaneseq
        %v602 = vshrl.u32 %v601, 7
        %v603 = vsub.s32 %v600, %v602
        %v604 = vrot.slane %v590, %v603
        %v605 = vcombine.high %v597, 0
        %v606 = vcombine.high %v604, 0
        %v607 = vcombine.low %v553, %v565
        %v609 = vunpack.c.l.s4 1983009808
        %v610 = vunpack.c.0.s8 %v609
        %v611 = vlaneseq
        %v612 = vshrl.u32 %v611, 7
        %v613 = vsub.s32 %v610, %v612
        %v614 = vrot.slane %v607, %v613
        %v615 = vcombine.low %v559, %v571
        %v617 = vunpack.c.l.s4 1983009808
        %v618 = vunpack.c.0.s8 %v617
        %v619 = vlaneseq
        %v620 = vshrl.u32 %v619, 7
        %v621 = vsub.s32 %v618, %v620
        %v622 = vrot.slane %v615, %v621
        %v623 = vcombine.low %v614, %v622
        %v624 = vcombine.high %v614, %v622
        %v626 = vunpack.c.l.s4 1934713408
        %v627 = vunpack.c.0.s8 %v626
        %v628 = vlaneseq
        %v629 = vshrl.u32 %v628, 7
        %v630 = vsub.s32 %v627, %v629
        %v631 = vrot.slane %v623, %v630
        %v633 = vunpack.c.l.s4 1934713408
        %v634 = vunpack.c.0.s8 %v633
        %v635 = vlaneseq
        %v636 = vshrl.u32 %v635, 7
        %v637 = vsub.s32 %v634, %v636
        %v638 = vrot.slane %v624, %v637
        %v639 = vcombine.high %v631, 0
        %v640 = vcombine.high %v638, 0
        %v643 = vpack.i.b16 %v631, %v597
        %v645 = vshrl.u32 %v597, 16
        %v646 = vshrl.u32 %v631, 16
        %v647 = vpack.i.b16 %v646, %v645
        %v651 = vpack.i.b16 %v639, %v605
        %v653 = vshrl.u32 %v605, 16
        %v654 = vshrl.u32 %v639, 16
        %v655 = vpack.i.b16 %v654, %v653
        %v659 = vpack.i.b16 %v638, %v604
        %v661 = vshrl.u32 %v604, 16
        %v662 = vshrl.u32 %v638, 16
        %v663 = vpack.i.b16 %v662, %v661
        %v667 = vpack.i.b16 %v640, %v606
        %v669 = vshrl.u32 %v606, 16
        %v670 = vshrl.u32 %v640, 16
        %v671 = vpack.i.b16 %v670, %v669
        %v673 = vcombine.low %v643, %v659
        %v675 = vunpack.c.l.s4 1983009808
        %v676 = vunpack.c.0.s8 %v675
        %v677 = vlaneseq
        %v678 = vshrl.u32 %v677, 7
        %v679 = vsub.s32 %v676, %v678
        %v680 = vrot.slane %v673, %v679
        %v681 = vcombine.low %v651, %v667
        %v683 = vunpack.c.l.s4 1983009808
        %v684 = vunpack.c.0.s8 %v683
        %v685 = vlaneseq
        %v686 = vshrl.u32 %v685, 7
        %v687 = vsub.s32 %v684, %v686
        %v688 = vrot.slane %v681, %v687
        %v689 = vcombine.low %v680, %v688
        %v690 = vcombine.high %v680, %v688
        %v692 = vunpack.c.l.s4 1934713408
        %v693 = vunpack.c.0.s8 %v692
        %v694 = vlaneseq
        %v695 = vshrl.u32 %v694, 7
        %v696 = vsub.s32 %v693, %v695
        %v697 = vrot.slane %v689, %v696
        %v699 = vunpack.c.l.s4 1934713408
        %v700 = vunpack.c.0.s8 %v699
        %v701 = vlaneseq
        %v702 = vshrl.u32 %v701, 7
        %v703 = vsub.s32 %v700, %v702
        %v704 = vrot.slane %v690, %v703
        %v705 = vcombine.high %v697, 0
        %v706 = vcombine.high %v704, 0
        %v707 = vcombine.low %v647, %v663
        %v709 = vunpack.c.l.s4 1983009808
        %v710 = vunpack.c.0.s8 %v709
        %v711 = vlaneseq
        %v712 = vshrl.u32 %v711, 7
        %v713 = vsub.s32 %v710, %v712
        %v714 = vrot.slane %v707, %v713
        %v715 = vcombine.low %v655, %v671
        %v717 = vunpack.c.l.s4 1983009808
        %v718 = vunpack.c.0.s8 %v717
        %v719 = vlaneseq
        %v720 = vshrl.u32 %v719, 7
        %v721 = vsub.s32 %v718, %v720
        %v722 = vrot.slane %v715, %v721
        %v723 = vcombine.low %v714, %v722
        %v724 = vcombine.high %v714, %v722
        %v726 = vunpack.c.l.s4 1934713408
        %v727 = vunpack.c.0.s8 %v726
        %v728 = vlaneseq
        %v729 = vshrl.u32 %v728, 7
        %v730 = vsub.s32 %v727, %v729
        %v731 = vrot.slane %v723, %v730
        %v733 = vunpack.c.l.s4 1934713408
        %v734 = vunpack.c.0.s8 %v733
        %v735 = vlaneseq
        %v736 = vshrl.u32 %v735, 7
        %v737 = vsub.s32 %v734, %v736
        %v738 = vrot.slane %v724, %v737
        %v739 = vcombine.high %v731, 0
        %v740 = vcombine.high %v738, 0
        %v743 = vpack.i.b16 %v731, %v697
        %v744 = vshrl.u32 %v697, 16
        %v745 = vshrl.u32 %v731, 16
        %v746 = vpack.i.b16 %v745, %v744
        %v749 = vpack.i.b16 %v739, %v705
        %v750 = vshrl.u32 %v705, 16
        %v751 = vshrl.u32 %v739, 16
        %v752 = vpack.i.b16 %v751, %v750
        %v755 = vpack.i.b16 %v738, %v704
        %v756 = vshrl.u32 %v704, 16
        %v757 = vshrl.u32 %v738, 16
        %v758 = vpack.i.b16 %v757, %v756
        %v761 = vpack.i.b16 %v740, %v706
        %v762 = vshrl.u32 %v706, 16
        %v763 = vshrl.u32 %v740, 16
        %v764 = vpack.i.b16 %v763, %v762
        %v765 = vpack.c.bf16 %v506, %v506
        %767 = vrot.lane.b32.xlu0 %v765, 112
        %v768 = vpop.permute.xlu0 %767
        %770 = vrot.lane.b32.xlu0 %v765, 96
        %v771 = vpop.permute.xlu0 %770
        %773 = vrot.lane.b32.xlu0 %v765, 80
        %v774 = vpop.permute.xlu0 %773
        %776 = vrot.lane.b32.xlu0 %v765, 64
        %v777 = vpop.permute.xlu0 %776
        %779 = vrot.lane.b32.xlu0 %v765, 48
        %v780 = vpop.permute.xlu0 %779
        %782 = vrot.lane.b32.xlu0 %v765, 32
        %v783 = vpop.permute.xlu0 %782
        %785 = vrot.lane.b32.xlu0 %v765, 16
        %v786 = vpop.permute.xlu0 %785
        %v788 = vcombine.low %v765, %v777
        %v790 = vunpack.c.l.s4 1983009808
        %v791 = vunpack.c.0.s8 %v790
        %v792 = vlaneseq
        %v793 = vshrl.u32 %v792, 7
        %v794 = vsub.s32 %v791, %v793
        %v795 = vrot.slane %v788, %v794
        %v796 = vcombine.low %v771, %v783
        %v798 = vunpack.c.l.s4 1983009808
        %v799 = vunpack.c.0.s8 %v798
        %v800 = vlaneseq
        %v801 = vshrl.u32 %v800, 7
        %v802 = vsub.s32 %v799, %v801
        %v803 = vrot.slane %v796, %v802
        %v804 = vcombine.low %v795, %v803
        %v805 = vcombine.high %v795, %v803
        %v807 = vunpack.c.l.s4 1934713408
        %v808 = vunpack.c.0.s8 %v807
        %v809 = vlaneseq
        %v810 = vshrl.u32 %v809, 7
        %v811 = vsub.s32 %v808, %v810
        %v812 = vrot.slane %v804, %v811
        %v814 = vunpack.c.l.s4 1934713408
        %v815 = vunpack.c.0.s8 %v814
        %v816 = vlaneseq
        %v817 = vshrl.u32 %v816, 7
        %v818 = vsub.s32 %v815, %v817
        %v819 = vrot.slane %v805, %v818
        %v820 = vcombine.high %v812, 0
        %v821 = vcombine.high %v819, 0
        %v822 = vcombine.low %v768, %v780
        %v824 = vunpack.c.l.s4 1983009808
        %v825 = vunpack.c.0.s8 %v824
        %v826 = vlaneseq
        %v827 = vshrl.u32 %v826, 7
        %v828 = vsub.s32 %v825, %v827
        %v829 = vrot.slane %v822, %v828
        %v830 = vcombine.low %v774, %v786
        %v832 = vunpack.c.l.s4 1983009808
        %v833 = vunpack.c.0.s8 %v832
        %v834 = vlaneseq
        %v835 = vshrl.u32 %v834, 7
        %v836 = vsub.s32 %v833, %v835
        %v837 = vrot.slane %v830, %v836
        %v838 = vcombine.low %v829, %v837
        %v839 = vcombine.high %v829, %v837
        %v841 = vunpack.c.l.s4 1934713408
        %v842 = vunpack.c.0.s8 %v841
        %v843 = vlaneseq
        %v844 = vshrl.u32 %v843, 7
        %v845 = vsub.s32 %v842, %v844
        %v846 = vrot.slane %v838, %v845
        %v848 = vunpack.c.l.s4 1934713408
        %v849 = vunpack.c.0.s8 %v848
        %v850 = vlaneseq
        %v851 = vshrl.u32 %v850, 7
        %v852 = vsub.s32 %v849, %v851
        %v853 = vrot.slane %v839, %v852
        %v854 = vcombine.high %v846, 0
        %v855 = vcombine.high %v853, 0
        %v858 = vpack.i.b16 %v846, %v812
        %v860 = vshrl.u32 %v812, 16
        %v861 = vshrl.u32 %v846, 16
        %v862 = vpack.i.b16 %v861, %v860
        %v866 = vpack.i.b16 %v854, %v820
        %v868 = vshrl.u32 %v820, 16
        %v869 = vshrl.u32 %v854, 16
        %v870 = vpack.i.b16 %v869, %v868
        %v874 = vpack.i.b16 %v853, %v819
        %v876 = vshrl.u32 %v819, 16
        %v877 = vshrl.u32 %v853, 16
        %v878 = vpack.i.b16 %v877, %v876
        %v882 = vpack.i.b16 %v855, %v821
        %v884 = vshrl.u32 %v821, 16
        %v885 = vshrl.u32 %v855, 16
        %v886 = vpack.i.b16 %v885, %v884
        %v888 = vcombine.low %v858, %v874
        %v890 = vunpack.c.l.s4 1983009808
        %v891 = vunpack.c.0.s8 %v890
        %v892 = vlaneseq
        %v893 = vshrl.u32 %v892, 7
        %v894 = vsub.s32 %v891, %v893
        %v895 = vrot.slane %v888, %v894
        %v896 = vcombine.low %v866, %v882
        %v898 = vunpack.c.l.s4 1983009808
        %v899 = vunpack.c.0.s8 %v898
        %v900 = vlaneseq
        %v901 = vshrl.u32 %v900, 7
        %v902 = vsub.s32 %v899, %v901
        %v903 = vrot.slane %v896, %v902
        %v904 = vcombine.low %v895, %v903
        %v905 = vcombine.high %v895, %v903
        %v907 = vunpack.c.l.s4 1934713408
        %v908 = vunpack.c.0.s8 %v907
        %v909 = vlaneseq
        %v910 = vshrl.u32 %v909, 7
        %v911 = vsub.s32 %v908, %v910
        %v912 = vrot.slane %v904, %v911
        %v914 = vunpack.c.l.s4 1934713408
        %v915 = vunpack.c.0.s8 %v914
        %v916 = vlaneseq
        %v917 = vshrl.u32 %v916, 7
        %v918 = vsub.s32 %v915, %v917
        %v919 = vrot.slane %v905, %v918
        %v920 = vcombine.high %v912, 0
        %v921 = vcombine.high %v919, 0
        %v922 = vcombine.low %v862, %v878
        %v924 = vunpack.c.l.s4 1983009808
        %v925 = vunpack.c.0.s8 %v924
        %v926 = vlaneseq
        %v927 = vshrl.u32 %v926, 7
        %v928 = vsub.s32 %v925, %v927
        %v929 = vrot.slane %v922, %v928
        %v930 = vcombine.low %v870, %v886
        %v932 = vunpack.c.l.s4 1983009808
        %v933 = vunpack.c.0.s8 %v932
        %v934 = vlaneseq
        %v935 = vshrl.u32 %v934, 7
        %v936 = vsub.s32 %v933, %v935
        %v937 = vrot.slane %v930, %v936
        %v938 = vcombine.low %v929, %v937
        %v939 = vcombine.high %v929, %v937
        %v941 = vunpack.c.l.s4 1934713408
        %v942 = vunpack.c.0.s8 %v941
        %v943 = vlaneseq
        %v944 = vshrl.u32 %v943, 7
        %v945 = vsub.s32 %v942, %v944
        %v946 = vrot.slane %v938, %v945
        %v948 = vunpack.c.l.s4 1934713408
        %v949 = vunpack.c.0.s8 %v948
        %v950 = vlaneseq
        %v951 = vshrl.u32 %v950, 7
        %v952 = vsub.s32 %v949, %v951
        %v953 = vrot.slane %v939, %v952
        %v954 = vcombine.high %v946, 0
        %v955 = vcombine.high %v953, 0
        %v958 = vpack.i.b16 %v946, %v912
        %v959 = vshrl.u32 %v912, 16
        %v960 = vshrl.u32 %v946, 16
        %v961 = vpack.i.b16 %v960, %v959
        %v964 = vpack.i.b16 %v954, %v920
        %v965 = vshrl.u32 %v920, 16
        %v966 = vshrl.u32 %v954, 16
        %v967 = vpack.i.b16 %v966, %v965
        %v970 = vpack.i.b16 %v953, %v919
        %v971 = vshrl.u32 %v919, 16
        %v972 = vshrl.u32 %v953, 16
        %v973 = vpack.i.b16 %v972, %v971
        %v976 = vpack.i.b16 %v955, %v921
        %v977 = vshrl.u32 %v921, 16
        %v978 = vshrl.u32 %v955, 16
        %v979 = vpack.i.b16 %v978, %v977
        %v980 = vpack.c.bf16 %v545, %v545
        %982 = vrot.lane.b32.xlu0 %v980, 112
        %v983 = vpop.permute.xlu0 %982
        %985 = vrot.lane.b32.xlu0 %v980, 96
        %v986 = vpop.permute.xlu0 %985
        %988 = vrot.lane.b32.xlu0 %v980, 80
        %v989 = vpop.permute.xlu0 %988
        %991 = vrot.lane.b32.xlu0 %v980, 64
        %v992 = vpop.permute.xlu0 %991
        %994 = vrot.lane.b32.xlu0 %v980, 48
        %v995 = vpop.permute.xlu0 %994
        %997 = vrot.lane.b32.xlu0 %v980, 32
        %v998 = vpop.permute.xlu0 %997
        %1000 = vrot.lane.b32.xlu0 %v980, 16
        %v1001 = vpop.permute.xlu0 %1000
        %v1003 = vcombine.low %v980, %v992
        %v1005 = vunpack.c.l.s4 1983009808
        %v1006 = vunpack.c.0.s8 %v1005
        %v1007 = vlaneseq
        %v1008 = vshrl.u32 %v1007, 7
        %v1009 = vsub.s32 %v1006, %v1008
        %v1010 = vrot.slane %v1003, %v1009
        %v1011 = vcombine.low %v986, %v998
        %v1013 = vunpack.c.l.s4 1983009808
        %v1014 = vunpack.c.0.s8 %v1013
        %v1015 = vlaneseq
        %v1016 = vshrl.u32 %v1015, 7
        %v1017 = vsub.s32 %v1014, %v1016
        %v1018 = vrot.slane %v1011, %v1017
        %v1019 = vcombine.low %v1010, %v1018
        %v1020 = vcombine.high %v1010, %v1018
        %v1022 = vunpack.c.l.s4 1934713408
        %v1023 = vunpack.c.0.s8 %v1022
        %v1024 = vlaneseq
        %v1025 = vshrl.u32 %v1024, 7
        %v1026 = vsub.s32 %v1023, %v1025
        %v1027 = vrot.slane %v1019, %v1026
        %v1029 = vunpack.c.l.s4 1934713408
        %v1030 = vunpack.c.0.s8 %v1029
        %v1031 = vlaneseq
        %v1032 = vshrl.u32 %v1031, 7
        %v1033 = vsub.s32 %v1030, %v1032
        %v1034 = vrot.slane %v1020, %v1033
        %v1035 = vcombine.high %v1027, 0
        %v1036 = vcombine.high %v1034, 0
        %v1037 = vcombine.low %v983, %v995
        %v1039 = vunpack.c.l.s4 1983009808
        %v1040 = vunpack.c.0.s8 %v1039
        %v1041 = vlaneseq
        %v1042 = vshrl.u32 %v1041, 7
        %v1043 = vsub.s32 %v1040, %v1042
        %v1044 = vrot.slane %v1037, %v1043
        %v1045 = vcombine.low %v989, %v1001
        %v1047 = vunpack.c.l.s4 1983009808
        %v1048 = vunpack.c.0.s8 %v1047
        %v1049 = vlaneseq
        %v1050 = vshrl.u32 %v1049, 7
        %v1051 = vsub.s32 %v1048, %v1050
        %v1052 = vrot.slane %v1045, %v1051
        %v1053 = vcombine.low %v1044, %v1052
        %v1054 = vcombine.high %v1044, %v1052
        %v1056 = vunpack.c.l.s4 1934713408
        %v1057 = vunpack.c.0.s8 %v1056
        %v1058 = vlaneseq
        %v1059 = vshrl.u32 %v1058, 7
        %v1060 = vsub.s32 %v1057, %v1059
        %v1061 = vrot.slane %v1053, %v1060
        %v1063 = vunpack.c.l.s4 1934713408
        %v1064 = vunpack.c.0.s8 %v1063
        %v1065 = vlaneseq
        %v1066 = vshrl.u32 %v1065, 7
        %v1067 = vsub.s32 %v1064, %v1066
        %v1068 = vrot.slane %v1054, %v1067
        %v1069 = vcombine.high %v1061, 0
        %v1070 = vcombine.high %v1068, 0
        %v1073 = vpack.i.b16 %v1061, %v1027
        %v1075 = vshrl.u32 %v1027, 16
        %v1076 = vshrl.u32 %v1061, 16
        %v1077 = vpack.i.b16 %v1076, %v1075
        %v1081 = vpack.i.b16 %v1069, %v1035
        %v1083 = vshrl.u32 %v1035, 16
        %v1084 = vshrl.u32 %v1069, 16
        %v1085 = vpack.i.b16 %v1084, %v1083
        %v1089 = vpack.i.b16 %v1068, %v1034
        %v1091 = vshrl.u32 %v1034, 16
        %v1092 = vshrl.u32 %v1068, 16
        %v1093 = vpack.i.b16 %v1092, %v1091
        %v1097 = vpack.i.b16 %v1070, %v1036
        %v1099 = vshrl.u32 %v1036, 16
        %v1100 = vshrl.u32 %v1070, 16
        %v1101 = vpack.i.b16 %v1100, %v1099
        %v1103 = vcombine.low %v1073, %v1089
        %v1105 = vunpack.c.l.s4 1983009808
        %v1106 = vunpack.c.0.s8 %v1105
        %v1107 = vlaneseq
        %v1108 = vshrl.u32 %v1107, 7
        %v1109 = vsub.s32 %v1106, %v1108
        %v1110 = vrot.slane %v1103, %v1109
        %v1111 = vcombine.low %v1081, %v1097
        %v1113 = vunpack.c.l.s4 1983009808
        %v1114 = vunpack.c.0.s8 %v1113
        %v1115 = vlaneseq
        %v1116 = vshrl.u32 %v1115, 7
        %v1117 = vsub.s32 %v1114, %v1116
        %v1118 = vrot.slane %v1111, %v1117
        %v1119 = vcombine.low %v1110, %v1118
        %v1120 = vcombine.high %v1110, %v1118
        %v1122 = vunpack.c.l.s4 1934713408
        %v1123 = vunpack.c.0.s8 %v1122
        %v1124 = vlaneseq
        %v1125 = vshrl.u32 %v1124, 7
        %v1126 = vsub.s32 %v1123, %v1125
        %v1127 = vrot.slane %v1119, %v1126
        %v1129 = vunpack.c.l.s4 1934713408
        %v1130 = vunpack.c.0.s8 %v1129
        %v1131 = vlaneseq
        %v1132 = vshrl.u32 %v1131, 7
        %v1133 = vsub.s32 %v1130, %v1132
        %v1134 = vrot.slane %v1120, %v1133
        %v1135 = vcombine.high %v1127, 0
        %v1136 = vcombine.high %v1134, 0
        %v1137 = vcombine.low %v1077, %v1093
        %v1139 = vunpack.c.l.s4 1983009808
        %v1140 = vunpack.c.0.s8 %v1139
        %v1141 = vlaneseq
        %v1142 = vshrl.u32 %v1141, 7
        %v1143 = vsub.s32 %v1140, %v1142
        %v1144 = vrot.slane %v1137, %v1143
        %v1145 = vcombine.low %v1085, %v1101
        %v1147 = vunpack.c.l.s4 1983009808
        %v1148 = vunpack.c.0.s8 %v1147
        %v1149 = vlaneseq
        %v1150 = vshrl.u32 %v1149, 7
        %v1151 = vsub.s32 %v1148, %v1150
        %v1152 = vrot.slane %v1145, %v1151
        %v1153 = vcombine.low %v1144, %v1152
        %v1154 = vcombine.high %v1144, %v1152
        %v1156 = vunpack.c.l.s4 1934713408
        %v1157 = vunpack.c.0.s8 %v1156
        %v1158 = vlaneseq
        %v1159 = vshrl.u32 %v1158, 7
        %v1160 = vsub.s32 %v1157, %v1159
        %v1161 = vrot.slane %v1153, %v1160
        %v1163 = vunpack.c.l.s4 1934713408
        %v1164 = vunpack.c.0.s8 %v1163
        %v1165 = vlaneseq
        %v1166 = vshrl.u32 %v1165, 7
        %v1167 = vsub.s32 %v1164, %v1166
        %v1168 = vrot.slane %v1154, %v1167
        %v1169 = vcombine.high %v1161, 0
        %v1170 = vcombine.high %v1168, 0
        %v1173 = vpack.i.b16 %v1161, %v1127
        %v1174 = vshrl.u32 %v1127, 16
        %v1175 = vshrl.u32 %v1161, 16
        %v1176 = vpack.i.b16 %v1175, %v1174
        %v1179 = vpack.i.b16 %v1169, %v1135
        %v1180 = vshrl.u32 %v1135, 16
        %v1181 = vshrl.u32 %v1169, 16
        %v1182 = vpack.i.b16 %v1181, %v1180
        %v1185 = vpack.i.b16 %v1168, %v1134
        %v1186 = vshrl.u32 %v1134, 16
        %v1187 = vshrl.u32 %v1168, 16
        %v1188 = vpack.i.b16 %v1187, %v1186
        %v1191 = vpack.i.b16 %v1170, %v1136
        %v1192 = vshrl.u32 %v1136, 16
        %v1193 = vshrl.u32 %v1170, 16
        %v1194 = vpack.i.b16 %v1193, %v1192
        %vm1195 = vcmask 130048
        %v1197 = vsel %vm1195, %v743, 0
        %v1200 = vsel %vm1195, %v958, 0
        %1202 = vmatprep.subr.bf16.mxu0 0
        %1203 = vmatpush1.bf16.xpose.msra.mxu0 0
        %1204 = vmatprep.subr.bf16.mxu0 0
        %1205 = vmatpush1.bf16.xpose.msra.mxu0 0
        %1206 = vmatprep.subr.bf16.mxu0 0
        %1207 = vmatpush1.bf16.xpose.msra.mxu0 0
        %1208 = vmatprep.subr.bf16.mxu0 0
        %1209 = vmatpush1.bf16.xpose.msra.mxu0 0
        %1210 = vmatprep.subr.bf16.mxu0 0
        %1211 = vmatpush1.bf16.xpose.msra.mxu0 0
        %1212 = vmatprep.subr.bf16.mxu0 0
        %1213 = vmatpush1.bf16.xpose.msra.mxu0 0
        %1214 = vmatprep.subr.bf16.mxu0 0
        %1215 = vmatpush1.bf16.xpose.msra.mxu0 0
        %1216 = vmatprep.subr.bf16.mxu0 0
        %1217 = vmatpush1.bf16.xpose.msra.mxu0 %v1200
        %1218 = vmatprep.subr.bf16.mxu0 0
        %1219 = vmatpush2.bf16.xpose.msra.mxu0 0
        %1220 = vmatprep.subr.bf16.mxu0 0
        %1221 = vmatpush2.bf16.xpose.msra.mxu0 0
        %1222 = vmatprep.subr.bf16.mxu0 0
        %1223 = vmatpush2.bf16.xpose.msra.mxu0 0
        %1224 = vmatprep.subr.bf16.mxu0 0
        %1225 = vmatpush2.bf16.xpose.msra.mxu0 0
        %1226 = vmatprep.subr.bf16.mxu0 0
        %1227 = vmatpush2.bf16.xpose.msra.mxu0 0
        %1228 = vmatprep.subr.bf16.mxu0 0
        %1229 = vmatpush2.bf16.xpose.msra.mxu0 0
        %1230 = vmatprep.subr.bf16.mxu0 0
        %1231 = vmatpush2.bf16.xpose.msra.mxu0 0
        %1232 = vmatprep.subr.bf16.mxu0 0
        %1233 = vmatpush2.bf16.xpose.msra.mxu0 0
        %1234 = vmatprep.mubr.bf16.mxu0 0
        %1235 = vmatmul.mubr.bf16.gmra.mxu0 %v1197
        %v1236 = vpop.f32.mrf.mxu0
        %v1237 = vadd.f32 0.0, %v1236
        %v1238 = vpop.f32.mrf.mxu0
        %v1239 = vpop.f32.mrf.mxu0
        %v1240 = vpop.f32.mrf.mxu0
        %1241 = vdwg.mxu0
        %v1243 = vsel %vm1195, %v746, 0
        %v1246 = vsel %vm1195, %v961, 0
        %1248 = vmatprep.subr.bf16.mxu0 0
        %1249 = vmatpush1.bf16.xpose.msra.mxu0 0
        %1250 = vmatprep.subr.bf16.mxu0 0
        %1251 = vmatpush1.bf16.xpose.msra.mxu0 0
        %1252 = vmatprep.subr.bf16.mxu0 0
        %1253 = vmatpush1.bf16.xpose.msra.mxu0 0
        %1254 = vmatprep.subr.bf16.mxu0 0
        %1255 = vmatpush1.bf16.xpose.msra.mxu0 0
        %1256 = vmatprep.subr.bf16.mxu0 0
        %1257 = vmatpush1.bf16.xpose.msra.mxu0 0
        %1258 = vmatprep.subr.bf16.mxu0 0
        %1259 = vmatpush1.bf16.xpose.msra.mxu0 0
        %1260 = vmatprep.subr.bf16.mxu0 0
        %1261 = vmatpush1.bf16.xpose.msra.mxu0 0
        %1262 = vmatprep.subr.bf16.mxu0 0
        %1263 = vmatpush1.bf16.xpose.msra.mxu0 %v1246
        %1264 = vmatprep.subr.bf16.mxu0 0
        %1265 = vmatpush2.bf16.xpose.msra.mxu0 0
        %1266 = vmatprep.subr.bf16.mxu0 0
        %1267 = vmatpush2.bf16.xpose.msra.mxu0 0
        %1268 = vmatprep.subr.bf16.mxu0 0
        %1269 = vmatpush2.bf16.xpose.msra.mxu0 0
        %1270 = vmatprep.subr.bf16.mxu0 0
        %1271 = vmatpush2.bf16.xpose.msra.mxu0 0
        %1272 = vmatprep.subr.bf16.mxu0 0
        %1273 = vmatpush2.bf16.xpose.msra.mxu0 0
        %1274 = vmatprep.subr.bf16.mxu0 0
        %1275 = vmatpush2.bf16.xpose.msra.mxu0 0
        %1276 = vmatprep.subr.bf16.mxu0 0
        %1277 = vmatpush2.bf16.xpose.msra.mxu0 0
        %1278 = vmatprep.subr.bf16.mxu0 0
        %1279 = vmatpush2.bf16.xpose.msra.mxu0 0
        %1280 = vmatprep.mubr.bf16.mxu0 0
        %1281 = vmatmul.mubr.bf16.gmra.mxu0 %v1243
        %v1282 = vpop.f32.mrf.mxu0
        %v1283 = vadd.f32 0.0, %v1282
        %v1284 = vpop.f32.mrf.mxu0
        %v1285 = vpop.f32.mrf.mxu0
        %v1286 = vpop.f32.mrf.mxu0
        %1287 = vdwg.mxu0
        %v1289 = vsel %vm1195, %v749, 0
        %v1292 = vsel %vm1195, %v964, 0
        %1294 = vmatprep.subr.bf16.mxu0 0
        %1295 = vmatpush1.bf16.xpose.msra.mxu0 0
        %1296 = vmatprep.subr.bf16.mxu0 0
        %1297 = vmatpush1.bf16.xpose.msra.mxu0 0
        %1298 = vmatprep.subr.bf16.mxu0 0
        %1299 = vmatpush1.bf16.xpose.msra.mxu0 0
        %1300 = vmatprep.subr.bf16.mxu0 0
        %1301 = vmatpush1.bf16.xpose.msra.mxu0 0
        %1302 = vmatprep.subr.bf16.mxu0 0
        %1303 = vmatpush1.bf16.xpose.msra.mxu0 0
        %1304 = vmatprep.subr.bf16.mxu0 0
        %1305 = vmatpush1.bf16.xpose.msra.mxu0 0
        %1306 = vmatprep.subr.bf16.mxu0 0
        %1307 = vmatpush1.bf16.xpose.msra.mxu0 0
        %1308 = vmatprep.subr.bf16.mxu0 0
        %1309 = vmatpush1.bf16.xpose.msra.mxu0 %v1292
        %1310 = vmatprep.subr.bf16.mxu0 0
        %1311 = vmatpush2.bf16.xpose.msra.mxu0 0
        %1312 = vmatprep.subr.bf16.mxu0 0
        %1313 = vmatpush2.bf16.xpose.msra.mxu0 0
        %1314 = vmatprep.subr.bf16.mxu0 0
        %1315 = vmatpush2.bf16.xpose.msra.mxu0 0
        %1316 = vmatprep.subr.bf16.mxu0 0
        %1317 = vmatpush2.bf16.xpose.msra.mxu0 0
        %1318 = vmatprep.subr.bf16.mxu0 0
        %1319 = vmatpush2.bf16.xpose.msra.mxu0 0
        %1320 = vmatprep.subr.bf16.mxu0 0
        %1321 = vmatpush2.bf16.xpose.msra.mxu0 0
        %1322 = vmatprep.subr.bf16.mxu0 0
        %1323 = vmatpush2.bf16.xpose.msra.mxu0 0
        %1324 = vmatprep.subr.bf16.mxu0 0
        %1325 = vmatpush2.bf16.xpose.msra.mxu0 0
        %1326 = vmatprep.mubr.bf16.mxu0 0
        %1327 = vmatmul.mubr.bf16.gmra.mxu0 %v1289
        %v1328 = vpop.f32.mrf.mxu0
        %v1329 = vadd.f32 0.0, %v1328
        %v1330 = vpop.f32.mrf.mxu0
        %v1331 = vpop.f32.mrf.mxu0
        %v1332 = vpop.f32.mrf.mxu0
        %1333 = vdwg.mxu0
        %v1335 = vsel %vm1195, %v752, 0
        %v1338 = vsel %vm1195, %v967, 0
        %1340 = vmatprep.subr.bf16.mxu0 0
        %1341 = vmatpush1.bf16.xpose.msra.mxu0 0
        %1342 = vmatprep.subr.bf16.mxu0 0
        %1343 = vmatpush1.bf16.xpose.msra.mxu0 0
        %1344 = vmatprep.subr.bf16.mxu0 0
        %1345 = vmatpush1.bf16.xpose.msra.mxu0 0
        %1346 = vmatprep.subr.bf16.mxu0 0
        %1347 = vmatpush1.bf16.xpose.msra.mxu0 0
        %1348 = vmatprep.subr.bf16.mxu0 0
        %1349 = vmatpush1.bf16.xpose.msra.mxu0 0
        %1350 = vmatprep.subr.bf16.mxu0 0
        %1351 = vmatpush1.bf16.xpose.msra.mxu0 0
        %1352 = vmatprep.subr.bf16.mxu0 0
        %1353 = vmatpush1.bf16.xpose.msra.mxu0 0
        %1354 = vmatprep.subr.bf16.mxu0 0
        %1355 = vmatpush1.bf16.xpose.msra.mxu0 %v1338
        %1356 = vmatprep.subr.bf16.mxu0 0
        %1357 = vmatpush2.bf16.xpose.msra.mxu0 0
        %1358 = vmatprep.subr.bf16.mxu0 0
        %1359 = vmatpush2.bf16.xpose.msra.mxu0 0
        %1360 = vmatprep.subr.bf16.mxu0 0
        %1361 = vmatpush2.bf16.xpose.msra.mxu0 0
        %1362 = vmatprep.subr.bf16.mxu0 0
        %1363 = vmatpush2.bf16.xpose.msra.mxu0 0
        %1364 = vmatprep.subr.bf16.mxu0 0
        %1365 = vmatpush2.bf16.xpose.msra.mxu0 0
        %1366 = vmatprep.subr.bf16.mxu0 0
        %1367 = vmatpush2.bf16.xpose.msra.mxu0 0
        %1368 = vmatprep.subr.bf16.mxu0 0
        %1369 = vmatpush2.bf16.xpose.msra.mxu0 0
        %1370 = vmatprep.subr.bf16.mxu0 0
        %1371 = vmatpush2.bf16.xpose.msra.mxu0 0
        %1372 = vmatprep.mubr.bf16.mxu0 0
        %1373 = vmatmul.mubr.bf16.gmra.mxu0 %v1335
        %v1374 = vpop.f32.mrf.mxu0
        %v1375 = vadd.f32 0.0, %v1374
        %v1376 = vpop.f32.mrf.mxu0
        %v1377 = vpop.f32.mrf.mxu0
        %v1378 = vpop.f32.mrf.mxu0
        %1379 = vdwg.mxu0
        %v1381 = vsel %vm1195, %v755, 0
        %v1384 = vsel %vm1195, %v970, 0
        %1386 = vmatprep.subr.bf16.mxu0 0
        %1387 = vmatpush1.bf16.xpose.msra.mxu0 0
        %1388 = vmatprep.subr.bf16.mxu0 0
        %1389 = vmatpush1.bf16.xpose.msra.mxu0 0
        %1390 = vmatprep.subr.bf16.mxu0 0
        %1391 = vmatpush1.bf16.xpose.msra.mxu0 0
        %1392 = vmatprep.subr.bf16.mxu0 0
        %1393 = vmatpush1.bf16.xpose.msra.mxu0 0
        %1394 = vmatprep.subr.bf16.mxu0 0
        %1395 = vmatpush1.bf16.xpose.msra.mxu0 0
        %1396 = vmatprep.subr.bf16.mxu0 0
        %1397 = vmatpush1.bf16.xpose.msra.mxu0 0
        %1398 = vmatprep.subr.bf16.mxu0 0
        %1399 = vmatpush1.bf16.xpose.msra.mxu0 0
        %1400 = vmatprep.subr.bf16.mxu0 0
        %1401 = vmatpush1.bf16.xpose.msra.mxu0 %v1384
        %1402 = vmatprep.subr.bf16.mxu0 0
        %1403 = vmatpush2.bf16.xpose.msra.mxu0 0
        %1404 = vmatprep.subr.bf16.mxu0 0
        %1405 = vmatpush2.bf16.xpose.msra.mxu0 0
        %1406 = vmatprep.subr.bf16.mxu0 0
        %1407 = vmatpush2.bf16.xpose.msra.mxu0 0
        %1408 = vmatprep.subr.bf16.mxu0 0
        %1409 = vmatpush2.bf16.xpose.msra.mxu0 0
        %1410 = vmatprep.subr.bf16.mxu0 0
        %1411 = vmatpush2.bf16.xpose.msra.mxu0 0
        %1412 = vmatprep.subr.bf16.mxu0 0
        %1413 = vmatpush2.bf16.xpose.msra.mxu0 0
        %1414 = vmatprep.subr.bf16.mxu0 0
        %1415 = vmatpush2.bf16.xpose.msra.mxu0 0
        %1416 = vmatprep.subr.bf16.mxu0 0
        %1417 = vmatpush2.bf16.xpose.msra.mxu0 0
        %1418 = vmatprep.mubr.bf16.mxu0 0
        %1419 = vmatmul.mubr.bf16.gmra.mxu0 %v1381
        %v1420 = vpop.f32.mrf.mxu0
        %v1421 = vadd.f32 0.0, %v1420
        %v1422 = vpop.f32.mrf.mxu0
        %v1423 = vpop.f32.mrf.mxu0
        %v1424 = vpop.f32.mrf.mxu0
        %1425 = vdwg.mxu0
        %v1427 = vsel %vm1195, %v758, 0
        %v1430 = vsel %vm1195, %v973, 0
        %1432 = vmatprep.subr.bf16.mxu0 0
        %1433 = vmatpush1.bf16.xpose.msra.mxu0 0
        %1434 = vmatprep.subr.bf16.mxu0 0
        %1435 = vmatpush1.bf16.xpose.msra.mxu0 0
        %1436 = vmatprep.subr.bf16.mxu0 0
        %1437 = vmatpush1.bf16.xpose.msra.mxu0 0
        %1438 = vmatprep.subr.bf16.mxu0 0
        %1439 = vmatpush1.bf16.xpose.msra.mxu0 0
        %1440 = vmatprep.subr.bf16.mxu0 0
        %1441 = vmatpush1.bf16.xpose.msra.mxu0 0
        %1442 = vmatprep.subr.bf16.mxu0 0
        %1443 = vmatpush1.bf16.xpose.msra.mxu0 0
        %1444 = vmatprep.subr.bf16.mxu0 0
        %1445 = vmatpush1.bf16.xpose.msra.mxu0 0
        %1446 = vmatprep.subr.bf16.mxu0 0
        %1447 = vmatpush1.bf16.xpose.msra.mxu0 %v1430
        %1448 = vmatprep.subr.bf16.mxu0 0
        %1449 = vmatpush2.bf16.xpose.msra.mxu0 0
        %1450 = vmatprep.subr.bf16.mxu0 0
        %1451 = vmatpush2.bf16.xpose.msra.mxu0 0
        %1452 = vmatprep.subr.bf16.mxu0 0
        %1453 = vmatpush2.bf16.xpose.msra.mxu0 0
        %1454 = vmatprep.subr.bf16.mxu0 0
        %1455 = vmatpush2.bf16.xpose.msra.mxu0 0
        %1456 = vmatprep.subr.bf16.mxu0 0
        %1457 = vmatpush2.bf16.xpose.msra.mxu0 0
        %1458 = vmatprep.subr.bf16.mxu0 0
        %1459 = vmatpush2.bf16.xpose.msra.mxu0 0
        %1460 = vmatprep.subr.bf16.mxu0 0
        %1461 = vmatpush2.bf16.xpose.msra.mxu0 0
        %1462 = vmatprep.subr.bf16.mxu0 0
        %1463 = vmatpush2.bf16.xpose.msra.mxu0 0
        %1464 = vmatprep.mubr.bf16.mxu0 0
        %1465 = vmatmul.mubr.bf16.gmra.mxu0 %v1427
        %v1466 = vpop.f32.mrf.mxu0
        %v1467 = vadd.f32 0.0, %v1466
        %v1468 = vpop.f32.mrf.mxu0
        %v1469 = vpop.f32.mrf.mxu0
        %v1470 = vpop.f32.mrf.mxu0
        %1471 = vdwg.mxu0
        %v1473 = vsel %vm1195, %v761, 0
        %v1476 = vsel %vm1195, %v976, 0
        %1478 = vmatprep.subr.bf16.mxu0 0
        %1479 = vmatpush1.bf16.xpose.msra.mxu0 0
        %1480 = vmatprep.subr.bf16.mxu0 0
        %1481 = vmatpush1.bf16.xpose.msra.mxu0 0
        %1482 = vmatprep.subr.bf16.mxu0 0
        %1483 = vmatpush1.bf16.xpose.msra.mxu0 0
        %1484 = vmatprep.subr.bf16.mxu0 0
        %1485 = vmatpush1.bf16.xpose.msra.mxu0 0
        %1486 = vmatprep.subr.bf16.mxu0 0
        %1487 = vmatpush1.bf16.xpose.msra.mxu0 0
        %1488 = vmatprep.subr.bf16.mxu0 0
        %1489 = vmatpush1.bf16.xpose.msra.mxu0 0
        %1490 = vmatprep.subr.bf16.mxu0 0
        %1491 = vmatpush1.bf16.xpose.msra.mxu0 0
        %1492 = vmatprep.subr.bf16.mxu0 0
        %1493 = vmatpush1.bf16.xpose.msra.mxu0 %v1476
        %1494 = vmatprep.subr.bf16.mxu0 0
        %1495 = vmatpush2.bf16.xpose.msra.mxu0 0
        %1496 = vmatprep.subr.bf16.mxu0 0
        %1497 = vmatpush2.bf16.xpose.msra.mxu0 0
        %1498 = vmatprep.subr.bf16.mxu0 0
        %1499 = vmatpush2.bf16.xpose.msra.mxu0 0
        %1500 = vmatprep.subr.bf16.mxu0 0
        %1501 = vmatpush2.bf16.xpose.msra.mxu0 0
        %1502 = vmatprep.subr.bf16.mxu0 0
        %1503 = vmatpush2.bf16.xpose.msra.mxu0 0
        %1504 = vmatprep.subr.bf16.mxu0 0
        %1505 = vmatpush2.bf16.xpose.msra.mxu0 0
        %1506 = vmatprep.subr.bf16.mxu0 0
        %1507 = vmatpush2.bf16.xpose.msra.mxu0 0
        %1508 = vmatprep.subr.bf16.mxu0 0
        %1509 = vmatpush2.bf16.xpose.msra.mxu0 0
        %1510 = vmatprep.mubr.bf16.mxu0 0
        %1511 = vmatmul.mubr.bf16.gmra.mxu0 %v1473
        %v1512 = vpop.f32.mrf.mxu0
        %v1513 = vadd.f32 0.0, %v1512
        %v1514 = vpop.f32.mrf.mxu0
        %v1515 = vpop.f32.mrf.mxu0
        %v1516 = vpop.f32.mrf.mxu0
        %1517 = vdwg.mxu0
        %v1519 = vsel %vm1195, %v764, 0
        %v1522 = vsel %vm1195, %v979, 0
        %1524 = vmatprep.subr.bf16.mxu0 0
        %1525 = vmatpush1.bf16.xpose.msra.mxu0 0
        %1526 = vmatprep.subr.bf16.mxu0 0
        %1527 = vmatpush1.bf16.xpose.msra.mxu0 0
        %1528 = vmatprep.subr.bf16.mxu0 0
        %1529 = vmatpush1.bf16.xpose.msra.mxu0 0
        %1530 = vmatprep.subr.bf16.mxu0 0
        %1531 = vmatpush1.bf16.xpose.msra.mxu0 0
        %1532 = vmatprep.subr.bf16.mxu0 0
        %1533 = vmatpush1.bf16.xpose.msra.mxu0 0
        %1534 = vmatprep.subr.bf16.mxu0 0
        %1535 = vmatpush1.bf16.xpose.msra.mxu0 0
        %1536 = vmatprep.subr.bf16.mxu0 0
        %1537 = vmatpush1.bf16.xpose.msra.mxu0 0
        %1538 = vmatprep.subr.bf16.mxu0 0
        %1539 = vmatpush1.bf16.xpose.msra.mxu0 %v1522
        %1540 = vmatprep.subr.bf16.mxu0 0
        %1541 = vmatpush2.bf16.xpose.msra.mxu0 0
        %1542 = vmatprep.subr.bf16.mxu0 0
        %1543 = vmatpush2.bf16.xpose.msra.mxu0 0
        %1544 = vmatprep.subr.bf16.mxu0 0
        %1545 = vmatpush2.bf16.xpose.msra.mxu0 0
        %1546 = vmatprep.subr.bf16.mxu0 0
        %1547 = vmatpush2.bf16.xpose.msra.mxu0 0
        %1548 = vmatprep.subr.bf16.mxu0 0
        %1549 = vmatpush2.bf16.xpose.msra.mxu0 0
        %1550 = vmatprep.subr.bf16.mxu0 0
        %1551 = vmatpush2.bf16.xpose.msra.mxu0 0
        %1552 = vmatprep.subr.bf16.mxu0 0
        %1553 = vmatpush2.bf16.xpose.msra.mxu0 0
        %1554 = vmatprep.subr.bf16.mxu0 0
        %1555 = vmatpush2.bf16.xpose.msra.mxu0 0
        %1556 = vmatprep.mubr.bf16.mxu0 0
        %1557 = vmatmul.mubr.bf16.gmra.mxu0 %v1519
        %v1558 = vpop.f32.mrf.mxu0
        %v1559 = vadd.f32 0.0, %v1558
        %v1560 = vpop.f32.mrf.mxu0
        %v1561 = vpop.f32.mrf.mxu0
        %v1562 = vpop.f32.mrf.mxu0
        %1563 = vdwg.mxu0
        %v1564 = vmul.f32 %v1237, 0.25
        %v1565 = vmul.f32 %v1283, 0.25
        %v1566 = vmul.f32 %v1329, 0.25
        %v1567 = vmul.f32 %v1375, 0.25
        %v1568 = vmul.f32 %v1421, 0.25
        %v1569 = vmul.f32 %v1467, 0.25
        %v1570 = vmul.f32 %v1513, 0.25
        %v1571 = vmul.f32 %v1559, 0.25
        %v1572 = vlaneseq
        %v1573 = vshrl.u32 %v1572, 7
        %v1574 = vlaneseq
        %v1575 = vand.u32 %v1574, 127
        %vm1576 = vcmp.le.s32.totalorder %v1575, %v1573
        %v1577 = vsel %vm1576, 1, 0
        %vm1578 = vcmp.eq.s32.totalorder %v1577, 1
        %v1579 = vsel %vm1578, %v1564, -1e+09
        %v1580 = vsel %vm1578, %v1565, -1e+09
        %v1581 = vsel %vm1578, %v1566, -1e+09
        %v1582 = vsel %vm1578, %v1567, -1e+09
        %v1583 = vsel %vm1578, %v1568, -1e+09
        %v1584 = vsel %vm1578, %v1569, -1e+09
        %v1585 = vsel %vm1578, %v1570, -1e+09
        %v1586 = vsel %vm1578, %v1571, -1e+09
        %vm1587 = vcmask 64512
        %v1588 = vsel %vm1587, %v1579, -inf
        %1589 = vmax.xlane.f32.xlu0 %v1588
        %v1590 = vpop.xlane.xlu0 %1589
        %v1591 = vsel %vm1587, %v1580, -inf
        %1592 = vmax.xlane.f32.xlu0 %v1591
        %v1593 = vpop.xlane.xlu0 %1592
        %v1594 = vsel %vm1587, %v1581, -inf
        %1595 = vmax.xlane.f32.xlu0 %v1594
        %v1596 = vpop.xlane.xlu0 %1595
        %v1597 = vsel %vm1587, %v1582, -inf
        %1598 = vmax.xlane.f32.xlu0 %v1597
        %v1599 = vpop.xlane.xlu0 %1598
        %v1600 = vsel %vm1587, %v1583, -inf
        %1601 = vmax.xlane.f32.xlu0 %v1600
        %v1602 = vpop.xlane.xlu0 %1601
        %v1603 = vsel %vm1587, %v1584, -inf
        %1604 = vmax.xlane.f32.xlu0 %v1603
        %v1605 = vpop.xlane.xlu0 %1604
        %v1606 = vsel %vm1587, %v1585, -inf
        %1607 = vmax.xlane.f32.xlu0 %v1606
        %v1608 = vpop.xlane.xlu0 %1607
        %v1609 = vsel %vm1587, %v1586, -inf
        %1610 = vmax.xlane.f32.xlu0 %v1609
        %v1611 = vpop.xlane.xlu0 %1610
        %v1612 = vsub.f32 %v1579, %v1590
        %v1613 = vsub.f32 %v1580, %v1593
        %v1614 = vsub.f32 %v1581, %v1596
        %v1615 = vsub.f32 %v1582, %v1599
        %v1616 = vsub.f32 %v1583, %v1602
        %v1617 = vsub.f32 %v1584, %v1605
        %v1618 = vsub.f32 %v1585, %v1608
        %v1619 = vsub.f32 %v1586, %v1611
        %v1620 = vmul.f32 %v1612, 1.442695
        %v1621 = vpow.pop %v1620
        %v1622 = vmul.f32 %v1613, 1.442695
        %v1623 = vpow.pop %v1622
        %v1624 = vmul.f32 %v1614, 1.442695
        %v1625 = vpow.pop %v1624
        %v1626 = vmul.f32 %v1615, 1.442695
        %v1627 = vpow.pop %v1626
        %v1628 = vmul.f32 %v1616, 1.442695
        %v1629 = vpow.pop %v1628
        %v1630 = vmul.f32 %v1617, 1.442695
        %v1631 = vpow.pop %v1630
        %v1632 = vmul.f32 %v1618, 1.442695
        %v1633 = vpow.pop %v1632
        %v1634 = vmul.f32 %v1619, 1.442695
        %v1635 = vpow.pop %v1634
        %v1636 = vsel %vm1587, %v1621, 0.0
        %1637 = vadd.xlane.f32.xlu0 %v1636
        %v1638 = vpop.xlane.xlu0 %1637
        %v1639 = vsel %vm1587, %v1623, 0.0
        %1640 = vadd.xlane.f32.xlu0 %v1639
        %v1641 = vpop.xlane.xlu0 %1640
        %v1642 = vsel %vm1587, %v1625, 0.0
        %1643 = vadd.xlane.f32.xlu0 %v1642
        %v1644 = vpop.xlane.xlu0 %1643
        %v1645 = vsel %vm1587, %v1627, 0.0
        %1646 = vadd.xlane.f32.xlu0 %v1645
        %v1647 = vpop.xlane.xlu0 %1646
        %v1648 = vsel %vm1587, %v1629, 0.0
        %1649 = vadd.xlane.f32.xlu0 %v1648
        %v1650 = vpop.xlane.xlu0 %1649
        %v1651 = vsel %vm1587, %v1631, 0.0
        %1652 = vadd.xlane.f32.xlu0 %v1651
        %v1653 = vpop.xlane.xlu0 %1652
        %v1654 = vsel %vm1587, %v1633, 0.0
        %1655 = vadd.xlane.f32.xlu0 %v1654
        %v1656 = vpop.xlane.xlu0 %1655
        %v1657 = vsel %vm1587, %v1635, 0.0
        %1658 = vadd.xlane.f32.xlu0 %v1657
        %v1659 = vpop.xlane.xlu0 %1658
        %v1660 = vrcp.pop %v1638
        %v1661 = vrcp.pop %v1641
        %v1662 = vrcp.pop %v1644
        %v1663 = vrcp.pop %v1647
        %v1664 = vrcp.pop %v1650
        %v1665 = vrcp.pop %v1653
        %v1666 = vrcp.pop %v1656
        %v1667 = vrcp.pop %v1659
        %v1668 = vmul.f32 %v1621, %v1660
        %v1669 = vmul.f32 %v1623, %v1661
        %v1670 = vmul.f32 %v1625, %v1662
        %v1671 = vmul.f32 %v1627, %v1663
        %v1672 = vmul.f32 %v1629, %v1664
        %v1673 = vmul.f32 %v1631, %v1665
        %v1674 = vmul.f32 %v1633, %v1666
        %v1675 = vmul.f32 %v1635, %v1667
        %v1676 = vpack.c.bf16 %v1668, %v1668
        %v1677 = vpack.c.bf16 %v1669, %v1669
        %v1678 = vpack.c.bf16 %v1670, %v1670
        %v1679 = vpack.c.bf16 %v1671, %v1671
        %v1680 = vpack.c.bf16 %v1672, %v1672
        %v1681 = vpack.c.bf16 %v1673, %v1673
        %v1682 = vpack.c.bf16 %v1674, %v1674
        %v1683 = vpack.c.bf16 %v1675, %v1675
        %v1685 = vsel %vm1587, %v1676, 0
        %vm1687 = vcmask 1043456
        %v1689 = vsel %vm1687, %v1173, 0
        %1691 = vmatprep.subr.bf16.mxu0 0
        %1692 = vmatpush1.bf16.msra.mxu0 0
        %1693 = vmatprep.subr.bf16.mxu0 0
        %1694 = vmatpush1.bf16.msra.mxu0 0
        %1695 = vmatprep.subr.bf16.mxu0 0
        %1696 = vmatpush1.bf16.msra.mxu0 0
        %1697 = vmatprep.subr.bf16.mxu0 0
        %1698 = vmatpush1.bf16.msra.mxu0 0
        %1699 = vmatprep.subr.bf16.mxu0 0
        %1700 = vmatpush1.bf16.msra.mxu0 0
        %1701 = vmatprep.subr.bf16.mxu0 0
        %1702 = vmatpush1.bf16.msra.mxu0 0
        %1703 = vmatprep.subr.bf16.mxu0 0
        %1704 = vmatpush1.bf16.msra.mxu0 0
        %1705 = vmatprep.subr.bf16.mxu0 0
        %1706 = vmatpush1.bf16.msra.mxu0 %v1689
        %1707 = vmatprep.subr.bf16.mxu0 0
        %1708 = vmatpush2.bf16.msra.mxu0 0
        %1709 = vmatprep.subr.bf16.mxu0 0
        %1710 = vmatpush2.bf16.msra.mxu0 0
        %1711 = vmatprep.subr.bf16.mxu0 0
        %1712 = vmatpush2.bf16.msra.mxu0 0
        %1713 = vmatprep.subr.bf16.mxu0 0
        %1714 = vmatpush2.bf16.msra.mxu0 0
        %1715 = vmatprep.subr.bf16.mxu0 0
        %1716 = vmatpush2.bf16.msra.mxu0 0
        %1717 = vmatprep.subr.bf16.mxu0 0
        %1718 = vmatpush2.bf16.msra.mxu0 0
        %1719 = vmatprep.subr.bf16.mxu0 0
        %1720 = vmatpush2.bf16.msra.mxu0 0
        %1721 = vmatprep.subr.bf16.mxu0 0
        %1722 = vmatpush2.bf16.msra.mxu0 0
        %1723 = vmatprep.mubr.bf16.mxu0 0
        %1724 = vmatmul.mubr.bf16.gmra.mxu0 %v1685
        %v1725 = vpop.f32.mrf.mxu0
        %v1726 = vadd.f32 0.0, %v1725
        %v1727 = vpop.f32.mrf.mxu0
        %v1728 = vpop.f32.mrf.mxu0
        %v1729 = vpop.f32.mrf.mxu0
        %1730 = vdwg.mxu0
        %v1732 = vsel %vm1587, %v1677, 0
        %v1735 = vsel %vm1687, %v1176, 0
        %1737 = vmatprep.subr.bf16.mxu0 0
        %1738 = vmatpush1.bf16.msra.mxu0 0
        %1739 = vmatprep.subr.bf16.mxu0 0
        %1740 = vmatpush1.bf16.msra.mxu0 0
        %1741 = vmatprep.subr.bf16.mxu0 0
        %1742 = vmatpush1.bf16.msra.mxu0 0
        %1743 = vmatprep.subr.bf16.mxu0 0
        %1744 = vmatpush1.bf16.msra.mxu0 0
        %1745 = vmatprep.subr.bf16.mxu0 0
        %1746 = vmatpush1.bf16.msra.mxu0 0
        %1747 = vmatprep.subr.bf16.mxu0 0
        %1748 = vmatpush1.bf16.msra.mxu0 0
        %1749 = vmatprep.subr.bf16.mxu0 0
        %1750 = vmatpush1.bf16.msra.mxu0 0
        %1751 = vmatprep.subr.bf16.mxu0 0
        %1752 = vmatpush1.bf16.msra.mxu0 %v1735
        %1753 = vmatprep.subr.bf16.mxu0 0
        %1754 = vmatpush2.bf16.msra.mxu0 0
        %1755 = vmatprep.subr.bf16.mxu0 0
        %1756 = vmatpush2.bf16.msra.mxu0 0
        %1757 = vmatprep.subr.bf16.mxu0 0
        %1758 = vmatpush2.bf16.msra.mxu0 0
        %1759 = vmatprep.subr.bf16.mxu0 0
        %1760 = vmatpush2.bf16.msra.mxu0 0
        %1761 = vmatprep.subr.bf16.mxu0 0
        %1762 = vmatpush2.bf16.msra.mxu0 0
        %1763 = vmatprep.subr.bf16.mxu0 0
        %1764 = vmatpush2.bf16.msra.mxu0 0
        %1765 = vmatprep.subr.bf16.mxu0 0
        %1766 = vmatpush2.bf16.msra.mxu0 0
        %1767 = vmatprep.subr.bf16.mxu0 0
        %1768 = vmatpush2.bf16.msra.mxu0 0
        %1769 = vmatprep.mubr.bf16.mxu0 0
        %1770 = vmatmul.mubr.bf16.gmra.mxu0 %v1732
        %v1771 = vpop.f32.mrf.mxu0
        %v1772 = vadd.f32 0.0, %v1771
        %v1773 = vpop.f32.mrf.mxu0
        %v1774 = vpop.f32.mrf.mxu0
        %v1775 = vpop.f32.mrf.mxu0
        %1776 = vdwg.mxu0
        %v1778 = vsel %vm1587, %v1678, 0
        %v1781 = vsel %vm1687, %v1179, 0
        %1783 = vmatprep.subr.bf16.mxu0 0
        %1784 = vmatpush1.bf16.msra.mxu0 0
        %1785 = vmatprep.subr.bf16.mxu0 0
        %1786 = vmatpush1.bf16.msra.mxu0 0
        %1787 = vmatprep.subr.bf16.mxu0 0
        %1788 = vmatpush1.bf16.msra.mxu0 0
        %1789 = vmatprep.subr.bf16.mxu0 0
        %1790 = vmatpush1.bf16.msra.mxu0 0
        %1791 = vmatprep.subr.bf16.mxu0 0
        %1792 = vmatpush1.bf16.msra.mxu0 0
        %1793 = vmatprep.subr.bf16.mxu0 0
        %1794 = vmatpush1.bf16.msra.mxu0 0
        %1795 = vmatprep.subr.bf16.mxu0 0
        %1796 = vmatpush1.bf16.msra.mxu0 0
        %1797 = vmatprep.subr.bf16.mxu0 0
        %1798 = vmatpush1.bf16.msra.mxu0 %v1781
        %1799 = vmatprep.subr.bf16.mxu0 0
        %1800 = vmatpush2.bf16.msra.mxu0 0
        %1801 = vmatprep.subr.bf16.mxu0 0
        %1802 = vmatpush2.bf16.msra.mxu0 0
        %1803 = vmatprep.subr.bf16.mxu0 0
        %1804 = vmatpush2.bf16.msra.mxu0 0
        %1805 = vmatprep.subr.bf16.mxu0 0
        %1806 = vmatpush2.bf16.msra.mxu0 0
        %1807 = vmatprep.subr.bf16.mxu0 0
        %1808 = vmatpush2.bf16.msra.mxu0 0
        %1809 = vmatprep.subr.bf16.mxu0 0
        %1810 = vmatpush2.bf16.msra.mxu0 0
        %1811 = vmatprep.subr.bf16.mxu0 0
        %1812 = vmatpush2.bf16.msra.mxu0 0
        %1813 = vmatprep.subr.bf16.mxu0 0
        %1814 = vmatpush2.bf16.msra.mxu0 0
        %1815 = vmatprep.mubr.bf16.mxu0 0
        %1816 = vmatmul.mubr.bf16.gmra.mxu0 %v1778
        %v1817 = vpop.f32.mrf.mxu0
        %v1818 = vadd.f32 0.0, %v1817
        %v1819 = vpop.f32.mrf.mxu0
        %v1820 = vpop.f32.mrf.mxu0
        %v1821 = vpop.f32.mrf.mxu0
        %1822 = vdwg.mxu0
        %v1824 = vsel %vm1587, %v1679, 0
        %v1827 = vsel %vm1687, %v1182, 0
        %1829 = vmatprep.subr.bf16.mxu0 0
        %1830 = vmatpush1.bf16.msra.mxu0 0
        %1831 = vmatprep.subr.bf16.mxu0 0
        %1832 = vmatpush1.bf16.msra.mxu0 0
        %1833 = vmatprep.subr.bf16.mxu0 0
        %1834 = vmatpush1.bf16.msra.mxu0 0
        %1835 = vmatprep.subr.bf16.mxu0 0
        %1836 = vmatpush1.bf16.msra.mxu0 0
        %1837 = vmatprep.subr.bf16.mxu0 0
        %1838 = vmatpush1.bf16.msra.mxu0 0
        %1839 = vmatprep.subr.bf16.mxu0 0
        %1840 = vmatpush1.bf16.msra.mxu0 0
        %1841 = vmatprep.subr.bf16.mxu0 0
        %1842 = vmatpush1.bf16.msra.mxu0 0
        %1843 = vmatprep.subr.bf16.mxu0 0
        %1844 = vmatpush1.bf16.msra.mxu0 %v1827
        %1845 = vmatprep.subr.bf16.mxu0 0
        %1846 = vmatpush2.bf16.msra.mxu0 0
        %1847 = vmatprep.subr.bf16.mxu0 0
        %1848 = vmatpush2.bf16.msra.mxu0 0
        %1849 = vmatprep.subr.bf16.mxu0 0
        %1850 = vmatpush2.bf16.msra.mxu0 0
        %1851 = vmatprep.subr.bf16.mxu0 0
        %1852 = vmatpush2.bf16.msra.mxu0 0
        %1853 = vmatprep.subr.bf16.mxu0 0
        %1854 = vmatpush2.bf16.msra.mxu0 0
        %1855 = vmatprep.subr.bf16.mxu0 0
        %1856 = vmatpush2.bf16.msra.mxu0 0
        %1857 = vmatprep.subr.bf16.mxu0 0
        %1858 = vmatpush2.bf16.msra.mxu0 0
        %1859 = vmatprep.subr.bf16.mxu0 0
        %1860 = vmatpush2.bf16.msra.mxu0 0
        %1861 = vmatprep.mubr.bf16.mxu0 0
        %1862 = vmatmul.mubr.bf16.gmra.mxu0 %v1824
        %v1863 = vpop.f32.mrf.mxu0
        %v1864 = vadd.f32 0.0, %v1863
        %v1865 = vpop.f32.mrf.mxu0
        %v1866 = vpop.f32.mrf.mxu0
        %v1867 = vpop.f32.mrf.mxu0
        %1868 = vdwg.mxu0
        %v1870 = vsel %vm1587, %v1680, 0
        %v1873 = vsel %vm1687, %v1185, 0
        %1875 = vmatprep.subr.bf16.mxu0 0
        %1876 = vmatpush1.bf16.msra.mxu0 0
        %1877 = vmatprep.subr.bf16.mxu0 0
        %1878 = vmatpush1.bf16.msra.mxu0 0
        %1879 = vmatprep.subr.bf16.mxu0 0
        %1880 = vmatpush1.bf16.msra.mxu0 0
        %1881 = vmatprep.subr.bf16.mxu0 0
        %1882 = vmatpush1.bf16.msra.mxu0 0
        %1883 = vmatprep.subr.bf16.mxu0 0
        %1884 = vmatpush1.bf16.msra.mxu0 0
        %1885 = vmatprep.subr.bf16.mxu0 0
        %1886 = vmatpush1.bf16.msra.mxu0 0
        %1887 = vmatprep.subr.bf16.mxu0 0
        %1888 = vmatpush1.bf16.msra.mxu0 0
        %1889 = vmatprep.subr.bf16.mxu0 0
        %1890 = vmatpush1.bf16.msra.mxu0 %v1873
        %1891 = vmatprep.subr.bf16.mxu0 0
        %1892 = vmatpush2.bf16.msra.mxu0 0
        %1893 = vmatprep.subr.bf16.mxu0 0
        %1894 = vmatpush2.bf16.msra.mxu0 0
        %1895 = vmatprep.subr.bf16.mxu0 0
        %1896 = vmatpush2.bf16.msra.mxu0 0
        %1897 = vmatprep.subr.bf16.mxu0 0
        %1898 = vmatpush2.bf16.msra.mxu0 0
        %1899 = vmatprep.subr.bf16.mxu0 0
        %1900 = vmatpush2.bf16.msra.mxu0 0
        %1901 = vmatprep.subr.bf16.mxu0 0
        %1902 = vmatpush2.bf16.msra.mxu0 0
        %1903 = vmatprep.subr.bf16.mxu0 0
        %1904 = vmatpush2.bf16.msra.mxu0 0
        %1905 = vmatprep.subr.bf16.mxu0 0
        %1906 = vmatpush2.bf16.msra.mxu0 0
        %1907 = vmatprep.mubr.bf16.mxu0 0
        %1908 = vmatmul.mubr.bf16.gmra.mxu0 %v1870
        %v1909 = vpop.f32.mrf.mxu0
        %v1910 = vadd.f32 0.0, %v1909
        %v1911 = vpop.f32.mrf.mxu0
        %v1912 = vpop.f32.mrf.mxu0
        %v1913 = vpop.f32.mrf.mxu0
        %1914 = vdwg.mxu0
        %v1916 = vsel %vm1587, %v1681, 0
        %v1919 = vsel %vm1687, %v1188, 0
        %1921 = vmatprep.subr.bf16.mxu0 0
        %1922 = vmatpush1.bf16.msra.mxu0 0
        %1923 = vmatprep.subr.bf16.mxu0 0
        %1924 = vmatpush1.bf16.msra.mxu0 0
        %1925 = vmatprep.subr.bf16.mxu0 0
        %1926 = vmatpush1.bf16.msra.mxu0 0
        %1927 = vmatprep.subr.bf16.mxu0 0
        %1928 = vmatpush1.bf16.msra.mxu0 0
        %1929 = vmatprep.subr.bf16.mxu0 0
        %1930 = vmatpush1.bf16.msra.mxu0 0
        %1931 = vmatprep.subr.bf16.mxu0 0
        %1932 = vmatpush1.bf16.msra.mxu0 0
        %1933 = vmatprep.subr.bf16.mxu0 0
        %1934 = vmatpush1.bf16.msra.mxu0 0
        %1935 = vmatprep.subr.bf16.mxu0 0
        %1936 = vmatpush1.bf16.msra.mxu0 %v1919
        %1937 = vmatprep.subr.bf16.mxu0 0
        %1938 = vmatpush2.bf16.msra.mxu0 0
        %1939 = vmatprep.subr.bf16.mxu0 0
        %1940 = vmatpush2.bf16.msra.mxu0 0
        %1941 = vmatprep.subr.bf16.mxu0 0
        %1942 = vmatpush2.bf16.msra.mxu0 0
        %1943 = vmatprep.subr.bf16.mxu0 0
        %1944 = vmatpush2.bf16.msra.mxu0 0
        %1945 = vmatprep.subr.bf16.mxu0 0
        %1946 = vmatpush2.bf16.msra.mxu0 0
        %1947 = vmatprep.subr.bf16.mxu0 0
        %1948 = vmatpush2.bf16.msra.mxu0 0
        %1949 = vmatprep.subr.bf16.mxu0 0
        %1950 = vmatpush2.bf16.msra.mxu0 0
        %1951 = vmatprep.subr.bf16.mxu0 0
        %1952 = vmatpush2.bf16.msra.mxu0 0
        %1953 = vmatprep.mubr.bf16.mxu0 0
        %1954 = vmatmul.mubr.bf16.gmra.mxu0 %v1916
        %v1955 = vpop.f32.mrf.mxu0
        %v1956 = vadd.f32 0.0, %v1955
        %v1957 = vpop.f32.mrf.mxu0
        %v1958 = vpop.f32.mrf.mxu0
        %v1959 = vpop.f32.mrf.mxu0
        %1960 = vdwg.mxu0
        %v1962 = vsel %vm1587, %v1682, 0
        %v1965 = vsel %vm1687, %v1191, 0
        %1967 = vmatprep.subr.bf16.mxu0 0
        %1968 = vmatpush1.bf16.msra.mxu0 0
        %1969 = vmatprep.subr.bf16.mxu0 0
        %1970 = vmatpush1.bf16.msra.mxu0 0
        %1971 = vmatprep.subr.bf16.mxu0 0
        %1972 = vmatpush1.bf16.msra.mxu0 0
        %1973 = vmatprep.subr.bf16.mxu0 0
        %1974 = vmatpush1.bf16.msra.mxu0 0
        %1975 = vmatprep.subr.bf16.mxu0 0
        %1976 = vmatpush1.bf16.msra.mxu0 0
        %1977 = vmatprep.subr.bf16.mxu0 0
        %1978 = vmatpush1.bf16.msra.mxu0 0
        %1979 = vmatprep.subr.bf16.mxu0 0
        %1980 = vmatpush1.bf16.msra.mxu0 0
        %1981 = vmatprep.subr.bf16.mxu0 0
        %1982 = vmatpush1.bf16.msra.mxu0 %v1965
        %1983 = vmatprep.subr.bf16.mxu0 0
        %1984 = vmatpush2.bf16.msra.mxu0 0
        %1985 = vmatprep.subr.bf16.mxu0 0
        %1986 = vmatpush2.bf16.msra.mxu0 0
        %1987 = vmatprep.subr.bf16.mxu0 0
        %1988 = vmatpush2.bf16.msra.mxu0 0
        %1989 = vmatprep.subr.bf16.mxu0 0
        %1990 = vmatpush2.bf16.msra.mxu0 0
        %1991 = vmatprep.subr.bf16.mxu0 0
        %1992 = vmatpush2.bf16.msra.mxu0 0
        %1993 = vmatprep.subr.bf16.mxu0 0
        %1994 = vmatpush2.bf16.msra.mxu0 0
        %1995 = vmatprep.subr.bf16.mxu0 0
        %1996 = vmatpush2.bf16.msra.mxu0 0
        %1997 = vmatprep.subr.bf16.mxu0 0
        %1998 = vmatpush2.bf16.msra.mxu0 0
        %1999 = vmatprep.mubr.bf16.mxu0 0
        %2000 = vmatmul.mubr.bf16.gmra.mxu0 %v1962
        %v2001 = vpop.f32.mrf.mxu0
        %v2002 = vadd.f32 0.0, %v2001
        %v2003 = vpop.f32.mrf.mxu0
        %v2004 = vpop.f32.mrf.mxu0
        %v2005 = vpop.f32.mrf.mxu0
        %2006 = vdwg.mxu0
        %v2008 = vsel %vm1587, %v1683, 0
        %v2011 = vsel %vm1687, %v1194, 0
        %2013 = vmatprep.subr.bf16.mxu0 0
        %2014 = vmatpush1.bf16.msra.mxu0 0
        %2015 = vmatprep.subr.bf16.mxu0 0
        %2016 = vmatpush1.bf16.msra.mxu0 0
        %2017 = vmatprep.subr.bf16.mxu0 0
        %2018 = vmatpush1.bf16.msra.mxu0 0
        %2019 = vmatprep.subr.bf16.mxu0 0
        %2020 = vmatpush1.bf16.msra.mxu0 0
        %2021 = vmatprep.subr.bf16.mxu0 0
        %2022 = vmatpush1.bf16.msra.mxu0 0
        %2023 = vmatprep.subr.bf16.mxu0 0
        %2024 = vmatpush1.bf16.msra.mxu0 0
        %2025 = vmatprep.subr.bf16.mxu0 0
        %2026 = vmatpush1.bf16.msra.mxu0 0
        %2027 = vmatprep.subr.bf16.mxu0 0
        %2028 = vmatpush1.bf16.msra.mxu0 %v2011
        %2029 = vmatprep.subr.bf16.mxu0 0
        %2030 = vmatpush2.bf16.msra.mxu0 0
        %2031 = vmatprep.subr.bf16.mxu0 0
        %2032 = vmatpush2.bf16.msra.mxu0 0
        %2033 = vmatprep.subr.bf16.mxu0 0
        %2034 = vmatpush2.bf16.msra.mxu0 0
        %2035 = vmatprep.subr.bf16.mxu0 0
        %2036 = vmatpush2.bf16.msra.mxu0 0
        %2037 = vmatprep.subr.bf16.mxu0 0
        %2038 = vmatpush2.bf16.msra.mxu0 0
        %2039 = vmatprep.subr.bf16.mxu0 0
        %2040 = vmatpush2.bf16.msra.mxu0 0
        %2041 = vmatprep.subr.bf16.mxu0 0
        %2042 = vmatpush2.bf16.msra.mxu0 0
        %2043 = vmatprep.subr.bf16.mxu0 0
        %2044 = vmatpush2.bf16.msra.mxu0 0
        %2045 = vmatprep.mubr.bf16.mxu0 0
        %2046 = vmatmul.mubr.bf16.gmra.mxu0 %v2008
        %v2047 = vpop.f32.mrf.mxu0
        %v2048 = vadd.f32 0.0, %v2047
        %v2049 = vpop.f32.mrf.mxu0
        %v2050 = vpop.f32.mrf.mxu0
        %v2051 = vpop.f32.mrf.mxu0
        %2052 = vdwg.mxu0
        %v2053 = vpack.c.bf16 %v1726, %v1726
        %v2054 = vpack.c.bf16 %v1772, %v1772
        %v2055 = vpack.c.bf16 %v1818, %v1818
        %v2056 = vpack.c.bf16 %v1864, %v1864
        %v2057 = vpack.c.bf16 %v1910, %v1910
        %v2058 = vpack.c.bf16 %v1956, %v1956
        %v2059 = vpack.c.bf16 %v2002, %v2002
        %v2060 = vpack.c.bf16 %v2048, %v2048
        %v2061 = vcombine.low %v2053, %v2057
        %v2063 = vunpack.c.l.s4 1983009808
        %v2064 = vunpack.c.0.s8 %v2063
        %v2065 = vlaneseq
        %v2066 = vshrl.u32 %v2065, 7
        %v2067 = vsub.s32 %v2064, %v2066
        %v2068 = vrot.slane %v2061, %v2067
        %v2069 = vcombine.low %v2055, %v2059
        %v2071 = vunpack.c.l.s4 1983009808
        %v2072 = vunpack.c.0.s8 %v2071
        %v2073 = vlaneseq
        %v2074 = vshrl.u32 %v2073, 7
        %v2075 = vsub.s32 %v2072, %v2074
        %v2076 = vrot.slane %v2069, %v2075
        %v2077 = vcombine.low %v2068, %v2076
        %v2078 = vcombine.high %v2068, %v2076
        %v2080 = vunpack.c.l.s4 1934713408
        %v2081 = vunpack.c.0.s8 %v2080
        %v2082 = vlaneseq
        %v2083 = vshrl.u32 %v2082, 7
        %v2084 = vsub.s32 %v2081, %v2083
        %v2085 = vrot.slane %v2077, %v2084
        %v2087 = vunpack.c.l.s4 1934713408
        %v2088 = vunpack.c.0.s8 %v2087
        %v2089 = vlaneseq
        %v2090 = vshrl.u32 %v2089, 7
        %v2091 = vsub.s32 %v2088, %v2090
        %v2092 = vrot.slane %v2078, %v2091
        %v2093 = vcombine.high %v2085, 0
        %v2094 = vcombine.high %v2092, 0
        %v2095 = vcombine.low %v2054, %v2058
        %v2097 = vunpack.c.l.s4 1983009808
        %v2098 = vunpack.c.0.s8 %v2097
        %v2099 = vlaneseq
        %v2100 = vshrl.u32 %v2099, 7
        %v2101 = vsub.s32 %v2098, %v2100
        %v2102 = vrot.slane %v2095, %v2101
        %v2103 = vcombine.low %v2056, %v2060
        %v2105 = vunpack.c.l.s4 1983009808
        %v2106 = vunpack.c.0.s8 %v2105
        %v2107 = vlaneseq
        %v2108 = vshrl.u32 %v2107, 7
        %v2109 = vsub.s32 %v2106, %v2108
        %v2110 = vrot.slane %v2103, %v2109
        %v2111 = vcombine.low %v2102, %v2110
        %v2112 = vcombine.high %v2102, %v2110
        %v2114 = vunpack.c.l.s4 1934713408
        %v2115 = vunpack.c.0.s8 %v2114
        %v2116 = vlaneseq
        %v2117 = vshrl.u32 %v2116, 7
        %v2118 = vsub.s32 %v2115, %v2117
        %v2119 = vrot.slane %v2111, %v2118
        %v2121 = vunpack.c.l.s4 1934713408
        %v2122 = vunpack.c.0.s8 %v2121
        %v2123 = vlaneseq
        %v2124 = vshrl.u32 %v2123, 7
        %v2125 = vsub.s32 %v2122, %v2124
        %v2126 = vrot.slane %v2112, %v2125
        %v2127 = vcombine.high %v2119, 0
        %v2128 = vcombine.high %v2126, 0
        %v2131 = vpack.i.b16 %v2119, %v2085
        %v2133 = vshrl.u32 %v2085, 16
        %v2134 = vshrl.u32 %v2119, 16
        %v2135 = vpack.i.b16 %v2134, %v2133
        %v2139 = vpack.i.b16 %v2127, %v2093
        %v2141 = vshrl.u32 %v2093, 16
        %v2142 = vshrl.u32 %v2127, 16
        %v2143 = vpack.i.b16 %v2142, %v2141
        %v2147 = vpack.i.b16 %v2126, %v2092
        %v2149 = vshrl.u32 %v2092, 16
        %v2150 = vshrl.u32 %v2126, 16
        %v2151 = vpack.i.b16 %v2150, %v2149
        %v2155 = vpack.i.b16 %v2128, %v2094
        %v2157 = vshrl.u32 %v2094, 16
        %v2158 = vshrl.u32 %v2128, 16
        %v2159 = vpack.i.b16 %v2158, %v2157
        %v2161 = vcombine.low %v2131, %v2147
        %v2163 = vunpack.c.l.s4 1983009808
        %v2164 = vunpack.c.0.s8 %v2163
        %v2165 = vlaneseq
        %v2166 = vshrl.u32 %v2165, 7
        %v2167 = vsub.s32 %v2164, %v2166
        %v2168 = vrot.slane %v2161, %v2167
        %v2169 = vcombine.low %v2139, %v2155
        %v2171 = vunpack.c.l.s4 1983009808
        %v2172 = vunpack.c.0.s8 %v2171
        %v2173 = vlaneseq
        %v2174 = vshrl.u32 %v2173, 7
        %v2175 = vsub.s32 %v2172, %v2174
        %v2176 = vrot.slane %v2169, %v2175
        %v2177 = vcombine.low %v2168, %v2176
        %v2178 = vcombine.high %v2168, %v2176
        %v2180 = vunpack.c.l.s4 1934713408
        %v2181 = vunpack.c.0.s8 %v2180
        %v2182 = vlaneseq
        %v2183 = vshrl.u32 %v2182, 7
        %v2184 = vsub.s32 %v2181, %v2183
        %v2185 = vrot.slane %v2177, %v2184
        %v2187 = vunpack.c.l.s4 1934713408
        %v2188 = vunpack.c.0.s8 %v2187
        %v2189 = vlaneseq
        %v2190 = vshrl.u32 %v2189, 7
        %v2191 = vsub.s32 %v2188, %v2190
        %v2192 = vrot.slane %v2178, %v2191
        %v2193 = vcombine.high %v2185, 0
        %v2194 = vcombine.high %v2192, 0
        %v2195 = vcombine.low %v2135, %v2151
        %v2197 = vunpack.c.l.s4 1983009808
        %v2198 = vunpack.c.0.s8 %v2197
        %v2199 = vlaneseq
        %v2200 = vshrl.u32 %v2199, 7
        %v2201 = vsub.s32 %v2198, %v2200
        %v2202 = vrot.slane %v2195, %v2201
        %v2203 = vcombine.low %v2143, %v2159
        %v2205 = vunpack.c.l.s4 1983009808
        %v2206 = vunpack.c.0.s8 %v2205
        %v2207 = vlaneseq
        %v2208 = vshrl.u32 %v2207, 7
        %v2209 = vsub.s32 %v2206, %v2208
        %v2210 = vrot.slane %v2203, %v2209
        %v2211 = vcombine.low %v2202, %v2210
        %v2212 = vcombine.high %v2202, %v2210
        %v2214 = vunpack.c.l.s4 1934713408
        %v2215 = vunpack.c.0.s8 %v2214
        %v2216 = vlaneseq
        %v2217 = vshrl.u32 %v2216, 7
        %v2218 = vsub.s32 %v2215, %v2217
        %v2219 = vrot.slane %v2211, %v2218
        %v2221 = vunpack.c.l.s4 1934713408
        %v2222 = vunpack.c.0.s8 %v2221
        %v2223 = vlaneseq
        %v2224 = vshrl.u32 %v2223, 7
        %v2225 = vsub.s32 %v2222, %v2224
        %v2226 = vrot.slane %v2212, %v2225
        %v2227 = vcombine.high %v2219, 0
        %v2228 = vcombine.high %v2226, 0
        %v2231 = vpack.i.b16 %v2219, %v2185
        %v2232 = vshrl.u32 %v2185, 16
        %v2233 = vshrl.u32 %v2219, 16
        %v2234 = vpack.i.b16 %v2233, %v2232
        %v2237 = vpack.i.b16 %v2227, %v2193
        %v2238 = vshrl.u32 %v2193, 16
        %v2239 = vshrl.u32 %v2227, 16
        %v2240 = vpack.i.b16 %v2239, %v2238
        %v2243 = vpack.i.b16 %v2226, %v2192
        %v2244 = vshrl.u32 %v2192, 16
        %v2245 = vshrl.u32 %v2226, 16
        %v2246 = vpack.i.b16 %v2245, %v2244
        %v2249 = vpack.i.b16 %v2228, %v2194
        %v2250 = vshrl.u32 %v2194, 16
        %v2251 = vshrl.u32 %v2228, 16
        %v2252 = vpack.i.b16 %v2251, %v2250
        %2253 = vrot.lane.b32.xlu0 %v2234, 16
        %v2254 = vpop.permute.xlu0 %2253
        %2255 = vrot.lane.b32.xlu0 %v2237, 32
        %v2256 = vpop.permute.xlu0 %2255
        %2257 = vrot.lane.b32.xlu0 %v2240, 48
        %v2258 = vpop.permute.xlu0 %2257
        %2259 = vrot.lane.b32.xlu0 %v2243, 64
        %v2260 = vpop.permute.xlu0 %2259
        %2261 = vrot.lane.b32.xlu0 %v2246, 80
        %v2262 = vpop.permute.xlu0 %2261
        %2263 = vrot.lane.b32.xlu0 %v2249, 96
        %v2264 = vpop.permute.xlu0 %2263
        %2265 = vrot.lane.b32.xlu0 %v2252, 112
        %v2266 = vpop.permute.xlu0 %2265
        %v2269 = vsel %vm1195, %v2231, %v2254
        %vm2270 = vcmask 261120
        %v2272 = vsel %vm2270, %v2269, %v2256
        %vm2273 = vcmask 392192
        %v2275 = vsel %vm2273, %v2272, %v2258
        %vm2276 = vcmask 523264
        %v2278 = vsel %vm2276, %v2275, %v2260
        %vm2279 = vcmask 654336
        %v2281 = vsel %vm2279, %v2278, %v2262
        %vm2282 = vcmask 785408
        %v2284 = vsel %vm2282, %v2281, %v2264
        %vm2285 = vcmask 916480
        %v2287 = vsel %vm2285, %v2284, %v2266
        %v2289 = vld [vmem:[#allocation2] sm:$0xf]
        %v2290 = vld [vmem:[#allocation2 + $0x4] sm:$0xf]
        %v2291 = vld [vmem:[#allocation2 + $0x8] sm:$0xf]
        %v2292 = vld [vmem:[#allocation2 + $0xc] sm:$0xf]
        %v2293 = vld [vmem:[#allocation2 + $0x10] sm:$0xf]
        %v2294 = vld [vmem:[#allocation2 + $0x14] sm:$0xf]
        %v2295 = vld [vmem:[#allocation2 + $0x18] sm:$0xf]
        %v2296 = vld [vmem:[#allocation2 + $0x1c] sm:$0xf]
        %v2297 = vld [vmem:[#allocation2 + $0x20] sm:$0xf]
        %v2298 = vld [vmem:[#allocation2 + $0x24] sm:$0xf]
        %v2299 = vld [vmem:[#allocation2 + $0x28] sm:$0xf]
        %v2300 = vld [vmem:[#allocation2 + $0x2c] sm:$0xf]
        %v2301 = vld [vmem:[#allocation2 + $0x30] sm:$0xf]
        %v2302 = vld [vmem:[#allocation2 + $0x34] sm:$0xf]
        %v2303 = vld [vmem:[#allocation2 + $0x38] sm:$0xf]
        %v2304 = vld [vmem:[#allocation2 + $0x3c] sm:$0xf]
        %v2305 = vld [vmem:[%s4] sm:$0x1]
        %v2307 = vlaneseq
        %v2308 = vshrl.u32 %v2307, 7
        %v2309 = vsub.s32 0, %v2308
        %v2310 = vrot.slane %v2305, %v2309
        %v2328 = vunpack.c.l.b16 %v2289
        %v2329 = vunpack.c.l.b16 %v2290
        %v2330 = vunpack.c.l.b16 %v2291
        %v2331 = vunpack.c.l.b16 %v2292
        %v2332 = vunpack.c.l.b16 %v2293
        %v2333 = vunpack.c.l.b16 %v2294
        %v2334 = vunpack.c.l.b16 %v2295
        %v2335 = vunpack.c.l.b16 %v2296
        %v2336 = vunpack.c.l.b16 %v2297
        %v2337 = vunpack.c.l.b16 %v2298
        %v2338 = vunpack.c.l.b16 %v2299
        %v2339 = vunpack.c.l.b16 %v2300
        %v2340 = vunpack.c.l.b16 %v2301
        %v2341 = vunpack.c.l.b16 %v2302
        %v2342 = vunpack.c.l.b16 %v2303
        %v2343 = vunpack.c.l.b16 %v2304
        %v2344 = vpack.c.b16 %v2329, %v2328
        %v2345 = vpack.c.b16 %v2331, %v2330
        %v2346 = vpack.c.b16 %v2333, %v2332
        %v2347 = vpack.c.b16 %v2335, %v2334
        %v2348 = vpack.c.b16 %v2337, %v2336
        %v2349 = vpack.c.b16 %v2339, %v2338
        %v2350 = vpack.c.b16 %v2341, %v2340
        %v2351 = vpack.c.b16 %v2343, %v2342
        %2360 = vmatprep.subr.bf16.mxu0 0
        %2361 = vmatpush1.bf16.msra.mxu0 %v2351
        %2362 = vmatprep.subr.bf16.mxu0 0
        %2363 = vmatpush1.bf16.msra.mxu0 %v2350
        %2364 = vmatprep.subr.bf16.mxu0 0
        %2365 = vmatpush1.bf16.msra.mxu0 %v2349
        %2366 = vmatprep.subr.bf16.mxu0 0
        %2367 = vmatpush1.bf16.msra.mxu0 %v2348
        %2368 = vmatprep.subr.bf16.mxu0 0
        %2369 = vmatpush1.bf16.msra.mxu0 %v2347
        %2370 = vmatprep.subr.bf16.mxu0 0
        %2371 = vmatpush1.bf16.msra.mxu0 %v2346
        %2372 = vmatprep.subr.bf16.mxu0 0
        %2373 = vmatpush1.bf16.msra.mxu0 %v2345
        %2374 = vmatprep.subr.bf16.mxu0 0
        %2375 = vmatpush1.bf16.msra.mxu0 %v2344
        %2376 = vmatprep.subr.bf16.mxu0 0
        %2377 = vmatpush2.bf16.msra.mxu0 0
        %2378 = vmatprep.subr.bf16.mxu0 0
        %2379 = vmatpush2.bf16.msra.mxu0 0
        %2380 = vmatprep.subr.bf16.mxu0 0
        %2381 = vmatpush2.bf16.msra.mxu0 0
        %2382 = vmatprep.subr.bf16.mxu0 0
        %2383 = vmatpush2.bf16.msra.mxu0 0
        %2384 = vmatprep.subr.bf16.mxu0 0
        %2385 = vmatpush2.bf16.msra.mxu0 0
        %2386 = vmatprep.subr.bf16.mxu0 0
        %2387 = vmatpush2.bf16.msra.mxu0 0
        %2388 = vmatprep.subr.bf16.mxu0 0
        %2389 = vmatpush2.bf16.msra.mxu0 0
        %2390 = vmatprep.subr.bf16.mxu0 0
        %2391 = vmatpush2.bf16.msra.mxu0 0
        %2392 = vmatprep.mubr.bf16.mxu0 0
        %2393 = vmatmul.mubr.bf16.gmra.mxu0 %v2287
        %v2394 = vpop.f32.mrf.mxu0
        %v2395 = vadd.f32 %v2310, %v2394
        %v2396 = vpop.f32.mrf.mxu0
        %v2397 = vpop.f32.mrf.mxu0
        %v2398 = vpop.f32.mrf.mxu0
        %2399 = vdwg.mxu0
        %v2400 = vadd.f32 %v291, %v2395
        %2401 = vadd.xlane.f32.xlu0 %v2400
        %v2402 = vpop.xlane.xlu0 %2401
        %v2403 = vrcp.pop 128.0
        %v2404 = vmul.f32 %v2402, %v2403
        %v2405 = vsub.f32 %v2400, %v2404
        %v2406 = vmul.f32 %v2405, %v2405
        %2407 = vadd.xlane.f32.xlu0 %v2406
        %v2408 = vpop.xlane.xlu0 %2407
        %v2409 = vmul.f32 %v2408, %v2403
        %v2410 = vadd.f32 %v2409, 1e-05
        %v2411 = vrsqrt.pop %v2410
        %v2412 = vmul.f32 %v2405, %v2411
        %v2413 = vld [vmem:[%s5] sm:$0x1]
        %v2415 = vlaneseq
        %v2416 = vshrl.u32 %v2415, 7
        %v2417 = vsub.s32 0, %v2416
        %v2418 = vrot.slane %v2413, %v2417
        %v2420 = vmul.f32 %v2412, %v2418
        %v2421 = vld [vmem:[%s6] sm:$0x1]
        %v2423 = vlaneseq
        %v2424 = vshrl.u32 %v2423, 7
        %v2425 = vsub.s32 0, %v2424
        %v2426 = vrot.slane %v2421, %v2425
        %v2428 = vadd.f32 %v2420, %v2426
        %v2429 = vpack.c.bf16 %v2428, %v2428
        %2430 = vst [vmem:[%s288] sm:$0xf] %v2429
        %p2431 = scmp.lt.s32.totalorder %s19, 1
        %s2432 = scalar_select %p2431, %s19, 1
        %s2433 = smul.addr %s2432, 4
        %s2434 = scalar_lea.vmem %s7, %s2433
        // Predicated region
        $region53: #{decoder_forward.7} parent=47 // pred_check
          %p2435 = pneg %p189
        $region54: #{decoder_forward.7} parent=47 // pred_check_branch
          %2437 = sbr.rel (%p2435) target = $region56
        $region55: #{decoder_forward.7} parent=47 // pred_region
          _
        $region56: #{decoder_forward.7} parent=47 // pred_fallthru
          _
      $region48: #{decoder_forward.7} parent=5 // pred_fallthru
        _
      %p2438 = scmp.le.s32.totalorder 2, %s14
      // Predicated region
      $region57: #{decoder_forward.7} parent=5 // pred_check
        %p2439 = pneg %p2438
      $region58: #{decoder_forward.7} parent=5 // pred_check_branch
        %2441 = sbr.rel (%p2439) target = $region60
      $region59: #{decoder_forward.7} parent=5 // pred_region
        %s2442 = ssub.s32 %s14, 2
        // Predicated region
        $region61: #{decoder_forward.7} parent=59 // pred_check
          %p2443 = pneg %p195
        $region62: #{decoder_forward.7} parent=59 // pred_check_branch
          %2445 = sbr.rel (%p2443) target = $region64
        $region63: #{decoder_forward.7} parent=59 // pred_region
          %p2446 = scmp.lt.s32.totalorder %s20, 1
          %s2447 = scalar_select %p2446, %s20, 1
          %s2448 = smul.addr %s2447, 4
          %s2449 = scalar_lea.vmem %s7, %s2448
        $region64: #{decoder_forward.7} parent=59 // pred_fallthru
          _
      $region60: #{decoder_forward.7} parent=5 // pred_fallthru
        _
    $region6: #{decoder_forward.7} parent=1 // loop_footer
      %s18 = sadd.s32 1, %s14
    $region7: #{decoder_forward.7} parent=1 // loop_footer_branch
      %13 = sbr.rel target = $region3
    $region8: #{decoder_forward.7} parent=1 // loop_exit
      _
    %2450 = vsyncpa [#allocation3], 1
    %s2451 = scalar_lea.sflag [#allocation3], 1
    %2452 = vsyncpa %s2451, 1

// kernel: decoder_forward.8
$region0: #{decoder_forward.8}
  #allocation0 [shape = 'u32[]', space=smem, size = 0x4, offset = 0x4, fixed_abs, tag = 'smem constant byte address 0x4 - core index']
  #allocation1 [shape = 'u32[144,128]{1,0:T(1,128)}', space=vmem, size = 0x12000, scoped, tag = 'internal scratch']
  %s0 = inlined_call_operand.vmem [shape: bf16[2,8,128], index: 0, kind: input, shape index: {}]
  %s1 = inlined_call_operand.vmem [shape: bf16[2,8,128], index: 1, kind: input, shape index: {}]
  %s2 = inlined_call_operand.hbm [shape: bf16[128,128], index: 2, kind: input, shape index: {}]
  %s3 = inlined_call_operand.vmem [shape: f32[1,128], index: 3, kind: input, shape index: {}]
  %s4 = inlined_call_operand.vmem [shape: bf16[128,256], index: 4, kind: input, shape index: {}]
  %s5 = inlined_call_operand.vmem [shape: f32[1,256], index: 5, kind: input, shape index: {}]
  %s6 = inlined_call_operand.hbm [shape: bf16[128,128], index: 6, kind: input, shape index: {}]
  %s7 = inlined_call_operand.vmem [shape: f32[1,128], index: 7, kind: input, shape index: {}]
  %s8 = inlined_call_operand.vmem [shape: f32[1,128], index: 8, kind: input, shape index: {}]
  %s9 = inlined_call_operand.vmem [shape: f32[1,128], index: 9, kind: input, shape index: {}]
  %s10 = inlined_call_operand.vmem [shape: bf16[2,8,128], index: 10, kind: output, shape index: {}]
  %s11 = sld [smem:[#allocation0]]
  $region81: #{decoder_forward.8} parent=0
    _
  %s13 = ssub.s32 1, %s11
  %s14 = scalar_select 0, %s13, %s11
  $region1: #{decoder_forward.8} parent=0
    #allocation2 [shape = 'u8[32768]{0}', space=vmem, size = 0x8000, scoped, tag = 'input window, operand 2, single buffered']
    #allocation3 [shape = 's32[2]{0}', space=sflag, size = 0x8, scoped, tag = 'scoped memory for decoder_forward.8']
    #allocation4 [shape = 'u8[32768]{0}', space=vmem, size = 0x8000, scoped, tag = 'input window, operand 6, single buffered']
    #allocation5 [shape = 's32[1]{0}', space=sflag, size = 0x4, scoped, tag = 'scoped memory for decoder_forward.8']
    %15 = vsyncpa [#allocation3], 0
    %16 = vsyncpa [#allocation5], 0
    loop: start=0, step=1, limit=4
    $region2: #{decoder_forward.8} parent=1 // loop_pre_header
      _
    $region3: #{decoder_forward.8} parent=1 // loop_header
      %s18 = sphi 0, %s22
      %p19 = scmp.ge.s32.totalorder %s18, 4
      %s28 = sphi 0, %s30
      %s31 = sphi 0, %s28
      %s32 = sphi 0, %s31
      %s48 = sphi 0, %s32
      %s54 = sphi 0, %s56
      %s57 = sphi 0, %s54
      %s58 = sphi 0, %s57
      %s74 = sphi 0, %s58
      %s78 = sphi 0, %s78
      %s80 = sphi 0, %s78
      %s81 = sphi 0, %s80
      %s95 = sphi 0, %s81
      %s99 = sphi 0, %s99
      %s101 = sphi 0, %s99
      %s102 = sphi 0, %s101
      %s116 = sphi 0, %s102
      %s120 = sphi 0, %s120
      %s122 = sphi 0, %s120
      %s123 = sphi 0, %s122
      %s137 = sphi 0, %s123
      %s141 = sphi 0, %s141
      %s143 = sphi 0, %s141
      %s144 = sphi 0, %s143
      %s158 = sphi 0, %s144
      %s162 = sphi 0, %s162
      %s164 = sphi 0, %s162
      %s165 = sphi 0, %s164
      %s179 = sphi 0, %s165
      %s183 = sphi 0, %s183
      %s185 = sphi 0, %s183
      %s186 = sphi 0, %s185
      %s200 = sphi 0, %s186
      %s204 = sphi 0, %s204
      %s206 = sphi 0, %s204
      %s207 = sphi 0, %s206
      %s221 = sphi 0, %s207
      %s225 = sphi 0, %s225
      %s227 = sphi 0, %s225
      %s228 = sphi 0, %s227
      %s242 = sphi 0, %s228
      %s248 = sphi 0, %s250
      %s251 = sphi 0, %s248
      %s252 = sphi 0, %s251
      %s268 = sphi 0, %s252
    $region4: #{decoder_forward.8} parent=1 // loop_header_branch
      %21 = sbr.rel (%p19) target = $region8
    $region5: #{decoder_forward.8} parent=1 // loop_body
      %s23 = ssub.s32 %s18, 1
      %s24 = ssub.s32 %s18, 2
      %s25 = sadd.s32 %s18, 1
      %s26 = ssub.s32 %s18, %s25
      %p27 = scmp.eq.s32.totalorder %s26, 0
      %s29 = sadd.s32 %s28, 1
      %s30 = scalar_select %p27, %s28, %s29
      %p33 = pneg %p27
      %p34 = scmp.eq.s32.totalorder %s18, 1
      %p35 = por %p33, %p34
      %p36 = scmp.ne.s32.totalorder %s28, %s31
      %p37 = scmp.eq.s32.totalorder %s18, 0
      %p38 = por %p36, %p37
      %p39 = scmp.ne.s32.totalorder %s28, %s31
      %p40 = scmp.eq.s32.totalorder %s23, 1
      %p41 = por %p39, %p40
      %p42 = scmp.ne.s32.totalorder %s31, %s32
      %p43 = scmp.eq.s32.totalorder %s23, 0
      %p44 = por %p42, %p43
      %p45 = scmp.ne.s32.totalorder %s31, %s32
      %p46 = scmp.eq.s32.totalorder %s24, 1
      %p47 = por %p45, %p46
      %p49 = scmp.ne.s32.totalorder %s32, %s48
      %p50 = scmp.eq.s32.totalorder %s24, 0
      %p51 = por %p49, %p50
      %s52 = ssub.s32 %s18, %s25
      %p53 = scmp.eq.s32.totalorder %s52, 0
      %s55 = sadd.s32 %s54, 1
      %s56 = scalar_select %p53, %s54, %s55
      %p59 = pneg %p53
      %p60 = scmp.eq.s32.totalorder %s18, 1
      %p61 = por %p59, %p60
      %p62 = scmp.ne.s32.totalorder %s54, %s57
      %p63 = scmp.eq.s32.totalorder %s18, 0
      %p64 = por %p62, %p63
      %p65 = scmp.ne.s32.totalorder %s54, %s57
      %p66 = scmp.eq.s32.totalorder %s23, 1
      %p67 = por %p65, %p66
      %p68 = scmp.ne.s32.totalorder %s57, %s58
      %p69 = scmp.eq.s32.totalorder %s23, 0
      %p70 = por %p68, %p69
      %p71 = scmp.ne.s32.totalorder %s57, %s58
      %p72 = scmp.eq.s32.totalorder %s24, 1
      %p73 = por %p71, %p72
      %p75 = scmp.ne.s32.totalorder %s58, %s74
      %p76 = scmp.eq.s32.totalorder %s24, 0
      %p77 = por %p75, %p76
      %s79 = sadd.s32 %s78, 1
      %p82 = scmp.eq.s32.totalorder %s18, 1
      %p83 = scmp.ne.s32.totalorder %s78, %s80
      %p84 = scmp.eq.s32.totalorder %s18, 0
      %p85 = por %p83, %p84
      %p86 = scmp.ne.s32.totalorder %s78, %s80
      %p87 = scmp.eq.s32.totalorder %s23, 1
      %p88 = por %p86, %p87
      %p89 = scmp.ne.s32.totalorder %s80, %s81
      %p90 = scmp.eq.s32.totalorder %s23, 0
      %p91 = por %p89, %p90
      %p92 = scmp.ne.s32.totalorder %s80, %s81
      %p93 = scmp.eq.s32.totalorder %s24, 1
      %p94 = por %p92, %p93
      %p96 = scmp.ne.s32.totalorder %s81, %s95
      %p97 = scmp.eq.s32.totalorder %s24, 0
      %p98 = por %p96, %p97
      %s100 = sadd.s32 %s99, 1
      %p103 = scmp.eq.s32.totalorder %s18, 1
      %p104 = scmp.ne.s32.totalorder %s99, %s101
      %p105 = scmp.eq.s32.totalorder %s18, 0
      %p106 = por %p104, %p105
      %p107 = scmp.ne.s32.totalorder %s99, %s101
      %p108 = scmp.eq.s32.totalorder %s23, 1
      %p109 = por %p107, %p108
      %p110 = scmp.ne.s32.totalorder %s101, %s102
      %p111 = scmp.eq.s32.totalorder %s23, 0
      %p112 = por %p110, %p111
      %p113 = scmp.ne.s32.totalorder %s101, %s102
      %p114 = scmp.eq.s32.totalorder %s24, 1
      %p115 = por %p113, %p114
      %p117 = scmp.ne.s32.totalorder %s102, %s116
      %p118 = scmp.eq.s32.totalorder %s24, 0
      %p119 = por %p117, %p118
      %s121 = sadd.s32 %s120, 1
      %p124 = scmp.eq.s32.totalorder %s18, 1
      %p125 = scmp.ne.s32.totalorder %s120, %s122
      %p126 = scmp.eq.s32.totalorder %s18, 0
      %p127 = por %p125, %p126
      %p128 = scmp.ne.s32.totalorder %s120, %s122
      %p129 = scmp.eq.s32.totalorder %s23, 1
      %p130 = por %p128, %p129
      %p131 = scmp.ne.s32.totalorder %s122, %s123
      %p132 = scmp.eq.s32.totalorder %s23, 0
      %p133 = por %p131, %p132
      %p134 = scmp.ne.s32.totalorder %s122, %s123
      %p135 = scmp.eq.s32.totalorder %s24, 1
      %p136 = por %p134, %p135
      %p138 = scmp.ne.s32.totalorder %s123, %s137
      %p139 = scmp.eq.s32.totalorder %s24, 0
      %p140 = por %p138, %p139
      %s142 = sadd.s32 %s141, 1
      %p145 = scmp.eq.s32.totalorder %s18, 1
      %p146 = scmp.ne.s32.totalorder %s141, %s143
      %p147 = scmp.eq.s32.totalorder %s18, 0
      %p148 = por %p146, %p147
      %p149 = scmp.ne.s32.totalorder %s141, %s143
      %p150 = scmp.eq.s32.totalorder %s23, 1
      %p151 = por %p149, %p150
      %p152 = scmp.ne.s32.totalorder %s143, %s144
      %p153 = scmp.eq.s32.totalorder %s23, 0
      %p154 = por %p152, %p153
      %p155 = scmp.ne.s32.totalorder %s143, %s144
      %p156 = scmp.eq.s32.totalorder %s24, 1
      %p157 = por %p155, %p156
      %p159 = scmp.ne.s32.totalorder %s144, %s158
      %p160 = scmp.eq.s32.totalorder %s24, 0
      %p161 = por %p159, %p160
      %s163 = sadd.s32 %s162, 1
      %p166 = scmp.eq.s32.totalorder %s18, 1
      %p167 = scmp.ne.s32.totalorder %s162, %s164
      %p168 = scmp.eq.s32.totalorder %s18, 0
      %p169 = por %p167, %p168
      %p170 = scmp.ne.s32.totalorder %s162, %s164
      %p171 = scmp.eq.s32.totalorder %s23, 1
      %p172 = por %p170, %p171
      %p173 = scmp.ne.s32.totalorder %s164, %s165
      %p174 = scmp.eq.s32.totalorder %s23, 0
      %p175 = por %p173, %p174
      %p176 = scmp.ne.s32.totalorder %s164, %s165
      %p177 = scmp.eq.s32.totalorder %s24, 1
      %p178 = por %p176, %p177
      %p180 = scmp.ne.s32.totalorder %s165, %s179
      %p181 = scmp.eq.s32.totalorder %s24, 0
      %p182 = por %p180, %p181
      %s184 = sadd.s32 %s183, 1
      %p187 = scmp.eq.s32.totalorder %s18, 1
      %p188 = scmp.ne.s32.totalorder %s183, %s185
      %p189 = scmp.eq.s32.totalorder %s18, 0
      %p190 = por %p188, %p189
      %p191 = scmp.ne.s32.totalorder %s183, %s185
      %p192 = scmp.eq.s32.totalorder %s23, 1
      %p193 = por %p191, %p192
      %p194 = scmp.ne.s32.totalorder %s185, %s186
      %p195 = scmp.eq.s32.totalorder %s23, 0
      %p196 = por %p194, %p195
      %p197 = scmp.ne.s32.totalorder %s185, %s186
      %p198 = scmp.eq.s32.totalorder %s24, 1
      %p199 = por %p197, %p198
      %p201 = scmp.ne.s32.totalorder %s186, %s200
      %p202 = scmp.eq.s32.totalorder %s24, 0
      %p203 = por %p201, %p202
      %s205 = sadd.s32 %s204, 1
      %p208 = scmp.eq.s32.totalorder %s18, 1
      %p209 = scmp.ne.s32.totalorder %s204, %s206
      %p210 = scmp.eq.s32.totalorder %s18, 0
      %p211 = por %p209, %p210
      %p212 = scmp.ne.s32.totalorder %s204, %s206
      %p213 = scmp.eq.s32.totalorder %s23, 1
      %p214 = por %p212, %p213
      %p215 = scmp.ne.s32.totalorder %s206, %s207
      %p216 = scmp.eq.s32.totalorder %s23, 0
      %p217 = por %p215, %p216
      %p218 = scmp.ne.s32.totalorder %s206, %s207
      %p219 = scmp.eq.s32.totalorder %s24, 1
      %p220 = por %p218, %p219
      %p222 = scmp.ne.s32.totalorder %s207, %s221
      %p223 = scmp.eq.s32.totalorder %s24, 0
      %p224 = por %p222, %p223
      %s226 = sadd.s32 %s225, 1
      %p229 = scmp.eq.s32.totalorder %s18, 1
      %p230 = scmp.ne.s32.totalorder %s225, %s227
      %p231 = scmp.eq.s32.totalorder %s18, 0
      %p232 = por %p230, %p231
      %p233 = scmp.ne.s32.totalorder %s225, %s227
      %p234 = scmp.eq.s32.totalorder %s23, 1
      %p235 = por %p233, %p234
      %p236 = scmp.ne.s32.totalorder %s227, %s228
      %p237 = scmp.eq.s32.totalorder %s23, 0
      %p238 = por %p236, %p237
      %p239 = scmp.ne.s32.totalorder %s227, %s228
      %p240 = scmp.eq.s32.totalorder %s24, 1
      %p241 = por %p239, %p240
      %p243 = scmp.ne.s32.totalorder %s228, %s242
      %p244 = scmp.eq.s32.totalorder %s24, 0
      %p245 = por %p243, %p244
      %s246 = ssub.s32 %s18, %s25
      %p247 = scmp.eq.s32.totalorder %s246, 0
      %s249 = sadd.s32 %s248, 1
      %s250 = scalar_select %p247, %s248, %s249
      %p253 = pneg %p247
      %p254 = scmp.eq.s32.totalorder %s18, 1
      %p255 = por %p253, %p254
      %p256 = scmp.ne.s32.totalorder %s248, %s251
      %p257 = scmp.eq.s32.totalorder %s18, 0
      %p258 = por %p256, %p257
      %p259 = scmp.ne.s32.totalorder %s248, %s251
      %p260 = scmp.eq.s32.totalorder %s23, 1
      %p261 = por %p259, %p260
      %p262 = scmp.ne.s32.totalorder %s251, %s252
      %p263 = scmp.eq.s32.totalorder %s23, 0
      %p264 = por %p262, %p263
      %p265 = scmp.ne.s32.totalorder %s251, %s252
      %p266 = scmp.eq.s32.totalorder %s24, 1
      %p267 = por %p265, %p266
      %p269 = scmp.ne.s32.totalorder %s252, %s268
      %p270 = scmp.eq.s32.totalorder %s24, 0
      %p271 = por %p269, %p270
      %p272 = scmp.le.s32.totalorder 1, %s18
      %p273 = scmp.lt.s32.totalorder %s18, 3
      %p274 = pnand %p272, %p273
      %p275 = pneg %p274
      // Predicated region
      $region9: #{decoder_forward.8} parent=5 // pred_check
        _
      $region10: #{decoder_forward.8} parent=5 // pred_check_branch
        %277 = sbr.rel (%p274) target = $region12
      $region11: #{decoder_forward.8} parent=5 // pred_region
        %s278 = ssub.s32 %s18, 1
        // Predicated region
        $region13: #{decoder_forward.8} parent=11 // pred_check
          %p279 = pneg %p91
        $region14: #{decoder_forward.8} parent=11 // pred_check_branch
          %281 = sbr.rel (%p279) target = $region16
        $region15: #{decoder_forward.8} parent=11 // pred_region
          %s283 = ssub.s32 1024, 1024
          %284 = vsyncadd [#allocation3], %s283
          %s285 = sshll.u32 [#allocation2], 4
          %s286 = int_to_ptr.vmem [resolvable:$true] %s285
          %291 = dma.hbm_to_vmem [thread:$0]  %s2, 1024, %s286, [#allocation3], 64, 64, 4
        $region16: #{decoder_forward.8} parent=11 // pred_fallthru
          _
        // Predicated region
        $region17: #{decoder_forward.8} parent=11 // pred_check
          %p292 = pneg %p112
        $region18: #{decoder_forward.8} parent=11 // pred_check_branch
          %294 = sbr.rel (%p292) target = $region20
        $region19: #{decoder_forward.8} parent=11 // pred_region
          _
        $region20: #{decoder_forward.8} parent=11 // pred_fallthru
          _
        // Predicated region
        $region21: #{decoder_forward.8} parent=11 // pred_check
          %p295 = pneg %p133
        $region22: #{decoder_forward.8} parent=11 // pred_check_branch
          %297 = sbr.rel (%p295) target = $region24
        $region23: #{decoder_forward.8} parent=11 // pred_region
          _
        $region24: #{decoder_forward.8} parent=11 // pred_fallthru
          _
        // Predicated region
        $region25: #{decoder_forward.8} parent=11 // pred_check
          %p298 = pneg %p154
        $region26: #{decoder_forward.8} parent=11 // pred_check_branch
          %300 = sbr.rel (%p298) target = $region28
        $region27: #{decoder_forward.8} parent=11 // pred_region
          _
        $region28: #{decoder_forward.8} parent=11 // pred_fallthru
          _
        // Predicated region
        $region29: #{decoder_forward.8} parent=11 // pred_check
          %p301 = pneg %p175
        $region30: #{decoder_forward.8} parent=11 // pred_check_branch
          %303 = sbr.rel (%p301) target = $region32
        $region31: #{decoder_forward.8} parent=11 // pred_region
          %s305 = ssub.s32 1024, 1024
          %306 = vsyncadd [#allocation5], %s305
          %s307 = sshll.u32 [#allocation4], 4
          %s308 = int_to_ptr.vmem [resolvable:$true] %s307
          %313 = dma.hbm_to_vmem [thread:$0]  %s6, 1024, %s308, [#allocation5], 64, 64, 4
        $region32: #{decoder_forward.8} parent=11 // pred_fallthru
          _
        // Predicated region
        $region33: #{decoder_forward.8} parent=11 // pred_check
          %p314 = pneg %p196
        $region34: #{decoder_forward.8} parent=11 // pred_check_branch
          %316 = sbr.rel (%p314) target = $region36
        $region35: #{decoder_forward.8} parent=11 // pred_region
          _
        $region36: #{decoder_forward.8} parent=11 // pred_fallthru
          _
        // Predicated region
        $region37: #{decoder_forward.8} parent=11 // pred_check
          %p317 = pneg %p217
        $region38: #{decoder_forward.8} parent=11 // pred_check_branch
          %319 = sbr.rel (%p317) target = $region40
        $region39: #{decoder_forward.8} parent=11 // pred_region
          _
        $region40: #{decoder_forward.8} parent=11 // pred_fallthru
          _
        // Predicated region
        $region41: #{decoder_forward.8} parent=11 // pred_check
          %p320 = pneg %p238
        $region42: #{decoder_forward.8} parent=11 // pred_check_branch
          %322 = sbr.rel (%p320) target = $region44
        $region43: #{decoder_forward.8} parent=11 // pred_region
          _
        $region44: #{decoder_forward.8} parent=11 // pred_fallthru
          _
      $region12: #{decoder_forward.8} parent=5 // pred_fallthru
        _
      %p323 = scmp.lt.s32.totalorder %s18, 2
      // Predicated region
      $region45: #{decoder_forward.8} parent=5 // pred_check
        %p324 = pneg %p323
      $region46: #{decoder_forward.8} parent=5 // pred_check_branch
        %326 = sbr.rel (%p324) target = $region48
      $region47: #{decoder_forward.8} parent=5 // pred_region
        // Predicated region
        $region49: #{decoder_forward.8} parent=47 // pred_check
          %p327 = pneg %p38
        $region50: #{decoder_forward.8} parent=47 // pred_check_branch
          %329 = sbr.rel (%p327) target = $region52
        $region51: #{decoder_forward.8} parent=47 // pred_region
          %p330 = scmp.lt.s32.totalorder %s18, 1
          %s331 = scalar_select %p330, %s18, 1
          %s332 = smul.addr %s331, 4
          %s333 = scalar_lea.vmem %s0, %s332
        $region52: #{decoder_forward.8} parent=47 // pred_fallthru
          _
        // Predicated region
        $region53: #{decoder_forward.8} parent=47 // pred_check
          %p334 = pneg %p64
        $region54: #{decoder_forward.8} parent=47 // pred_check_branch
          %336 = sbr.rel (%p334) target = $region56
        $region55: #{decoder_forward.8} parent=47 // pred_region
          %p337 = scmp.lt.s32.totalorder %s18, 1
          %s338 = scalar_select %p337, %s18, 1
          %s339 = smul.addr %s338, 4
          %s340 = scalar_lea.vmem %s1, %s339
        $region56: #{decoder_forward.8} parent=47 // pred_fallthru
          _
      $region48: #{decoder_forward.8} parent=5 // pred_fallthru
        _
      %p341 = scmp.le.s32.totalorder 1, %s18
      %p342 = scmp.lt.s32.totalorder %s18, 3
      %p343 = pnand %p341, %p342
      %p344 = pneg %p343
      // Predicated region
      $region57: #{decoder_forward.8} parent=5 // pred_check
        _
      $region58: #{decoder_forward.8} parent=5 // pred_check_branch
        %346 = sbr.rel (%p343) target = $region60
      $region59: #{decoder_forward.8} parent=5 // pred_region
        %s347 = ssub.s32 %s18, 1
        // Predicated region
        $region61: #{decoder_forward.8} parent=59 // pred_check
          %p348 = pneg %p91
        $region62: #{decoder_forward.8} parent=59 // pred_check_branch
          %350 = sbr.rel (%p348) target = $region64
        $region63: #{decoder_forward.8} parent=59 // pred_region
          %351 = dma.done [#allocation3], 1024
        $region64: #{decoder_forward.8} parent=59 // pred_fallthru
          _
        // Predicated region
        $region65: #{decoder_forward.8} parent=59 // pred_check
          %p352 = pneg %p175
        $region66: #{decoder_forward.8} parent=59 // pred_check_branch
          %354 = sbr.rel (%p352) target = $region68
        $region67: #{decoder_forward.8} parent=59 // pred_region
          %355 = dma.done [#allocation5], 1024
        $region68: #{decoder_forward.8} parent=59 // pred_fallthru
          _
        %p356 = scmp.lt.s32.totalorder %s23, 1
        %s357 = scalar_select %p356, %s23, 1
        %s358 = smul.addr %s357, 4
        %s359 = scalar_lea.vmem %s0, %s358
        %p360 = pneg %p44
        %p361 = pneg %p41
        %p362 = scmp.lt.s32.totalorder %s23, 1
        %s363 = scalar_select %p362, %s23, 1
        %s364 = smul.addr %s363, 4
        %s365 = scalar_lea.vmem %s1, %s364
        %p366 = pneg %p70
        %p367 = pneg %p67
        %p368 = pneg %p91
        %p369 = pneg %p88
        %p370 = pneg %p112
        %p371 = pneg %p109
        %p372 = pneg %p133
        %p373 = pneg %p130
        %p374 = pneg %p154
        %p375 = pneg %p151
        %p376 = pneg %p175
        %p377 = pneg %p172
        %p378 = pneg %p196
        %p379 = pneg %p193
        %p380 = pneg %p217
        %p381 = pneg %p214
        %p382 = pneg %p238
        %p383 = pneg %p235
        %p384 = pneg %p264
        %p385 = pneg %p261
        %p386 = scmp.lt.s32.totalorder %s23, 1
        %s387 = scalar_select %p386, %s23, 1
        %s388 = smul.addr %s387, 4
        %s389 = scalar_lea.vmem %s10, %s388
        %p390 = scmp.lt.s32.totalorder %s23, 1
        %s391 = scalar_select %p390, %s23, 1
        %s392 = smul.addr %s391, 4
        %s393 = scalar_lea.vmem %s0, %s392
        %p394 = scmp.lt.s32.totalorder %s23, 1
        %s395 = scalar_select %p394, %s23, 1
        %s396 = smul.addr %s395, 4
        %s397 = scalar_lea.vmem %s1, %s396
        %p398 = scmp.lt.s32.totalorder %s23, 1
        %s399 = scalar_select %p398, %s23, 1
        %s400 = smul.addr %s399, 4
        %s401 = scalar_lea.vmem %s10, %s400
        %v403 = vld [vmem:[%s393] sm:$0xf]
        %v404 = vunpack.c.l.bf16 %v403
        %v405 = vld [vmem:[%s397] sm:$0xf]
        %v406 = vld [vmem:[#allocation2] sm:$0xf]
        %v407 = vld [vmem:[#allocation2 + $0x4] sm:$0xf]
        %v408 = vld [vmem:[#allocation2 + $0x8] sm:$0xf]
        %v409 = vld [vmem:[#allocation2 + $0xc] sm:$0xf]
        %v410 = vld [vmem:[#allocation2 + $0x10] sm:$0xf]
        %v411 = vld [vmem:[#allocation2 + $0x14] sm:$0xf]
        %v412 = vld [vmem:[#allocation2 + $0x18] sm:$0xf]
        %v413 = vld [vmem:[#allocation2 + $0x1c] sm:$0xf]
        %v414 = vld [vmem:[#allocation2 + $0x20] sm:$0xf]
        %v415 = vld [vmem:[#allocation2 + $0x24] sm:$0xf]
        %v416 = vld [vmem:[#allocation2 + $0x28] sm:$0xf]
        %v417 = vld [vmem:[#allocation2 + $0x2c] sm:$0xf]
        %v418 = vld [vmem:[#allocation2 + $0x30] sm:$0xf]
        %v419 = vld [vmem:[#allocation2 + $0x34] sm:$0xf]
        %v420 = vld [vmem:[#allocation2 + $0x38] sm:$0xf]
        %v421 = vld [vmem:[#allocation2 + $0x3c] sm:$0xf]
        %v422 = vld [vmem:[%s3] sm:$0x1]
        %v424 = vlaneseq
        %v425 = vshrl.u32 %v424, 7
        %v426 = vsub.s32 0, %v425
        %v427 = vrot.slane %v422, %v426
        %v445 = vunpack.c.l.b16 %v406
        %v446 = vunpack.c.l.b16 %v407
        %v447 = vunpack.c.l.b16 %v408
        %v448 = vunpack.c.l.b16 %v409
        %v449 = vunpack.c.l.b16 %v410
        %v450 = vunpack.c.l.b16 %v411
        %v451 = vunpack.c.l.b16 %v412
        %v452 = vunpack.c.l.b16 %v413
        %v453 = vunpack.c.l.b16 %v414
        %v454 = vunpack.c.l.b16 %v415
        %v455 = vunpack.c.l.b16 %v416
        %v456 = vunpack.c.l.b16 %v417
        %v457 = vunpack.c.l.b16 %v418
        %v458 = vunpack.c.l.b16 %v419
        %v459 = vunpack.c.l.b16 %v420
        %v460 = vunpack.c.l.b16 %v421
        %v461 = vpack.c.b16 %v446, %v445
        %v462 = vpack.c.b16 %v448, %v447
        %v463 = vpack.c.b16 %v450, %v449
        %v464 = vpack.c.b16 %v452, %v451
        %v465 = vpack.c.b16 %v454, %v453
        %v466 = vpack.c.b16 %v456, %v455
        %v467 = vpack.c.b16 %v458, %v457
        %v468 = vpack.c.b16 %v460, %v459
        %477 = vmatprep.subr.bf16.mxu0 0
        %478 = vmatpush1.bf16.msra.mxu0 %v468
        %479 = vmatprep.subr.bf16.mxu0 0
        %480 = vmatpush1.bf16.msra.mxu0 %v467
        %481 = vmatprep.subr.bf16.mxu0 0
        %482 = vmatpush1.bf16.msra.mxu0 %v466
        %483 = vmatprep.subr.bf16.mxu0 0
        %484 = vmatpush1.bf16.msra.mxu0 %v465
        %485 = vmatprep.subr.bf16.mxu0 0
        %486 = vmatpush1.bf16.msra.mxu0 %v464
        %487 = vmatprep.subr.bf16.mxu0 0
        %488 = vmatpush1.bf16.msra.mxu0 %v463
        %489 = vmatprep.subr.bf16.mxu0 0
        %490 = vmatpush1.bf16.msra.mxu0 %v462
        %491 = vmatprep.subr.bf16.mxu0 0
        %492 = vmatpush1.bf16.msra.mxu0 %v461
        %493 = vmatprep.subr.bf16.mxu0 0
        %494 = vmatpush2.bf16.msra.mxu0 0
        %495 = vmatprep.subr.bf16.mxu0 0
        %496 = vmatpush2.bf16.msra.mxu0 0
        %497 = vmatprep.subr.bf16.mxu0 0
        %498 = vmatpush2.bf16.msra.mxu0 0
        %499 = vmatprep.subr.bf16.mxu0 0
        %500 = vmatpush2.bf16.msra.mxu0 0
        %501 = vmatprep.subr.bf16.mxu0 0
        %502 = vmatpush2.bf16.msra.mxu0 0
        %503 = vmatprep.subr.bf16.mxu0 0
        %504 = vmatpush2.bf16.msra.mxu0 0
        %505 = vmatprep.subr.bf16.mxu0 0
        %506 = vmatpush2.bf16.msra.mxu0 0
        %507 = vmatprep.subr.bf16.mxu0 0
        %508 = vmatpush2.bf16.msra.mxu0 0
        %509 = vmatprep.mubr.bf16.mxu0 0
        %510 = vmatmul.mubr.bf16.gmra.mxu0 %v403
        %v511 = vpop.f32.mrf.mxu0
        %v512 = vadd.f32 %v427, %v511
        %v513 = vpop.f32.mrf.mxu0
        %v514 = vpop.f32.mrf.mxu0
        %v515 = vpop.f32.mrf.mxu0
        %516 = vdwg.mxu0
        %v517 = vld [vmem:[%s4] sm:$0xff]
        %v518 = vld [vmem:[%s4 + $0x8] sm:$0xff]
        %v519 = vld [vmem:[%s4 + $0x10] sm:$0xff]
        %v520 = vld [vmem:[%s4 + $0x18] sm:$0xff]
        %v521 = vld [vmem:[%s4 + $0x20] sm:$0xff]
        %v522 = vld [vmem:[%s4 + $0x28] sm:$0xff]
        %v523 = vld [vmem:[%s4 + $0x30] sm:$0xff]
        %v524 = vld [vmem:[%s4 + $0x38] sm:$0xff]
        %v525 = vld [vmem:[%s4 + $0x40] sm:$0xff]
        %v526 = vld [vmem:[%s4 + $0x48] sm:$0xff]
        %v527 = vld [vmem:[%s4 + $0x50] sm:$0xff]
        %v528 = vld [vmem:[%s4 + $0x58] sm:$0xff]
        %v529 = vld [vmem:[%s4 + $0x60] sm:$0xff]
        %v530 = vld [vmem:[%s4 + $0x68] sm:$0xff]
        %v531 = vld [vmem:[%s4 + $0x70] sm:$0xff]
        %v532 = vld [vmem:[%s4 + $0x78] sm:$0xff]
        %v533 = vld [vmem:[%s5] sm:$0x3]
        %v535 = vlaneseq
        %v536 = vshrl.u32 %v535, 7
        %v537 = vsub.s32 0, %v536
        %v538 = vrot.slane %v533, %v537
        %v539 = vlaneseq
        %v540 = vshrl.u32 %v539, 7
        %v541 = vsub.s32 1, %v540
        %v542 = vrot.slane %v533, %v541
        %v561 = vunpack.c.l.b16 %v517
        %v562 = vunpack.c.h.b16 %v517
        %v563 = vunpack.c.l.b16 %v518
        %v564 = vunpack.c.h.b16 %v518
        %v565 = vunpack.c.l.b16 %v519
        %v566 = vunpack.c.h.b16 %v519
        %v567 = vunpack.c.l.b16 %v520
        %v568 = vunpack.c.h.b16 %v520
        %v569 = vunpack.c.l.b16 %v521
        %v570 = vunpack.c.h.b16 %v521
        %v571 = vunpack.c.l.b16 %v522
        %v572 = vunpack.c.h.b16 %v522
        %v573 = vunpack.c.l.b16 %v523
        %v574 = vunpack.c.h.b16 %v523
        %v575 = vunpack.c.l.b16 %v524
        %v576 = vunpack.c.h.b16 %v524
        %v577 = vunpack.c.l.b16 %v525
        %v578 = vunpack.c.h.b16 %v525
        %v579 = vunpack.c.l.b16 %v526
        %v580 = vunpack.c.h.b16 %v526
        %v581 = vunpack.c.l.b16 %v527
        %v582 = vunpack.c.h.b16 %v527
        %v583 = vunpack.c.l.b16 %v528
        %v584 = vunpack.c.h.b16 %v528
        %v585 = vunpack.c.l.b16 %v529
        %v586 = vunpack.c.h.b16 %v529
        %v587 = vunpack.c.l.b16 %v530
        %v588 = vunpack.c.h.b16 %v530
        %v589 = vunpack.c.l.b16 %v531
        %v590 = vunpack.c.h.b16 %v531
        %v591 = vunpack.c.l.b16 %v532
        %v592 = vunpack.c.h.b16 %v532
        %v593 = vpack.c.b16 %v563, %v561
        %v594 = vpack.c.b16 %v564, %v562
        %v595 = vpack.c.b16 %v567, %v565
        %v596 = vpack.c.b16 %v568, %v566
        %v597 = vpack.c.b16 %v571, %v569
        %v598 = vpack.c.b16 %v572, %v570
        %v599 = vpack.c.b16 %v575, %v573
        %v600 = vpack.c.b16 %v576, %v574
        %v601 = vpack.c.b16 %v579, %v577
        %v602 = vpack.c.b16 %v580, %v578
        %v603 = vpack.c.b16 %v583, %v581
        %v604 = vpack.c.b16 %v584, %v582
        %v605 = vpack.c.b16 %v587, %v585
        %v606 = vpack.c.b16 %v588, %v586
        %v607 = vpack.c.b16 %v591, %v589
        %v608 = vpack.c.b16 %v592, %v590
        %625 = vmatprep.subr.bf16.mxu0 %v608
        %626 = vmatpush1.bf16.msra.mxu0 %v607
        %627 = vmatprep.subr.bf16.mxu0 %v606
        %628 = vmatpush1.bf16.msra.mxu0 %v605
        %629 = vmatprep.subr.bf16.mxu0 %v604
        %630 = vmatpush1.bf16.msra.mxu0 %v603
        %631 = vmatprep.subr.bf16.mxu0 %v602
        %632 = vmatpush1.bf16.msra.mxu0 %v601
        %633 = vmatprep.subr.bf16.mxu0 %v600
        %634 = vmatpush1.bf16.msra.mxu0 %v599
        %635 = vmatprep.subr.bf16.mxu0 %v598
        %636 = vmatpush1.bf16.msra.mxu0 %v597
        %637 = vmatprep.subr.bf16.mxu0 %v596
        %638 = vmatpush1.bf16.msra.mxu0 %v595
        %639 = vmatprep.subr.bf16.mxu0 %v594
        %640 = vmatpush1.bf16.msra.mxu0 %v593
        %641 = vmatprep.subr.bf16.mxu0 0
        %642 = vmatpush2.bf16.msra.mxu0 0
        %643 = vmatprep.subr.bf16.mxu0 0
        %644 = vmatpush2.bf16.msra.mxu0 0
        %645 = vmatprep.subr.bf16.mxu0 0
        %646 = vmatpush2.bf16.msra.mxu0 0
        %647 = vmatprep.subr.bf16.mxu0 0
        %648 = vmatpush2.bf16.msra.mxu0 0
        %649 = vmatprep.subr.bf16.mxu0 0
        %650 = vmatpush2.bf16.msra.mxu0 0
        %651 = vmatprep.subr.bf16.mxu0 0
        %652 = vmatpush2.bf16.msra.mxu0 0
        %653 = vmatprep.subr.bf16.mxu0 0
        %654 = vmatpush2.bf16.msra.mxu0 0
        %655 = vmatprep.subr.bf16.mxu0 0
        %656 = vmatpush2.bf16.msra.mxu0 0
        %657 = vmatprep.mubr.bf16.mxu0 0
        %658 = vmatmul.mubr.bf16.gmra.mxu0 %v405
        %v659 = vpop.f32.mrf.mxu0
        %v660 = vadd.f32 %v538, %v659
        %v661 = vpop.f32.mrf.mxu0
        %v662 = vadd.f32 %v542, %v661
        %v663 = vpop.f32.mrf.mxu0
        %v664 = vpop.f32.mrf.mxu0
        %665 = vdwg.mxu0
        %v666 = vpack.c.bf16 %v512, %v512
        %668 = vrot.lane.b32.xlu0 %v666, 112
        %v669 = vpop.permute.xlu0 %668
        %671 = vrot.lane.b32.xlu0 %v666, 96
        %v672 = vpop.permute.xlu0 %671
        %674 = vrot.lane.b32.xlu0 %v666, 80
        %v675 = vpop.permute.xlu0 %674
        %677 = vrot.lane.b32.xlu0 %v666, 64
        %v678 = vpop.permute.xlu0 %677
        %680 = vrot.lane.b32.xlu0 %v666, 48
        %v681 = vpop.permute.xlu0 %680
        %683 = vrot.lane.b32.xlu0 %v666, 32
        %v684 = vpop.permute.xlu0 %683
        %686 = vrot.lane.b32.xlu0 %v666, 16
        %v687 = vpop.permute.xlu0 %686
        %v689 = vcombine.low %v666, %v678
        %v691 = vunpack.c.l.s4 1983009808
        %v692 = vunpack.c.0.s8 %v691
        %v693 = vlaneseq
        %v694 = vshrl.u32 %v693, 7
        %v695 = vsub.s32 %v692, %v694
        %v696 = vrot.slane %v689, %v695
        %v697 = vcombine.low %v672, %v684
        %v699 = vunpack.c.l.s4 1983009808
        %v700 = vunpack.c.0.s8 %v699
        %v701 = vlaneseq
        %v702 = vshrl.u32 %v701, 7
        %v703 = vsub.s32 %v700, %v702
        %v704 = vrot.slane %v697, %v703
        %v705 = vcombine.low %v696, %v704
        %v706 = vcombine.high %v696, %v704
        %v708 = vunpack.c.l.s4 1934713408
        %v709 = vunpack.c.0.s8 %v708
        %v710 = vlaneseq
        %v711 = vshrl.u32 %v710, 7
        %v712 = vsub.s32 %v709, %v711
        %v713 = vrot.slane %v705, %v712
        %v715 = vunpack.c.l.s4 1934713408
        %v716 = vunpack.c.0.s8 %v715
        %v717 = vlaneseq
        %v718 = vshrl.u32 %v717, 7
        %v719 = vsub.s32 %v716, %v718
        %v720 = vrot.slane %v706, %v719
        %v721 = vcombine.high %v713, 0
        %v722 = vcombine.high %v720, 0
        %v723 = vcombine.low %v669, %v681
        %v725 = vunpack.c.l.s4 1983009808
        %v726 = vunpack.c.0.s8 %v725
        %v727 = vlaneseq
        %v728 = vshrl.u32 %v727, 7
        %v729 = vsub.s32 %v726, %v728
        %v730 = vrot.slane %v723, %v729
        %v731 = vcombine.low %v675, %v687
        %v733 = vunpack.c.l.s4 1983009808
        %v734 = vunpack.c.0.s8 %v733
        %v735 = vlaneseq
        %v736 = vshrl.u32 %v735, 7
        %v737 = vsub.s32 %v734, %v736
        %v738 = vrot.slane %v731, %v737
        %v739 = vcombine.low %v730, %v738
        %v740 = vcombine.high %v730, %v738
        %v742 = vunpack.c.l.s4 1934713408
        %v743 = vunpack.c.0.s8 %v742
        %v744 = vlaneseq
        %v745 = vshrl.u32 %v744, 7
        %v746 = vsub.s32 %v743, %v745
        %v747 = vrot.slane %v739, %v746
        %v749 = vunpack.c.l.s4 1934713408
        %v750 = vunpack.c.0.s8 %v749
        %v751 = vlaneseq
        %v752 = vshrl.u32 %v751, 7
        %v753 = vsub.s32 %v750, %v752
        %v754 = vrot.slane %v740, %v753
        %v755 = vcombine.high %v747, 0
        %v756 = vcombine.high %v754, 0
        %v759 = vpack.i.b16 %v747, %v713
        %v761 = vshrl.u32 %v713, 16
        %v762 = vshrl.u32 %v747, 16
        %v763 = vpack.i.b16 %v762, %v761
        %v767 = vpack.i.b16 %v755, %v721
        %v769 = vshrl.u32 %v721, 16
        %v770 = vshrl.u32 %v755, 16
        %v771 = vpack.i.b16 %v770, %v769
        %v775 = vpack.i.b16 %v754, %v720
        %v777 = vshrl.u32 %v720, 16
        %v778 = vshrl.u32 %v754, 16
        %v779 = vpack.i.b16 %v778, %v777
        %v783 = vpack.i.b16 %v756, %v722
        %v785 = vshrl.u32 %v722, 16
        %v786 = vshrl.u32 %v756, 16
        %v787 = vpack.i.b16 %v786, %v785
        %v789 = vcombine.low %v759, %v775
        %v791 = vunpack.c.l.s4 1983009808
        %v792 = vunpack.c.0.s8 %v791
        %v793 = vlaneseq
        %v794 = vshrl.u32 %v793, 7
        %v795 = vsub.s32 %v792, %v794
        %v796 = vrot.slane %v789, %v795
        %v797 = vcombine.low %v767, %v783
        %v799 = vunpack.c.l.s4 1983009808
        %v800 = vunpack.c.0.s8 %v799
        %v801 = vlaneseq
        %v802 = vshrl.u32 %v801, 7
        %v803 = vsub.s32 %v800, %v802
        %v804 = vrot.slane %v797, %v803
        %v805 = vcombine.low %v796, %v804
        %v806 = vcombine.high %v796, %v804
        %v808 = vunpack.c.l.s4 1934713408
        %v809 = vunpack.c.0.s8 %v808
        %v810 = vlaneseq
        %v811 = vshrl.u32 %v810, 7
        %v812 = vsub.s32 %v809, %v811
        %v813 = vrot.slane %v805, %v812
        %v815 = vunpack.c.l.s4 1934713408
        %v816 = vunpack.c.0.s8 %v815
        %v817 = vlaneseq
        %v818 = vshrl.u32 %v817, 7
        %v819 = vsub.s32 %v816, %v818
        %v820 = vrot.slane %v806, %v819
        %v821 = vcombine.high %v813, 0
        %v822 = vcombine.high %v820, 0
        %v823 = vcombine.low %v763, %v779
        %v825 = vunpack.c.l.s4 1983009808
        %v826 = vunpack.c.0.s8 %v825
        %v827 = vlaneseq
        %v828 = vshrl.u32 %v827, 7
        %v829 = vsub.s32 %v826, %v828
        %v830 = vrot.slane %v823, %v829
        %v831 = vcombine.low %v771, %v787
        %v833 = vunpack.c.l.s4 1983009808
        %v834 = vunpack.c.0.s8 %v833
        %v835 = vlaneseq
        %v836 = vshrl.u32 %v835, 7
        %v837 = vsub.s32 %v834, %v836
        %v838 = vrot.slane %v831, %v837
        %v839 = vcombine.low %v830, %v838
        %v840 = vcombine.high %v830, %v838
        %v842 = vunpack.c.l.s4 1934713408
        %v843 = vunpack.c.0.s8 %v842
        %v844 = vlaneseq
        %v845 = vshrl.u32 %v844, 7
        %v846 = vsub.s32 %v843, %v845
        %v847 = vrot.slane %v839, %v846
        %v849 = vunpack.c.l.s4 1934713408
        %v850 = vunpack.c.0.s8 %v849
        %v851 = vlaneseq
        %v852 = vshrl.u32 %v851, 7
        %v853 = vsub.s32 %v850, %v852
        %v854 = vrot.slane %v840, %v853
        %v855 = vcombine.high %v847, 0
        %v856 = vcombine.high %v854, 0
        %v859 = vpack.i.b16 %v847, %v813
        %v860 = vshrl.u32 %v813, 16
        %v861 = vshrl.u32 %v847, 16
        %v862 = vpack.i.b16 %v861, %v860
        %v865 = vpack.i.b16 %v855, %v821
        %v866 = vshrl.u32 %v821, 16
        %v867 = vshrl.u32 %v855, 16
        %v868 = vpack.i.b16 %v867, %v866
        %v871 = vpack.i.b16 %v854, %v820
        %v872 = vshrl.u32 %v820, 16
        %v873 = vshrl.u32 %v854, 16
        %v874 = vpack.i.b16 %v873, %v872
        %v877 = vpack.i.b16 %v856, %v822
        %v878 = vshrl.u32 %v822, 16
        %v879 = vshrl.u32 %v856, 16
        %v880 = vpack.i.b16 %v879, %v878
        %v881 = vpack.c.bf16 %v660, %v660
        %883 = vrot.lane.b32.xlu0 %v881, 112
        %v884 = vpop.permute.xlu0 %883
        %886 = vrot.lane.b32.xlu0 %v881, 96
        %v887 = vpop.permute.xlu0 %886
        %889 = vrot.lane.b32.xlu0 %v881, 80
        %v890 = vpop.permute.xlu0 %889
        %892 = vrot.lane.b32.xlu0 %v881, 64
        %v893 = vpop.permute.xlu0 %892
        %895 = vrot.lane.b32.xlu0 %v881, 48
        %v896 = vpop.permute.xlu0 %895
        %898 = vrot.lane.b32.xlu0 %v881, 32
        %v899 = vpop.permute.xlu0 %898
        %901 = vrot.lane.b32.xlu0 %v881, 16
        %v902 = vpop.permute.xlu0 %901
        %v904 = vcombine.low %v881, %v893
        %v906 = vunpack.c.l.s4 1983009808
        %v907 = vunpack.c.0.s8 %v906
        %v908 = vlaneseq
        %v909 = vshrl.u32 %v908, 7
        %v910 = vsub.s32 %v907, %v909
        %v911 = vrot.slane %v904, %v910
        %v912 = vcombine.low %v887, %v899
        %v914 = vunpack.c.l.s4 1983009808
        %v915 = vunpack.c.0.s8 %v914
        %v916 = vlaneseq
        %v917 = vshrl.u32 %v916, 7
        %v918 = vsub.s32 %v915, %v917
        %v919 = vrot.slane %v912, %v918
        %v920 = vcombine.low %v911, %v919
        %v921 = vcombine.high %v911, %v919
        %v923 = vunpack.c.l.s4 1934713408
        %v924 = vunpack.c.0.s8 %v923
        %v925 = vlaneseq
        %v926 = vshrl.u32 %v925, 7
        %v927 = vsub.s32 %v924, %v926
        %v928 = vrot.slane %v920, %v927
        %v930 = vunpack.c.l.s4 1934713408
        %v931 = vunpack.c.0.s8 %v930
        %v932 = vlaneseq
        %v933 = vshrl.u32 %v932, 7
        %v934 = vsub.s32 %v931, %v933
        %v935 = vrot.slane %v921, %v934
        %v936 = vcombine.high %v928, 0
        %v937 = vcombine.high %v935, 0
        %v938 = vcombine.low %v884, %v896
        %v940 = vunpack.c.l.s4 1983009808
        %v941 = vunpack.c.0.s8 %v940
        %v942 = vlaneseq
        %v943 = vshrl.u32 %v942, 7
        %v944 = vsub.s32 %v941, %v943
        %v945 = vrot.slane %v938, %v944
        %v946 = vcombine.low %v890, %v902
        %v948 = vunpack.c.l.s4 1983009808
        %v949 = vunpack.c.0.s8 %v948
        %v950 = vlaneseq
        %v951 = vshrl.u32 %v950, 7
        %v952 = vsub.s32 %v949, %v951
        %v953 = vrot.slane %v946, %v952
        %v954 = vcombine.low %v945, %v953
        %v955 = vcombine.high %v945, %v953
        %v957 = vunpack.c.l.s4 1934713408
        %v958 = vunpack.c.0.s8 %v957
        %v959 = vlaneseq
        %v960 = vshrl.u32 %v959, 7
        %v961 = vsub.s32 %v958, %v960
        %v962 = vrot.slane %v954, %v961
        %v964 = vunpack.c.l.s4 1934713408
        %v965 = vunpack.c.0.s8 %v964
        %v966 = vlaneseq
        %v967 = vshrl.u32 %v966, 7
        %v968 = vsub.s32 %v965, %v967
        %v969 = vrot.slane %v955, %v968
        %v970 = vcombine.high %v962, 0
        %v971 = vcombine.high %v969, 0
        %v974 = vpack.i.b16 %v962, %v928
        %v976 = vshrl.u32 %v928, 16
        %v977 = vshrl.u32 %v962, 16
        %v978 = vpack.i.b16 %v977, %v976
        %v982 = vpack.i.b16 %v970, %v936
        %v984 = vshrl.u32 %v936, 16
        %v985 = vshrl.u32 %v970, 16
        %v986 = vpack.i.b16 %v985, %v984
        %v990 = vpack.i.b16 %v969, %v935
        %v992 = vshrl.u32 %v935, 16
        %v993 = vshrl.u32 %v969, 16
        %v994 = vpack.i.b16 %v993, %v992
        %v998 = vpack.i.b16 %v971, %v937
        %v1000 = vshrl.u32 %v937, 16
        %v1001 = vshrl.u32 %v971, 16
        %v1002 = vpack.i.b16 %v1001, %v1000
        %v1004 = vcombine.low %v974, %v990
        %v1006 = vunpack.c.l.s4 1983009808
        %v1007 = vunpack.c.0.s8 %v1006
        %v1008 = vlaneseq
        %v1009 = vshrl.u32 %v1008, 7
        %v1010 = vsub.s32 %v1007, %v1009
        %v1011 = vrot.slane %v1004, %v1010
        %v1012 = vcombine.low %v982, %v998
        %v1014 = vunpack.c.l.s4 1983009808
        %v1015 = vunpack.c.0.s8 %v1014
        %v1016 = vlaneseq
        %v1017 = vshrl.u32 %v1016, 7
        %v1018 = vsub.s32 %v1015, %v1017
        %v1019 = vrot.slane %v1012, %v1018
        %v1020 = vcombine.low %v1011, %v1019
        %v1021 = vcombine.high %v1011, %v1019
        %v1023 = vunpack.c.l.s4 1934713408
        %v1024 = vunpack.c.0.s8 %v1023
        %v1025 = vlaneseq
        %v1026 = vshrl.u32 %v1025, 7
        %v1027 = vsub.s32 %v1024, %v1026
        %v1028 = vrot.slane %v1020, %v1027
        %v1030 = vunpack.c.l.s4 1934713408
        %v1031 = vunpack.c.0.s8 %v1030
        %v1032 = vlaneseq
        %v1033 = vshrl.u32 %v1032, 7
        %v1034 = vsub.s32 %v1031, %v1033
        %v1035 = vrot.slane %v1021, %v1034
        %v1036 = vcombine.high %v1028, 0
        %v1037 = vcombine.high %v1035, 0
        %v1038 = vcombine.low %v978, %v994
        %v1040 = vunpack.c.l.s4 1983009808
        %v1041 = vunpack.c.0.s8 %v1040
        %v1042 = vlaneseq
        %v1043 = vshrl.u32 %v1042, 7
        %v1044 = vsub.s32 %v1041, %v1043
        %v1045 = vrot.slane %v1038, %v1044
        %v1046 = vcombine.low %v986, %v1002
        %v1048 = vunpack.c.l.s4 1983009808
        %v1049 = vunpack.c.0.s8 %v1048
        %v1050 = vlaneseq
        %v1051 = vshrl.u32 %v1050, 7
        %v1052 = vsub.s32 %v1049, %v1051
        %v1053 = vrot.slane %v1046, %v1052
        %v1054 = vcombine.low %v1045, %v1053
        %v1055 = vcombine.high %v1045, %v1053
        %v1057 = vunpack.c.l.s4 1934713408
        %v1058 = vunpack.c.0.s8 %v1057
        %v1059 = vlaneseq
        %v1060 = vshrl.u32 %v1059, 7
        %v1061 = vsub.s32 %v1058, %v1060
        %v1062 = vrot.slane %v1054, %v1061
        %v1064 = vunpack.c.l.s4 1934713408
        %v1065 = vunpack.c.0.s8 %v1064
        %v1066 = vlaneseq
        %v1067 = vshrl.u32 %v1066, 7
        %v1068 = vsub.s32 %v1065, %v1067
        %v1069 = vrot.slane %v1055, %v1068
        %v1070 = vcombine.high %v1062, 0
        %v1071 = vcombine.high %v1069, 0
        %v1074 = vpack.i.b16 %v1062, %v1028
        %v1075 = vshrl.u32 %v1028, 16
        %v1076 = vshrl.u32 %v1062, 16
        %v1077 = vpack.i.b16 %v1076, %v1075
        %v1080 = vpack.i.b16 %v1070, %v1036
        %v1081 = vshrl.u32 %v1036, 16
        %v1082 = vshrl.u32 %v1070, 16
        %v1083 = vpack.i.b16 %v1082, %v1081
        %v1086 = vpack.i.b16 %v1069, %v1035
        %v1087 = vshrl.u32 %v1035, 16
        %v1088 = vshrl.u32 %v1069, 16
        %v1089 = vpack.i.b16 %v1088, %v1087
        %v1092 = vpack.i.b16 %v1071, %v1037
        %v1093 = vshrl.u32 %v1037, 16
        %v1094 = vshrl.u32 %v1071, 16
        %v1095 = vpack.i.b16 %v1094, %v1093
        %v1096 = vpack.c.bf16 %v662, %v662
        %1098 = vrot.lane.b32.xlu0 %v1096, 112
        %v1099 = vpop.permute.xlu0 %1098
        %1101 = vrot.lane.b32.xlu0 %v1096, 96
        %v1102 = vpop.permute.xlu0 %1101
        %1104 = vrot.lane.b32.xlu0 %v1096, 80
        %v1105 = vpop.permute.xlu0 %1104
        %1107 = vrot.lane.b32.xlu0 %v1096, 64
        %v1108 = vpop.permute.xlu0 %1107
        %1110 = vrot.lane.b32.xlu0 %v1096, 48
        %v1111 = vpop.permute.xlu0 %1110
        %1113 = vrot.lane.b32.xlu0 %v1096, 32
        %v1114 = vpop.permute.xlu0 %1113
        %1116 = vrot.lane.b32.xlu0 %v1096, 16
        %v1117 = vpop.permute.xlu0 %1116
        %v1119 = vcombine.low %v1096, %v1108
        %v1121 = vunpack.c.l.s4 1983009808
        %v1122 = vunpack.c.0.s8 %v1121
        %v1123 = vlaneseq
        %v1124 = vshrl.u32 %v1123, 7
        %v1125 = vsub.s32 %v1122, %v1124
        %v1126 = vrot.slane %v1119, %v1125
        %v1127 = vcombine.low %v1102, %v1114
        %v1129 = vunpack.c.l.s4 1983009808
        %v1130 = vunpack.c.0.s8 %v1129
        %v1131 = vlaneseq
        %v1132 = vshrl.u32 %v1131, 7
        %v1133 = vsub.s32 %v1130, %v1132
        %v1134 = vrot.slane %v1127, %v1133
        %v1135 = vcombine.low %v1126, %v1134
        %v1136 = vcombine.high %v1126, %v1134
        %v1138 = vunpack.c.l.s4 1934713408
        %v1139 = vunpack.c.0.s8 %v1138
        %v1140 = vlaneseq
        %v1141 = vshrl.u32 %v1140, 7
        %v1142 = vsub.s32 %v1139, %v1141
        %v1143 = vrot.slane %v1135, %v1142
        %v1145 = vunpack.c.l.s4 1934713408
        %v1146 = vunpack.c.0.s8 %v1145
        %v1147 = vlaneseq
        %v1148 = vshrl.u32 %v1147, 7
        %v1149 = vsub.s32 %v1146, %v1148
        %v1150 = vrot.slane %v1136, %v1149
        %v1151 = vcombine.high %v1143, 0
        %v1152 = vcombine.high %v1150, 0
        %v1153 = vcombine.low %v1099, %v1111
        %v1155 = vunpack.c.l.s4 1983009808
        %v1156 = vunpack.c.0.s8 %v1155
        %v1157 = vlaneseq
        %v1158 = vshrl.u32 %v1157, 7
        %v1159 = vsub.s32 %v1156, %v1158
        %v1160 = vrot.slane %v1153, %v1159
        %v1161 = vcombine.low %v1105, %v1117
        %v1163 = vunpack.c.l.s4 1983009808
        %v1164 = vunpack.c.0.s8 %v1163
        %v1165 = vlaneseq
        %v1166 = vshrl.u32 %v1165, 7
        %v1167 = vsub.s32 %v1164, %v1166
        %v1168 = vrot.slane %v1161, %v1167
        %v1169 = vcombine.low %v1160, %v1168
        %v1170 = vcombine.high %v1160, %v1168
        %v1172 = vunpack.c.l.s4 1934713408
        %v1173 = vunpack.c.0.s8 %v1172
        %v1174 = vlaneseq
        %v1175 = vshrl.u32 %v1174, 7
        %v1176 = vsub.s32 %v1173, %v1175
        %v1177 = vrot.slane %v1169, %v1176
        %v1179 = vunpack.c.l.s4 1934713408
        %v1180 = vunpack.c.0.s8 %v1179
        %v1181 = vlaneseq
        %v1182 = vshrl.u32 %v1181, 7
        %v1183 = vsub.s32 %v1180, %v1182
        %v1184 = vrot.slane %v1170, %v1183
        %v1185 = vcombine.high %v1177, 0
        %v1186 = vcombine.high %v1184, 0
        %v1189 = vpack.i.b16 %v1177, %v1143
        %v1191 = vshrl.u32 %v1143, 16
        %v1192 = vshrl.u32 %v1177, 16
        %v1193 = vpack.i.b16 %v1192, %v1191
        %v1197 = vpack.i.b16 %v1185, %v1151
        %v1199 = vshrl.u32 %v1151, 16
        %v1200 = vshrl.u32 %v1185, 16
        %v1201 = vpack.i.b16 %v1200, %v1199
        %v1205 = vpack.i.b16 %v1184, %v1150
        %v1207 = vshrl.u32 %v1150, 16
        %v1208 = vshrl.u32 %v1184, 16
        %v1209 = vpack.i.b16 %v1208, %v1207
        %v1213 = vpack.i.b16 %v1186, %v1152
        %v1215 = vshrl.u32 %v1152, 16
        %v1216 = vshrl.u32 %v1186, 16
        %v1217 = vpack.i.b16 %v1216, %v1215
        %v1219 = vcombine.low %v1189, %v1205
        %v1221 = vunpack.c.l.s4 1983009808
        %v1222 = vunpack.c.0.s8 %v1221
        %v1223 = vlaneseq
        %v1224 = vshrl.u32 %v1223, 7
        %v1225 = vsub.s32 %v1222, %v1224
        %v1226 = vrot.slane %v1219, %v1225
        %v1227 = vcombine.low %v1197, %v1213
        %v1229 = vunpack.c.l.s4 1983009808
        %v1230 = vunpack.c.0.s8 %v1229
        %v1231 = vlaneseq
        %v1232 = vshrl.u32 %v1231, 7
        %v1233 = vsub.s32 %v1230, %v1232
        %v1234 = vrot.slane %v1227, %v1233
        %v1235 = vcombine.low %v1226, %v1234
        %v1236 = vcombine.high %v1226, %v1234
        %v1238 = vunpack.c.l.s4 1934713408
        %v1239 = vunpack.c.0.s8 %v1238
        %v1240 = vlaneseq
        %v1241 = vshrl.u32 %v1240, 7
        %v1242 = vsub.s32 %v1239, %v1241
        %v1243 = vrot.slane %v1235, %v1242
        %v1245 = vunpack.c.l.s4 1934713408
        %v1246 = vunpack.c.0.s8 %v1245
        %v1247 = vlaneseq
        %v1248 = vshrl.u32 %v1247, 7
        %v1249 = vsub.s32 %v1246, %v1248
        %v1250 = vrot.slane %v1236, %v1249
        %v1251 = vcombine.high %v1243, 0
        %v1252 = vcombine.high %v1250, 0
        %v1253 = vcombine.low %v1193, %v1209
        %v1255 = vunpack.c.l.s4 1983009808
        %v1256 = vunpack.c.0.s8 %v1255
        %v1257 = vlaneseq
        %v1258 = vshrl.u32 %v1257, 7
        %v1259 = vsub.s32 %v1256, %v1258
        %v1260 = vrot.slane %v1253, %v1259
        %v1261 = vcombine.low %v1201, %v1217
        %v1263 = vunpack.c.l.s4 1983009808
        %v1264 = vunpack.c.0.s8 %v1263
        %v1265 = vlaneseq
        %v1266 = vshrl.u32 %v1265, 7
        %v1267 = vsub.s32 %v1264, %v1266
        %v1268 = vrot.slane %v1261, %v1267
        %v1269 = vcombine.low %v1260, %v1268
        %v1270 = vcombine.high %v1260, %v1268
        %v1272 = vunpack.c.l.s4 1934713408
        %v1273 = vunpack.c.0.s8 %v1272
        %v1274 = vlaneseq
        %v1275 = vshrl.u32 %v1274, 7
        %v1276 = vsub.s32 %v1273, %v1275
        %v1277 = vrot.slane %v1269, %v1276
        %v1279 = vunpack.c.l.s4 1934713408
        %v1280 = vunpack.c.0.s8 %v1279
        %v1281 = vlaneseq
        %v1282 = vshrl.u32 %v1281, 7
        %v1283 = vsub.s32 %v1280, %v1282
        %v1284 = vrot.slane %v1270, %v1283
        %v1285 = vcombine.high %v1277, 0
        %v1286 = vcombine.high %v1284, 0
        %v1289 = vpack.i.b16 %v1277, %v1243
        %v1290 = vshrl.u32 %v1243, 16
        %v1291 = vshrl.u32 %v1277, 16
        %v1292 = vpack.i.b16 %v1291, %v1290
        %v1295 = vpack.i.b16 %v1285, %v1251
        %v1296 = vshrl.u32 %v1251, 16
        %v1297 = vshrl.u32 %v1285, 16
        %v1298 = vpack.i.b16 %v1297, %v1296
        %v1301 = vpack.i.b16 %v1284, %v1250
        %v1302 = vshrl.u32 %v1250, 16
        %v1303 = vshrl.u32 %v1284, 16
        %v1304 = vpack.i.b16 %v1303, %v1302
        %v1307 = vpack.i.b16 %v1286, %v1252
        %v1308 = vshrl.u32 %v1252, 16
        %v1309 = vshrl.u32 %v1286, 16
        %v1310 = vpack.i.b16 %v1309, %v1308
        %vm1311 = vcmask 130048
        %v1313 = vsel %vm1311, %v859, 0
        %v1316 = vsel %vm1311, %v1074, 0
        %1318 = vmatprep.subr.bf16.mxu0 0
        %1319 = vmatpush1.bf16.xpose.msra.mxu0 0
        %1320 = vmatprep.subr.bf16.mxu0 0
        %1321 = vmatpush1.bf16.xpose.msra.mxu0 0
        %1322 = vmatprep.subr.bf16.mxu0 0
        %1323 = vmatpush1.bf16.xpose.msra.mxu0 0
        %1324 = vmatprep.subr.bf16.mxu0 0
        %1325 = vmatpush1.bf16.xpose.msra.mxu0 0
        %1326 = vmatprep.subr.bf16.mxu0 0
        %1327 = vmatpush1.bf16.xpose.msra.mxu0 0
        %1328 = vmatprep.subr.bf16.mxu0 0
        %1329 = vmatpush1.bf16.xpose.msra.mxu0 0
        %1330 = vmatprep.subr.bf16.mxu0 0
        %1331 = vmatpush1.bf16.xpose.msra.mxu0 0
        %1332 = vmatprep.subr.bf16.mxu0 0
        %1333 = vmatpush1.bf16.xpose.msra.mxu0 %v1316
        %1334 = vmatprep.subr.bf16.mxu0 0
        %1335 = vmatpush2.bf16.xpose.msra.mxu0 0
        %1336 = vmatprep.subr.bf16.mxu0 0
        %1337 = vmatpush2.bf16.xpose.msra.mxu0 0
        %1338 = vmatprep.subr.bf16.mxu0 0
        %1339 = vmatpush2.bf16.xpose.msra.mxu0 0
        %1340 = vmatprep.subr.bf16.mxu0 0
        %1341 = vmatpush2.bf16.xpose.msra.mxu0 0
        %1342 = vmatprep.subr.bf16.mxu0 0
        %1343 = vmatpush2.bf16.xpose.msra.mxu0 0
        %1344 = vmatprep.subr.bf16.mxu0 0
        %1345 = vmatpush2.bf16.xpose.msra.mxu0 0
        %1346 = vmatprep.subr.bf16.mxu0 0
        %1347 = vmatpush2.bf16.xpose.msra.mxu0 0
        %1348 = vmatprep.subr.bf16.mxu0 0
        %1349 = vmatpush2.bf16.xpose.msra.mxu0 0
        %1350 = vmatprep.mubr.bf16.mxu0 0
        %1351 = vmatmul.mubr.bf16.gmra.mxu0 %v1313
        %v1352 = vpop.f32.mrf.mxu0
        %v1353 = vadd.f32 0.0, %v1352
        %v1354 = vpop.f32.mrf.mxu0
        %v1355 = vpop.f32.mrf.mxu0
        %v1356 = vpop.f32.mrf.mxu0
        %1357 = vdwg.mxu0
        %v1359 = vsel %vm1311, %v862, 0
        %v1362 = vsel %vm1311, %v1077, 0
        %1364 = vmatprep.subr.bf16.mxu0 0
        %1365 = vmatpush1.bf16.xpose.msra.mxu0 0
        %1366 = vmatprep.subr.bf16.mxu0 0
        %1367 = vmatpush1.bf16.xpose.msra.mxu0 0
        %1368 = vmatprep.subr.bf16.mxu0 0
        %1369 = vmatpush1.bf16.xpose.msra.mxu0 0
        %1370 = vmatprep.subr.bf16.mxu0 0
        %1371 = vmatpush1.bf16.xpose.msra.mxu0 0
        %1372 = vmatprep.subr.bf16.mxu0 0
        %1373 = vmatpush1.bf16.xpose.msra.mxu0 0
        %1374 = vmatprep.subr.bf16.mxu0 0
        %1375 = vmatpush1.bf16.xpose.msra.mxu0 0
        %1376 = vmatprep.subr.bf16.mxu0 0
        %1377 = vmatpush1.bf16.xpose.msra.mxu0 0
        %1378 = vmatprep.subr.bf16.mxu0 0
        %1379 = vmatpush1.bf16.xpose.msra.mxu0 %v1362
        %1380 = vmatprep.subr.bf16.mxu0 0
        %1381 = vmatpush2.bf16.xpose.msra.mxu0 0
        %1382 = vmatprep.subr.bf16.mxu0 0
        %1383 = vmatpush2.bf16.xpose.msra.mxu0 0
        %1384 = vmatprep.subr.bf16.mxu0 0
        %1385 = vmatpush2.bf16.xpose.msra.mxu0 0
        %1386 = vmatprep.subr.bf16.mxu0 0
        %1387 = vmatpush2.bf16.xpose.msra.mxu0 0
        %1388 = vmatprep.subr.bf16.mxu0 0
        %1389 = vmatpush2.bf16.xpose.msra.mxu0 0
        %1390 = vmatprep.subr.bf16.mxu0 0
        %1391 = vmatpush2.bf16.xpose.msra.mxu0 0
        %1392 = vmatprep.subr.bf16.mxu0 0
        %1393 = vmatpush2.bf16.xpose.msra.mxu0 0
        %1394 = vmatprep.subr.bf16.mxu0 0
        %1395 = vmatpush2.bf16.xpose.msra.mxu0 0
        %1396 = vmatprep.mubr.bf16.mxu0 0
        %1397 = vmatmul.mubr.bf16.gmra.mxu0 %v1359
        %v1398 = vpop.f32.mrf.mxu0
        %v1399 = vadd.f32 0.0, %v1398
        %v1400 = vpop.f32.mrf.mxu0
        %v1401 = vpop.f32.mrf.mxu0
        %v1402 = vpop.f32.mrf.mxu0
        %1403 = vdwg.mxu0
        %v1405 = vsel %vm1311, %v865, 0
        %v1408 = vsel %vm1311, %v1080, 0
        %1410 = vmatprep.subr.bf16.mxu0 0
        %1411 = vmatpush1.bf16.xpose.msra.mxu0 0
        %1412 = vmatprep.subr.bf16.mxu0 0
        %1413 = vmatpush1.bf16.xpose.msra.mxu0 0
        %1414 = vmatprep.subr.bf16.mxu0 0
        %1415 = vmatpush1.bf16.xpose.msra.mxu0 0
        %1416 = vmatprep.subr.bf16.mxu0 0
        %1417 = vmatpush1.bf16.xpose.msra.mxu0 0
        %1418 = vmatprep.subr.bf16.mxu0 0
        %1419 = vmatpush1.bf16.xpose.msra.mxu0 0
        %1420 = vmatprep.subr.bf16.mxu0 0
        %1421 = vmatpush1.bf16.xpose.msra.mxu0 0
        %1422 = vmatprep.subr.bf16.mxu0 0
        %1423 = vmatpush1.bf16.xpose.msra.mxu0 0
        %1424 = vmatprep.subr.bf16.mxu0 0
        %1425 = vmatpush1.bf16.xpose.msra.mxu0 %v1408
        %1426 = vmatprep.subr.bf16.mxu0 0
        %1427 = vmatpush2.bf16.xpose.msra.mxu0 0
        %1428 = vmatprep.subr.bf16.mxu0 0
        %1429 = vmatpush2.bf16.xpose.msra.mxu0 0
        %1430 = vmatprep.subr.bf16.mxu0 0
        %1431 = vmatpush2.bf16.xpose.msra.mxu0 0
        %1432 = vmatprep.subr.bf16.mxu0 0
        %1433 = vmatpush2.bf16.xpose.msra.mxu0 0
        %1434 = vmatprep.subr.bf16.mxu0 0
        %1435 = vmatpush2.bf16.xpose.msra.mxu0 0
        %1436 = vmatprep.subr.bf16.mxu0 0
        %1437 = vmatpush2.bf16.xpose.msra.mxu0 0
        %1438 = vmatprep.subr.bf16.mxu0 0
        %1439 = vmatpush2.bf16.xpose.msra.mxu0 0
        %1440 = vmatprep.subr.bf16.mxu0 0
        %1441 = vmatpush2.bf16.xpose.msra.mxu0 0
        %1442 = vmatprep.mubr.bf16.mxu0 0
        %1443 = vmatmul.mubr.bf16.gmra.mxu0 %v1405
        %v1444 = vpop.f32.mrf.mxu0
        %v1445 = vadd.f32 0.0, %v1444
        %v1446 = vpop.f32.mrf.mxu0
        %v1447 = vpop.f32.mrf.mxu0
        %v1448 = vpop.f32.mrf.mxu0
        %1449 = vdwg.mxu0
        %v1451 = vsel %vm1311, %v868, 0
        %v1454 = vsel %vm1311, %v1083, 0
        %1456 = vmatprep.subr.bf16.mxu0 0
        %1457 = vmatpush1.bf16.xpose.msra.mxu0 0
        %1458 = vmatprep.subr.bf16.mxu0 0
        %1459 = vmatpush1.bf16.xpose.msra.mxu0 0
        %1460 = vmatprep.subr.bf16.mxu0 0
        %1461 = vmatpush1.bf16.xpose.msra.mxu0 0
        %1462 = vmatprep.subr.bf16.mxu0 0
        %1463 = vmatpush1.bf16.xpose.msra.mxu0 0
        %1464 = vmatprep.subr.bf16.mxu0 0
        %1465 = vmatpush1.bf16.xpose.msra.mxu0 0
        %1466 = vmatprep.subr.bf16.mxu0 0
        %1467 = vmatpush1.bf16.xpose.msra.mxu0 0
        %1468 = vmatprep.subr.bf16.mxu0 0
        %1469 = vmatpush1.bf16.xpose.msra.mxu0 0
        %1470 = vmatprep.subr.bf16.mxu0 0
        %1471 = vmatpush1.bf16.xpose.msra.mxu0 %v1454
        %1472 = vmatprep.subr.bf16.mxu0 0
        %1473 = vmatpush2.bf16.xpose.msra.mxu0 0
        %1474 = vmatprep.subr.bf16.mxu0 0
        %1475 = vmatpush2.bf16.xpose.msra.mxu0 0
        %1476 = vmatprep.subr.bf16.mxu0 0
        %1477 = vmatpush2.bf16.xpose.msra.mxu0 0
        %1478 = vmatprep.subr.bf16.mxu0 0
        %1479 = vmatpush2.bf16.xpose.msra.mxu0 0
        %1480 = vmatprep.subr.bf16.mxu0 0
        %1481 = vmatpush2.bf16.xpose.msra.mxu0 0
        %1482 = vmatprep.subr.bf16.mxu0 0
        %1483 = vmatpush2.bf16.xpose.msra.mxu0 0
        %1484 = vmatprep.subr.bf16.mxu0 0
        %1485 = vmatpush2.bf16.xpose.msra.mxu0 0
        %1486 = vmatprep.subr.bf16.mxu0 0
        %1487 = vmatpush2.bf16.xpose.msra.mxu0 0
        %1488 = vmatprep.mubr.bf16.mxu0 0
        %1489 = vmatmul.mubr.bf16.gmra.mxu0 %v1451
        %v1490 = vpop.f32.mrf.mxu0
        %v1491 = vadd.f32 0.0, %v1490
        %v1492 = vpop.f32.mrf.mxu0
        %v1493 = vpop.f32.mrf.mxu0
        %v1494 = vpop.f32.mrf.mxu0
        %1495 = vdwg.mxu0
        %v1497 = vsel %vm1311, %v871, 0
        %v1500 = vsel %vm1311, %v1086, 0
        %1502 = vmatprep.subr.bf16.mxu0 0
        %1503 = vmatpush1.bf16.xpose.msra.mxu0 0
        %1504 = vmatprep.subr.bf16.mxu0 0
        %1505 = vmatpush1.bf16.xpose.msra.mxu0 0
        %1506 = vmatprep.subr.bf16.mxu0 0
        %1507 = vmatpush1.bf16.xpose.msra.mxu0 0
        %1508 = vmatprep.subr.bf16.mxu0 0
        %1509 = vmatpush1.bf16.xpose.msra.mxu0 0
        %1510 = vmatprep.subr.bf16.mxu0 0
        %1511 = vmatpush1.bf16.xpose.msra.mxu0 0
        %1512 = vmatprep.subr.bf16.mxu0 0
        %1513 = vmatpush1.bf16.xpose.msra.mxu0 0
        %1514 = vmatprep.subr.bf16.mxu0 0
        %1515 = vmatpush1.bf16.xpose.msra.mxu0 0
        %1516 = vmatprep.subr.bf16.mxu0 0
        %1517 = vmatpush1.bf16.xpose.msra.mxu0 %v1500
        %1518 = vmatprep.subr.bf16.mxu0 0
        %1519 = vmatpush2.bf16.xpose.msra.mxu0 0
        %1520 = vmatprep.subr.bf16.mxu0 0
        %1521 = vmatpush2.bf16.xpose.msra.mxu0 0
        %1522 = vmatprep.subr.bf16.mxu0 0
        %1523 = vmatpush2.bf16.xpose.msra.mxu0 0
        %1524 = vmatprep.subr.bf16.mxu0 0
        %1525 = vmatpush2.bf16.xpose.msra.mxu0 0
        %1526 = vmatprep.subr.bf16.mxu0 0
        %1527 = vmatpush2.bf16.xpose.msra.mxu0 0
        %1528 = vmatprep.subr.bf16.mxu0 0
        %1529 = vmatpush2.bf16.xpose.msra.mxu0 0
        %1530 = vmatprep.subr.bf16.mxu0 0
        %1531 = vmatpush2.bf16.xpose.msra.mxu0 0
        %1532 = vmatprep.subr.bf16.mxu0 0
        %1533 = vmatpush2.bf16.xpose.msra.mxu0 0
        %1534 = vmatprep.mubr.bf16.mxu0 0
        %1535 = vmatmul.mubr.bf16.gmra.mxu0 %v1497
        %v1536 = vpop.f32.mrf.mxu0
        %v1537 = vadd.f32 0.0, %v1536
        %v1538 = vpop.f32.mrf.mxu0
        %v1539 = vpop.f32.mrf.mxu0
        %v1540 = vpop.f32.mrf.mxu0
        %1541 = vdwg.mxu0
        %v1543 = vsel %vm1311, %v874, 0
        %v1546 = vsel %vm1311, %v1089, 0
        %1548 = vmatprep.subr.bf16.mxu0 0
        %1549 = vmatpush1.bf16.xpose.msra.mxu0 0
        %1550 = vmatprep.subr.bf16.mxu0 0
        %1551 = vmatpush1.bf16.xpose.msra.mxu0 0
        %1552 = vmatprep.subr.bf16.mxu0 0
        %1553 = vmatpush1.bf16.xpose.msra.mxu0 0
        %1554 = vmatprep.subr.bf16.mxu0 0
        %1555 = vmatpush1.bf16.xpose.msra.mxu0 0
        %1556 = vmatprep.subr.bf16.mxu0 0
        %1557 = vmatpush1.bf16.xpose.msra.mxu0 0
        %1558 = vmatprep.subr.bf16.mxu0 0
        %1559 = vmatpush1.bf16.xpose.msra.mxu0 0
        %1560 = vmatprep.subr.bf16.mxu0 0
        %1561 = vmatpush1.bf16.xpose.msra.mxu0 0
        %1562 = vmatprep.subr.bf16.mxu0 0
        %1563 = vmatpush1.bf16.xpose.msra.mxu0 %v1546
        %1564 = vmatprep.subr.bf16.mxu0 0
        %1565 = vmatpush2.bf16.xpose.msra.mxu0 0
        %1566 = vmatprep.subr.bf16.mxu0 0
        %1567 = vmatpush2.bf16.xpose.msra.mxu0 0
        %1568 = vmatprep.subr.bf16.mxu0 0
        %1569 = vmatpush2.bf16.xpose.msra.mxu0 0
        %1570 = vmatprep.subr.bf16.mxu0 0
        %1571 = vmatpush2.bf16.xpose.msra.mxu0 0
        %1572 = vmatprep.subr.bf16.mxu0 0
        %1573 = vmatpush2.bf16.xpose.msra.mxu0 0
        %1574 = vmatprep.subr.bf16.mxu0 0
        %1575 = vmatpush2.bf16.xpose.msra.mxu0 0
        %1576 = vmatprep.subr.bf16.mxu0 0
        %1577 = vmatpush2.bf16.xpose.msra.mxu0 0
        %1578 = vmatprep.subr.bf16.mxu0 0
        %1579 = vmatpush2.bf16.xpose.msra.mxu0 0
        %1580 = vmatprep.mubr.bf16.mxu0 0
        %1581 = vmatmul.mubr.bf16.gmra.mxu0 %v1543
        %v1582 = vpop.f32.mrf.mxu0
        %v1583 = vadd.f32 0.0, %v1582
        %v1584 = vpop.f32.mrf.mxu0
        %v1585 = vpop.f32.mrf.mxu0
        %v1586 = vpop.f32.mrf.mxu0
        %1587 = vdwg.mxu0
        %v1589 = vsel %vm1311, %v877, 0
        %v1592 = vsel %vm1311, %v1092, 0
        %1594 = vmatprep.subr.bf16.mxu0 0
        %1595 = vmatpush1.bf16.xpose.msra.mxu0 0
        %1596 = vmatprep.subr.bf16.mxu0 0
        %1597 = vmatpush1.bf16.xpose.msra.mxu0 0
        %1598 = vmatprep.subr.bf16.mxu0 0
        %1599 = vmatpush1.bf16.xpose.msra.mxu0 0
        %1600 = vmatprep.subr.bf16.mxu0 0
        %1601 = vmatpush1.bf16.xpose.msra.mxu0 0
        %1602 = vmatprep.subr.bf16.mxu0 0
        %1603 = vmatpush1.bf16.xpose.msra.mxu0 0
        %1604 = vmatprep.subr.bf16.mxu0 0
        %1605 = vmatpush1.bf16.xpose.msra.mxu0 0
        %1606 = vmatprep.subr.bf16.mxu0 0
        %1607 = vmatpush1.bf16.xpose.msra.mxu0 0
        %1608 = vmatprep.subr.bf16.mxu0 0
        %1609 = vmatpush1.bf16.xpose.msra.mxu0 %v1592
        %1610 = vmatprep.subr.bf16.mxu0 0
        %1611 = vmatpush2.bf16.xpose.msra.mxu0 0
        %1612 = vmatprep.subr.bf16.mxu0 0
        %1613 = vmatpush2.bf16.xpose.msra.mxu0 0
        %1614 = vmatprep.subr.bf16.mxu0 0
        %1615 = vmatpush2.bf16.xpose.msra.mxu0 0
        %1616 = vmatprep.subr.bf16.mxu0 0
        %1617 = vmatpush2.bf16.xpose.msra.mxu0 0
        %1618 = vmatprep.subr.bf16.mxu0 0
        %1619 = vmatpush2.bf16.xpose.msra.mxu0 0
        %1620 = vmatprep.subr.bf16.mxu0 0
        %1621 = vmatpush2.bf16.xpose.msra.mxu0 0
        %1622 = vmatprep.subr.bf16.mxu0 0
        %1623 = vmatpush2.bf16.xpose.msra.mxu0 0
        %1624 = vmatprep.subr.bf16.mxu0 0
        %1625 = vmatpush2.bf16.xpose.msra.mxu0 0
        %1626 = vmatprep.mubr.bf16.mxu0 0
        %1627 = vmatmul.mubr.bf16.gmra.mxu0 %v1589
        %v1628 = vpop.f32.mrf.mxu0
        %v1629 = vadd.f32 0.0, %v1628
        %v1630 = vpop.f32.mrf.mxu0
        %v1631 = vpop.f32.mrf.mxu0
        %v1632 = vpop.f32.mrf.mxu0
        %1633 = vdwg.mxu0
        %v1635 = vsel %vm1311, %v880, 0
        %v1638 = vsel %vm1311, %v1095, 0
        %1640 = vmatprep.subr.bf16.mxu0 0
        %1641 = vmatpush1.bf16.xpose.msra.mxu0 0
        %1642 = vmatprep.subr.bf16.mxu0 0
        %1643 = vmatpush1.bf16.xpose.msra.mxu0 0
        %1644 = vmatprep.subr.bf16.mxu0 0
        %1645 = vmatpush1.bf16.xpose.msra.mxu0 0
        %1646 = vmatprep.subr.bf16.mxu0 0
        %1647 = vmatpush1.bf16.xpose.msra.mxu0 0
        %1648 = vmatprep.subr.bf16.mxu0 0
        %1649 = vmatpush1.bf16.xpose.msra.mxu0 0
        %1650 = vmatprep.subr.bf16.mxu0 0
        %1651 = vmatpush1.bf16.xpose.msra.mxu0 0
        %1652 = vmatprep.subr.bf16.mxu0 0
        %1653 = vmatpush1.bf16.xpose.msra.mxu0 0
        %1654 = vmatprep.subr.bf16.mxu0 0
        %1655 = vmatpush1.bf16.xpose.msra.mxu0 %v1638
        %1656 = vmatprep.subr.bf16.mxu0 0
        %1657 = vmatpush2.bf16.xpose.msra.mxu0 0
        %1658 = vmatprep.subr.bf16.mxu0 0
        %1659 = vmatpush2.bf16.xpose.msra.mxu0 0
        %1660 = vmatprep.subr.bf16.mxu0 0
        %1661 = vmatpush2.bf16.xpose.msra.mxu0 0
        %1662 = vmatprep.subr.bf16.mxu0 0
        %1663 = vmatpush2.bf16.xpose.msra.mxu0 0
        %1664 = vmatprep.subr.bf16.mxu0 0
        %1665 = vmatpush2.bf16.xpose.msra.mxu0 0
        %1666 = vmatprep.subr.bf16.mxu0 0
        %1667 = vmatpush2.bf16.xpose.msra.mxu0 0
        %1668 = vmatprep.subr.bf16.mxu0 0
        %1669 = vmatpush2.bf16.xpose.msra.mxu0 0
        %1670 = vmatprep.subr.bf16.mxu0 0
        %1671 = vmatpush2.bf16.xpose.msra.mxu0 0
        %1672 = vmatprep.mubr.bf16.mxu0 0
        %1673 = vmatmul.mubr.bf16.gmra.mxu0 %v1635
        %v1674 = vpop.f32.mrf.mxu0
        %v1675 = vadd.f32 0.0, %v1674
        %v1676 = vpop.f32.mrf.mxu0
        %v1677 = vpop.f32.mrf.mxu0
        %v1678 = vpop.f32.mrf.mxu0
        %1679 = vdwg.mxu0
        %v1680 = vmul.f32 %v1353, 0.25
        %v1681 = vmul.f32 %v1399, 0.25
        %v1682 = vmul.f32 %v1445, 0.25
        %v1683 = vmul.f32 %v1491, 0.25
        %v1684 = vmul.f32 %v1537, 0.25
        %v1685 = vmul.f32 %v1583, 0.25
        %v1686 = vmul.f32 %v1629, 0.25
        %v1687 = vmul.f32 %v1675, 0.25
        %vm1688 = vcmask 64512
        %v1689 = vsel %vm1688, %v1680, -inf
        %1690 = vmax.xlane.f32.xlu0 %v1689
        %v1691 = vpop.xlane.xlu0 %1690
        %v1692 = vsel %vm1688, %v1681, -inf
        %1693 = vmax.xlane.f32.xlu0 %v1692
        %v1694 = vpop.xlane.xlu0 %1693
        %v1695 = vsel %vm1688, %v1682, -inf
        %1696 = vmax.xlane.f32.xlu0 %v1695
        %v1697 = vpop.xlane.xlu0 %1696
        %v1698 = vsel %vm1688, %v1683, -inf
        %1699 = vmax.xlane.f32.xlu0 %v1698
        %v1700 = vpop.xlane.xlu0 %1699
        %v1701 = vsel %vm1688, %v1684, -inf
        %1702 = vmax.xlane.f32.xlu0 %v1701
        %v1703 = vpop.xlane.xlu0 %1702
        %v1704 = vsel %vm1688, %v1685, -inf
        %1705 = vmax.xlane.f32.xlu0 %v1704
        %v1706 = vpop.xlane.xlu0 %1705
        %v1707 = vsel %vm1688, %v1686, -inf
        %1708 = vmax.xlane.f32.xlu0 %v1707
        %v1709 = vpop.xlane.xlu0 %1708
        %v1710 = vsel %vm1688, %v1687, -inf
        %1711 = vmax.xlane.f32.xlu0 %v1710
        %v1712 = vpop.xlane.xlu0 %1711
        %v1713 = vsub.f32 %v1680, %v1691
        %v1714 = vsub.f32 %v1681, %v1694
        %v1715 = vsub.f32 %v1682, %v1697
        %v1716 = vsub.f32 %v1683, %v1700
        %v1717 = vsub.f32 %v1684, %v1703
        %v1718 = vsub.f32 %v1685, %v1706
        %v1719 = vsub.f32 %v1686, %v1709
        %v1720 = vsub.f32 %v1687, %v1712
        %v1721 = vmul.f32 %v1713, 1.442695
        %v1722 = vpow.pop %v1721
        %v1723 = vmul.f32 %v1714, 1.442695
        %v1724 = vpow.pop %v1723
        %v1725 = vmul.f32 %v1715, 1.442695
        %v1726 = vpow.pop %v1725
        %v1727 = vmul.f32 %v1716, 1.442695
        %v1728 = vpow.pop %v1727
        %v1729 = vmul.f32 %v1717, 1.442695
        %v1730 = vpow.pop %v1729
        %v1731 = vmul.f32 %v1718, 1.442695
        %v1732 = vpow.pop %v1731
        %v1733 = vmul.f32 %v1719, 1.442695
        %v1734 = vpow.pop %v1733
        %v1735 = vmul.f32 %v1720, 1.442695
        %v1736 = vpow.pop %v1735
        %v1737 = vsel %vm1688, %v1722, 0.0
        %1738 = vadd.xlane.f32.xlu0 %v1737
        %v1739 = vpop.xlane.xlu0 %1738
        %v1740 = vsel %vm1688, %v1724, 0.0
        %1741 = vadd.xlane.f32.xlu0 %v1740
        %v1742 = vpop.xlane.xlu0 %1741
        %v1743 = vsel %vm1688, %v1726, 0.0
        %1744 = vadd.xlane.f32.xlu0 %v1743
        %v1745 = vpop.xlane.xlu0 %1744
        %v1746 = vsel %vm1688, %v1728, 0.0
        %1747 = vadd.xlane.f32.xlu0 %v1746
        %v1748 = vpop.xlane.xlu0 %1747
        %v1749 = vsel %vm1688, %v1730, 0.0
        %1750 = vadd.xlane.f32.xlu0 %v1749
        %v1751 = vpop.xlane.xlu0 %1750
        %v1752 = vsel %vm1688, %v1732, 0.0
        %1753 = vadd.xlane.f32.xlu0 %v1752
        %v1754 = vpop.xlane.xlu0 %1753
        %v1755 = vsel %vm1688, %v1734, 0.0
        %1756 = vadd.xlane.f32.xlu0 %v1755
        %v1757 = vpop.xlane.xlu0 %1756
        %v1758 = vsel %vm1688, %v1736, 0.0
        %1759 = vadd.xlane.f32.xlu0 %v1758
        %v1760 = vpop.xlane.xlu0 %1759
        %v1761 = vrcp.pop %v1739
        %v1762 = vrcp.pop %v1742
        %v1763 = vrcp.pop %v1745
        %v1764 = vrcp.pop %v1748
        %v1765 = vrcp.pop %v1751
        %v1766 = vrcp.pop %v1754
        %v1767 = vrcp.pop %v1757
        %v1768 = vrcp.pop %v1760
        %v1769 = vmul.f32 %v1722, %v1761
        %v1770 = vmul.f32 %v1724, %v1762
        %v1771 = vmul.f32 %v1726, %v1763
        %v1772 = vmul.f32 %v1728, %v1764
        %v1773 = vmul.f32 %v1730, %v1765
        %v1774 = vmul.f32 %v1732, %v1766
        %v1775 = vmul.f32 %v1734, %v1767
        %v1776 = vmul.f32 %v1736, %v1768
        %v1777 = vpack.c.bf16 %v1769, %v1769
        %v1778 = vpack.c.bf16 %v1770, %v1770
        %v1779 = vpack.c.bf16 %v1771, %v1771
        %v1780 = vpack.c.bf16 %v1772, %v1772
        %v1781 = vpack.c.bf16 %v1773, %v1773
        %v1782 = vpack.c.bf16 %v1774, %v1774
        %v1783 = vpack.c.bf16 %v1775, %v1775
        %v1784 = vpack.c.bf16 %v1776, %v1776
        %v1786 = vsel %vm1688, %v1777, 0
        %vm1788 = vcmask 1043456
        %v1790 = vsel %vm1788, %v1289, 0
        %1792 = vmatprep.subr.bf16.mxu0 0
        %1793 = vmatpush1.bf16.msra.mxu0 0
        %1794 = vmatprep.subr.bf16.mxu0 0
        %1795 = vmatpush1.bf16.msra.mxu0 0
        %1796 = vmatprep.subr.bf16.mxu0 0
        %1797 = vmatpush1.bf16.msra.mxu0 0
        %1798 = vmatprep.subr.bf16.mxu0 0
        %1799 = vmatpush1.bf16.msra.mxu0 0
        %1800 = vmatprep.subr.bf16.mxu0 0
        %1801 = vmatpush1.bf16.msra.mxu0 0
        %1802 = vmatprep.subr.bf16.mxu0 0
        %1803 = vmatpush1.bf16.msra.mxu0 0
        %1804 = vmatprep.subr.bf16.mxu0 0
        %1805 = vmatpush1.bf16.msra.mxu0 0
        %1806 = vmatprep.subr.bf16.mxu0 0
        %1807 = vmatpush1.bf16.msra.mxu0 %v1790
        %1808 = vmatprep.subr.bf16.mxu0 0
        %1809 = vmatpush2.bf16.msra.mxu0 0
        %1810 = vmatprep.subr.bf16.mxu0 0
        %1811 = vmatpush2.bf16.msra.mxu0 0
        %1812 = vmatprep.subr.bf16.mxu0 0
        %1813 = vmatpush2.bf16.msra.mxu0 0
        %1814 = vmatprep.subr.bf16.mxu0 0
        %1815 = vmatpush2.bf16.msra.mxu0 0
        %1816 = vmatprep.subr.bf16.mxu0 0
        %1817 = vmatpush2.bf16.msra.mxu0 0
        %1818 = vmatprep.subr.bf16.mxu0 0
        %1819 = vmatpush2.bf16.msra.mxu0 0
        %1820 = vmatprep.subr.bf16.mxu0 0
        %1821 = vmatpush2.bf16.msra.mxu0 0
        %1822 = vmatprep.subr.bf16.mxu0 0
        %1823 = vmatpush2.bf16.msra.mxu0 0
        %1824 = vmatprep.mubr.bf16.mxu0 0
        %1825 = vmatmul.mubr.bf16.gmra.mxu0 %v1786
        %v1826 = vpop.f32.mrf.mxu0
        %v1827 = vadd.f32 0.0, %v1826
        %v1828 = vpop.f32.mrf.mxu0
        %v1829 = vpop.f32.mrf.mxu0
        %v1830 = vpop.f32.mrf.mxu0
        %1831 = vdwg.mxu0
        %v1833 = vsel %vm1688, %v1778, 0
        %v1836 = vsel %vm1788, %v1292, 0
        %1838 = vmatprep.subr.bf16.mxu0 0
        %1839 = vmatpush1.bf16.msra.mxu0 0
        %1840 = vmatprep.subr.bf16.mxu0 0
        %1841 = vmatpush1.bf16.msra.mxu0 0
        %1842 = vmatprep.subr.bf16.mxu0 0
        %1843 = vmatpush1.bf16.msra.mxu0 0
        %1844 = vmatprep.subr.bf16.mxu0 0
        %1845 = vmatpush1.bf16.msra.mxu0 0
        %1846 = vmatprep.subr.bf16.mxu0 0
        %1847 = vmatpush1.bf16.msra.mxu0 0
        %1848 = vmatprep.subr.bf16.mxu0 0
        %1849 = vmatpush1.bf16.msra.mxu0 0
        %1850 = vmatprep.subr.bf16.mxu0 0
        %1851 = vmatpush1.bf16.msra.mxu0 0
        %1852 = vmatprep.subr.bf16.mxu0 0
        %1853 = vmatpush1.bf16.msra.mxu0 %v1836
        %1854 = vmatprep.subr.bf16.mxu0 0
        %1855 = vmatpush2.bf16.msra.mxu0 0
        %1856 = vmatprep.subr.bf16.mxu0 0
        %1857 = vmatpush2.bf16.msra.mxu0 0
        %1858 = vmatprep.subr.bf16.mxu0 0
        %1859 = vmatpush2.bf16.msra.mxu0 0
        %1860 = vmatprep.subr.bf16.mxu0 0
        %1861 = vmatpush2.bf16.msra.mxu0 0
        %1862 = vmatprep.subr.bf16.mxu0 0
        %1863 = vmatpush2.bf16.msra.mxu0 0
        %1864 = vmatprep.subr.bf16.mxu0 0
        %1865 = vmatpush2.bf16.msra.mxu0 0
        %1866 = vmatprep.subr.bf16.mxu0 0
        %1867 = vmatpush2.bf16.msra.mxu0 0
        %1868 = vmatprep.subr.bf16.mxu0 0
        %1869 = vmatpush2.bf16.msra.mxu0 0
        %1870 = vmatprep.mubr.bf16.mxu0 0
        %1871 = vmatmul.mubr.bf16.gmra.mxu0 %v1833
        %v1872 = vpop.f32.mrf.mxu0
        %v1873 = vadd.f32 0.0, %v1872
        %v1874 = vpop.f32.mrf.mxu0
        %v1875 = vpop.f32.mrf.mxu0
        %v1876 = vpop.f32.mrf.mxu0
        %1877 = vdwg.mxu0
        %v1879 = vsel %vm1688, %v1779, 0
        %v1882 = vsel %vm1788, %v1295, 0
        %1884 = vmatprep.subr.bf16.mxu0 0
        %1885 = vmatpush1.bf16.msra.mxu0 0
        %1886 = vmatprep.subr.bf16.mxu0 0
        %1887 = vmatpush1.bf16.msra.mxu0 0
        %1888 = vmatprep.subr.bf16.mxu0 0
        %1889 = vmatpush1.bf16.msra.mxu0 0
        %1890 = vmatprep.subr.bf16.mxu0 0
        %1891 = vmatpush1.bf16.msra.mxu0 0
        %1892 = vmatprep.subr.bf16.mxu0 0
        %1893 = vmatpush1.bf16.msra.mxu0 0
        %1894 = vmatprep.subr.bf16.mxu0 0
        %1895 = vmatpush1.bf16.msra.mxu0 0
        %1896 = vmatprep.subr.bf16.mxu0 0
        %1897 = vmatpush1.bf16.msra.mxu0 0
        %1898 = vmatprep.subr.bf16.mxu0 0
        %1899 = vmatpush1.bf16.msra.mxu0 %v1882
        %1900 = vmatprep.subr.bf16.mxu0 0
        %1901 = vmatpush2.bf16.msra.mxu0 0
        %1902 = vmatprep.subr.bf16.mxu0 0
        %1903 = vmatpush2.bf16.msra.mxu0 0
        %1904 = vmatprep.subr.bf16.mxu0 0
        %1905 = vmatpush2.bf16.msra.mxu0 0
        %1906 = vmatprep.subr.bf16.mxu0 0
        %1907 = vmatpush2.bf16.msra.mxu0 0
        %1908 = vmatprep.subr.bf16.mxu0 0
        %1909 = vmatpush2.bf16.msra.mxu0 0
        %1910 = vmatprep.subr.bf16.mxu0 0
        %1911 = vmatpush2.bf16.msra.mxu0 0
        %1912 = vmatprep.subr.bf16.mxu0 0
        %1913 = vmatpush2.bf16.msra.mxu0 0
        %1914 = vmatprep.subr.bf16.mxu0 0
        %1915 = vmatpush2.bf16.msra.mxu0 0
        %1916 = vmatprep.mubr.bf16.mxu0 0
        %1917 = vmatmul.mubr.bf16.gmra.mxu0 %v1879
        %v1918 = vpop.f32.mrf.mxu0
        %v1919 = vadd.f32 0.0, %v1918
        %v1920 = vpop.f32.mrf.mxu0
        %v1921 = vpop.f32.mrf.mxu0
        %v1922 = vpop.f32.mrf.mxu0
        %1923 = vdwg.mxu0
        %v1925 = vsel %vm1688, %v1780, 0
        %v1928 = vsel %vm1788, %v1298, 0
        %1930 = vmatprep.subr.bf16.mxu0 0
        %1931 = vmatpush1.bf16.msra.mxu0 0
        %1932 = vmatprep.subr.bf16.mxu0 0
        %1933 = vmatpush1.bf16.msra.mxu0 0
        %1934 = vmatprep.subr.bf16.mxu0 0
        %1935 = vmatpush1.bf16.msra.mxu0 0
        %1936 = vmatprep.subr.bf16.mxu0 0
        %1937 = vmatpush1.bf16.msra.mxu0 0
        %1938 = vmatprep.subr.bf16.mxu0 0
        %1939 = vmatpush1.bf16.msra.mxu0 0
        %1940 = vmatprep.subr.bf16.mxu0 0
        %1941 = vmatpush1.bf16.msra.mxu0 0
        %1942 = vmatprep.subr.bf16.mxu0 0
        %1943 = vmatpush1.bf16.msra.mxu0 0
        %1944 = vmatprep.subr.bf16.mxu0 0
        %1945 = vmatpush1.bf16.msra.mxu0 %v1928
        %1946 = vmatprep.subr.bf16.mxu0 0
        %1947 = vmatpush2.bf16.msra.mxu0 0
        %1948 = vmatprep.subr.bf16.mxu0 0
        %1949 = vmatpush2.bf16.msra.mxu0 0
        %1950 = vmatprep.subr.bf16.mxu0 0
        %1951 = vmatpush2.bf16.msra.mxu0 0
        %1952 = vmatprep.subr.bf16.mxu0 0
        %1953 = vmatpush2.bf16.msra.mxu0 0
        %1954 = vmatprep.subr.bf16.mxu0 0
        %1955 = vmatpush2.bf16.msra.mxu0 0
        %1956 = vmatprep.subr.bf16.mxu0 0
        %1957 = vmatpush2.bf16.msra.mxu0 0
        %1958 = vmatprep.subr.bf16.mxu0 0
        %1959 = vmatpush2.bf16.msra.mxu0 0
        %1960 = vmatprep.subr.bf16.mxu0 0
        %1961 = vmatpush2.bf16.msra.mxu0 0
        %1962 = vmatprep.mubr.bf16.mxu0 0
        %1963 = vmatmul.mubr.bf16.gmra.mxu0 %v1925
        %v1964 = vpop.f32.mrf.mxu0
        %v1965 = vadd.f32 0.0, %v1964
        %v1966 = vpop.f32.mrf.mxu0
        %v1967 = vpop.f32.mrf.mxu0
        %v1968 = vpop.f32.mrf.mxu0
        %1969 = vdwg.mxu0
        %v1971 = vsel %vm1688, %v1781, 0
        %v1974 = vsel %vm1788, %v1301, 0
        %1976 = vmatprep.subr.bf16.mxu0 0
        %1977 = vmatpush1.bf16.msra.mxu0 0
        %1978 = vmatprep.subr.bf16.mxu0 0
        %1979 = vmatpush1.bf16.msra.mxu0 0
        %1980 = vmatprep.subr.bf16.mxu0 0
        %1981 = vmatpush1.bf16.msra.mxu0 0
        %1982 = vmatprep.subr.bf16.mxu0 0
        %1983 = vmatpush1.bf16.msra.mxu0 0
        %1984 = vmatprep.subr.bf16.mxu0 0
        %1985 = vmatpush1.bf16.msra.mxu0 0
        %1986 = vmatprep.subr.bf16.mxu0 0
        %1987 = vmatpush1.bf16.msra.mxu0 0
        %1988 = vmatprep.subr.bf16.mxu0 0
        %1989 = vmatpush1.bf16.msra.mxu0 0
        %1990 = vmatprep.subr.bf16.mxu0 0
        %1991 = vmatpush1.bf16.msra.mxu0 %v1974
        %1992 = vmatprep.subr.bf16.mxu0 0
        %1993 = vmatpush2.bf16.msra.mxu0 0
        %1994 = vmatprep.subr.bf16.mxu0 0
        %1995 = vmatpush2.bf16.msra.mxu0 0
        %1996 = vmatprep.subr.bf16.mxu0 0
        %1997 = vmatpush2.bf16.msra.mxu0 0
        %1998 = vmatprep.subr.bf16.mxu0 0
        %1999 = vmatpush2.bf16.msra.mxu0 0
        %2000 = vmatprep.subr.bf16.mxu0 0
        %2001 = vmatpush2.bf16.msra.mxu0 0
        %2002 = vmatprep.subr.bf16.mxu0 0
        %2003 = vmatpush2.bf16.msra.mxu0 0
        %2004 = vmatprep.subr.bf16.mxu0 0
        %2005 = vmatpush2.bf16.msra.mxu0 0
        %2006 = vmatprep.subr.bf16.mxu0 0
        %2007 = vmatpush2.bf16.msra.mxu0 0
        %2008 = vmatprep.mubr.bf16.mxu0 0
        %2009 = vmatmul.mubr.bf16.gmra.mxu0 %v1971
        %v2010 = vpop.f32.mrf.mxu0
        %v2011 = vadd.f32 0.0, %v2010
        %v2012 = vpop.f32.mrf.mxu0
        %v2013 = vpop.f32.mrf.mxu0
        %v2014 = vpop.f32.mrf.mxu0
        %2015 = vdwg.mxu0
        %v2017 = vsel %vm1688, %v1782, 0
        %v2020 = vsel %vm1788, %v1304, 0
        %2022 = vmatprep.subr.bf16.mxu0 0
        %2023 = vmatpush1.bf16.msra.mxu0 0
        %2024 = vmatprep.subr.bf16.mxu0 0
        %2025 = vmatpush1.bf16.msra.mxu0 0
        %2026 = vmatprep.subr.bf16.mxu0 0
        %2027 = vmatpush1.bf16.msra.mxu0 0
        %2028 = vmatprep.subr.bf16.mxu0 0
        %2029 = vmatpush1.bf16.msra.mxu0 0
        %2030 = vmatprep.subr.bf16.mxu0 0
        %2031 = vmatpush1.bf16.msra.mxu0 0
        %2032 = vmatprep.subr.bf16.mxu0 0
        %2033 = vmatpush1.bf16.msra.mxu0 0
        %2034 = vmatprep.subr.bf16.mxu0 0
        %2035 = vmatpush1.bf16.msra.mxu0 0
        %2036 = vmatprep.subr.bf16.mxu0 0
        %2037 = vmatpush1.bf16.msra.mxu0 %v2020
        %2038 = vmatprep.subr.bf16.mxu0 0
        %2039 = vmatpush2.bf16.msra.mxu0 0
        %2040 = vmatprep.subr.bf16.mxu0 0
        %2041 = vmatpush2.bf16.msra.mxu0 0
        %2042 = vmatprep.subr.bf16.mxu0 0
        %2043 = vmatpush2.bf16.msra.mxu0 0
        %2044 = vmatprep.subr.bf16.mxu0 0
        %2045 = vmatpush2.bf16.msra.mxu0 0
        %2046 = vmatprep.subr.bf16.mxu0 0
        %2047 = vmatpush2.bf16.msra.mxu0 0
        %2048 = vmatprep.subr.bf16.mxu0 0
        %2049 = vmatpush2.bf16.msra.mxu0 0
        %2050 = vmatprep.subr.bf16.mxu0 0
        %2051 = vmatpush2.bf16.msra.mxu0 0
        %2052 = vmatprep.subr.bf16.mxu0 0
        %2053 = vmatpush2.bf16.msra.mxu0 0
        %2054 = vmatprep.mubr.bf16.mxu0 0
        %2055 = vmatmul.mubr.bf16.gmra.mxu0 %v2017
        %v2056 = vpop.f32.mrf.mxu0
        %v2057 = vadd.f32 0.0, %v2056
        %v2058 = vpop.f32.mrf.mxu0
        %v2059 = vpop.f32.mrf.mxu0
        %v2060 = vpop.f32.mrf.mxu0
        %2061 = vdwg.mxu0
        %v2063 = vsel %vm1688, %v1783, 0
        %v2066 = vsel %vm1788, %v1307, 0
        %2068 = vmatprep.subr.bf16.mxu0 0
        %2069 = vmatpush1.bf16.msra.mxu0 0
        %2070 = vmatprep.subr.bf16.mxu0 0
        %2071 = vmatpush1.bf16.msra.mxu0 0
        %2072 = vmatprep.subr.bf16.mxu0 0
        %2073 = vmatpush1.bf16.msra.mxu0 0
        %2074 = vmatprep.subr.bf16.mxu0 0
        %2075 = vmatpush1.bf16.msra.mxu0 0
        %2076 = vmatprep.subr.bf16.mxu0 0
        %2077 = vmatpush1.bf16.msra.mxu0 0
        %2078 = vmatprep.subr.bf16.mxu0 0
        %2079 = vmatpush1.bf16.msra.mxu0 0
        %2080 = vmatprep.subr.bf16.mxu0 0
        %2081 = vmatpush1.bf16.msra.mxu0 0
        %2082 = vmatprep.subr.bf16.mxu0 0
        %2083 = vmatpush1.bf16.msra.mxu0 %v2066
        %2084 = vmatprep.subr.bf16.mxu0 0
        %2085 = vmatpush2.bf16.msra.mxu0 0
        %2086 = vmatprep.subr.bf16.mxu0 0
        %2087 = vmatpush2.bf16.msra.mxu0 0
        %2088 = vmatprep.subr.bf16.mxu0 0
        %2089 = vmatpush2.bf16.msra.mxu0 0
        %2090 = vmatprep.subr.bf16.mxu0 0
        %2091 = vmatpush2.bf16.msra.mxu0 0
        %2092 = vmatprep.subr.bf16.mxu0 0
        %2093 = vmatpush2.bf16.msra.mxu0 0
        %2094 = vmatprep.subr.bf16.mxu0 0
        %2095 = vmatpush2.bf16.msra.mxu0 0
        %2096 = vmatprep.subr.bf16.mxu0 0
        %2097 = vmatpush2.bf16.msra.mxu0 0
        %2098 = vmatprep.subr.bf16.mxu0 0
        %2099 = vmatpush2.bf16.msra.mxu0 0
        %2100 = vmatprep.mubr.bf16.mxu0 0
        %2101 = vmatmul.mubr.bf16.gmra.mxu0 %v2063
        %v2102 = vpop.f32.mrf.mxu0
        %v2103 = vadd.f32 0.0, %v2102
        %v2104 = vpop.f32.mrf.mxu0
        %v2105 = vpop.f32.mrf.mxu0
        %v2106 = vpop.f32.mrf.mxu0
        %2107 = vdwg.mxu0
        %v2109 = vsel %vm1688, %v1784, 0
        %v2112 = vsel %vm1788, %v1310, 0
        %2114 = vmatprep.subr.bf16.mxu0 0
        %2115 = vmatpush1.bf16.msra.mxu0 0
        %2116 = vmatprep.subr.bf16.mxu0 0
        %2117 = vmatpush1.bf16.msra.mxu0 0
        %2118 = vmatprep.subr.bf16.mxu0 0
        %2119 = vmatpush1.bf16.msra.mxu0 0
        %2120 = vmatprep.subr.bf16.mxu0 0
        %2121 = vmatpush1.bf16.msra.mxu0 0
        %2122 = vmatprep.subr.bf16.mxu0 0
        %2123 = vmatpush1.bf16.msra.mxu0 0
        %2124 = vmatprep.subr.bf16.mxu0 0
        %2125 = vmatpush1.bf16.msra.mxu0 0
        %2126 = vmatprep.subr.bf16.mxu0 0
        %2127 = vmatpush1.bf16.msra.mxu0 0
        %2128 = vmatprep.subr.bf16.mxu0 0
        %2129 = vmatpush1.bf16.msra.mxu0 %v2112
        %2130 = vmatprep.subr.bf16.mxu0 0
        %2131 = vmatpush2.bf16.msra.mxu0 0
        %2132 = vmatprep.subr.bf16.mxu0 0
        %2133 = vmatpush2.bf16.msra.mxu0 0
        %2134 = vmatprep.subr.bf16.mxu0 0
        %2135 = vmatpush2.bf16.msra.mxu0 0
        %2136 = vmatprep.subr.bf16.mxu0 0
        %2137 = vmatpush2.bf16.msra.mxu0 0
        %2138 = vmatprep.subr.bf16.mxu0 0
        %2139 = vmatpush2.bf16.msra.mxu0 0
        %2140 = vmatprep.subr.bf16.mxu0 0
        %2141 = vmatpush2.bf16.msra.mxu0 0
        %2142 = vmatprep.subr.bf16.mxu0 0
        %2143 = vmatpush2.bf16.msra.mxu0 0
        %2144 = vmatprep.subr.bf16.mxu0 0
        %2145 = vmatpush2.bf16.msra.mxu0 0
        %2146 = vmatprep.mubr.bf16.mxu0 0
        %2147 = vmatmul.mubr.bf16.gmra.mxu0 %v2109
        %v2148 = vpop.f32.mrf.mxu0
        %v2149 = vadd.f32 0.0, %v2148
        %v2150 = vpop.f32.mrf.mxu0
        %v2151 = vpop.f32.mrf.mxu0
        %v2152 = vpop.f32.mrf.mxu0
        %2153 = vdwg.mxu0
        %v2154 = vpack.c.bf16 %v1827, %v1827
        %v2155 = vpack.c.bf16 %v1873, %v1873
        %v2156 = vpack.c.bf16 %v1919, %v1919
        %v2157 = vpack.c.bf16 %v1965, %v1965
        %v2158 = vpack.c.bf16 %v2011, %v2011
        %v2159 = vpack.c.bf16 %v2057, %v2057
        %v2160 = vpack.c.bf16 %v2103, %v2103
        %v2161 = vpack.c.bf16 %v2149, %v2149
        %v2162 = vcombine.low %v2154, %v2158
        %v2164 = vunpack.c.l.s4 1983009808
        %v2165 = vunpack.c.0.s8 %v2164
        %v2166 = vlaneseq
        %v2167 = vshrl.u32 %v2166, 7
        %v2168 = vsub.s32 %v2165, %v2167
        %v2169 = vrot.slane %v2162, %v2168
        %v2170 = vcombine.low %v2156, %v2160
        %v2172 = vunpack.c.l.s4 1983009808
        %v2173 = vunpack.c.0.s8 %v2172
        %v2174 = vlaneseq
        %v2175 = vshrl.u32 %v2174, 7
        %v2176 = vsub.s32 %v2173, %v2175
        %v2177 = vrot.slane %v2170, %v2176
        %v2178 = vcombine.low %v2169, %v2177
        %v2179 = vcombine.high %v2169, %v2177
        %v2181 = vunpack.c.l.s4 1934713408
        %v2182 = vunpack.c.0.s8 %v2181
        %v2183 = vlaneseq
        %v2184 = vshrl.u32 %v2183, 7
        %v2185 = vsub.s32 %v2182, %v2184
        %v2186 = vrot.slane %v2178, %v2185
        %v2188 = vunpack.c.l.s4 1934713408
        %v2189 = vunpack.c.0.s8 %v2188
        %v2190 = vlaneseq
        %v2191 = vshrl.u32 %v2190, 7
        %v2192 = vsub.s32 %v2189, %v2191
        %v2193 = vrot.slane %v2179, %v2192
        %v2194 = vcombine.high %v2186, 0
        %v2195 = vcombine.high %v2193, 0
        %v2196 = vcombine.low %v2155, %v2159
        %v2198 = vunpack.c.l.s4 1983009808
        %v2199 = vunpack.c.0.s8 %v2198
        %v2200 = vlaneseq
        %v2201 = vshrl.u32 %v2200, 7
        %v2202 = vsub.s32 %v2199, %v2201
        %v2203 = vrot.slane %v2196, %v2202
        %v2204 = vcombine.low %v2157, %v2161
        %v2206 = vunpack.c.l.s4 1983009808
        %v2207 = vunpack.c.0.s8 %v2206
        %v2208 = vlaneseq
        %v2209 = vshrl.u32 %v2208, 7
        %v2210 = vsub.s32 %v2207, %v2209
        %v2211 = vrot.slane %v2204, %v2210
        %v2212 = vcombine.low %v2203, %v2211
        %v2213 = vcombine.high %v2203, %v2211
        %v2215 = vunpack.c.l.s4 1934713408
        %v2216 = vunpack.c.0.s8 %v2215
        %v2217 = vlaneseq
        %v2218 = vshrl.u32 %v2217, 7
        %v2219 = vsub.s32 %v2216, %v2218
        %v2220 = vrot.slane %v2212, %v2219
        %v2222 = vunpack.c.l.s4 1934713408
        %v2223 = vunpack.c.0.s8 %v2222
        %v2224 = vlaneseq
        %v2225 = vshrl.u32 %v2224, 7
        %v2226 = vsub.s32 %v2223, %v2225
        %v2227 = vrot.slane %v2213, %v2226
        %v2228 = vcombine.high %v2220, 0
        %v2229 = vcombine.high %v2227, 0
        %v2232 = vpack.i.b16 %v2220, %v2186
        %v2234 = vshrl.u32 %v2186, 16
        %v2235 = vshrl.u32 %v2220, 16
        %v2236 = vpack.i.b16 %v2235, %v2234
        %v2240 = vpack.i.b16 %v2228, %v2194
        %v2242 = vshrl.u32 %v2194, 16
        %v2243 = vshrl.u32 %v2228, 16
        %v2244 = vpack.i.b16 %v2243, %v2242
        %v2248 = vpack.i.b16 %v2227, %v2193
        %v2250 = vshrl.u32 %v2193, 16
        %v2251 = vshrl.u32 %v2227, 16
        %v2252 = vpack.i.b16 %v2251, %v2250
        %v2256 = vpack.i.b16 %v2229, %v2195
        %v2258 = vshrl.u32 %v2195, 16
        %v2259 = vshrl.u32 %v2229, 16
        %v2260 = vpack.i.b16 %v2259, %v2258
        %v2262 = vcombine.low %v2232, %v2248
        %v2264 = vunpack.c.l.s4 1983009808
        %v2265 = vunpack.c.0.s8 %v2264
        %v2266 = vlaneseq
        %v2267 = vshrl.u32 %v2266, 7
        %v2268 = vsub.s32 %v2265, %v2267
        %v2269 = vrot.slane %v2262, %v2268
        %v2270 = vcombine.low %v2240, %v2256
        %v2272 = vunpack.c.l.s4 1983009808
        %v2273 = vunpack.c.0.s8 %v2272
        %v2274 = vlaneseq
        %v2275 = vshrl.u32 %v2274, 7
        %v2276 = vsub.s32 %v2273, %v2275
        %v2277 = vrot.slane %v2270, %v2276
        %v2278 = vcombine.low %v2269, %v2277
        %v2279 = vcombine.high %v2269, %v2277
        %v2281 = vunpack.c.l.s4 1934713408
        %v2282 = vunpack.c.0.s8 %v2281
        %v2283 = vlaneseq
        %v2284 = vshrl.u32 %v2283, 7
        %v2285 = vsub.s32 %v2282, %v2284
        %v2286 = vrot.slane %v2278, %v2285
        %v2288 = vunpack.c.l.s4 1934713408
        %v2289 = vunpack.c.0.s8 %v2288
        %v2290 = vlaneseq
        %v2291 = vshrl.u32 %v2290, 7
        %v2292 = vsub.s32 %v2289, %v2291
        %v2293 = vrot.slane %v2279, %v2292
        %v2294 = vcombine.high %v2286, 0
        %v2295 = vcombine.high %v2293, 0
        %v2296 = vcombine.low %v2236, %v2252
        %v2298 = vunpack.c.l.s4 1983009808
        %v2299 = vunpack.c.0.s8 %v2298
        %v2300 = vlaneseq
        %v2301 = vshrl.u32 %v2300, 7
        %v2302 = vsub.s32 %v2299, %v2301
        %v2303 = vrot.slane %v2296, %v2302
        %v2304 = vcombine.low %v2244, %v2260
        %v2306 = vunpack.c.l.s4 1983009808
        %v2307 = vunpack.c.0.s8 %v2306
        %v2308 = vlaneseq
        %v2309 = vshrl.u32 %v2308, 7
        %v2310 = vsub.s32 %v2307, %v2309
        %v2311 = vrot.slane %v2304, %v2310
        %v2312 = vcombine.low %v2303, %v2311
        %v2313 = vcombine.high %v2303, %v2311
        %v2315 = vunpack.c.l.s4 1934713408
        %v2316 = vunpack.c.0.s8 %v2315
        %v2317 = vlaneseq
        %v2318 = vshrl.u32 %v2317, 7
        %v2319 = vsub.s32 %v2316, %v2318
        %v2320 = vrot.slane %v2312, %v2319
        %v2322 = vunpack.c.l.s4 1934713408
        %v2323 = vunpack.c.0.s8 %v2322
        %v2324 = vlaneseq
        %v2325 = vshrl.u32 %v2324, 7
        %v2326 = vsub.s32 %v2323, %v2325
        %v2327 = vrot.slane %v2313, %v2326
        %v2328 = vcombine.high %v2320, 0
        %v2329 = vcombine.high %v2327, 0
        %v2332 = vpack.i.b16 %v2320, %v2286
        %v2333 = vshrl.u32 %v2286, 16
        %v2334 = vshrl.u32 %v2320, 16
        %v2335 = vpack.i.b16 %v2334, %v2333
        %v2338 = vpack.i.b16 %v2328, %v2294
        %v2339 = vshrl.u32 %v2294, 16
        %v2340 = vshrl.u32 %v2328, 16
        %v2341 = vpack.i.b16 %v2340, %v2339
        %v2344 = vpack.i.b16 %v2327, %v2293
        %v2345 = vshrl.u32 %v2293, 16
        %v2346 = vshrl.u32 %v2327, 16
        %v2347 = vpack.i.b16 %v2346, %v2345
        %v2350 = vpack.i.b16 %v2329, %v2295
        %v2351 = vshrl.u32 %v2295, 16
        %v2352 = vshrl.u32 %v2329, 16
        %v2353 = vpack.i.b16 %v2352, %v2351
        %2354 = vrot.lane.b32.xlu0 %v2335, 16
        %v2355 = vpop.permute.xlu0 %2354
        %2356 = vrot.lane.b32.xlu0 %v2338, 32
        %v2357 = vpop.permute.xlu0 %2356
        %2358 = vrot.lane.b32.xlu0 %v2341, 48
        %v2359 = vpop.permute.xlu0 %2358
        %2360 = vrot.lane.b32.xlu0 %v2344, 64
        %v2361 = vpop.permute.xlu0 %2360
        %2362 = vrot.lane.b32.xlu0 %v2347, 80
        %v2363 = vpop.permute.xlu0 %2362
        %2364 = vrot.lane.b32.xlu0 %v2350, 96
        %v2365 = vpop.permute.xlu0 %2364
        %2366 = vrot.lane.b32.xlu0 %v2353, 112
        %v2367 = vpop.permute.xlu0 %2366
        %v2370 = vsel %vm1311, %v2332, %v2355
        %vm2371 = vcmask 261120
        %v2373 = vsel %vm2371, %v2370, %v2357
        %vm2374 = vcmask 392192
        %v2376 = vsel %vm2374, %v2373, %v2359
        %vm2377 = vcmask 523264
        %v2379 = vsel %vm2377, %v2376, %v2361
        %vm2380 = vcmask 654336
        %v2382 = vsel %vm2380, %v2379, %v2363
        %vm2383 = vcmask 785408
        %v2385 = vsel %vm2383, %v2382, %v2365
        %vm2386 = vcmask 916480
        %v2388 = vsel %vm2386, %v2385, %v2367
        %v2390 = vld [vmem:[#allocation4] sm:$0xf]
        %v2391 = vld [vmem:[#allocation4 + $0x4] sm:$0xf]
        %v2392 = vld [vmem:[#allocation4 + $0x8] sm:$0xf]
        %v2393 = vld [vmem:[#allocation4 + $0xc] sm:$0xf]
        %v2394 = vld [vmem:[#allocation4 + $0x10] sm:$0xf]
        %v2395 = vld [vmem:[#allocation4 + $0x14] sm:$0xf]
        %v2396 = vld [vmem:[#allocation4 + $0x18] sm:$0xf]
        %v2397 = vld [vmem:[#allocation4 + $0x1c] sm:$0xf]
        %v2398 = vld [vmem:[#allocation4 + $0x20] sm:$0xf]
        %v2399 = vld [vmem:[#allocation4 + $0x24] sm:$0xf]
        %v2400 = vld [vmem:[#allocation4 + $0x28] sm:$0xf]
        %v2401 = vld [vmem:[#allocation4 + $0x2c] sm:$0xf]
        %v2402 = vld [vmem:[#allocation4 + $0x30] sm:$0xf]
        %v2403 = vld [vmem:[#allocation4 + $0x34] sm:$0xf]
        %v2404 = vld [vmem:[#allocation4 + $0x38] sm:$0xf]
        %v2405 = vld [vmem:[#allocation4 + $0x3c] sm:$0xf]
        %v2406 = vld [vmem:[%s7] sm:$0x1]
        %v2408 = vlaneseq
        %v2409 = vshrl.u32 %v2408, 7
        %v2410 = vsub.s32 0, %v2409
        %v2411 = vrot.slane %v2406, %v2410
        %v2429 = vunpack.c.l.b16 %v2390
        %v2430 = vunpack.c.l.b16 %v2391
        %v2431 = vunpack.c.l.b16 %v2392
        %v2432 = vunpack.c.l.b16 %v2393
        %v2433 = vunpack.c.l.b16 %v2394
        %v2434 = vunpack.c.l.b16 %v2395
        %v2435 = vunpack.c.l.b16 %v2396
        %v2436 = vunpack.c.l.b16 %v2397
        %v2437 = vunpack.c.l.b16 %v2398
        %v2438 = vunpack.c.l.b16 %v2399
        %v2439 = vunpack.c.l.b16 %v2400
        %v2440 = vunpack.c.l.b16 %v2401
        %v2441 = vunpack.c.l.b16 %v2402
        %v2442 = vunpack.c.l.b16 %v2403
        %v2443 = vunpack.c.l.b16 %v2404
        %v2444 = vunpack.c.l.b16 %v2405
        %v2445 = vpack.c.b16 %v2430, %v2429
        %v2446 = vpack.c.b16 %v2432, %v2431
        %v2447 = vpack.c.b16 %v2434, %v2433
        %v2448 = vpack.c.b16 %v2436, %v2435
        %v2449 = vpack.c.b16 %v2438, %v2437
        %v2450 = vpack.c.b16 %v2440, %v2439
        %v2451 = vpack.c.b16 %v2442, %v2441
        %v2452 = vpack.c.b16 %v2444, %v2443
        %2461 = vmatprep.subr.bf16.mxu0 0
        %2462 = vmatpush1.bf16.msra.mxu0 %v2452
        %2463 = vmatprep.subr.bf16.mxu0 0
        %2464 = vmatpush1.bf16.msra.mxu0 %v2451
        %2465 = vmatprep.subr.bf16.mxu0 0
        %2466 = vmatpush1.bf16.msra.mxu0 %v2450
        %2467 = vmatprep.subr.bf16.mxu0 0
        %2468 = vmatpush1.bf16.msra.mxu0 %v2449
        %2469 = vmatprep.subr.bf16.mxu0 0
        %2470 = vmatpush1.bf16.msra.mxu0 %v2448
        %2471 = vmatprep.subr.bf16.mxu0 0
        %2472 = vmatpush1.bf16.msra.mxu0 %v2447
        %2473 = vmatprep.subr.bf16.mxu0 0
        %2474 = vmatpush1.bf16.msra.mxu0 %v2446
        %2475 = vmatprep.subr.bf16.mxu0 0
        %2476 = vmatpush1.bf16.msra.mxu0 %v2445
        %2477 = vmatprep.subr.bf16.mxu0 0
        %2478 = vmatpush2.bf16.msra.mxu0 0
        %2479 = vmatprep.subr.bf16.mxu0 0
        %2480 = vmatpush2.bf16.msra.mxu0 0
        %2481 = vmatprep.subr.bf16.mxu0 0
        %2482 = vmatpush2.bf16.msra.mxu0 0
        %2483 = vmatprep.subr.bf16.mxu0 0
        %2484 = vmatpush2.bf16.msra.mxu0 0
        %2485 = vmatprep.subr.bf16.mxu0 0
        %2486 = vmatpush2.bf16.msra.mxu0 0
        %2487 = vmatprep.subr.bf16.mxu0 0
        %2488 = vmatpush2.bf16.msra.mxu0 0
        %2489 = vmatprep.subr.bf16.mxu0 0
        %2490 = vmatpush2.bf16.msra.mxu0 0
        %2491 = vmatprep.subr.bf16.mxu0 0
        %2492 = vmatpush2.bf16.msra.mxu0 0
        %2493 = vmatprep.mubr.bf16.mxu0 0
        %2494 = vmatmul.mubr.bf16.gmra.mxu0 %v2388
        %v2495 = vpop.f32.mrf.mxu0
        %v2496 = vadd.f32 %v2411, %v2495
        %v2497 = vpop.f32.mrf.mxu0
        %v2498 = vpop.f32.mrf.mxu0
        %v2499 = vpop.f32.mrf.mxu0
        %2500 = vdwg.mxu0
        %v2501 = vadd.f32 %v404, %v2496
        %2502 = vadd.xlane.f32.xlu0 %v2501
        %v2503 = vpop.xlane.xlu0 %2502
        %v2504 = vrcp.pop 128.0
        %v2505 = vmul.f32 %v2503, %v2504
        %v2506 = vsub.f32 %v2501, %v2505
        %v2507 = vmul.f32 %v2506, %v2506
        %2508 = vadd.xlane.f32.xlu0 %v2507
        %v2509 = vpop.xlane.xlu0 %2508
        %v2510 = vmul.f32 %v2509, %v2504
        %v2511 = vadd.f32 %v2510, 1e-05
        %v2512 = vrsqrt.pop %v2511
        %v2513 = vmul.f32 %v2506, %v2512
        %v2514 = vld [vmem:[%s8] sm:$0x1]
        %v2516 = vlaneseq
        %v2517 = vshrl.u32 %v2516, 7
        %v2518 = vsub.s32 0, %v2517
        %v2519 = vrot.slane %v2514, %v2518
        %v2521 = vmul.f32 %v2513, %v2519
        %v2522 = vld [vmem:[%s9] sm:$0x1]
        %v2524 = vlaneseq
        %v2525 = vshrl.u32 %v2524, 7
        %v2526 = vsub.s32 0, %v2525
        %v2527 = vrot.slane %v2522, %v2526
        %v2529 = vadd.f32 %v2521, %v2527
        %v2530 = vpack.c.bf16 %v2529, %v2529
        %2531 = vst [vmem:[%s401] sm:$0xf] %v2530
        %p2532 = scmp.lt.s32.totalorder %s23, 1
        %s2533 = scalar_select %p2532, %s23, 1
        %s2534 = smul.addr %s2533, 4
        %s2535 = scalar_lea.vmem %s10, %s2534
        // Predicated region
        $region69: #{decoder_forward.8} parent=59 // pred_check
          %p2536 = pneg %p261
        $region70: #{decoder_forward.8} parent=59 // pred_check_branch
          %2538 = sbr.rel (%p2536) target = $region72
        $region71: #{decoder_forward.8} parent=59 // pred_region
          _
        $region72: #{decoder_forward.8} parent=59 // pred_fallthru
          _
      $region60: #{decoder_forward.8} parent=5 // pred_fallthru
        _
      %p2539 = scmp.le.s32.totalorder 2, %s18
      // Predicated region
      $region73: #{decoder_forward.8} parent=5 // pred_check
        %p2540 = pneg %p2539
      $region74: #{decoder_forward.8} parent=5 // pred_check_branch
        %2542 = sbr.rel (%p2540) target = $region76
      $region75: #{decoder_forward.8} parent=5 // pred_region
        %s2543 = ssub.s32 %s18, 2
        // Predicated region
        $region77: #{decoder_forward.8} parent=75 // pred_check
          %p2544 = pneg %p267
        $region78: #{decoder_forward.8} parent=75 // pred_check_branch
          %2546 = sbr.rel (%p2544) target = $region80
        $region79: #{decoder_forward.8} parent=75 // pred_region
          %p2547 = scmp.lt.s32.totalorder %s24, 1
          %s2548 = scalar_select %p2547, %s24, 1
          %s2549 = smul.addr %s2548, 4
          %s2550 = scalar_lea.vmem %s10, %s2549
        $region80: #{decoder_forward.8} parent=75 // pred_fallthru
          _
      $region76: #{decoder_forward.8} parent=5 // pred_fallthru
        _
    $region6: #{decoder_forward.8} parent=1 // loop_footer
      %s22 = sadd.s32 1, %s18
    $region7: #{decoder_forward.8} parent=1 // loop_footer_branch
      %17 = sbr.rel target = $region3
    $region8: #{decoder_forward.8} parent=1 // loop_exit
      _
    %2551 = vsyncpa [#allocation3], 1
    %s2552 = scalar_lea.sflag [#allocation3], 1
    %2553 = vsyncpa %s2552, 1
    %2554 = vsyncpa [#allocation5], 1

// kernel: decoder_forward.10
$region0: #{decoder_forward.10}
  #allocation0 [shape = 'u32[]', space=smem, size = 0x4, offset = 0x4, fixed_abs, tag = 'smem constant byte address 0x4 - core index']
  #allocation1 [shape = 'u32[144,128]{1,0:T(1,128)}', space=vmem, size = 0x12000, scoped, tag = 'internal scratch']
  %s0 = inlined_call_operand.vmem [shape: bf16[2,8,128], index: 0, kind: input, shape index: {}]
  %s1 = inlined_call_operand.vmem [shape: bf16[128,384], index: 1, kind: input, shape index: {}]
  %s2 = inlined_call_operand.vmem [shape: f32[1,384], index: 2, kind: input, shape index: {}]
  %s3 = inlined_call_operand.vmem [shape: bf16[128,128], index: 3, kind: input, shape index: {}]
  %s4 = inlined_call_operand.vmem [shape: f32[1,128], index: 4, kind: input, shape index: {}]
  %s5 = inlined_call_operand.vmem [shape: f32[1,128], index: 5, kind: input, shape index: {}]
  %s6 = inlined_call_operand.vmem [shape: f32[1,128], index: 6, kind: input, shape index: {}]
  %s7 = inlined_call_operand.vmem [shape: bf16[2,8,128], index: 7, kind: output, shape index: {}]
  %s8 = sld [smem:[#allocation0]]
  $region61: #{decoder_forward.10} parent=0
    _
  %s10 = ssub.s32 1, %s8
  %s11 = scalar_select 0, %s10, %s8
  loop: start=0, step=1, limit=4
  $region2: #{decoder_forward.10} parent=0 // loop_pre_header
    _
  $region3: #{decoder_forward.10} parent=0 // loop_header
    %s13 = sphi 0, %s17
    %p14 = scmp.ge.s32.totalorder %s13, 4
    %s23 = sphi 0, %s25
    %s26 = sphi 0, %s23
    %s27 = sphi 0, %s26
    %s43 = sphi 0, %s27
    %s47 = sphi 0, %s47
    %s49 = sphi 0, %s47
    %s50 = sphi 0, %s49
    %s64 = sphi 0, %s50
    %s68 = sphi 0, %s68
    %s70 = sphi 0, %s68
    %s71 = sphi 0, %s70
    %s85 = sphi 0, %s71
    %s89 = sphi 0, %s89
    %s91 = sphi 0, %s89
    %s92 = sphi 0, %s91
    %s106 = sphi 0, %s92
    %s110 = sphi 0, %s110
    %s112 = sphi 0, %s110
    %s113 = sphi 0, %s112
    %s127 = sphi 0, %s113
    %s131 = sphi 0, %s131
    %s133 = sphi 0, %s131
    %s134 = sphi 0, %s133
    %s148 = sphi 0, %s134
    %s152 = sphi 0, %s152
    %s154 = sphi 0, %s152
    %s155 = sphi 0, %s154
    %s169 = sphi 0, %s155
    %s175 = sphi 0, %s177
    %s178 = sphi 0, %s175
    %s179 = sphi 0, %s178
    %s195 = sphi 0, %s179
  $region4: #{decoder_forward.10} parent=0 // loop_header_branch
    %16 = sbr.rel (%p14) target = $region8
  $region5: #{decoder_forward.10} parent=0 // loop_body
    %s18 = ssub.s32 %s13, 1
    %s19 = ssub.s32 %s13, 2
    %s20 = sadd.s32 %s13, 1
    %s21 = ssub.s32 %s13, %s20
    %p22 = scmp.eq.s32.totalorder %s21, 0
    %s24 = sadd.s32 %s23, 1
    %s25 = scalar_select %p22, %s23, %s24
    %p28 = pneg %p22
    %p29 = scmp.eq.s32.totalorder %s13, 1
    %p30 = por %p28, %p29
    %p31 = scmp.ne.s32.totalorder %s23, %s26
    %p32 = scmp.eq.s32.totalorder %s13, 0
    %p33 = por %p31, %p32
    %p34 = scmp.ne.s32.totalorder %s23, %s26
    %p35 = scmp.eq.s32.totalorder %s18, 1
    %p36 = por %p34, %p35
    %p37 = scmp.ne.s32.totalorder %s26, %s27
    %p38 = scmp.eq.s32.totalorder %s18, 0
    %p39 = por %p37, %p38
    %p40 = scmp.ne.s32.totalorder %s26, %s27
    %p41 = scmp.eq.s32.totalorder %s19, 1
    %p42 = por %p40, %p41
    %p44 = scmp.ne.s32.totalorder %s27, %s43
    %p45 = scmp.eq.s32.totalorder %s19, 0
    %p46 = por %p44, %p45
    %s48 = sadd.s32 %s47, 1
    %p51 = scmp.eq.s32.totalorder %s13, 1
    %p52 = scmp.ne.s32.totalorder %s47, %s49
    %p53 = scmp.eq.s32.totalorder %s13, 0
    %p54 = por %p52, %p53
    %p55 = scmp.ne.s32.totalorder %s47, %s49
    %p56 = scmp.eq.s32.totalorder %s18, 1
    %p57 = por %p55, %p56
    %p58 = scmp.ne.s32.totalorder %s49, %s50
    %p59 = scmp.eq.s32.totalorder %s18, 0
    %p60 = por %p58, %p59
    %p61 = scmp.ne.s32.totalorder %s49, %s50
    %p62 = scmp.eq.s32.totalorder %s19, 1
    %p63 = por %p61, %p62
    %p65 = scmp.ne.s32.totalorder %s50, %s64
    %p66 = scmp.eq.s32.totalorder %s19, 0
    %p67 = por %p65, %p66
    %s69 = sadd.s32 %s68, 1
    %p72 = scmp.eq.s32.totalorder %s13, 1
    %p73 = scmp.ne.s32.totalorder %s68, %s70
    %p74 = scmp.eq.s32.totalorder %s13, 0
    %p75 = por %p73, %p74
    %p76 = scmp.ne.s32.totalorder %s68, %s70
    %p77 = scmp.eq.s32.totalorder %s18, 1
    %p78 = por %p76, %p77
    %p79 = scmp.ne.s32.totalorder %s70, %s71
    %p80 = scmp.eq.s32.totalorder %s18, 0
    %p81 = por %p79, %p80
    %p82 = scmp.ne.s32.totalorder %s70, %s71
    %p83 = scmp.eq.s32.totalorder %s19, 1
    %p84 = por %p82, %p83
    %p86 = scmp.ne.s32.totalorder %s71, %s85
    %p87 = scmp.eq.s32.totalorder %s19, 0
    %p88 = por %p86, %p87
    %s90 = sadd.s32 %s89, 1
    %p93 = scmp.eq.s32.totalorder %s13, 1
    %p94 = scmp.ne.s32.totalorder %s89, %s91
    %p95 = scmp.eq.s32.totalorder %s13, 0
    %p96 = por %p94, %p95
    %p97 = scmp.ne.s32.totalorder %s89, %s91
    %p98 = scmp.eq.s32.totalorder %s18, 1
    %p99 = por %p97, %p98
    %p100 = scmp.ne.s32.totalorder %s91, %s92
    %p101 = scmp.eq.s32.totalorder %s18, 0
    %p102 = por %p100, %p101
    %p103 = scmp.ne.s32.totalorder %s91, %s92
    %p104 = scmp.eq.s32.totalorder %s19, 1
    %p105 = por %p103, %p104
    %p107 = scmp.ne.s32.totalorder %s92, %s106
    %p108 = scmp.eq.s32.totalorder %s19, 0
    %p109 = por %p107, %p108
    %s111 = sadd.s32 %s110, 1
    %p114 = scmp.eq.s32.totalorder %s13, 1
    %p115 = scmp.ne.s32.totalorder %s110, %s112
    %p116 = scmp.eq.s32.totalorder %s13, 0
    %p117 = por %p115, %p116
    %p118 = scmp.ne.s32.totalorder %s110, %s112
    %p119 = scmp.eq.s32.totalorder %s18, 1
    %p120 = por %p118, %p119
    %p121 = scmp.ne.s32.totalorder %s112, %s113
    %p122 = scmp.eq.s32.totalorder %s18, 0
    %p123 = por %p121, %p122
    %p124 = scmp.ne.s32.totalorder %s112, %s113
    %p125 = scmp.eq.s32.totalorder %s19, 1
    %p126 = por %p124, %p125
    %p128 = scmp.ne.s32.totalorder %s113, %s127
    %p129 = scmp.eq.s32.totalorder %s19, 0
    %p130 = por %p128, %p129
    %s132 = sadd.s32 %s131, 1
    %p135 = scmp.eq.s32.totalorder %s13, 1
    %p136 = scmp.ne.s32.totalorder %s131, %s133
    %p137 = scmp.eq.s32.totalorder %s13, 0
    %p138 = por %p136, %p137
    %p139 = scmp.ne.s32.totalorder %s131, %s133
    %p140 = scmp.eq.s32.totalorder %s18, 1
    %p141 = por %p139, %p140
    %p142 = scmp.ne.s32.totalorder %s133, %s134
    %p143 = scmp.eq.s32.totalorder %s18, 0
    %p144 = por %p142, %p143
    %p145 = scmp.ne.s32.totalorder %s133, %s134
    %p146 = scmp.eq.s32.totalorder %s19, 1
    %p147 = por %p145, %p146
    %p149 = scmp.ne.s32.totalorder %s134, %s148
    %p150 = scmp.eq.s32.totalorder %s19, 0
    %p151 = por %p149, %p150
    %s153 = sadd.s32 %s152, 1
    %p156 = scmp.eq.s32.totalorder %s13, 1
    %p157 = scmp.ne.s32.totalorder %s152, %s154
    %p158 = scmp.eq.s32.totalorder %s13, 0
    %p159 = por %p157, %p158
    %p160 = scmp.ne.s32.totalorder %s152, %s154
    %p161 = scmp.eq.s32.totalorder %s18, 1
    %p162 = por %p160, %p161
    %p163 = scmp.ne.s32.totalorder %s154, %s155
    %p164 = scmp.eq.s32.totalorder %s18, 0
    %p165 = por %p163, %p164
    %p166 = scmp.ne.s32.totalorder %s154, %s155
    %p167 = scmp.eq.s32.totalorder %s19, 1
    %p168 = por %p166, %p167
    %p170 = scmp.ne.s32.totalorder %s155, %s169
    %p171 = scmp.eq.s32.totalorder %s19, 0
    %p172 = por %p170, %p171
    %s173 = ssub.s32 %s13, %s20
    %p174 = scmp.eq.s32.totalorder %s173, 0
    %s176 = sadd.s32 %s175, 1
    %s177 = scalar_select %p174, %s175, %s176
    %p180 = pneg %p174
    %p181 = scmp.eq.s32.totalorder %s13, 1
    %p182 = por %p180, %p181
    %p183 = scmp.ne.s32.totalorder %s175, %s178
    %p184 = scmp.eq.s32.totalorder %s13, 0
    %p185 = por %p183, %p184
    %p186 = scmp.ne.s32.totalorder %s175, %s178
    %p187 = scmp.eq.s32.totalorder %s18, 1
    %p188 = por %p186, %p187
    %p189 = scmp.ne.s32.totalorder %s178, %s179
    %p190 = scmp.eq.s32.totalorder %s18, 0
    %p191 = por %p189, %p190
    %p192 = scmp.ne.s32.totalorder %s178, %s179
    %p193 = scmp.eq.s32.totalorder %s19, 1
    %p194 = por %p192, %p193
    %p196 = scmp.ne.s32.totalorder %s179, %s195
    %p197 = scmp.eq.s32.totalorder %s19, 0
    %p198 = por %p196, %p197
    %p199 = scmp.le.s32.totalorder 1, %s13
    %p200 = scmp.lt.s32.totalorder %s13, 3
    %p201 = pnand %p199, %p200
    %p202 = pneg %p201
    // Predicated region
    $region9: #{decoder_forward.10} parent=5 // pred_check
      _
    $region10: #{decoder_forward.10} parent=5 // pred_check_branch
      %204 = sbr.rel (%p201) target = $region12
    $region11: #{decoder_forward.10} parent=5 // pred_region
      %s205 = ssub.s32 %s13, 1
      // Predicated region
      $region13: #{decoder_forward.10} parent=11 // pred_check
        %p206 = pneg %p60
      $region14: #{decoder_forward.10} parent=11 // pred_check_branch
        %208 = sbr.rel (%p206) target = $region16
      $region15: #{decoder_forward.10} parent=11 // pred_region
        _
      $region16: #{decoder_forward.10} parent=11 // pred_fallthru
        _
      // Predicated region
      $region17: #{decoder_forward.10} parent=11 // pred_check
        %p209 = pneg %p81
      $region18: #{decoder_forward.10} parent=11 // pred_check_branch
        %211 = sbr.rel (%p209) target = $region20
      $region19: #{decoder_forward.10} parent=11 // pred_region
        _
      $region20: #{decoder_forward.10} parent=11 // pred_fallthru
        _
      // Predicated region
      $region21: #{decoder_forward.10} parent=11 // pred_check
        %p212 = pneg %p102
      $region22: #{decoder_forward.10} parent=11 // pred_check_branch
        %214 = sbr.rel (%p212) target = $region24
      $region23: #{decoder_forward.10} parent=11 // pred_region
        _
      $region24: #{decoder_forward.10} parent=11 // pred_fallthru
        _
      // Predicated region
      $region25: #{decoder_forward.10} parent=11 // pred_check
        %p215 = pneg %p123
      $region26: #{decoder_forward.10} parent=11 // pred_check_branch
        %217 = sbr.rel (%p215) target = $region28
      $region27: #{decoder_forward.10} parent=11 // pred_region
        _
      $region28: #{decoder_forward.10} parent=11 // pred_fallthru
        _
      // Predicated region
      $region29: #{decoder_forward.10} parent=11 // pred_check
        %p218 = pneg %p144
      $region30: #{decoder_forward.10} parent=11 // pred_check_branch
        %220 = sbr.rel (%p218) target = $region32
      $region31: #{decoder_forward.10} parent=11 // pred_region
        _
      $region32: #{decoder_forward.10} parent=11 // pred_fallthru
        _
      // Predicated region
      $region33: #{decoder_forward.10} parent=11 // pred_check
        %p221 = pneg %p165
      $region34: #{decoder_forward.10} parent=11 // pred_check_branch
        %223 = sbr.rel (%p221) target = $region36
      $region35: #{decoder_forward.10} parent=11 // pred_region
        _
      $region36: #{decoder_forward.10} parent=11 // pred_fallthru
        _
    $region12: #{decoder_forward.10} parent=5 // pred_fallthru
      _
    %p224 = scmp.lt.s32.totalorder %s13, 2
    // Predicated region
    $region37: #{decoder_forward.10} parent=5 // pred_check
      %p225 = pneg %p224
    $region38: #{decoder_forward.10} parent=5 // pred_check_branch
      %227 = sbr.rel (%p225) target = $region40
    $region39: #{decoder_forward.10} parent=5 // pred_region
      // Predicated region
      $region41: #{decoder_forward.10} parent=39 // pred_check
        %p228 = pneg %p33
      $region42: #{decoder_forward.10} parent=39 // pred_check_branch
        %230 = sbr.rel (%p228) target = $region44
      $region43: #{decoder_forward.10} parent=39 // pred_region
        %p231 = scmp.lt.s32.totalorder %s13, 1
        %s232 = scalar_select %p231, %s13, 1
        %s233 = smul.addr %s232, 4
        %s234 = scalar_lea.vmem %s0, %s233
      $region44: #{decoder_forward.10} parent=39 // pred_fallthru
        _
    $region40: #{decoder_forward.10} parent=5 // pred_fallthru
      _
    %p235 = scmp.le.s32.totalorder 1, %s13
    %p236 = scmp.lt.s32.totalorder %s13, 3
    %p237 = pnand %p235, %p236
    %p238 = pneg %p237
    // Predicated region
    $region45: #{decoder_forward.10} parent=5 // pred_check
      _
    $region46: #{decoder_forward.10} parent=5 // pred_check_branch
      %240 = sbr.rel (%p237) target = $region48
    $region47: #{decoder_forward.10} parent=5 // pred_region
      %s241 = ssub.s32 %s13, 1
      %p242 = scmp.lt.s32.totalorder %s18, 1
      %s243 = scalar_select %p242, %s18, 1
      %s244 = smul.addr %s243, 4
      %s245 = scalar_lea.vmem %s0, %s244
      %p246 = pneg %p39
      %p247 = pneg %p36
      %p248 = pneg %p60
      %p249 = pneg %p57
      %p250 = pneg %p81
      %p251 = pneg %p78
      %p252 = pneg %p102
      %p253 = pneg %p99
      %p254 = pneg %p123
      %p255 = pneg %p120
      %p256 = pneg %p144
      %p257 = pneg %p141
      %p258 = pneg %p165
      %p259 = pneg %p162
      %p260 = pneg %p191
      %p261 = pneg %p188
      %p262 = scmp.lt.s32.totalorder %s18, 1
      %s263 = scalar_select %p262, %s18, 1
      %s264 = smul.addr %s263, 4
      %s265 = scalar_lea.vmem %s7, %s264
      %p266 = scmp.lt.s32.totalorder %s18, 1
      %s267 = scalar_select %p266, %s18, 1
      %s268 = smul.addr %s267, 4
      %s269 = scalar_lea.vmem %s0, %s268
      %p270 = scmp.lt.s32.totalorder %s18, 1
      %s271 = scalar_select %p270, %s18, 1
      %s272 = smul.addr %s271, 4
      %s273 = scalar_lea.vmem %s7, %s272
      %v275 = vld [vmem:[%s269] sm:$0xf]
      %v276 = vunpack.c.l.bf16 %v275
      %v277 = vld [vmem:[%s1] sm:$0xff]
      %v278 = vld [vmem:[%s1 + $0x8] sm:$0xf]
      %v279 = vld [vmem:[%s1 + $0xc] sm:$0xff]
      %v280 = vld [vmem:[%s1 + $0x14] sm:$0xf]
      %v281 = vld [vmem:[%s1 + $0x18] sm:$0xff]
      %v282 = vld [vmem:[%s1 + $0x20] sm:$0xf]
      %v283 = vld [vmem:[%s1 + $0x24] sm:$0xff]
      %v284 = vld [vmem:[%s1 + $0x2c] sm:$0xf]
      %v285 = vld [vmem:[%s1 + $0x30] sm:$0xff]
      %v286 = vld [vmem:[%s1 + $0x38] sm:$0xf]
      %v287 = vld [vmem:[%s1 + $0x3c] sm:$0xff]
      %v288 = vld [vmem:[%s1 + $0x44] sm:$0xf]
      %v289 = vld [vmem:[%s1 + $0x48] sm:$0xff]
      %v290 = vld [vmem:[%s1 + $0x50] sm:$0xf]
      %v291 = vld [vmem:[%s1 + $0x54] sm:$0xff]
      %v292 = vld [vmem:[%s1 + $0x5c] sm:$0xf]
      %v293 = vld [vmem:[%s1 + $0x60] sm:$0xff]
      %v294 = vld [vmem:[%s1 + $0x68] sm:$0xf]
      %v295 = vld [vmem:[%s1 + $0x6c] sm:$0xff]
      %v296 = vld [vmem:[%s1 + $0x74] sm:$0xf]
      %v297 = vld [vmem:[%s1 + $0x78] sm:$0xff]
      %v298 = vld [vmem:[%s1 + $0x80] sm:$0xf]
      %v299 = vld [vmem:[%s1 + $0x84] sm:$0xff]
      %v300 = vld [vmem:[%s1 + $0x8c] sm:$0xf]
      %v301 = vld [vmem:[%s1 + $0x90] sm:$0xff]
      %v302 = vld [vmem:[%s1 + $0x98] sm:$0xf]
      %v303 = vld [vmem:[%s1 + $0x9c] sm:$0xff]
      %v304 = vld [vmem:[%s1 + $0xa4] sm:$0xf]
      %v305 = vld [vmem:[%s1 + $0xa8] sm:$0xff]
      %v306 = vld [vmem:[%s1 + $0xb0] sm:$0xf]
      %v307 = vld [vmem:[%s1 + $0xb4] sm:$0xff]
      %v308 = vld [vmem:[%s1 + $0xbc] sm:$0xf]
      %v309 = vld [vmem:[%s2] sm:$0x7]
      %v311 = vlaneseq
      %v312 = vshrl.u32 %v311, 7
      %v313 = vsub.s32 0, %v312
      %v314 = vrot.slane %v309, %v313
      %v315 = vlaneseq
      %v316 = vshrl.u32 %v315, 7
      %v317 = vsub.s32 1, %v316
      %v318 = vrot.slane %v309, %v317
      %v319 = vlaneseq
      %v320 = vshrl.u32 %v319, 7
      %v321 = vsub.s32 2, %v320
      %v322 = vrot.slane %v309, %v321
      %v358 = vunpack.c.l.b16 %v277
      %v359 = vunpack.c.h.b16 %v277
      %v360 = vunpack.c.l.b16 %v278
      %v361 = vunpack.c.l.b16 %v279
      %v362 = vunpack.c.h.b16 %v279
      %v363 = vunpack.c.l.b16 %v280
      %v364 = vunpack.c.l.b16 %v281
      %v365 = vunpack.c.h.b16 %v281
      %v366 = vunpack.c.l.b16 %v282
      %v367 = vunpack.c.l.b16 %v283
      %v368 = vunpack.c.h.b16 %v283
      %v369 = vunpack.c.l.b16 %v284
      %v370 = vunpack.c.l.b16 %v285
      %v371 = vunpack.c.h.b16 %v285
      %v372 = vunpack.c.l.b16 %v286
      %v373 = vunpack.c.l.b16 %v287
      %v374 = vunpack.c.h.b16 %v287
      %v375 = vunpack.c.l.b16 %v288
      %v376 = vunpack.c.l.b16 %v289
      %v377 = vunpack.c.h.b16 %v289
      %v378 = vunpack.c.l.b16 %v290
      %v379 = vunpack.c.l.b16 %v291
      %v380 = vunpack.c.h.b16 %v291
      %v381 = vunpack.c.l.b16 %v292
      %v382 = vunpack.c.l.b16 %v293
      %v383 = vunpack.c.h.b16 %v293
      %v384 = vunpack.c.l.b16 %v294
      %v385 = vunpack.c.l.b16 %v295
      %v386 = vunpack.c.h.b16 %v295
      %v387 = vunpack.c.l.b16 %v296
      %v388 = vunpack.c.l.b16 %v297
      %v389 = vunpack.c.h.b16 %v297
      %v390 = vunpack.c.l.b16 %v298
      %v391 = vunpack.c.l.b16 %v299
      %v392 = vunpack.c.h.b16 %v299
      %v393 = vunpack.c.l.b16 %v300
      %v394 = vunpack.c.l.b16 %v301
      %v395 = vunpack.c.h.b16 %v301
      %v396 = vunpack.c.l.b16 %v302
      %v397 = vunpack.c.l.b16 %v303
      %v398 = vunpack.c.h.b16 %v303
      %v399 = vunpack.c.l.b16 %v304
      %v400 = vunpack.c.l.b16 %v305
      %v401 = vunpack.c.h.b16 %v305
      %v402 = vunpack.c.l.b16 %v306
      %v403 = vunpack.c.l.b16 %v307
      %v404 = vunpack.c.h.b16 %v307
      %v405 = vunpack.c.l.b16 %v308
      %v406 = vpack.c.b16 %v361, %v358
      %v407 = vpack.c.b16 %v362, %v359
      %v408 = vpack.c.b16 %v363, %v360
      %v409 = vpack.c.b16 %v367, %v364
      %v410 = vpack.c.b16 %v368, %v365
      %v411 = vpack.c.b16 %v369, %v366
      %v412 = vpack.c.b16 %v373, %v370
      %v413 = vpack.c.b16 %v374, %v371
      %v414 = vpack.c.b16 %v375, %v372
      %v415 = vpack.c.b16 %v379, %v376
      %v416 = vpack.c.b16 %v380, %v377
      %v417 = vpack.c.b16 %v381, %v378
      %v418 = vpack.c.b16 %v385, %v382
      %v419 = vpack.c.b16 %v386, %v383
      %v420 = vpack.c.b16 %v387, %v384
      %v421 = vpack.c.b16 %v391, %v388
      %v422 = vpack.c.b16 %v392, %v389
      %v423 = vpack.c.b16 %v393, %v390
      %v424 = vpack.c.b16 %v397, %v394
      %v425 = vpack.c.b16 %v398, %v395
      %v426 = vpack.c.b16 %v399, %v396
      %v427 = vpack.c.b16 %v403, %v400
      %v428 = vpack.c.b16 %v404, %v401
      %v429 = vpack.c.b16 %v405, %v402
      %454 = vmatprep.subr.bf16.mxu0 %v428
      %455 = vmatpush1.bf16.msra.mxu0 %v427
      %456 = vmatprep.subr.bf16.mxu0 %v425
      %457 = vmatpush1.bf16.msra.mxu0 %v424
      %458 = vmatprep.subr.bf16.mxu0 %v422
      %459 = vmatpush1.bf16.msra.mxu0 %v421
      %460 = vmatprep.subr.bf16.mxu0 %v419
      %461 = vmatpush1.bf16.msra.mxu0 %v418
      %462 = vmatprep.subr.bf16.mxu0 %v416
      %463 = vmatpush1.bf16.msra.mxu0 %v415
      %464 = vmatprep.subr.bf16.mxu0 %v413
      %465 = vmatpush1.bf16.msra.mxu0 %v412
      %466 = vmatprep.subr.bf16.mxu0 %v410
      %467 = vmatpush1.bf16.msra.mxu0 %v409
      %468 = vmatprep.subr.bf16.mxu0 %v407
      %469 = vmatpush1.bf16.msra.mxu0 %v406
      %470 = vmatprep.subr.bf16.mxu0 0
      %471 = vmatpush2.bf16.msra.mxu0 0
      %472 = vmatprep.subr.bf16.mxu0 0
      %473 = vmatpush2.bf16.msra.mxu0 0
      %474 = vmatprep.subr.bf16.mxu0 0
      %475 = vmatpush2.bf16.msra.mxu0 0
      %476 = vmatprep.subr.bf16.mxu0 0
      %477 = vmatpush2.bf16.msra.mxu0 0
      %478 = vmatprep.subr.bf16.mxu0 0
      %479 = vmatpush2.bf16.msra.mxu0 0
      %480 = vmatprep.subr.bf16.mxu0 0
      %481 = vmatpush2.bf16.msra.mxu0 0
      %482 = vmatprep.subr.bf16.mxu0 0
      %483 = vmatpush2.bf16.msra.mxu0 0
      %484 = vmatprep.subr.bf16.mxu0 0
      %485 = vmatpush2.bf16.msra.mxu0 0
      %486 = vmatprep.mubr.bf16.mxu0 0
      %487 = vmatmul.mubr.bf16.gmra.mxu0 %v275
      %v488 = vpop.f32.mrf.mxu0
      %v489 = vadd.f32 %v314, %v488
      %v490 = vpop.f32.mrf.mxu0
      %v491 = vadd.f32 %v318, %v490
      %v492 = vpop.f32.mrf.mxu0
      %v493 = vpop.f32.mrf.mxu0
      %494 = vdwg.mxu0
      %495 = vmatprep.subr.bf16.mxu0 0
      %496 = vmatpush1.bf16.msra.mxu0 %v429
      %497 = vmatprep.subr.bf16.mxu0 0
      %498 = vmatpush1.bf16.msra.mxu0 %v426
      %499 = vmatprep.subr.bf16.mxu0 0
      %500 = vmatpush1.bf16.msra.mxu0 %v423
      %501 = vmatprep.subr.bf16.mxu0 0
      %502 = vmatpush1.bf16.msra.mxu0 %v420
      %503 = vmatprep.subr.bf16.mxu0 0
      %504 = vmatpush1.bf16.msra.mxu0 %v417
      %505 = vmatprep.subr.bf16.mxu0 0
      %506 = vmatpush1.bf16.msra.mxu0 %v414
      %507 = vmatprep.subr.bf16.mxu0 0
      %508 = vmatpush1.bf16.msra.mxu0 %v411
      %509 = vmatprep.subr.bf16.mxu0 0
      %510 = vmatpush1.bf16.msra.mxu0 %v408
      %511 = vmatprep.subr.bf16.mxu0 0
      %512 = vmatpush2.bf16.msra.mxu0 0
      %513 = vmatprep.subr.bf16.mxu0 0
      %514 = vmatpush2.bf16.msra.mxu0 0
      %515 = vmatprep.subr.bf16.mxu0 0
      %516 = vmatpush2.bf16.msra.mxu0 0
      %517 = vmatprep.subr.bf16.mxu0 0
      %518 = vmatpush2.bf16.msra.mxu0 0
      %519 = vmatprep.subr.bf16.mxu0 0
      %520 = vmatpush2.bf16.msra.mxu0 0
      %521 = vmatprep.subr.bf16.mxu0 0
      %522 = vmatpush2.bf16.msra.mxu0 0
      %523 = vmatprep.subr.bf16.mxu0 0
      %524 = vmatpush2.bf16.msra.mxu0 0
      %525 = vmatprep.subr.bf16.mxu0 0
      %526 = vmatpush2.bf16.msra.mxu0 0
      %527 = vmatprep.mubr.bf16.mxu0 0
      %528 = vmatmul.mubr.bf16.gmra.mxu0 %v275
      %v529 = vpop.f32.mrf.mxu0
      %v530 = vadd.f32 %v322, %v529
      %v531 = vpop.f32.mrf.mxu0
      %v532 = vpop.f32.mrf.mxu0
      %v533 = vpop.f32.mrf.mxu0
      %534 = vdwg.mxu0
      %v535 = vpack.c.bf16 %v489, %v489
      %537 = vrot.lane.b32.xlu0 %v535, 112
      %v538 = vpop.permute.xlu0 %537
      %540 = vrot.lane.b32.xlu0 %v535, 96
      %v541 = vpop.permute.xlu0 %540
      %543 = vrot.lane.b32.xlu0 %v535, 80
      %v544 = vpop.permute.xlu0 %543
      %546 = vrot.lane.b32.xlu0 %v535, 64
      %v547 = vpop.permute.xlu0 %546
      %549 = vrot.lane.b32.xlu0 %v535, 48
      %v550 = vpop.permute.xlu0 %549
      %552 = vrot.lane.b32.xlu0 %v535, 32
      %v553 = vpop.permute.xlu0 %552
      %555 = vrot.lane.b32.xlu0 %v535, 16
      %v556 = vpop.permute.xlu0 %555
      %v558 = vcombine.low %v535, %v547
      %v560 = vunpack.c.l.s4 1983009808
      %v561 = vunpack.c.0.s8 %v560
      %v562 = vlaneseq
      %v563 = vshrl.u32 %v562, 7
      %v564 = vsub.s32 %v561, %v563
      %v565 = vrot.slane %v558, %v564
      %v566 = vcombine.low %v541, %v553
      %v568 = vunpack.c.l.s4 1983009808
      %v569 = vunpack.c.0.s8 %v568
      %v570 = vlaneseq
      %v571 = vshrl.u32 %v570, 7
      %v572 = vsub.s32 %v569, %v571
      %v573 = vrot.slane %v566, %v572
      %v574 = vcombine.low %v565, %v573
      %v575 = vcombine.high %v565, %v573
      %v577 = vunpack.c.l.s4 1934713408
      %v578 = vunpack.c.0.s8 %v577
      %v579 = vlaneseq
      %v580 = vshrl.u32 %v579, 7
      %v581 = vsub.s32 %v578, %v580
      %v582 = vrot.slane %v574, %v581
      %v584 = vunpack.c.l.s4 1934713408
      %v585 = vunpack.c.0.s8 %v584
      %v586 = vlaneseq
      %v587 = vshrl.u32 %v586, 7
      %v588 = vsub.s32 %v585, %v587
      %v589 = vrot.slane %v575, %v588
      %v590 = vcombine.high %v582, 0
      %v591 = vcombine.high %v589, 0
      %v592 = vcombine.low %v538, %v550
      %v594 = vunpack.c.l.s4 1983009808
      %v595 = vunpack.c.0.s8 %v594
      %v596 = vlaneseq
      %v597 = vshrl.u32 %v596, 7
      %v598 = vsub.s32 %v595, %v597
      %v599 = vrot.slane %v592, %v598
      %v600 = vcombine.low %v544, %v556
      %v602 = vunpack.c.l.s4 1983009808
      %v603 = vunpack.c.0.s8 %v602
      %v604 = vlaneseq
      %v605 = vshrl.u32 %v604, 7
      %v606 = vsub.s32 %v603, %v605
      %v607 = vrot.slane %v600, %v606
      %v608 = vcombine.low %v599, %v607
      %v609 = vcombine.high %v599, %v607
      %v611 = vunpack.c.l.s4 1934713408
      %v612 = vunpack.c.0.s8 %v611
      %v613 = vlaneseq
      %v614 = vshrl.u32 %v613, 7
      %v615 = vsub.s32 %v612, %v614
      %v616 = vrot.slane %v608, %v615
      %v618 = vunpack.c.l.s4 1934713408
      %v619 = vunpack.c.0.s8 %v618
      %v620 = vlaneseq
      %v621 = vshrl.u32 %v620, 7
      %v622 = vsub.s32 %v619, %v621
      %v623 = vrot.slane %v609, %v622
      %v624 = vcombine.high %v616, 0
      %v625 = vcombine.high %v623, 0
      %v628 = vpack.i.b16 %v616, %v582
      %v630 = vshrl.u32 %v582, 16
      %v631 = vshrl.u32 %v616, 16
      %v632 = vpack.i.b16 %v631, %v630
      %v636 = vpack.i.b16 %v624, %v590
      %v638 = vshrl.u32 %v590, 16
      %v639 = vshrl.u32 %v624, 16
      %v640 = vpack.i.b16 %v639, %v638
      %v644 = vpack.i.b16 %v623, %v589
      %v646 = vshrl.u32 %v589, 16
      %v647 = vshrl.u32 %v623, 16
      %v648 = vpack.i.b16 %v647, %v646
      %v652 = vpack.i.b16 %v625, %v591
      %v654 = vshrl.u32 %v591, 16
      %v655 = vshrl.u32 %v625, 16
      %v656 = vpack.i.b16 %v655, %v654
      %v658 = vcombine.low %v628, %v644
      %v660 = vunpack.c.l.s4 1983009808
      %v661 = vunpack.c.0.s8 %v660
      %v662 = vlaneseq
      %v663 = vshrl.u32 %v662, 7
      %v664 = vsub.s32 %v661, %v663
      %v665 = vrot.slane %v658, %v664
      %v666 = vcombine.low %v636, %v652
      %v668 = vunpack.c.l.s4 1983009808
      %v669 = vunpack.c.0.s8 %v668
      %v670 = vlaneseq
      %v671 = vshrl.u32 %v670, 7
      %v672 = vsub.s32 %v669, %v671
      %v673 = vrot.slane %v666, %v672
      %v674 = vcombine.low %v665, %v673
      %v675 = vcombine.high %v665, %v673
      %v677 = vunpack.c.l.s4 1934713408
      %v678 = vunpack.c.0.s8 %v677
      %v679 = vlaneseq
      %v680 = vshrl.u32 %v679, 7
      %v681 = vsub.s32 %v678, %v680
      %v682 = vrot.slane %v674, %v681
      %v684 = vunpack.c.l.s4 1934713408
      %v685 = vunpack.c.0.s8 %v684
      %v686 = vlaneseq
      %v687 = vshrl.u32 %v686, 7
      %v688 = vsub.s32 %v685, %v687
      %v689 = vrot.slane %v675, %v688
      %v690 = vcombine.high %v682, 0
      %v691 = vcombine.high %v689, 0
      %v692 = vcombine.low %v632, %v648
      %v694 = vunpack.c.l.s4 1983009808
      %v695 = vunpack.c.0.s8 %v694
      %v696 = vlaneseq
      %v697 = vshrl.u32 %v696, 7
      %v698 = vsub.s32 %v695, %v697
      %v699 = vrot.slane %v692, %v698
      %v700 = vcombine.low %v640, %v656
      %v702 = vunpack.c.l.s4 1983009808
      %v703 = vunpack.c.0.s8 %v702
      %v704 = vlaneseq
      %v705 = vshrl.u32 %v704, 7
      %v706 = vsub.s32 %v703, %v705
      %v707 = vrot.slane %v700, %v706
      %v708 = vcombine.low %v699, %v707
      %v709 = vcombine.high %v699, %v707
      %v711 = vunpack.c.l.s4 1934713408
      %v712 = vunpack.c.0.s8 %v711
      %v713 = vlaneseq
      %v714 = vshrl.u32 %v713, 7
      %v715 = vsub.s32 %v712, %v714
      %v716 = vrot.slane %v708, %v715
      %v718 = vunpack.c.l.s4 1934713408
      %v719 = vunpack.c.0.s8 %v718
      %v720 = vlaneseq
      %v721 = vshrl.u32 %v720, 7
      %v722 = vsub.s32 %v719, %v721
      %v723 = vrot.slane %v709, %v722
      %v724 = vcombine.high %v716, 0
      %v725 = vcombine.high %v723, 0
      %v728 = vpack.i.b16 %v716, %v682
      %v729 = vshrl.u32 %v682, 16
      %v730 = vshrl.u32 %v716, 16
      %v731 = vpack.i.b16 %v730, %v729
      %v734 = vpack.i.b16 %v724, %v690
      %v735 = vshrl.u32 %v690, 16
      %v736 = vshrl.u32 %v724, 16
      %v737 = vpack.i.b16 %v736, %v735
      %v740 = vpack.i.b16 %v723, %v689
      %v741 = vshrl.u32 %v689, 16
      %v742 = vshrl.u32 %v723, 16
      %v743 = vpack.i.b16 %v742, %v741
      %v746 = vpack.i.b16 %v725, %v691
      %v747 = vshrl.u32 %v691, 16
      %v748 = vshrl.u32 %v725, 16
      %v749 = vpack.i.b16 %v748, %v747
      %v750 = vpack.c.bf16 %v491, %v491
      %752 = vrot.lane.b32.xlu0 %v750, 112
      %v753 = vpop.permute.xlu0 %752
      %755 = vrot.lane.b32.xlu0 %v750, 96
      %v756 = vpop.permute.xlu0 %755
      %758 = vrot.lane.b32.xlu0 %v750, 80
      %v759 = vpop.permute.xlu0 %758
      %761 = vrot.lane.b32.xlu0 %v750, 64
      %v762 = vpop.permute.xlu0 %761
      %764 = vrot.lane.b32.xlu0 %v750, 48
      %v765 = vpop.permute.xlu0 %764
      %767 = vrot.lane.b32.xlu0 %v750, 32
      %v768 = vpop.permute.xlu0 %767
      %770 = vrot.lane.b32.xlu0 %v750, 16
      %v771 = vpop.permute.xlu0 %770
      %v773 = vcombine.low %v750, %v762
      %v775 = vunpack.c.l.s4 1983009808
      %v776 = vunpack.c.0.s8 %v775
      %v777 = vlaneseq
      %v778 = vshrl.u32 %v777, 7
      %v779 = vsub.s32 %v776, %v778
      %v780 = vrot.slane %v773, %v779
      %v781 = vcombine.low %v756, %v768
      %v783 = vunpack.c.l.s4 1983009808
      %v784 = vunpack.c.0.s8 %v783
      %v785 = vlaneseq
      %v786 = vshrl.u32 %v785, 7
      %v787 = vsub.s32 %v784, %v786
      %v788 = vrot.slane %v781, %v787
      %v789 = vcombine.low %v780, %v788
      %v790 = vcombine.high %v780, %v788
      %v792 = vunpack.c.l.s4 1934713408
      %v793 = vunpack.c.0.s8 %v792
      %v794 = vlaneseq
      %v795 = vshrl.u32 %v794, 7
      %v796 = vsub.s32 %v793, %v795
      %v797 = vrot.slane %v789, %v796
      %v799 = vunpack.c.l.s4 1934713408
      %v800 = vunpack.c.0.s8 %v799
      %v801 = vlaneseq
      %v802 = vshrl.u32 %v801, 7
      %v803 = vsub.s32 %v800, %v802
      %v804 = vrot.slane %v790, %v803
      %v805 = vcombine.high %v797, 0
      %v806 = vcombine.high %v804, 0
      %v807 = vcombine.low %v753, %v765
      %v809 = vunpack.c.l.s4 1983009808
      %v810 = vunpack.c.0.s8 %v809
      %v811 = vlaneseq
      %v812 = vshrl.u32 %v811, 7
      %v813 = vsub.s32 %v810, %v812
      %v814 = vrot.slane %v807, %v813
      %v815 = vcombine.low %v759, %v771
      %v817 = vunpack.c.l.s4 1983009808
      %v818 = vunpack.c.0.s8 %v817
      %v819 = vlaneseq
      %v820 = vshrl.u32 %v819, 7
      %v821 = vsub.s32 %v818, %v820
      %v822 = vrot.slane %v815, %v821
      %v823 = vcombine.low %v814, %v822
      %v824 = vcombine.high %v814, %v822
      %v826 = vunpack.c.l.s4 1934713408
      %v827 = vunpack.c.0.s8 %v826
      %v828 = vlaneseq
      %v829 = vshrl.u32 %v828, 7
      %v830 = vsub.s32 %v827, %v829
      %v831 = vrot.slane %v823, %v830
      %v833 = vunpack.c.l.s4 1934713408
      %v834 = vunpack.c.0.s8 %v833
      %v835 = vlaneseq
      %v836 = vshrl.u32 %v835, 7
      %v837 = vsub.s32 %v834, %v836
      %v838 = vrot.slane %v824, %v837
      %v839 = vcombine.high %v831, 0
      %v840 = vcombine.high %v838, 0
      %v843 = vpack.i.b16 %v831, %v797
      %v845 = vshrl.u32 %v797, 16
      %v846 = vshrl.u32 %v831, 16
      %v847 = vpack.i.b16 %v846, %v845
      %v851 = vpack.i.b16 %v839, %v805
      %v853 = vshrl.u32 %v805, 16
      %v854 = vshrl.u32 %v839, 16
      %v855 = vpack.i.b16 %v854, %v853
      %v859 = vpack.i.b16 %v838, %v804
      %v861 = vshrl.u32 %v804, 16
      %v862 = vshrl.u32 %v838, 16
      %v863 = vpack.i.b16 %v862, %v861
      %v867 = vpack.i.b16 %v840, %v806
      %v869 = vshrl.u32 %v806, 16
      %v870 = vshrl.u32 %v840, 16
      %v871 = vpack.i.b16 %v870, %v869
      %v873 = vcombine.low %v843, %v859
      %v875 = vunpack.c.l.s4 1983009808
      %v876 = vunpack.c.0.s8 %v875
      %v877 = vlaneseq
      %v878 = vshrl.u32 %v877, 7
      %v879 = vsub.s32 %v876, %v878
      %v880 = vrot.slane %v873, %v879
      %v881 = vcombine.low %v851, %v867
      %v883 = vunpack.c.l.s4 1983009808
      %v884 = vunpack.c.0.s8 %v883
      %v885 = vlaneseq
      %v886 = vshrl.u32 %v885, 7
      %v887 = vsub.s32 %v884, %v886
      %v888 = vrot.slane %v881, %v887
      %v889 = vcombine.low %v880, %v888
      %v890 = vcombine.high %v880, %v888
      %v892 = vunpack.c.l.s4 1934713408
      %v893 = vunpack.c.0.s8 %v892
      %v894 = vlaneseq
      %v895 = vshrl.u32 %v894, 7
      %v896 = vsub.s32 %v893, %v895
      %v897 = vrot.slane %v889, %v896
      %v899 = vunpack.c.l.s4 1934713408
      %v900 = vunpack.c.0.s8 %v899
      %v901 = vlaneseq
      %v902 = vshrl.u32 %v901, 7
      %v903 = vsub.s32 %v900, %v902
      %v904 = vrot.slane %v890, %v903
      %v905 = vcombine.high %v897, 0
      %v906 = vcombine.high %v904, 0
      %v907 = vcombine.low %v847, %v863
      %v909 = vunpack.c.l.s4 1983009808
      %v910 = vunpack.c.0.s8 %v909
      %v911 = vlaneseq
      %v912 = vshrl.u32 %v911, 7
      %v913 = vsub.s32 %v910, %v912
      %v914 = vrot.slane %v907, %v913
      %v915 = vcombine.low %v855, %v871
      %v917 = vunpack.c.l.s4 1983009808
      %v918 = vunpack.c.0.s8 %v917
      %v919 = vlaneseq
      %v920 = vshrl.u32 %v919, 7
      %v921 = vsub.s32 %v918, %v920
      %v922 = vrot.slane %v915, %v921
      %v923 = vcombine.low %v914, %v922
      %v924 = vcombine.high %v914, %v922
      %v926 = vunpack.c.l.s4 1934713408
      %v927 = vunpack.c.0.s8 %v926
      %v928 = vlaneseq
      %v929 = vshrl.u32 %v928, 7
      %v930 = vsub.s32 %v927, %v929
      %v931 = vrot.slane %v923, %v930
      %v933 = vunpack.c.l.s4 1934713408
      %v934 = vunpack.c.0.s8 %v933
      %v935 = vlaneseq
      %v936 = vshrl.u32 %v935, 7
      %v937 = vsub.s32 %v934, %v936
      %v938 = vrot.slane %v924, %v937
      %v939 = vcombine.high %v931, 0
      %v940 = vcombine.high %v938, 0
      %v943 = vpack.i.b16 %v931, %v897
      %v944 = vshrl.u32 %v897, 16
      %v945 = vshrl.u32 %v931, 16
      %v946 = vpack.i.b16 %v945, %v944
      %v949 = vpack.i.b16 %v939, %v905
      %v950 = vshrl.u32 %v905, 16
      %v951 = vshrl.u32 %v939, 16
      %v952 = vpack.i.b16 %v951, %v950
      %v955 = vpack.i.b16 %v938, %v904
      %v956 = vshrl.u32 %v904, 16
      %v957 = vshrl.u32 %v938, 16
      %v958 = vpack.i.b16 %v957, %v956
      %v961 = vpack.i.b16 %v940, %v906
      %v962 = vshrl.u32 %v906, 16
      %v963 = vshrl.u32 %v940, 16
      %v964 = vpack.i.b16 %v963, %v962
      %v965 = vpack.c.bf16 %v530, %v530
      %967 = vrot.lane.b32.xlu0 %v965, 112
      %v968 = vpop.permute.xlu0 %967
      %970 = vrot.lane.b32.xlu0 %v965, 96
      %v971 = vpop.permute.xlu0 %970
      %973 = vrot.lane.b32.xlu0 %v965, 80
      %v974 = vpop.permute.xlu0 %973
      %976 = vrot.lane.b32.xlu0 %v965, 64
      %v977 = vpop.permute.xlu0 %976
      %979 = vrot.lane.b32.xlu0 %v965, 48
      %v980 = vpop.permute.xlu0 %979
      %982 = vrot.lane.b32.xlu0 %v965, 32
      %v983 = vpop.permute.xlu0 %982
      %985 = vrot.lane.b32.xlu0 %v965, 16
      %v986 = vpop.permute.xlu0 %985
      %v988 = vcombine.low %v965, %v977
      %v990 = vunpack.c.l.s4 1983009808
      %v991 = vunpack.c.0.s8 %v990
      %v992 = vlaneseq
      %v993 = vshrl.u32 %v992, 7
      %v994 = vsub.s32 %v991, %v993
      %v995 = vrot.slane %v988, %v994
      %v996 = vcombine.low %v971, %v983
      %v998 = vunpack.c.l.s4 1983009808
      %v999 = vunpack.c.0.s8 %v998
      %v1000 = vlaneseq
      %v1001 = vshrl.u32 %v1000, 7
      %v1002 = vsub.s32 %v999, %v1001
      %v1003 = vrot.slane %v996, %v1002
      %v1004 = vcombine.low %v995, %v1003
      %v1005 = vcombine.high %v995, %v1003
      %v1007 = vunpack.c.l.s4 1934713408
      %v1008 = vunpack.c.0.s8 %v1007
      %v1009 = vlaneseq
      %v1010 = vshrl.u32 %v1009, 7
      %v1011 = vsub.s32 %v1008, %v1010
      %v1012 = vrot.slane %v1004, %v1011
      %v1014 = vunpack.c.l.s4 1934713408
      %v1015 = vunpack.c.0.s8 %v1014
      %v1016 = vlaneseq
      %v1017 = vshrl.u32 %v1016, 7
      %v1018 = vsub.s32 %v1015, %v1017
      %v1019 = vrot.slane %v1005, %v1018
      %v1020 = vcombine.high %v1012, 0
      %v1021 = vcombine.high %v1019, 0
      %v1022 = vcombine.low %v968, %v980
      %v1024 = vunpack.c.l.s4 1983009808
      %v1025 = vunpack.c.0.s8 %v1024
      %v1026 = vlaneseq
      %v1027 = vshrl.u32 %v1026, 7
      %v1028 = vsub.s32 %v1025, %v1027
      %v1029 = vrot.slane %v1022, %v1028
      %v1030 = vcombine.low %v974, %v986
      %v1032 = vunpack.c.l.s4 1983009808
      %v1033 = vunpack.c.0.s8 %v1032
      %v1034 = vlaneseq
      %v1035 = vshrl.u32 %v1034, 7
      %v1036 = vsub.s32 %v1033, %v1035
      %v1037 = vrot.slane %v1030, %v1036
      %v1038 = vcombine.low %v1029, %v1037
      %v1039 = vcombine.high %v1029, %v1037
      %v1041 = vunpack.c.l.s4 1934713408
      %v1042 = vunpack.c.0.s8 %v1041
      %v1043 = vlaneseq
      %v1044 = vshrl.u32 %v1043, 7
      %v1045 = vsub.s32 %v1042, %v1044
      %v1046 = vrot.slane %v1038, %v1045
      %v1048 = vunpack.c.l.s4 1934713408
      %v1049 = vunpack.c.0.s8 %v1048
      %v1050 = vlaneseq
      %v1051 = vshrl.u32 %v1050, 7
      %v1052 = vsub.s32 %v1049, %v1051
      %v1053 = vrot.slane %v1039, %v1052
      %v1054 = vcombine.high %v1046, 0
      %v1055 = vcombine.high %v1053, 0
      %v1058 = vpack.i.b16 %v1046, %v1012
      %v1060 = vshrl.u32 %v1012, 16
      %v1061 = vshrl.u32 %v1046, 16
      %v1062 = vpack.i.b16 %v1061, %v1060
      %v1066 = vpack.i.b16 %v1054, %v1020
      %v1068 = vshrl.u32 %v1020, 16
      %v1069 = vshrl.u32 %v1054, 16
      %v1070 = vpack.i.b16 %v1069, %v1068
      %v1074 = vpack.i.b16 %v1053, %v1019
      %v1076 = vshrl.u32 %v1019, 16
      %v1077 = vshrl.u32 %v1053, 16
      %v1078 = vpack.i.b16 %v1077, %v1076
      %v1082 = vpack.i.b16 %v1055, %v1021
      %v1084 = vshrl.u32 %v1021, 16
      %v1085 = vshrl.u32 %v1055, 16
      %v1086 = vpack.i.b16 %v1085, %v1084
      %v1088 = vcombine.low %v1058, %v1074
      %v1090 = vunpack.c.l.s4 1983009808
      %v1091 = vunpack.c.0.s8 %v1090
      %v1092 = vlaneseq
      %v1093 = vshrl.u32 %v1092, 7
      %v1094 = vsub.s32 %v1091, %v1093
      %v1095 = vrot.slane %v1088, %v1094
      %v1096 = vcombine.low %v1066, %v1082
      %v1098 = vunpack.c.l.s4 1983009808
      %v1099 = vunpack.c.0.s8 %v1098
      %v1100 = vlaneseq
      %v1101 = vshrl.u32 %v1100, 7
      %v1102 = vsub.s32 %v1099, %v1101
      %v1103 = vrot.slane %v1096, %v1102
      %v1104 = vcombine.low %v1095, %v1103
      %v1105 = vcombine.high %v1095, %v1103
      %v1107 = vunpack.c.l.s4 1934713408
      %v1108 = vunpack.c.0.s8 %v1107
      %v1109 = vlaneseq
      %v1110 = vshrl.u32 %v1109, 7
      %v1111 = vsub.s32 %v1108, %v1110
      %v1112 = vrot.slane %v1104, %v1111
      %v1114 = vunpack.c.l.s4 1934713408
      %v1115 = vunpack.c.0.s8 %v1114
      %v1116 = vlaneseq
      %v1117 = vshrl.u32 %v1116, 7
      %v1118 = vsub.s32 %v1115, %v1117
      %v1119 = vrot.slane %v1105, %v1118
      %v1120 = vcombine.high %v1112, 0
      %v1121 = vcombine.high %v1119, 0
      %v1122 = vcombine.low %v1062, %v1078
      %v1124 = vunpack.c.l.s4 1983009808
      %v1125 = vunpack.c.0.s8 %v1124
      %v1126 = vlaneseq
      %v1127 = vshrl.u32 %v1126, 7
      %v1128 = vsub.s32 %v1125, %v1127
      %v1129 = vrot.slane %v1122, %v1128
      %v1130 = vcombine.low %v1070, %v1086
      %v1132 = vunpack.c.l.s4 1983009808
      %v1133 = vunpack.c.0.s8 %v1132
      %v1134 = vlaneseq
      %v1135 = vshrl.u32 %v1134, 7
      %v1136 = vsub.s32 %v1133, %v1135
      %v1137 = vrot.slane %v1130, %v1136
      %v1138 = vcombine.low %v1129, %v1137
      %v1139 = vcombine.high %v1129, %v1137
      %v1141 = vunpack.c.l.s4 1934713408
      %v1142 = vunpack.c.0.s8 %v1141
      %v1143 = vlaneseq
      %v1144 = vshrl.u32 %v1143, 7
      %v1145 = vsub.s32 %v1142, %v1144
      %v1146 = vrot.slane %v1138, %v1145
      %v1148 = vunpack.c.l.s4 1934713408
      %v1149 = vunpack.c.0.s8 %v1148
      %v1150 = vlaneseq
      %v1151 = vshrl.u32 %v1150, 7
      %v1152 = vsub.s32 %v1149, %v1151
      %v1153 = vrot.slane %v1139, %v1152
      %v1154 = vcombine.high %v1146, 0
      %v1155 = vcombine.high %v1153, 0
      %v1158 = vpack.i.b16 %v1146, %v1112
      %v1159 = vshrl.u32 %v1112, 16
      %v1160 = vshrl.u32 %v1146, 16
      %v1161 = vpack.i.b16 %v1160, %v1159
      %v1164 = vpack.i.b16 %v1154, %v1120
      %v1165 = vshrl.u32 %v1120, 16
      %v1166 = vshrl.u32 %v1154, 16
      %v1167 = vpack.i.b16 %v1166, %v1165
      %v1170 = vpack.i.b16 %v1153, %v1119
      %v1171 = vshrl.u32 %v1119, 16
      %v1172 = vshrl.u32 %v1153, 16
      %v1173 = vpack.i.b16 %v1172, %v1171
      %v1176 = vpack.i.b16 %v1155, %v1121
      %v1177 = vshrl.u32 %v1121, 16
      %v1178 = vshrl.u32 %v1155, 16
      %v1179 = vpack.i.b16 %v1178, %v1177
      %vm1180 = vcmask 130048
      %v1182 = vsel %vm1180, %v728, 0
      %v1185 = vsel %vm1180, %v943, 0
      %1187 = vmatprep.subr.bf16.mxu0 0
      %1188 = vmatpush1.bf16.xpose.msra.mxu0 0
      %1189 = vmatprep.subr.bf16.mxu0 0
      %1190 = vmatpush1.bf16.xpose.msra.mxu0 0
      %1191 = vmatprep.subr.bf16.mxu0 0
      %1192 = vmatpush1.bf16.xpose.msra.mxu0 0
      %1193 = vmatprep.subr.bf16.mxu0 0
      %1194 = vmatpush1.bf16.xpose.msra.mxu0 0
      %1195 = vmatprep.subr.bf16.mxu0 0
      %1196 = vmatpush1.bf16.xpose.msra.mxu0 0
      %1197 = vmatprep.subr.bf16.mxu0 0
      %1198 = vmatpush1.bf16.xpose.msra.mxu0 0
      %1199 = vmatprep.subr.bf16.mxu0 0
      %1200 = vmatpush1.bf16.xpose.msra.mxu0 0
      %1201 = vmatprep.subr.bf16.mxu0 0
      %1202 = vmatpush1.bf16.xpose.msra.mxu0 %v1185
      %1203 = vmatprep.subr.bf16.mxu0 0
      %1204 = vmatpush2.bf16.xpose.msra.mxu0 0
      %1205 = vmatprep.subr.bf16.mxu0 0
      %1206 = vmatpush2.bf16.xpose.msra.mxu0 0
      %1207 = vmatprep.subr.bf16.mxu0 0
      %1208 = vmatpush2.bf16.xpose.msra.mxu0 0
      %1209 = vmatprep.subr.bf16.mxu0 0
      %1210 = vmatpush2.bf16.xpose.msra.mxu0 0
      %1211 = vmatprep.subr.bf16.mxu0 0
      %1212 = vmatpush2.bf16.xpose.msra.mxu0 0
      %1213 = vmatprep.subr.bf16.mxu0 0
      %1214 = vmatpush2.bf16.xpose.msra.mxu0 0
      %1215 = vmatprep.subr.bf16.mxu0 0
      %1216 = vmatpush2.bf16.xpose.msra.mxu0 0
      %1217 = vmatprep.subr.bf16.mxu0 0
      %1218 = vmatpush2.bf16.xpose.msra.mxu0 0
      %1219 = vmatprep.mubr.bf16.mxu0 0
      %1220 = vmatmul.mubr.bf16.gmra.mxu0 %v1182
      %v1221 = vpop.f32.mrf.mxu0
      %v1222 = vadd.f32 0.0, %v1221
      %v1223 = vpop.f32.mrf.mxu0
      %v1224 = vpop.f32.mrf.mxu0
      %v1225 = vpop.f32.mrf.mxu0
      %1226 = vdwg.mxu0
      %v1228 = vsel %vm1180, %v731, 0
      %v1231 = vsel %vm1180, %v946, 0
      %1233 = vmatprep.subr.bf16.mxu0 0
      %1234 = vmatpush1.bf16.xpose.msra.mxu0 0
      %1235 = vmatprep.subr.bf16.mxu0 0
      %1236 = vmatpush1.bf16.xpose.msra.mxu0 0
      %1237 = vmatprep.subr.bf16.mxu0 0
      %1238 = vmatpush1.bf16.xpose.msra.mxu0 0
      %1239 = vmatprep.subr.bf16.mxu0 0
      %1240 = vmatpush1.bf16.xpose.msra.mxu0 0
      %1241 = vmatprep.subr.bf16.mxu0 0
      %1242 = vmatpush1.bf16.xpose.msra.mxu0 0
      %1243 = vmatprep.subr.bf16.mxu0 0
      %1244 = vmatpush1.bf16.xpose.msra.mxu0 0
      %1245 = vmatprep.subr.bf16.mxu0 0
      %1246 = vmatpush1.bf16.xpose.msra.mxu0 0
      %1247 = vmatprep.subr.bf16.mxu0 0
      %1248 = vmatpush1.bf16.xpose.msra.mxu0 %v1231
      %1249 = vmatprep.subr.bf16.mxu0 0
      %1250 = vmatpush2.bf16.xpose.msra.mxu0 0
      %1251 = vmatprep.subr.bf16.mxu0 0
      %1252 = vmatpush2.bf16.xpose.msra.mxu0 0
      %1253 = vmatprep.subr.bf16.mxu0 0
      %1254 = vmatpush2.bf16.xpose.msra.mxu0 0
      %1255 = vmatprep.subr.bf16.mxu0 0
      %1256 = vmatpush2.bf16.xpose.msra.mxu0 0
      %1257 = vmatprep.subr.bf16.mxu0 0
      %1258 = vmatpush2.bf16.xpose.msra.mxu0 0
      %1259 = vmatprep.subr.bf16.mxu0 0
      %1260 = vmatpush2.bf16.xpose.msra.mxu0 0
      %1261 = vmatprep.subr.bf16.mxu0 0
      %1262 = vmatpush2.bf16.xpose.msra.mxu0 0
      %1263 = vmatprep.subr.bf16.mxu0 0
      %1264 = vmatpush2.bf16.xpose.msra.mxu0 0
      %1265 = vmatprep.mubr.bf16.mxu0 0
      %1266 = vmatmul.mubr.bf16.gmra.mxu0 %v1228
      %v1267 = vpop.f32.mrf.mxu0
      %v1268 = vadd.f32 0.0, %v1267
      %v1269 = vpop.f32.mrf.mxu0
      %v1270 = vpop.f32.mrf.mxu0
      %v1271 = vpop.f32.mrf.mxu0
      %1272 = vdwg.mxu0
      %v1274 = vsel %vm1180, %v734, 0
      %v1277 = vsel %vm1180, %v949, 0
      %1279 = vmatprep.subr.bf16.mxu0 0
      %1280 = vmatpush1.bf16.xpose.msra.mxu0 0
      %1281 = vmatprep.subr.bf16.mxu0 0
      %1282 = vmatpush1.bf16.xpose.msra.mxu0 0
      %1283 = vmatprep.subr.bf16.mxu0 0
      %1284 = vmatpush1.bf16.xpose.msra.mxu0 0
      %1285 = vmatprep.subr.bf16.mxu0 0
      %1286 = vmatpush1.bf16.xpose.msra.mxu0 0
      %1287 = vmatprep.subr.bf16.mxu0 0
      %1288 = vmatpush1.bf16.xpose.msra.mxu0 0
      %1289 = vmatprep.subr.bf16.mxu0 0
      %1290 = vmatpush1.bf16.xpose.msra.mxu0 0
      %1291 = vmatprep.subr.bf16.mxu0 0
      %1292 = vmatpush1.bf16.xpose.msra.mxu0 0
      %1293 = vmatprep.subr.bf16.mxu0 0
      %1294 = vmatpush1.bf16.xpose.msra.mxu0 %v1277
      %1295 = vmatprep.subr.bf16.mxu0 0
      %1296 = vmatpush2.bf16.xpose.msra.mxu0 0
      %1297 = vmatprep.subr.bf16.mxu0 0
      %1298 = vmatpush2.bf16.xpose.msra.mxu0 0
      %1299 = vmatprep.subr.bf16.mxu0 0
      %1300 = vmatpush2.bf16.xpose.msra.mxu0 0
      %1301 = vmatprep.subr.bf16.mxu0 0
      %1302 = vmatpush2.bf16.xpose.msra.mxu0 0
      %1303 = vmatprep.subr.bf16.mxu0 0
      %1304 = vmatpush2.bf16.xpose.msra.mxu0 0
      %1305 = vmatprep.subr.bf16.mxu0 0
      %1306 = vmatpush2.bf16.xpose.msra.mxu0 0
      %1307 = vmatprep.subr.bf16.mxu0 0
      %1308 = vmatpush2.bf16.xpose.msra.mxu0 0
      %1309 = vmatprep.subr.bf16.mxu0 0
      %1310 = vmatpush2.bf16.xpose.msra.mxu0 0
      %1311 = vmatprep.mubr.bf16.mxu0 0
      %1312 = vmatmul.mubr.bf16.gmra.mxu0 %v1274
      %v1313 = vpop.f32.mrf.mxu0
      %v1314 = vadd.f32 0.0, %v1313
      %v1315 = vpop.f32.mrf.mxu0
      %v1316 = vpop.f32.mrf.mxu0
      %v1317 = vpop.f32.mrf.mxu0
      %1318 = vdwg.mxu0
      %v1320 = vsel %vm1180, %v737, 0
      %v1323 = vsel %vm1180, %v952, 0
      %1325 = vmatprep.subr.bf16.mxu0 0
      %1326 = vmatpush1.bf16.xpose.msra.mxu0 0
      %1327 = vmatprep.subr.bf16.mxu0 0
      %1328 = vmatpush1.bf16.xpose.msra.mxu0 0
      %1329 = vmatprep.subr.bf16.mxu0 0
      %1330 = vmatpush1.bf16.xpose.msra.mxu0 0
      %1331 = vmatprep.subr.bf16.mxu0 0
      %1332 = vmatpush1.bf16.xpose.msra.mxu0 0
      %1333 = vmatprep.subr.bf16.mxu0 0
      %1334 = vmatpush1.bf16.xpose.msra.mxu0 0
      %1335 = vmatprep.subr.bf16.mxu0 0
      %1336 = vmatpush1.bf16.xpose.msra.mxu0 0
      %1337 = vmatprep.subr.bf16.mxu0 0
      %1338 = vmatpush1.bf16.xpose.msra.mxu0 0
      %1339 = vmatprep.subr.bf16.mxu0 0
      %1340 = vmatpush1.bf16.xpose.msra.mxu0 %v1323
      %1341 = vmatprep.subr.bf16.mxu0 0
      %1342 = vmatpush2.bf16.xpose.msra.mxu0 0
      %1343 = vmatprep.subr.bf16.mxu0 0
      %1344 = vmatpush2.bf16.xpose.msra.mxu0 0
      %1345 = vmatprep.subr.bf16.mxu0 0
      %1346 = vmatpush2.bf16.xpose.msra.mxu0 0
      %1347 = vmatprep.subr.bf16.mxu0 0
      %1348 = vmatpush2.bf16.xpose.msra.mxu0 0
      %1349 = vmatprep.subr.bf16.mxu0 0
      %1350 = vmatpush2.bf16.xpose.msra.mxu0 0
      %1351 = vmatprep.subr.bf16.mxu0 0
      %1352 = vmatpush2.bf16.xpose.msra.mxu0 0
      %1353 = vmatprep.subr.bf16.mxu0 0
      %1354 = vmatpush2.bf16.xpose.msra.mxu0 0
      %1355 = vmatprep.subr.bf16.mxu0 0
      %1356 = vmatpush2.bf16.xpose.msra.mxu0 0
      %1357 = vmatprep.mubr.bf16.mxu0 0
      %1358 = vmatmul.mubr.bf16.gmra.mxu0 %v1320
      %v1359 = vpop.f32.mrf.mxu0
      %v1360 = vadd.f32 0.0, %v1359
      %v1361 = vpop.f32.mrf.mxu0
      %v1362 = vpop.f32.mrf.mxu0
      %v1363 = vpop.f32.mrf.mxu0
      %1364 = vdwg.mxu0
      %v1366 = vsel %vm1180, %v740, 0
      %v1369 = vsel %vm1180, %v955, 0
      %1371 = vmatprep.subr.bf16.mxu0 0
      %1372 = vmatpush1.bf16.xpose.msra.mxu0 0
      %1373 = vmatprep.subr.bf16.mxu0 0
      %1374 = vmatpush1.bf16.xpose.msra.mxu0 0
      %1375 = vmatprep.subr.bf16.mxu0 0
      %1376 = vmatpush1.bf16.xpose.msra.mxu0 0
      %1377 = vmatprep.subr.bf16.mxu0 0
      %1378 = vmatpush1.bf16.xpose.msra.mxu0 0
      %1379 = vmatprep.subr.bf16.mxu0 0
      %1380 = vmatpush1.bf16.xpose.msra.mxu0 0
      %1381 = vmatprep.subr.bf16.mxu0 0
      %1382 = vmatpush1.bf16.xpose.msra.mxu0 0
      %1383 = vmatprep.subr.bf16.mxu0 0
      %1384 = vmatpush1.bf16.xpose.msra.mxu0 0
      %1385 = vmatprep.subr.bf16.mxu0 0
      %1386 = vmatpush1.bf16.xpose.msra.mxu0 %v1369
      %1387 = vmatprep.subr.bf16.mxu0 0
      %1388 = vmatpush2.bf16.xpose.msra.mxu0 0
      %1389 = vmatprep.subr.bf16.mxu0 0
      %1390 = vmatpush2.bf16.xpose.msra.mxu0 0
      %1391 = vmatprep.subr.bf16.mxu0 0
      %1392 = vmatpush2.bf16.xpose.msra.mxu0 0
      %1393 = vmatprep.subr.bf16.mxu0 0
      %1394 = vmatpush2.bf16.xpose.msra.mxu0 0
      %1395 = vmatprep.subr.bf16.mxu0 0
      %1396 = vmatpush2.bf16.xpose.msra.mxu0 0
      %1397 = vmatprep.subr.bf16.mxu0 0
      %1398 = vmatpush2.bf16.xpose.msra.mxu0 0
      %1399 = vmatprep.subr.bf16.mxu0 0
      %1400 = vmatpush2.bf16.xpose.msra.mxu0 0
      %1401 = vmatprep.subr.bf16.mxu0 0
      %1402 = vmatpush2.bf16.xpose.msra.mxu0 0
      %1403 = vmatprep.mubr.bf16.mxu0 0
      %1404 = vmatmul.mubr.bf16.gmra.mxu0 %v1366
      %v1405 = vpop.f32.mrf.mxu0
      %v1406 = vadd.f32 0.0, %v1405
      %v1407 = vpop.f32.mrf.mxu0
      %v1408 = vpop.f32.mrf.mxu0
      %v1409 = vpop.f32.mrf.mxu0
      %1410 = vdwg.mxu0
      %v1412 = vsel %vm1180, %v743, 0
      %v1415 = vsel %vm1180, %v958, 0
      %1417 = vmatprep.subr.bf16.mxu0 0
      %1418 = vmatpush1.bf16.xpose.msra.mxu0 0
      %1419 = vmatprep.subr.bf16.mxu0 0
      %1420 = vmatpush1.bf16.xpose.msra.mxu0 0
      %1421 = vmatprep.subr.bf16.mxu0 0
      %1422 = vmatpush1.bf16.xpose.msra.mxu0 0
      %1423 = vmatprep.subr.bf16.mxu0 0
      %1424 = vmatpush1.bf16.xpose.msra.mxu0 0
      %1425 = vmatprep.subr.bf16.mxu0 0
      %1426 = vmatpush1.bf16.xpose.msra.mxu0 0
      %1427 = vmatprep.subr.bf16.mxu0 0
      %1428 = vmatpush1.bf16.xpose.msra.mxu0 0
      %1429 = vmatprep.subr.bf16.mxu0 0
      %1430 = vmatpush1.bf16.xpose.msra.mxu0 0
      %1431 = vmatprep.subr.bf16.mxu0 0
      %1432 = vmatpush1.bf16.xpose.msra.mxu0 %v1415
      %1433 = vmatprep.subr.bf16.mxu0 0
      %1434 = vmatpush2.bf16.xpose.msra.mxu0 0
      %1435 = vmatprep.subr.bf16.mxu0 0
      %1436 = vmatpush2.bf16.xpose.msra.mxu0 0
      %1437 = vmatprep.subr.bf16.mxu0 0
      %1438 = vmatpush2.bf16.xpose.msra.mxu0 0
      %1439 = vmatprep.subr.bf16.mxu0 0
      %1440 = vmatpush2.bf16.xpose.msra.mxu0 0
      %1441 = vmatprep.subr.bf16.mxu0 0
      %1442 = vmatpush2.bf16.xpose.msra.mxu0 0
      %1443 = vmatprep.subr.bf16.mxu0 0
      %1444 = vmatpush2.bf16.xpose.msra.mxu0 0
      %1445 = vmatprep.subr.bf16.mxu0 0
      %1446 = vmatpush2.bf16.xpose.msra.mxu0 0
      %1447 = vmatprep.subr.bf16.mxu0 0
      %1448 = vmatpush2.bf16.xpose.msra.mxu0 0
      %1449 = vmatprep.mubr.bf16.mxu0 0
      %1450 = vmatmul.mubr.bf16.gmra.mxu0 %v1412
      %v1451 = vpop.f32.mrf.mxu0
      %v1452 = vadd.f32 0.0, %v1451
      %v1453 = vpop.f32.mrf.mxu0
      %v1454 = vpop.f32.mrf.mxu0
      %v1455 = vpop.f32.mrf.mxu0
      %1456 = vdwg.mxu0
      %v1458 = vsel %vm1180, %v746, 0
      %v1461 = vsel %vm1180, %v961, 0
      %1463 = vmatprep.subr.bf16.mxu0 0
      %1464 = vmatpush1.bf16.xpose.msra.mxu0 0
      %1465 = vmatprep.subr.bf16.mxu0 0
      %1466 = vmatpush1.bf16.xpose.msra.mxu0 0
      %1467 = vmatprep.subr.bf16.mxu0 0
      %1468 = vmatpush1.bf16.xpose.msra.mxu0 0
      %1469 = vmatprep.subr.bf16.mxu0 0
      %1470 = vmatpush1.bf16.xpose.msra.mxu0 0
      %1471 = vmatprep.subr.bf16.mxu0 0
      %1472 = vmatpush1.bf16.xpose.msra.mxu0 0
      %1473 = vmatprep.subr.bf16.mxu0 0
      %1474 = vmatpush1.bf16.xpose.msra.mxu0 0
      %1475 = vmatprep.subr.bf16.mxu0 0
      %1476 = vmatpush1.bf16.xpose.msra.mxu0 0
      %1477 = vmatprep.subr.bf16.mxu0 0
      %1478 = vmatpush1.bf16.xpose.msra.mxu0 %v1461
      %1479 = vmatprep.subr.bf16.mxu0 0
      %1480 = vmatpush2.bf16.xpose.msra.mxu0 0
      %1481 = vmatprep.subr.bf16.mxu0 0
      %1482 = vmatpush2.bf16.xpose.msra.mxu0 0
      %1483 = vmatprep.subr.bf16.mxu0 0
      %1484 = vmatpush2.bf16.xpose.msra.mxu0 0
      %1485 = vmatprep.subr.bf16.mxu0 0
      %1486 = vmatpush2.bf16.xpose.msra.mxu0 0
      %1487 = vmatprep.subr.bf16.mxu0 0
      %1488 = vmatpush2.bf16.xpose.msra.mxu0 0
      %1489 = vmatprep.subr.bf16.mxu0 0
      %1490 = vmatpush2.bf16.xpose.msra.mxu0 0
      %1491 = vmatprep.subr.bf16.mxu0 0
      %1492 = vmatpush2.bf16.xpose.msra.mxu0 0
      %1493 = vmatprep.subr.bf16.mxu0 0
      %1494 = vmatpush2.bf16.xpose.msra.mxu0 0
      %1495 = vmatprep.mubr.bf16.mxu0 0
      %1496 = vmatmul.mubr.bf16.gmra.mxu0 %v1458
      %v1497 = vpop.f32.mrf.mxu0
      %v1498 = vadd.f32 0.0, %v1497
      %v1499 = vpop.f32.mrf.mxu0
      %v1500 = vpop.f32.mrf.mxu0
      %v1501 = vpop.f32.mrf.mxu0
      %1502 = vdwg.mxu0
      %v1504 = vsel %vm1180, %v749, 0
      %v1507 = vsel %vm1180, %v964, 0
      %1509 = vmatprep.subr.bf16.mxu0 0
      %1510 = vmatpush1.bf16.xpose.msra.mxu0 0
      %1511 = vmatprep.subr.bf16.mxu0 0
      %1512 = vmatpush1.bf16.xpose.msra.mxu0 0
      %1513 = vmatprep.subr.bf16.mxu0 0
      %1514 = vmatpush1.bf16.xpose.msra.mxu0 0
      %1515 = vmatprep.subr.bf16.mxu0 0
      %1516 = vmatpush1.bf16.xpose.msra.mxu0 0
      %1517 = vmatprep.subr.bf16.mxu0 0
      %1518 = vmatpush1.bf16.xpose.msra.mxu0 0
      %1519 = vmatprep.subr.bf16.mxu0 0
      %1520 = vmatpush1.bf16.xpose.msra.mxu0 0
      %1521 = vmatprep.subr.bf16.mxu0 0
      %1522 = vmatpush1.bf16.xpose.msra.mxu0 0
      %1523 = vmatprep.subr.bf16.mxu0 0
      %1524 = vmatpush1.bf16.xpose.msra.mxu0 %v1507
      %1525 = vmatprep.subr.bf16.mxu0 0
      %1526 = vmatpush2.bf16.xpose.msra.mxu0 0
      %1527 = vmatprep.subr.bf16.mxu0 0
      %1528 = vmatpush2.bf16.xpose.msra.mxu0 0
      %1529 = vmatprep.subr.bf16.mxu0 0
      %1530 = vmatpush2.bf16.xpose.msra.mxu0 0
      %1531 = vmatprep.subr.bf16.mxu0 0
      %1532 = vmatpush2.bf16.xpose.msra.mxu0 0
      %1533 = vmatprep.subr.bf16.mxu0 0
      %1534 = vmatpush2.bf16.xpose.msra.mxu0 0
      %1535 = vmatprep.subr.bf16.mxu0 0
      %1536 = vmatpush2.bf16.xpose.msra.mxu0 0
      %1537 = vmatprep.subr.bf16.mxu0 0
      %1538 = vmatpush2.bf16.xpose.msra.mxu0 0
      %1539 = vmatprep.subr.bf16.mxu0 0
      %1540 = vmatpush2.bf16.xpose.msra.mxu0 0
      %1541 = vmatprep.mubr.bf16.mxu0 0
      %1542 = vmatmul.mubr.bf16.gmra.mxu0 %v1504
      %v1543 = vpop.f32.mrf.mxu0
      %v1544 = vadd.f32 0.0, %v1543
      %v1545 = vpop.f32.mrf.mxu0
      %v1546 = vpop.f32.mrf.mxu0
      %v1547 = vpop.f32.mrf.mxu0
      %1548 = vdwg.mxu0
      %v1549 = vmul.f32 %v1222, 0.25
      %v1550 = vmul.f32 %v1268, 0.25
      %v1551 = vmul.f32 %v1314, 0.25
      %v1552 = vmul.f32 %v1360, 0.25
      %v1553 = vmul.f32 %v1406, 0.25
      %v1554 = vmul.f32 %v1452, 0.25
      %v1555 = vmul.f32 %v1498, 0.25
      %v1556 = vmul.f32 %v1544, 0.25
      %v1557 = vlaneseq
      %v1558 = vshrl.u32 %v1557, 7
      %v1559 = vlaneseq
      %v1560 = vand.u32 %v1559, 127
      %vm1561 = vcmp.le.s32.totalorder %v1560, %v1558
      %v1562 = vsel %vm1561, 1, 0
      %vm1563 = vcmp.eq.s32.totalorder %v1562, 1
      %v1564 = vsel %vm1563, %v1549, -1e+09
      %v1565 = vsel %vm1563, %v1550, -1e+09
      %v1566 = vsel %vm1563, %v1551, -1e+09
      %v1567 = vsel %vm1563, %v1552, -1e+09
      %v1568 = vsel %vm1563, %v1553, -1e+09
      %v1569 = vsel %vm1563, %v1554, -1e+09
      %v1570 = vsel %vm1563, %v1555, -1e+09
      %v1571 = vsel %vm1563, %v1556, -1e+09
      %vm1572 = vcmask 64512
      %v1573 = vsel %vm1572, %v1564, -inf
      %1574 = vmax.xlane.f32.xlu0 %v1573
      %v1575 = vpop.xlane.xlu0 %1574
      %v1576 = vsel %vm1572, %v1565, -inf
      %1577 = vmax.xlane.f32.xlu0 %v1576
      %v1578 = vpop.xlane.xlu0 %1577
      %v1579 = vsel %vm1572, %v1566, -inf
      %1580 = vmax.xlane.f32.xlu0 %v1579
      %v1581 = vpop.xlane.xlu0 %1580
      %v1582 = vsel %vm1572, %v1567, -inf
      %1583 = vmax.xlane.f32.xlu0 %v1582
      %v1584 = vpop.xlane.xlu0 %1583
      %v1585 = vsel %vm1572, %v1568, -inf
      %1586 = vmax.xlane.f32.xlu0 %v1585
      %v1587 = vpop.xlane.xlu0 %1586
      %v1588 = vsel %vm1572, %v1569, -inf
      %1589 = vmax.xlane.f32.xlu0 %v1588
      %v1590 = vpop.xlane.xlu0 %1589
      %v1591 = vsel %vm1572, %v1570, -inf
      %1592 = vmax.xlane.f32.xlu0 %v1591
      %v1593 = vpop.xlane.xlu0 %1592
      %v1594 = vsel %vm1572, %v1571, -inf
      %1595 = vmax.xlane.f32.xlu0 %v1594
      %v1596 = vpop.xlane.xlu0 %1595
      %v1597 = vsub.f32 %v1564, %v1575
      %v1598 = vsub.f32 %v1565, %v1578
      %v1599 = vsub.f32 %v1566, %v1581
      %v1600 = vsub.f32 %v1567, %v1584
      %v1601 = vsub.f32 %v1568, %v1587
      %v1602 = vsub.f32 %v1569, %v1590
      %v1603 = vsub.f32 %v1570, %v1593
      %v1604 = vsub.f32 %v1571, %v1596
      %v1605 = vmul.f32 %v1597, 1.442695
      %v1606 = vpow.pop %v1605
      %v1607 = vmul.f32 %v1598, 1.442695
      %v1608 = vpow.pop %v1607
      %v1609 = vmul.f32 %v1599, 1.442695
      %v1610 = vpow.pop %v1609
      %v1611 = vmul.f32 %v1600, 1.442695
      %v1612 = vpow.pop %v1611
      %v1613 = vmul.f32 %v1601, 1.442695
      %v1614 = vpow.pop %v1613
      %v1615 = vmul.f32 %v1602, 1.442695
      %v1616 = vpow.pop %v1615
      %v1617 = vmul.f32 %v1603, 1.442695
      %v1618 = vpow.pop %v1617
      %v1619 = vmul.f32 %v1604, 1.442695
      %v1620 = vpow.pop %v1619
      %v1621 = vsel %vm1572, %v1606, 0.0
      %1622 = vadd.xlane.f32.xlu0 %v1621
      %v1623 = vpop.xlane.xlu0 %1622
      %v1624 = vsel %vm1572, %v1608, 0.0
      %1625 = vadd.xlane.f32.xlu0 %v1624
      %v1626 = vpop.xlane.xlu0 %1625
      %v1627 = vsel %vm1572, %v1610, 0.0
      %1628 = vadd.xlane.f32.xlu0 %v1627
      %v1629 = vpop.xlane.xlu0 %1628
      %v1630 = vsel %vm1572, %v1612, 0.0
      %1631 = vadd.xlane.f32.xlu0 %v1630
      %v1632 = vpop.xlane.xlu0 %1631
      %v1633 = vsel %vm1572, %v1614, 0.0
      %1634 = vadd.xlane.f32.xlu0 %v1633
      %v1635 = vpop.xlane.xlu0 %1634
      %v1636 = vsel %vm1572, %v1616, 0.0
      %1637 = vadd.xlane.f32.xlu0 %v1636
      %v1638 = vpop.xlane.xlu0 %1637
      %v1639 = vsel %vm1572, %v1618, 0.0
      %1640 = vadd.xlane.f32.xlu0 %v1639
      %v1641 = vpop.xlane.xlu0 %1640
      %v1642 = vsel %vm1572, %v1620, 0.0
      %1643 = vadd.xlane.f32.xlu0 %v1642
      %v1644 = vpop.xlane.xlu0 %1643
      %v1645 = vrcp.pop %v1623
      %v1646 = vrcp.pop %v1626
      %v1647 = vrcp.pop %v1629
      %v1648 = vrcp.pop %v1632
      %v1649 = vrcp.pop %v1635
      %v1650 = vrcp.pop %v1638
      %v1651 = vrcp.pop %v1641
      %v1652 = vrcp.pop %v1644
      %v1653 = vmul.f32 %v1606, %v1645
      %v1654 = vmul.f32 %v1608, %v1646
      %v1655 = vmul.f32 %v1610, %v1647
      %v1656 = vmul.f32 %v1612, %v1648
      %v1657 = vmul.f32 %v1614, %v1649
      %v1658 = vmul.f32 %v1616, %v1650
      %v1659 = vmul.f32 %v1618, %v1651
      %v1660 = vmul.f32 %v1620, %v1652
      %v1661 = vpack.c.bf16 %v1653, %v1653
      %v1662 = vpack.c.bf16 %v1654, %v1654
      %v1663 = vpack.c.bf16 %v1655, %v1655
      %v1664 = vpack.c.bf16 %v1656, %v1656
      %v1665 = vpack.c.bf16 %v1657, %v1657
      %v1666 = vpack.c.bf16 %v1658, %v1658
      %v1667 = vpack.c.bf16 %v1659, %v1659
      %v1668 = vpack.c.bf16 %v1660, %v1660
      %v1670 = vsel %vm1572, %v1661, 0
      %vm1672 = vcmask 1043456
      %v1674 = vsel %vm1672, %v1158, 0
      %1676 = vmatprep.subr.bf16.mxu0 0
      %1677 = vmatpush1.bf16.msra.mxu0 0
      %1678 = vmatprep.subr.bf16.mxu0 0
      %1679 = vmatpush1.bf16.msra.mxu0 0
      %1680 = vmatprep.subr.bf16.mxu0 0
      %1681 = vmatpush1.bf16.msra.mxu0 0
      %1682 = vmatprep.subr.bf16.mxu0 0
      %1683 = vmatpush1.bf16.msra.mxu0 0
      %1684 = vmatprep.subr.bf16.mxu0 0
      %1685 = vmatpush1.bf16.msra.mxu0 0
      %1686 = vmatprep.subr.bf16.mxu0 0
      %1687 = vmatpush1.bf16.msra.mxu0 0
      %1688 = vmatprep.subr.bf16.mxu0 0
      %1689 = vmatpush1.bf16.msra.mxu0 0
      %1690 = vmatprep.subr.bf16.mxu0 0
      %1691 = vmatpush1.bf16.msra.mxu0 %v1674
      %1692 = vmatprep.subr.bf16.mxu0 0
      %1693 = vmatpush2.bf16.msra.mxu0 0
      %1694 = vmatprep.subr.bf16.mxu0 0
      %1695 = vmatpush2.bf16.msra.mxu0 0
      %1696 = vmatprep.subr.bf16.mxu0 0
      %1697 = vmatpush2.bf16.msra.mxu0 0
      %1698 = vmatprep.subr.bf16.mxu0 0
      %1699 = vmatpush2.bf16.msra.mxu0 0
      %1700 = vmatprep.subr.bf16.mxu0 0
      %1701 = vmatpush2.bf16.msra.mxu0 0
      %1702 = vmatprep.subr.bf16.mxu0 0
      %1703 = vmatpush2.bf16.msra.mxu0 0
      %1704 = vmatprep.subr.bf16.mxu0 0
      %1705 = vmatpush2.bf16.msra.mxu0 0
      %1706 = vmatprep.subr.bf16.mxu0 0
      %1707 = vmatpush2.bf16.msra.mxu0 0
      %1708 = vmatprep.mubr.bf16.mxu0 0
      %1709 = vmatmul.mubr.bf16.gmra.mxu0 %v1670
      %v1710 = vpop.f32.mrf.mxu0
      %v1711 = vadd.f32 0.0, %v1710
      %v1712 = vpop.f32.mrf.mxu0
      %v1713 = vpop.f32.mrf.mxu0
      %v1714 = vpop.f32.mrf.mxu0
      %1715 = vdwg.mxu0
      %v1717 = vsel %vm1572, %v1662, 0
      %v1720 = vsel %vm1672, %v1161, 0
      %1722 = vmatprep.subr.bf16.mxu0 0
      %1723 = vmatpush1.bf16.msra.mxu0 0
      %1724 = vmatprep.subr.bf16.mxu0 0
      %1725 = vmatpush1.bf16.msra.mxu0 0
      %1726 = vmatprep.subr.bf16.mxu0 0
      %1727 = vmatpush1.bf16.msra.mxu0 0
      %1728 = vmatprep.subr.bf16.mxu0 0
      %1729 = vmatpush1.bf16.msra.mxu0 0
      %1730 = vmatprep.subr.bf16.mxu0 0
      %1731 = vmatpush1.bf16.msra.mxu0 0
      %1732 = vmatprep.subr.bf16.mxu0 0
      %1733 = vmatpush1.bf16.msra.mxu0 0
      %1734 = vmatprep.subr.bf16.mxu0 0
      %1735 = vmatpush1.bf16.msra.mxu0 0
      %1736 = vmatprep.subr.bf16.mxu0 0
      %1737 = vmatpush1.bf16.msra.mxu0 %v1720
      %1738 = vmatprep.subr.bf16.mxu0 0
      %1739 = vmatpush2.bf16.msra.mxu0 0
      %1740 = vmatprep.subr.bf16.mxu0 0
      %1741 = vmatpush2.bf16.msra.mxu0 0
      %1742 = vmatprep.subr.bf16.mxu0 0
      %1743 = vmatpush2.bf16.msra.mxu0 0
      %1744 = vmatprep.subr.bf16.mxu0 0
      %1745 = vmatpush2.bf16.msra.mxu0 0
      %1746 = vmatprep.subr.bf16.mxu0 0
      %1747 = vmatpush2.bf16.msra.mxu0 0
      %1748 = vmatprep.subr.bf16.mxu0 0
      %1749 = vmatpush2.bf16.msra.mxu0 0
      %1750 = vmatprep.subr.bf16.mxu0 0
      %1751 = vmatpush2.bf16.msra.mxu0 0
      %1752 = vmatprep.subr.bf16.mxu0 0
      %1753 = vmatpush2.bf16.msra.mxu0 0
      %1754 = vmatprep.mubr.bf16.mxu0 0
      %1755 = vmatmul.mubr.bf16.gmra.mxu0 %v1717
      %v1756 = vpop.f32.mrf.mxu0
      %v1757 = vadd.f32 0.0, %v1756
      %v1758 = vpop.f32.mrf.mxu0
      %v1759 = vpop.f32.mrf.mxu0
      %v1760 = vpop.f32.mrf.mxu0
      %1761 = vdwg.mxu0
      %v1763 = vsel %vm1572, %v1663, 0
      %v1766 = vsel %vm1672, %v1164, 0
      %1768 = vmatprep.subr.bf16.mxu0 0
      %1769 = vmatpush1.bf16.msra.mxu0 0
      %1770 = vmatprep.subr.bf16.mxu0 0
      %1771 = vmatpush1.bf16.msra.mxu0 0
      %1772 = vmatprep.subr.bf16.mxu0 0
      %1773 = vmatpush1.bf16.msra.mxu0 0
      %1774 = vmatprep.subr.bf16.mxu0 0
      %1775 = vmatpush1.bf16.msra.mxu0 0
      %1776 = vmatprep.subr.bf16.mxu0 0
      %1777 = vmatpush1.bf16.msra.mxu0 0
      %1778 = vmatprep.subr.bf16.mxu0 0
      %1779 = vmatpush1.bf16.msra.mxu0 0
      %1780 = vmatprep.subr.bf16.mxu0 0
      %1781 = vmatpush1.bf16.msra.mxu0 0
      %1782 = vmatprep.subr.bf16.mxu0 0
      %1783 = vmatpush1.bf16.msra.mxu0 %v1766
      %1784 = vmatprep.subr.bf16.mxu0 0
      %1785 = vmatpush2.bf16.msra.mxu0 0
      %1786 = vmatprep.subr.bf16.mxu0 0
      %1787 = vmatpush2.bf16.msra.mxu0 0
      %1788 = vmatprep.subr.bf16.mxu0 0
      %1789 = vmatpush2.bf16.msra.mxu0 0
      %1790 = vmatprep.subr.bf16.mxu0 0
      %1791 = vmatpush2.bf16.msra.mxu0 0
      %1792 = vmatprep.subr.bf16.mxu0 0
      %1793 = vmatpush2.bf16.msra.mxu0 0
      %1794 = vmatprep.subr.bf16.mxu0 0
      %1795 = vmatpush2.bf16.msra.mxu0 0
      %1796 = vmatprep.subr.bf16.mxu0 0
      %1797 = vmatpush2.bf16.msra.mxu0 0
      %1798 = vmatprep.subr.bf16.mxu0 0
      %1799 = vmatpush2.bf16.msra.mxu0 0
      %1800 = vmatprep.mubr.bf16.mxu0 0
      %1801 = vmatmul.mubr.bf16.gmra.mxu0 %v1763
      %v1802 = vpop.f32.mrf.mxu0
      %v1803 = vadd.f32 0.0, %v1802
      %v1804 = vpop.f32.mrf.mxu0
      %v1805 = vpop.f32.mrf.mxu0
      %v1806 = vpop.f32.mrf.mxu0
      %1807 = vdwg.mxu0
      %v1809 = vsel %vm1572, %v1664, 0
      %v1812 = vsel %vm1672, %v1167, 0
      %1814 = vmatprep.subr.bf16.mxu0 0
      %1815 = vmatpush1.bf16.msra.mxu0 0
      %1816 = vmatprep.subr.bf16.mxu0 0
      %1817 = vmatpush1.bf16.msra.mxu0 0
      %1818 = vmatprep.subr.bf16.mxu0 0
      %1819 = vmatpush1.bf16.msra.mxu0 0
      %1820 = vmatprep.subr.bf16.mxu0 0
      %1821 = vmatpush1.bf16.msra.mxu0 0
      %1822 = vmatprep.subr.bf16.mxu0 0
      %1823 = vmatpush1.bf16.msra.mxu0 0
      %1824 = vmatprep.subr.bf16.mxu0 0
      %1825 = vmatpush1.bf16.msra.mxu0 0
      %1826 = vmatprep.subr.bf16.mxu0 0
      %1827 = vmatpush1.bf16.msra.mxu0 0
      %1828 = vmatprep.subr.bf16.mxu0 0
      %1829 = vmatpush1.bf16.msra.mxu0 %v1812
      %1830 = vmatprep.subr.bf16.mxu0 0
      %1831 = vmatpush2.bf16.msra.mxu0 0
      %1832 = vmatprep.subr.bf16.mxu0 0
      %1833 = vmatpush2.bf16.msra.mxu0 0
      %1834 = vmatprep.subr.bf16.mxu0 0
      %1835 = vmatpush2.bf16.msra.mxu0 0
      %1836 = vmatprep.subr.bf16.mxu0 0
      %1837 = vmatpush2.bf16.msra.mxu0 0
      %1838 = vmatprep.subr.bf16.mxu0 0
      %1839 = vmatpush2.bf16.msra.mxu0 0
      %1840 = vmatprep.subr.bf16.mxu0 0
      %1841 = vmatpush2.bf16.msra.mxu0 0
      %1842 = vmatprep.subr.bf16.mxu0 0
      %1843 = vmatpush2.bf16.msra.mxu0 0
      %1844 = vmatprep.subr.bf16.mxu0 0
      %1845 = vmatpush2.bf16.msra.mxu0 0
      %1846 = vmatprep.mubr.bf16.mxu0 0
      %1847 = vmatmul.mubr.bf16.gmra.mxu0 %v1809
      %v1848 = vpop.f32.mrf.mxu0
      %v1849 = vadd.f32 0.0, %v1848
      %v1850 = vpop.f32.mrf.mxu0
      %v1851 = vpop.f32.mrf.mxu0
      %v1852 = vpop.f32.mrf.mxu0
      %1853 = vdwg.mxu0
      %v1855 = vsel %vm1572, %v1665, 0
      %v1858 = vsel %vm1672, %v1170, 0
      %1860 = vmatprep.subr.bf16.mxu0 0
      %1861 = vmatpush1.bf16.msra.mxu0 0
      %1862 = vmatprep.subr.bf16.mxu0 0
      %1863 = vmatpush1.bf16.msra.mxu0 0
      %1864 = vmatprep.subr.bf16.mxu0 0
      %1865 = vmatpush1.bf16.msra.mxu0 0
      %1866 = vmatprep.subr.bf16.mxu0 0
      %1867 = vmatpush1.bf16.msra.mxu0 0
      %1868 = vmatprep.subr.bf16.mxu0 0
      %1869 = vmatpush1.bf16.msra.mxu0 0
      %1870 = vmatprep.subr.bf16.mxu0 0
      %1871 = vmatpush1.bf16.msra.mxu0 0
      %1872 = vmatprep.subr.bf16.mxu0 0
      %1873 = vmatpush1.bf16.msra.mxu0 0
      %1874 = vmatprep.subr.bf16.mxu0 0
      %1875 = vmatpush1.bf16.msra.mxu0 %v1858
      %1876 = vmatprep.subr.bf16.mxu0 0
      %1877 = vmatpush2.bf16.msra.mxu0 0
      %1878 = vmatprep.subr.bf16.mxu0 0
      %1879 = vmatpush2.bf16.msra.mxu0 0
      %1880 = vmatprep.subr.bf16.mxu0 0
      %1881 = vmatpush2.bf16.msra.mxu0 0
      %1882 = vmatprep.subr.bf16.mxu0 0
      %1883 = vmatpush2.bf16.msra.mxu0 0
      %1884 = vmatprep.subr.bf16.mxu0 0
      %1885 = vmatpush2.bf16.msra.mxu0 0
      %1886 = vmatprep.subr.bf16.mxu0 0
      %1887 = vmatpush2.bf16.msra.mxu0 0
      %1888 = vmatprep.subr.bf16.mxu0 0
      %1889 = vmatpush2.bf16.msra.mxu0 0
      %1890 = vmatprep.subr.bf16.mxu0 0
      %1891 = vmatpush2.bf16.msra.mxu0 0
      %1892 = vmatprep.mubr.bf16.mxu0 0
      %1893 = vmatmul.mubr.bf16.gmra.mxu0 %v1855
      %v1894 = vpop.f32.mrf.mxu0
      %v1895 = vadd.f32 0.0, %v1894
      %v1896 = vpop.f32.mrf.mxu0
      %v1897 = vpop.f32.mrf.mxu0
      %v1898 = vpop.f32.mrf.mxu0
      %1899 = vdwg.mxu0
      %v1901 = vsel %vm1572, %v1666, 0
      %v1904 = vsel %vm1672, %v1173, 0
      %1906 = vmatprep.subr.bf16.mxu0 0
      %1907 = vmatpush1.bf16.msra.mxu0 0
      %1908 = vmatprep.subr.bf16.mxu0 0
      %1909 = vmatpush1.bf16.msra.mxu0 0
      %1910 = vmatprep.subr.bf16.mxu0 0
      %1911 = vmatpush1.bf16.msra.mxu0 0
      %1912 = vmatprep.subr.bf16.mxu0 0
      %1913 = vmatpush1.bf16.msra.mxu0 0
      %1914 = vmatprep.subr.bf16.mxu0 0
      %1915 = vmatpush1.bf16.msra.mxu0 0
      %1916 = vmatprep.subr.bf16.mxu0 0
      %1917 = vmatpush1.bf16.msra.mxu0 0
      %1918 = vmatprep.subr.bf16.mxu0 0
      %1919 = vmatpush1.bf16.msra.mxu0 0
      %1920 = vmatprep.subr.bf16.mxu0 0
      %1921 = vmatpush1.bf16.msra.mxu0 %v1904
      %1922 = vmatprep.subr.bf16.mxu0 0
      %1923 = vmatpush2.bf16.msra.mxu0 0
      %1924 = vmatprep.subr.bf16.mxu0 0
      %1925 = vmatpush2.bf16.msra.mxu0 0
      %1926 = vmatprep.subr.bf16.mxu0 0
      %1927 = vmatpush2.bf16.msra.mxu0 0
      %1928 = vmatprep.subr.bf16.mxu0 0
      %1929 = vmatpush2.bf16.msra.mxu0 0
      %1930 = vmatprep.subr.bf16.mxu0 0
      %1931 = vmatpush2.bf16.msra.mxu0 0
      %1932 = vmatprep.subr.bf16.mxu0 0
      %1933 = vmatpush2.bf16.msra.mxu0 0
      %1934 = vmatprep.subr.bf16.mxu0 0
      %1935 = vmatpush2.bf16.msra.mxu0 0
      %1936 = vmatprep.subr.bf16.mxu0 0
      %1937 = vmatpush2.bf16.msra.mxu0 0
      %1938 = vmatprep.mubr.bf16.mxu0 0
      %1939 = vmatmul.mubr.bf16.gmra.mxu0 %v1901
      %v1940 = vpop.f32.mrf.mxu0
      %v1941 = vadd.f32 0.0, %v1940
      %v1942 = vpop.f32.mrf.mxu0
      %v1943 = vpop.f32.mrf.mxu0
      %v1944 = vpop.f32.mrf.mxu0
      %1945 = vdwg.mxu0
      %v1947 = vsel %vm1572, %v1667, 0
      %v1950 = vsel %vm1672, %v1176, 0
      %1952 = vmatprep.subr.bf16.mxu0 0
      %1953 = vmatpush1.bf16.msra.mxu0 0
      %1954 = vmatprep.subr.bf16.mxu0 0
      %1955 = vmatpush1.bf16.msra.mxu0 0
      %1956 = vmatprep.subr.bf16.mxu0 0
      %1957 = vmatpush1.bf16.msra.mxu0 0
      %1958 = vmatprep.subr.bf16.mxu0 0
      %1959 = vmatpush1.bf16.msra.mxu0 0
      %1960 = vmatprep.subr.bf16.mxu0 0
      %1961 = vmatpush1.bf16.msra.mxu0 0
      %1962 = vmatprep.subr.bf16.mxu0 0
      %1963 = vmatpush1.bf16.msra.mxu0 0
      %1964 = vmatprep.subr.bf16.mxu0 0
      %1965 = vmatpush1.bf16.msra.mxu0 0
      %1966 = vmatprep.subr.bf16.mxu0 0
      %1967 = vmatpush1.bf16.msra.mxu0 %v1950
      %1968 = vmatprep.subr.bf16.mxu0 0
      %1969 = vmatpush2.bf16.msra.mxu0 0
      %1970 = vmatprep.subr.bf16.mxu0 0
      %1971 = vmatpush2.bf16.msra.mxu0 0
      %1972 = vmatprep.subr.bf16.mxu0 0
      %1973 = vmatpush2.bf16.msra.mxu0 0
      %1974 = vmatprep.subr.bf16.mxu0 0
      %1975 = vmatpush2.bf16.msra.mxu0 0
      %1976 = vmatprep.subr.bf16.mxu0 0
      %1977 = vmatpush2.bf16.msra.mxu0 0
      %1978 = vmatprep.subr.bf16.mxu0 0
      %1979 = vmatpush2.bf16.msra.mxu0 0
      %1980 = vmatprep.subr.bf16.mxu0 0
      %1981 = vmatpush2.bf16.msra.mxu0 0
      %1982 = vmatprep.subr.bf16.mxu0 0
      %1983 = vmatpush2.bf16.msra.mxu0 0
      %1984 = vmatprep.mubr.bf16.mxu0 0
      %1985 = vmatmul.mubr.bf16.gmra.mxu0 %v1947
      %v1986 = vpop.f32.mrf.mxu0
      %v1987 = vadd.f32 0.0, %v1986
      %v1988 = vpop.f32.mrf.mxu0
      %v1989 = vpop.f32.mrf.mxu0
      %v1990 = vpop.f32.mrf.mxu0
      %1991 = vdwg.mxu0
      %v1993 = vsel %vm1572, %v1668, 0
      %v1996 = vsel %vm1672, %v1179, 0
      %1998 = vmatprep.subr.bf16.mxu0 0
      %1999 = vmatpush1.bf16.msra.mxu0 0
      %2000 = vmatprep.subr.bf16.mxu0 0
      %2001 = vmatpush1.bf16.msra.mxu0 0
      %2002 = vmatprep.subr.bf16.mxu0 0
      %2003 = vmatpush1.bf16.msra.mxu0 0
      %2004 = vmatprep.subr.bf16.mxu0 0
      %2005 = vmatpush1.bf16.msra.mxu0 0
      %2006 = vmatprep.subr.bf16.mxu0 0
      %2007 = vmatpush1.bf16.msra.mxu0 0
      %2008 = vmatprep.subr.bf16.mxu0 0
      %2009 = vmatpush1.bf16.msra.mxu0 0
      %2010 = vmatprep.subr.bf16.mxu0 0
      %2011 = vmatpush1.bf16.msra.mxu0 0
      %2012 = vmatprep.subr.bf16.mxu0 0
      %2013 = vmatpush1.bf16.msra.mxu0 %v1996
      %2014 = vmatprep.subr.bf16.mxu0 0
      %2015 = vmatpush2.bf16.msra.mxu0 0
      %2016 = vmatprep.subr.bf16.mxu0 0
      %2017 = vmatpush2.bf16.msra.mxu0 0
      %2018 = vmatprep.subr.bf16.mxu0 0
      %2019 = vmatpush2.bf16.msra.mxu0 0
      %2020 = vmatprep.subr.bf16.mxu0 0
      %2021 = vmatpush2.bf16.msra.mxu0 0
      %2022 = vmatprep.subr.bf16.mxu0 0
      %2023 = vmatpush2.bf16.msra.mxu0 0
      %2024 = vmatprep.subr.bf16.mxu0 0
      %2025 = vmatpush2.bf16.msra.mxu0 0
      %2026 = vmatprep.subr.bf16.mxu0 0
      %2027 = vmatpush2.bf16.msra.mxu0 0
      %2028 = vmatprep.subr.bf16.mxu0 0
      %2029 = vmatpush2.bf16.msra.mxu0 0
      %2030 = vmatprep.mubr.bf16.mxu0 0
      %2031 = vmatmul.mubr.bf16.gmra.mxu0 %v1993
      %v2032 = vpop.f32.mrf.mxu0
      %v2033 = vadd.f32 0.0, %v2032
      %v2034 = vpop.f32.mrf.mxu0
      %v2035 = vpop.f32.mrf.mxu0
      %v2036 = vpop.f32.mrf.mxu0
      %2037 = vdwg.mxu0
      %v2038 = vpack.c.bf16 %v1711, %v1711
      %v2039 = vpack.c.bf16 %v1757, %v1757
      %v2040 = vpack.c.bf16 %v1803, %v1803
      %v2041 = vpack.c.bf16 %v1849, %v1849
      %v2042 = vpack.c.bf16 %v1895, %v1895
      %v2043 = vpack.c.bf16 %v1941, %v1941
      %v2044 = vpack.c.bf16 %v1987, %v1987
      %v2045 = vpack.c.bf16 %v2033, %v2033
      %v2046 = vcombine.low %v2038, %v2042
      %v2048 = vunpack.c.l.s4 1983009808
      %v2049 = vunpack.c.0.s8 %v2048
      %v2050 = vlaneseq
      %v2051 = vshrl.u32 %v2050, 7
      %v2052 = vsub.s32 %v2049, %v2051
      %v2053 = vrot.slane %v2046, %v2052
      %v2054 = vcombine.low %v2040, %v2044
      %v2056 = vunpack.c.l.s4 1983009808
      %v2057 = vunpack.c.0.s8 %v2056
      %v2058 = vlaneseq
      %v2059 = vshrl.u32 %v2058, 7
      %v2060 = vsub.s32 %v2057, %v2059
      %v2061 = vrot.slane %v2054, %v2060
      %v2062 = vcombine.low %v2053, %v2061
      %v2063 = vcombine.high %v2053, %v2061
      %v2065 = vunpack.c.l.s4 1934713408
      %v2066 = vunpack.c.0.s8 %v2065
      %v2067 = vlaneseq
      %v2068 = vshrl.u32 %v2067, 7
      %v2069 = vsub.s32 %v2066, %v2068
      %v2070 = vrot.slane %v2062, %v2069
      %v2072 = vunpack.c.l.s4 1934713408
      %v2073 = vunpack.c.0.s8 %v2072
      %v2074 = vlaneseq
      %v2075 = vshrl.u32 %v2074, 7
      %v2076 = vsub.s32 %v2073, %v2075
      %v2077 = vrot.slane %v2063, %v2076
      %v2078 = vcombine.high %v2070, 0
      %v2079 = vcombine.high %v2077, 0
      %v2080 = vcombine.low %v2039, %v2043
      %v2082 = vunpack.c.l.s4 1983009808
      %v2083 = vunpack.c.0.s8 %v2082
      %v2084 = vlaneseq
      %v2085 = vshrl.u32 %v2084, 7
      %v2086 = vsub.s32 %v2083, %v2085
      %v2087 = vrot.slane %v2080, %v2086
      %v2088 = vcombine.low %v2041, %v2045
      %v2090 = vunpack.c.l.s4 1983009808
      %v2091 = vunpack.c.0.s8 %v2090
      %v2092 = vlaneseq
      %v2093 = vshrl.u32 %v2092, 7
      %v2094 = vsub.s32 %v2091, %v2093
      %v2095 = vrot.slane %v2088, %v2094
      %v2096 = vcombine.low %v2087, %v2095
      %v2097 = vcombine.high %v2087, %v2095
      %v2099 = vunpack.c.l.s4 1934713408
      %v2100 = vunpack.c.0.s8 %v2099
      %v2101 = vlaneseq
      %v2102 = vshrl.u32 %v2101, 7
      %v2103 = vsub.s32 %v2100, %v2102
      %v2104 = vrot.slane %v2096, %v2103
      %v2106 = vunpack.c.l.s4 1934713408
      %v2107 = vunpack.c.0.s8 %v2106
      %v2108 = vlaneseq
      %v2109 = vshrl.u32 %v2108, 7
      %v2110 = vsub.s32 %v2107, %v2109
      %v2111 = vrot.slane %v2097, %v2110
      %v2112 = vcombine.high %v2104, 0
      %v2113 = vcombine.high %v2111, 0
      %v2116 = vpack.i.b16 %v2104, %v2070
      %v2118 = vshrl.u32 %v2070, 16
      %v2119 = vshrl.u32 %v2104, 16
      %v2120 = vpack.i.b16 %v2119, %v2118
      %v2124 = vpack.i.b16 %v2112, %v2078
      %v2126 = vshrl.u32 %v2078, 16
      %v2127 = vshrl.u32 %v2112, 16
      %v2128 = vpack.i.b16 %v2127, %v2126
      %v2132 = vpack.i.b16 %v2111, %v2077
      %v2134 = vshrl.u32 %v2077, 16
      %v2135 = vshrl.u32 %v2111, 16
      %v2136 = vpack.i.b16 %v2135, %v2134
      %v2140 = vpack.i.b16 %v2113, %v2079
      %v2142 = vshrl.u32 %v2079, 16
      %v2143 = vshrl.u32 %v2113, 16
      %v2144 = vpack.i.b16 %v2143, %v2142
      %v2146 = vcombine.low %v2116, %v2132
      %v2148 = vunpack.c.l.s4 1983009808
      %v2149 = vunpack.c.0.s8 %v2148
      %v2150 = vlaneseq
      %v2151 = vshrl.u32 %v2150, 7
      %v2152 = vsub.s32 %v2149, %v2151
      %v2153 = vrot.slane %v2146, %v2152
      %v2154 = vcombine.low %v2124, %v2140
      %v2156 = vunpack.c.l.s4 1983009808
      %v2157 = vunpack.c.0.s8 %v2156
      %v2158 = vlaneseq
      %v2159 = vshrl.u32 %v2158, 7
      %v2160 = vsub.s32 %v2157, %v2159
      %v2161 = vrot.slane %v2154, %v2160
      %v2162 = vcombine.low %v2153, %v2161
      %v2163 = vcombine.high %v2153, %v2161
      %v2165 = vunpack.c.l.s4 1934713408
      %v2166 = vunpack.c.0.s8 %v2165
      %v2167 = vlaneseq
      %v2168 = vshrl.u32 %v2167, 7
      %v2169 = vsub.s32 %v2166, %v2168
      %v2170 = vrot.slane %v2162, %v2169
      %v2172 = vunpack.c.l.s4 1934713408
      %v2173 = vunpack.c.0.s8 %v2172
      %v2174 = vlaneseq
      %v2175 = vshrl.u32 %v2174, 7
      %v2176 = vsub.s32 %v2173, %v2175
      %v2177 = vrot.slane %v2163, %v2176
      %v2178 = vcombine.high %v2170, 0
      %v2179 = vcombine.high %v2177, 0
      %v2180 = vcombine.low %v2120, %v2136
      %v2182 = vunpack.c.l.s4 1983009808
      %v2183 = vunpack.c.0.s8 %v2182
      %v2184 = vlaneseq
      %v2185 = vshrl.u32 %v2184, 7
      %v2186 = vsub.s32 %v2183, %v2185
      %v2187 = vrot.slane %v2180, %v2186
      %v2188 = vcombine.low %v2128, %v2144
      %v2190 = vunpack.c.l.s4 1983009808
      %v2191 = vunpack.c.0.s8 %v2190
      %v2192 = vlaneseq
      %v2193 = vshrl.u32 %v2192, 7
      %v2194 = vsub.s32 %v2191, %v2193
      %v2195 = vrot.slane %v2188, %v2194
      %v2196 = vcombine.low %v2187, %v2195
      %v2197 = vcombine.high %v2187, %v2195
      %v2199 = vunpack.c.l.s4 1934713408
      %v2200 = vunpack.c.0.s8 %v2199
      %v2201 = vlaneseq
      %v2202 = vshrl.u32 %v2201, 7
      %v2203 = vsub.s32 %v2200, %v2202
      %v2204 = vrot.slane %v2196, %v2203
      %v2206 = vunpack.c.l.s4 1934713408
      %v2207 = vunpack.c.0.s8 %v2206
      %v2208 = vlaneseq
      %v2209 = vshrl.u32 %v2208, 7
      %v2210 = vsub.s32 %v2207, %v2209
      %v2211 = vrot.slane %v2197, %v2210
      %v2212 = vcombine.high %v2204, 0
      %v2213 = vcombine.high %v2211, 0
      %v2216 = vpack.i.b16 %v2204, %v2170
      %v2217 = vshrl.u32 %v2170, 16
      %v2218 = vshrl.u32 %v2204, 16
      %v2219 = vpack.i.b16 %v2218, %v2217
      %v2222 = vpack.i.b16 %v2212, %v2178
      %v2223 = vshrl.u32 %v2178, 16
      %v2224 = vshrl.u32 %v2212, 16
      %v2225 = vpack.i.b16 %v2224, %v2223
      %v2228 = vpack.i.b16 %v2211, %v2177
      %v2229 = vshrl.u32 %v2177, 16
      %v2230 = vshrl.u32 %v2211, 16
      %v2231 = vpack.i.b16 %v2230, %v2229
      %v2234 = vpack.i.b16 %v2213, %v2179
      %v2235 = vshrl.u32 %v2179, 16
      %v2236 = vshrl.u32 %v2213, 16
      %v2237 = vpack.i.b16 %v2236, %v2235
      %2238 = vrot.lane.b32.xlu0 %v2219, 16
      %v2239 = vpop.permute.xlu0 %2238
      %2240 = vrot.lane.b32.xlu0 %v2222, 32
      %v2241 = vpop.permute.xlu0 %2240
      %2242 = vrot.lane.b32.xlu0 %v2225, 48
      %v2243 = vpop.permute.xlu0 %2242
      %2244 = vrot.lane.b32.xlu0 %v2228, 64
      %v2245 = vpop.permute.xlu0 %2244
      %2246 = vrot.lane.b32.xlu0 %v2231, 80
      %v2247 = vpop.permute.xlu0 %2246
      %2248 = vrot.lane.b32.xlu0 %v2234, 96
      %v2249 = vpop.permute.xlu0 %2248
      %2250 = vrot.lane.b32.xlu0 %v2237, 112
      %v2251 = vpop.permute.xlu0 %2250
      %v2254 = vsel %vm1180, %v2216, %v2239
      %vm2255 = vcmask 261120
      %v2257 = vsel %vm2255, %v2254, %v2241
      %vm2258 = vcmask 392192
      %v2260 = vsel %vm2258, %v2257, %v2243
      %vm2261 = vcmask 523264
      %v2263 = vsel %vm2261, %v2260, %v2245
      %vm2264 = vcmask 654336
      %v2266 = vsel %vm2264, %v2263, %v2247
      %vm2267 = vcmask 785408
      %v2269 = vsel %vm2267, %v2266, %v2249
      %vm2270 = vcmask 916480
      %v2272 = vsel %vm2270, %v2269, %v2251
      %v2274 = vld [vmem:[%s3] sm:$0xf]
      %v2275 = vld [vmem:[%s3 + $0x4] sm:$0xf]
      %v2276 = vld [vmem:[%s3 + $0x8] sm:$0xf]
      %v2277 = vld [vmem:[%s3 + $0xc] sm:$0xf]
      %v2278 = vld [vmem:[%s3 + $0x10] sm:$0xf]
      %v2279 = vld [vmem:[%s3 + $0x14] sm:$0xf]
      %v2280 = vld [vmem:[%s3 + $0x18] sm:$0xf]
      %v2281 = vld [vmem:[%s3 + $0x1c] sm:$0xf]
      %v2282 = vld [vmem:[%s3 + $0x20] sm:$0xf]
      %v2283 = vld [vmem:[%s3 + $0x24] sm:$0xf]
      %v2284 = vld [vmem:[%s3 + $0x28] sm:$0xf]
      %v2285 = vld [vmem:[%s3 + $0x2c] sm:$0xf]
      %v2286 = vld [vmem:[%s3 + $0x30] sm:$0xf]
      %v2287 = vld [vmem:[%s3 + $0x34] sm:$0xf]
      %v2288 = vld [vmem:[%s3 + $0x38] sm:$0xf]
      %v2289 = vld [vmem:[%s3 + $0x3c] sm:$0xf]
      %v2290 = vld [vmem:[%s4] sm:$0x1]
      %v2292 = vlaneseq
      %v2293 = vshrl.u32 %v2292, 7
      %v2294 = vsub.s32 0, %v2293
      %v2295 = vrot.slane %v2290, %v2294
      %v2313 = vunpack.c.l.b16 %v2274
      %v2314 = vunpack.c.l.b16 %v2275
      %v2315 = vunpack.c.l.b16 %v2276
      %v2316 = vunpack.c.l.b16 %v2277
      %v2317 = vunpack.c.l.b16 %v2278
      %v2318 = vunpack.c.l.b16 %v2279
      %v2319 = vunpack.c.l.b16 %v2280
      %v2320 = vunpack.c.l.b16 %v2281
      %v2321 = vunpack.c.l.b16 %v2282
      %v2322 = vunpack.c.l.b16 %v2283
      %v2323 = vunpack.c.l.b16 %v2284
      %v2324 = vunpack.c.l.b16 %v2285
      %v2325 = vunpack.c.l.b16 %v2286
      %v2326 = vunpack.c.l.b16 %v2287
      %v2327 = vunpack.c.l.b16 %v2288
      %v2328 = vunpack.c.l.b16 %v2289
      %v2329 = vpack.c.b16 %v2314, %v2313
      %v2330 = vpack.c.b16 %v2316, %v2315
      %v2331 = vpack.c.b16 %v2318, %v2317
      %v2332 = vpack.c.b16 %v2320, %v2319
      %v2333 = vpack.c.b16 %v2322, %v2321
      %v2334 = vpack.c.b16 %v2324, %v2323
      %v2335 = vpack.c.b16 %v2326, %v2325
      %v2336 = vpack.c.b16 %v2328, %v2327
      %2345 = vmatprep.subr.bf16.mxu0 0
      %2346 = vmatpush1.bf16.msra.mxu0 %v2336
      %2347 = vmatprep.subr.bf16.mxu0 0
      %2348 = vmatpush1.bf16.msra.mxu0 %v2335
      %2349 = vmatprep.subr.bf16.mxu0 0
      %2350 = vmatpush1.bf16.msra.mxu0 %v2334
      %2351 = vmatprep.subr.bf16.mxu0 0
      %2352 = vmatpush1.bf16.msra.mxu0 %v2333
      %2353 = vmatprep.subr.bf16.mxu0 0
      %2354 = vmatpush1.bf16.msra.mxu0 %v2332
      %2355 = vmatprep.subr.bf16.mxu0 0
      %2356 = vmatpush1.bf16.msra.mxu0 %v2331
      %2357 = vmatprep.subr.bf16.mxu0 0
      %2358 = vmatpush1.bf16.msra.mxu0 %v2330
      %2359 = vmatprep.subr.bf16.mxu0 0
      %2360 = vmatpush1.bf16.msra.mxu0 %v2329
      %2361 = vmatprep.subr.bf16.mxu0 0
      %2362 = vmatpush2.bf16.msra.mxu0 0
      %2363 = vmatprep.subr.bf16.mxu0 0
      %2364 = vmatpush2.bf16.msra.mxu0 0
      %2365 = vmatprep.subr.bf16.mxu0 0
      %2366 = vmatpush2.bf16.msra.mxu0 0
      %2367 = vmatprep.subr.bf16.mxu0 0
      %2368 = vmatpush2.bf16.msra.mxu0 0
      %2369 = vmatprep.subr.bf16.mxu0 0
      %2370 = vmatpush2.bf16.msra.mxu0 0
      %2371 = vmatprep.subr.bf16.mxu0 0
      %2372 = vmatpush2.bf16.msra.mxu0 0
      %2373 = vmatprep.subr.bf16.mxu0 0
      %2374 = vmatpush2.bf16.msra.mxu0 0
      %2375 = vmatprep.subr.bf16.mxu0 0
      %2376 = vmatpush2.bf16.msra.mxu0 0
      %2377 = vmatprep.mubr.bf16.mxu0 0
      %2378 = vmatmul.mubr.bf16.gmra.mxu0 %v2272
      %v2379 = vpop.f32.mrf.mxu0
      %v2380 = vadd.f32 %v2295, %v2379
      %v2381 = vpop.f32.mrf.mxu0
      %v2382 = vpop.f32.mrf.mxu0
      %v2383 = vpop.f32.mrf.mxu0
      %2384 = vdwg.mxu0
      %v2385 = vadd.f32 %v276, %v2380
      %2386 = vadd.xlane.f32.xlu0 %v2385
      %v2387 = vpop.xlane.xlu0 %2386
      %v2388 = vrcp.pop 128.0
      %v2389 = vmul.f32 %v2387, %v2388
      %v2390 = vsub.f32 %v2385, %v2389
      %v2391 = vmul.f32 %v2390, %v2390
      %2392 = vadd.xlane.f32.xlu0 %v2391
      %v2393 = vpop.xlane.xlu0 %2392
      %v2394 = vmul.f32 %v2393, %v2388
      %v2395 = vadd.f32 %v2394, 1e-05
      %v2396 = vrsqrt.pop %v2395
      %v2397 = vmul.f32 %v2390, %v2396
      %v2398 = vld [vmem:[%s5] sm:$0x1]
      %v2400 = vlaneseq
      %v2401 = vshrl.u32 %v2400, 7
      %v2402 = vsub.s32 0, %v2401
      %v2403 = vrot.slane %v2398, %v2402
      %v2405 = vmul.f32 %v2397, %v2403
      %v2406 = vld [vmem:[%s6] sm:$0x1]
      %v2408 = vlaneseq
      %v2409 = vshrl.u32 %v2408, 7
      %v2410 = vsub.s32 0, %v2409
      %v2411 = vrot.slane %v2406, %v2410
      %v2413 = vadd.f32 %v2405, %v2411
      %v2414 = vpack.c.bf16 %v2413, %v2413
      %2415 = vst [vmem:[%s273] sm:$0xf] %v2414
      %p2416 = scmp.lt.s32.totalorder %s18, 1
      %s2417 = scalar_select %p2416, %s18, 1
      %s2418 = smul.addr %s2417, 4
      %s2419 = scalar_lea.vmem %s7, %s2418
      // Predicated region
      $region49: #{decoder_forward.10} parent=47 // pred_check
        %p2420 = pneg %p188
      $region50: #{decoder_forward.10} parent=47 // pred_check_branch
        %2422 = sbr.rel (%p2420) target = $region52
      $region51: #{decoder_forward.10} parent=47 // pred_region
        _
      $region52: #{decoder_forward.10} parent=47 // pred_fallthru
        _
    $region48: #{decoder_forward.10} parent=5 // pred_fallthru
      _
    %p2423 = scmp.le.s32.totalorder 2, %s13
    // Predicated region
    $region53: #{decoder_forward.10} parent=5 // pred_check
      %p2424 = pneg %p2423
    $region54: #{decoder_forward.10} parent=5 // pred_check_branch
      %2426 = sbr.rel (%p2424) target = $region56
    $region55: #{decoder_forward.10} parent=5 // pred_region
      %s2427 = ssub.s32 %s13, 2
      // Predicated region
      $region57: #{decoder_forward.10} parent=55 // pred_check
        %p2428 = pneg %p194
      $region58: #{decoder_forward.10} parent=55 // pred_check_branch
        %2430 = sbr.rel (%p2428) target = $region60
      $region59: #{decoder_forward.10} parent=55 // pred_region
        %p2431 = scmp.lt.s32.totalorder %s19, 1
        %s2432 = scalar_select %p2431, %s19, 1
        %s2433 = smul.addr %s2432, 4
        %s2434 = scalar_lea.vmem %s7, %s2433
      $region60: #{decoder_forward.10} parent=55 // pred_fallthru
        _
    $region56: #{decoder_forward.10} parent=5 // pred_fallthru
      _
  $region6: #{decoder_forward.10} parent=0 // loop_footer
    %s17 = sadd.s32 1, %s13
  $region7: #{decoder_forward.10} parent=0 // loop_footer_branch
    %12 = sbr.rel target = $region3
  $region8: #{decoder_forward.10} parent=0 // loop_exit
    _

// kernel: decoder_forward.13
$region0: #{decoder_forward.13}
  #allocation0 [shape = 'u32[]', space=smem, size = 0x4, offset = 0x4, fixed_abs, tag = 'smem constant byte address 0x4 - core index']
  #allocation1 [shape = 'u32[144,128]{1,0:T(1,128)}', space=vmem, size = 0x12000, scoped, tag = 'internal scratch']
  #allocation2 [shape = 'f32[16,128]{1,0:T(8,128)}', space=vmem, size = 0x2000, scoped, tag = 'scratch operand']
  %s0 = inlined_call_operand.vmem [shape: bf16[16,128], index: 0, kind: input, shape index: {}]
  %s1 = inlined_call_operand.vmem [shape: bf16[128,128], index: 1, kind: input, shape index: {}]
  %s2 = inlined_call_operand.vmem [shape: f32[1,128], index: 2, kind: input, shape index: {}]
  %s3 = inlined_call_operand.hbm [shape: f32[16,128], index: 3, kind: output, shape index: {}]
  %s4 = sld [smem:[#allocation0]]
  $region30: #{decoder_forward.13} parent=0
    _
  %s6 = ssub.s32 1, %s4
  %s7 = scalar_select 0, %s6, %s4
  $region1: #{decoder_forward.13} parent=0
    #allocation3 [shape = 'u8[8192]{0}', space=vmem, size = 0x2000, scoped, tag = 'output window, operand 0, single buffered']
    #allocation4 [shape = 's32[1]{0}', space=sflag, size = 0x4, scoped, tag = 'scoped memory for decoder_forward.13']
    %8 = vsyncpa [#allocation4], 0
    // Predicated region
    $region2: #{decoder_forward.13} parent=1 // pred_check
      _
    $region3: #{decoder_forward.13} parent=1 // pred_check_branch
      %10 = sbr.rel (0) target = $region5
    $region4: #{decoder_forward.13} parent=1 // pred_region
      _
    $region5: #{decoder_forward.13} parent=1 // pred_fallthru
      _
    // Predicated region
    $region6: #{decoder_forward.13} parent=1 // pred_check
      _
    $region7: #{decoder_forward.13} parent=1 // pred_check_branch
      %12 = sbr.rel (0) target = $region9
    $region8: #{decoder_forward.13} parent=1 // pred_region
      _
    $region9: #{decoder_forward.13} parent=1 // pred_fallthru
      _
    // Predicated region
    $region10: #{decoder_forward.13} parent=1 // pred_check
      _
    $region11: #{decoder_forward.13} parent=1 // pred_check_branch
      %14 = sbr.rel (0) target = $region13
    $region12: #{decoder_forward.13} parent=1 // pred_region
      _
    $region13: #{decoder_forward.13} parent=1 // pred_fallthru
      _
    %p16 = scmp.eq.s32.totalorder 0, 0
    // Predicated region
    $region14: #{decoder_forward.13} parent=1 // pred_check
      %p17 = pneg %p16
    $region15: #{decoder_forward.13} parent=1 // pred_check_branch
      %19 = sbr.rel (%p17) target = $region17
    $region16: #{decoder_forward.13} parent=1 // pred_region
      %20 = vst [vmem:[#allocation2] sm:$0xff] 0.0
      %21 = vst [vmem:[#allocation2 + $0x8] sm:$0xff] 0.0
    $region17: #{decoder_forward.13} parent=1 // pred_fallthru
      _
    %v22 = vld [vmem:[#allocation2] sm:$0xff]
    %v23 = vld [vmem:[#allocation2 + $0x8] sm:$0xff]
    %v24 = vld [vmem:[%s0] sm:$0xf]
    %v25 = vld [vmem:[%s0 + $0x4] sm:$0xf]
    %v26 = vld [vmem:[%s1] sm:$0xf]
    %v27 = vld [vmem:[%s1 + $0x4] sm:$0xf]
    %v28 = vld [vmem:[%s1 + $0x8] sm:$0xf]
    %v29 = vld [vmem:[%s1 + $0xc] sm:$0xf]
    %v30 = vld [vmem:[%s1 + $0x10] sm:$0xf]
    %v31 = vld [vmem:[%s1 + $0x14] sm:$0xf]
    %v32 = vld [vmem:[%s1 + $0x18] sm:$0xf]
    %v33 = vld [vmem:[%s1 + $0x1c] sm:$0xf]
    %v34 = vld [vmem:[%s1 + $0x20] sm:$0xf]
    %v35 = vld [vmem:[%s1 + $0x24] sm:$0xf]
    %v36 = vld [vmem:[%s1 + $0x28] sm:$0xf]
    %v37 = vld [vmem:[%s1 + $0x2c] sm:$0xf]
    %v38 = vld [vmem:[%s1 + $0x30] sm:$0xf]
    %v39 = vld [vmem:[%s1 + $0x34] sm:$0xf]
    %v40 = vld [vmem:[%s1 + $0x38] sm:$0xf]
    %v41 = vld [vmem:[%s1 + $0x3c] sm:$0xf]
    %v44 = vunpack.c.l.b16 %v24
    %v45 = vunpack.c.l.b16 %v25
    %v46 = vpack.c.b16 %v45, %v44
    %v64 = vunpack.c.l.b16 %v26
    %v65 = vunpack.c.l.b16 %v27
    %v66 = vunpack.c.l.b16 %v28
    %v67 = vunpack.c.l.b16 %v29
    %v68 = vunpack.c.l.b16 %v30
    %v69 = vunpack.c.l.b16 %v31
    %v70 = vunpack.c.l.b16 %v32
    %v71 = vunpack.c.l.b16 %v33
    %v72 = vunpack.c.l.b16 %v34
    %v73 = vunpack.c.l.b16 %v35
    %v74 = vunpack.c.l.b16 %v36
    %v75 = vunpack.c.l.b16 %v37
    %v76 = vunpack.c.l.b16 %v38
    %v77 = vunpack.c.l.b16 %v39
    %v78 = vunpack.c.l.b16 %v40
    %v79 = vunpack.c.l.b16 %v41
    %v80 = vpack.c.b16 %v65, %v64
    %v81 = vpack.c.b16 %v67, %v66
    %v82 = vpack.c.b16 %v69, %v68
    %v83 = vpack.c.b16 %v71, %v70
    %v84 = vpack.c.b16 %v73, %v72
    %v85 = vpack.c.b16 %v75, %v74
    %v86 = vpack.c.b16 %v77, %v76
    %v87 = vpack.c.b16 %v79, %v78
    %96 = vmatprep.subr.bf16.mxu0 0
    %97 = vmatpush1.bf16.msra.mxu0 %v87
    %98 = vmatprep.subr.bf16.mxu0 0
    %99 = vmatpush1.bf16.msra.mxu0 %v86
    %100 = vmatprep.subr.bf16.mxu0 0
    %101 = vmatpush1.bf16.msra.mxu0 %v85
    %102 = vmatprep.subr.bf16.mxu0 0
    %103 = vmatpush1.bf16.msra.mxu0 %v84
    %104 = vmatprep.subr.bf16.mxu0 0
    %105 = vmatpush1.bf16.msra.mxu0 %v83
    %106 = vmatprep.subr.bf16.mxu0 0
    %107 = vmatpush1.bf16.msra.mxu0 %v82
    %108 = vmatprep.subr.bf16.mxu0 0
    %109 = vmatpush1.bf16.msra.mxu0 %v81
    %110 = vmatprep.subr.bf16.mxu0 0
    %111 = vmatpush1.bf16.msra.mxu0 %v80
    %112 = vmatprep.subr.bf16.mxu0 0
    %113 = vmatpush2.bf16.msra.mxu0 0
    %114 = vmatprep.subr.bf16.mxu0 0
    %115 = vmatpush2.bf16.msra.mxu0 0
    %116 = vmatprep.subr.bf16.mxu0 0
    %117 = vmatpush2.bf16.msra.mxu0 0
    %118 = vmatprep.subr.bf16.mxu0 0
    %119 = vmatpush2.bf16.msra.mxu0 0
    %120 = vmatprep.subr.bf16.mxu0 0
    %121 = vmatpush2.bf16.msra.mxu0 0
    %122 = vmatprep.subr.bf16.mxu0 0
    %123 = vmatpush2.bf16.msra.mxu0 0
    %124 = vmatprep.subr.bf16.mxu0 0
    %125 = vmatpush2.bf16.msra.mxu0 0
    %126 = vmatprep.subr.bf16.mxu0 0
    %127 = vmatpush2.bf16.msra.mxu0 0
    %128 = vmatprep.mubr.bf16.mxu0 0
    %129 = vmatmul.mubr.bf16.gmra.mxu0 %v46
    %v130 = vpop.f32.mrf.mxu0
    %v131 = vadd.f32 0.0, %v130
    %v132 = vpop.f32.mrf.mxu0
    %v133 = vpop.f32.mrf.mxu0
    %v134 = vadd.f32 0.0, %v133
    %v135 = vpop.f32.mrf.mxu0
    %136 = vdwg.mxu0
    %v137 = vadd.f32 %v22, %v131
    %v138 = vadd.f32 %v23, %v134
    %139 = vst [vmem:[#allocation2] sm:$0xff] %v137
    %140 = vst [vmem:[#allocation2 + $0x8] sm:$0xff] %v138
    // Predicated region
    $region18: #{decoder_forward.13} parent=1 // pred_check
      %p141 = pneg %p16
    $region19: #{decoder_forward.13} parent=1 // pred_check_branch
      %143 = sbr.rel (%p141) target = $region21
    $region20: #{decoder_forward.13} parent=1 // pred_region
      %v144 = vld [vmem:[#allocation2] sm:$0xff]
      %v145 = vld [vmem:[#allocation2 + $0x8] sm:$0xff]
      %v146 = vld [vmem:[%s2] sm:$0x1]
      %v148 = vlaneseq
      %v149 = vshrl.u32 %v148, 7
      %v150 = vsub.s32 0, %v149
      %v151 = vrot.slane %v146, %v150
      %v153 = vadd.f32 %v144, %v151
      %v154 = vadd.f32 %v145, %v151
      %155 = vst [vmem:[#allocation3] sm:$0xff] %v153
      %156 = vst [vmem:[#allocation3 + $0x8] sm:$0xff] %v154
    $region21: #{decoder_forward.13} parent=1 // pred_fallthru
      _
    // Predicated region
    $region22: #{decoder_forward.13} parent=1 // pred_check
      _
    $region23: #{decoder_forward.13} parent=1 // pred_check_branch
      %158 = sbr.rel (0) target = $region25
    $region24: #{decoder_forward.13} parent=1 // pred_region
      %s160 = ssub.s32 256, 256
      %161 = vsyncadd [#allocation4], %s160
      %s162 = sshll.u32 [#allocation3], 4
      %s163 = int_to_ptr.vmem [resolvable:$true] %s162
      %168 = dma.vmem_to_hbm [thread:$0]  %s163, 256, %s3, [#allocation4], 128, 128, 8
    $region25: #{decoder_forward.13} parent=1 // pred_fallthru
      _
    // Predicated region
    $region26: #{decoder_forward.13} parent=1 // pred_check
      _
    $region27: #{decoder_forward.13} parent=1 // pred_check_branch
      %170 = sbr.rel (0) target = $region29
    $region28: #{decoder_forward.13} parent=1 // pred_region
      %171 = dma.done [#allocation4], 256
    $region29: #{decoder_forward.13} parent=1 // pred_fallthru
      _
    %172 = vsyncpa [#allocation4], 1

// kernel: decoder_forward.11
$region0: #{decoder_forward.11}
  #allocation0 [shape = 'u32[]', space=smem, size = 0x4, offset = 0x4, fixed_abs, tag = 'smem constant byte address 0x4 - core index']
  #allocation1 [shape = 'u32[144,128]{1,0:T(1,128)}', space=vmem, size = 0x12000, scoped, tag = 'internal scratch']
  %s0 = inlined_call_operand.vmem [shape: bf16[2,8,128], index: 0, kind: input, shape index: {}]
  %s1 = inlined_call_operand.vmem [shape: bf16[2,8,128], index: 1, kind: input, shape index: {}]
  %s2 = inlined_call_operand.vmem [shape: bf16[128,128], index: 2, kind: input, shape index: {}]
  %s3 = inlined_call_operand.vmem [shape: f32[1,128], index: 3, kind: input, shape index: {}]
  %s4 = inlined_call_operand.vmem [shape: bf16[128,256], index: 4, kind: input, shape index: {}]
  %s5 = inlined_call_operand.vmem [shape: f32[1,256], index: 5, kind: input, shape index: {}]
  %s6 = inlined_call_operand.vmem [shape: bf16[128,128], index: 6, kind: input, shape index: {}]
  %s7 = inlined_call_operand.vmem [shape: f32[1,128], index: 7, kind: input, shape index: {}]
  %s8 = inlined_call_operand.vmem [shape: f32[1,128], index: 8, kind: input, shape index: {}]
  %s9 = inlined_call_operand.vmem [shape: f32[1,128], index: 9, kind: input, shape index: {}]
  %s10 = inlined_call_operand.vmem [shape: bf16[2,8,128], index: 10, kind: output, shape index: {}]
  %s11 = sld [smem:[#allocation0]]
  $region73: #{decoder_forward.11} parent=0
    _
  %s13 = ssub.s32 1, %s11
  %s14 = scalar_select 0, %s13, %s11
  loop: start=0, step=1, limit=4
  $region2: #{decoder_forward.11} parent=0 // loop_pre_header
    _
  $region3: #{decoder_forward.11} parent=0 // loop_header
    %s16 = sphi 0, %s20
    %p17 = scmp.ge.s32.totalorder %s16, 4
    %s26 = sphi 0, %s28
    %s29 = sphi 0, %s26
    %s30 = sphi 0, %s29
    %s46 = sphi 0, %s30
    %s52 = sphi 0, %s54
    %s55 = sphi 0, %s52
    %s56 = sphi 0, %s55
    %s72 = sphi 0, %s56
    %s76 = sphi 0, %s76
    %s78 = sphi 0, %s76
    %s79 = sphi 0, %s78
    %s93 = sphi 0, %s79
    %s97 = sphi 0, %s97
    %s99 = sphi 0, %s97
    %s100 = sphi 0, %s99
    %s114 = sphi 0, %s100
    %s118 = sphi 0, %s118
    %s120 = sphi 0, %s118
    %s121 = sphi 0, %s120
    %s135 = sphi 0, %s121
    %s139 = sphi 0, %s139
    %s141 = sphi 0, %s139
    %s142 = sphi 0, %s141
    %s156 = sphi 0, %s142
    %s160 = sphi 0, %s160
    %s162 = sphi 0, %s160
    %s163 = sphi 0, %s162
    %s177 = sphi 0, %s163
    %s181 = sphi 0, %s181
    %s183 = sphi 0, %s181
    %s184 = sphi 0, %s183
    %s198 = sphi 0, %s184
    %s202 = sphi 0, %s202
    %s204 = sphi 0, %s202
    %s205 = sphi 0, %s204
    %s219 = sphi 0, %s205
    %s223 = sphi 0, %s223
    %s225 = sphi 0, %s223
    %s226 = sphi 0, %s225
    %s240 = sphi 0, %s226
    %s246 = sphi 0, %s248
    %s249 = sphi 0, %s246
    %s250 = sphi 0, %s249
    %s266 = sphi 0, %s250
  $region4: #{decoder_forward.11} parent=0 // loop_header_branch
    %19 = sbr.rel (%p17) target = $region8
  $region5: #{decoder_forward.11} parent=0 // loop_body
    %s21 = ssub.s32 %s16, 1
    %s22 = ssub.s32 %s16, 2
    %s23 = sadd.s32 %s16, 1
    %s24 = ssub.s32 %s16, %s23
    %p25 = scmp.eq.s32.totalorder %s24, 0
    %s27 = sadd.s32 %s26, 1
    %s28 = scalar_select %p25, %s26, %s27
    %p31 = pneg %p25
    %p32 = scmp.eq.s32.totalorder %s16, 1
    %p33 = por %p31, %p32
    %p34 = scmp.ne.s32.totalorder %s26, %s29
    %p35 = scmp.eq.s32.totalorder %s16, 0
    %p36 = por %p34, %p35
    %p37 = scmp.ne.s32.totalorder %s26, %s29
    %p38 = scmp.eq.s32.totalorder %s21, 1
    %p39 = por %p37, %p38
    %p40 = scmp.ne.s32.totalorder %s29, %s30
    %p41 = scmp.eq.s32.totalorder %s21, 0
    %p42 = por %p40, %p41
    %p43 = scmp.ne.s32.totalorder %s29, %s30
    %p44 = scmp.eq.s32.totalorder %s22, 1
    %p45 = por %p43, %p44
    %p47 = scmp.ne.s32.totalorder %s30, %s46
    %p48 = scmp.eq.s32.totalorder %s22, 0
    %p49 = por %p47, %p48
    %s50 = ssub.s32 %s16, %s23
    %p51 = scmp.eq.s32.totalorder %s50, 0
    %s53 = sadd.s32 %s52, 1
    %s54 = scalar_select %p51, %s52, %s53
    %p57 = pneg %p51
    %p58 = scmp.eq.s32.totalorder %s16, 1
    %p59 = por %p57, %p58
    %p60 = scmp.ne.s32.totalorder %s52, %s55
    %p61 = scmp.eq.s32.totalorder %s16, 0
    %p62 = por %p60, %p61
    %p63 = scmp.ne.s32.totalorder %s52, %s55
    %p64 = scmp.eq.s32.totalorder %s21, 1
    %p65 = por %p63, %p64
    %p66 = scmp.ne.s32.totalorder %s55, %s56
    %p67 = scmp.eq.s32.totalorder %s21, 0
    %p68 = por %p66, %p67
    %p69 = scmp.ne.s32.totalorder %s55, %s56
    %p70 = scmp.eq.s32.totalorder %s22, 1
    %p71 = por %p69, %p70
    %p73 = scmp.ne.s32.totalorder %s56, %s72
    %p74 = scmp.eq.s32.totalorder %s22, 0
    %p75 = por %p73, %p74
    %s77 = sadd.s32 %s76, 1
    %p80 = scmp.eq.s32.totalorder %s16, 1
    %p81 = scmp.ne.s32.totalorder %s76, %s78
    %p82 = scmp.eq.s32.totalorder %s16, 0
    %p83 = por %p81, %p82
    %p84 = scmp.ne.s32.totalorder %s76, %s78
    %p85 = scmp.eq.s32.totalorder %s21, 1
    %p86 = por %p84, %p85
    %p87 = scmp.ne.s32.totalorder %s78, %s79
    %p88 = scmp.eq.s32.totalorder %s21, 0
    %p89 = por %p87, %p88
    %p90 = scmp.ne.s32.totalorder %s78, %s79
    %p91 = scmp.eq.s32.totalorder %s22, 1
    %p92 = por %p90, %p91
    %p94 = scmp.ne.s32.totalorder %s79, %s93
    %p95 = scmp.eq.s32.totalorder %s22, 0
    %p96 = por %p94, %p95
    %s98 = sadd.s32 %s97, 1
    %p101 = scmp.eq.s32.totalorder %s16, 1
    %p102 = scmp.ne.s32.totalorder %s97, %s99
    %p103 = scmp.eq.s32.totalorder %s16, 0
    %p104 = por %p102, %p103
    %p105 = scmp.ne.s32.totalorder %s97, %s99
    %p106 = scmp.eq.s32.totalorder %s21, 1
    %p107 = por %p105, %p106
    %p108 = scmp.ne.s32.totalorder %s99, %s100
    %p109 = scmp.eq.s32.totalorder %s21, 0
    %p110 = por %p108, %p109
    %p111 = scmp.ne.s32.totalorder %s99, %s100
    %p112 = scmp.eq.s32.totalorder %s22, 1
    %p113 = por %p111, %p112
    %p115 = scmp.ne.s32.totalorder %s100, %s114
    %p116 = scmp.eq.s32.totalorder %s22, 0
    %p117 = por %p115, %p116
    %s119 = sadd.s32 %s118, 1
    %p122 = scmp.eq.s32.totalorder %s16, 1
    %p123 = scmp.ne.s32.totalorder %s118, %s120
    %p124 = scmp.eq.s32.totalorder %s16, 0
    %p125 = por %p123, %p124
    %p126 = scmp.ne.s32.totalorder %s118, %s120
    %p127 = scmp.eq.s32.totalorder %s21, 1
    %p128 = por %p126, %p127
    %p129 = scmp.ne.s32.totalorder %s120, %s121
    %p130 = scmp.eq.s32.totalorder %s21, 0
    %p131 = por %p129, %p130
    %p132 = scmp.ne.s32.totalorder %s120, %s121
    %p133 = scmp.eq.s32.totalorder %s22, 1
    %p134 = por %p132, %p133
    %p136 = scmp.ne.s32.totalorder %s121, %s135
    %p137 = scmp.eq.s32.totalorder %s22, 0
    %p138 = por %p136, %p137
    %s140 = sadd.s32 %s139, 1
    %p143 = scmp.eq.s32.totalorder %s16, 1
    %p144 = scmp.ne.s32.totalorder %s139, %s141
    %p145 = scmp.eq.s32.totalorder %s16, 0
    %p146 = por %p144, %p145
    %p147 = scmp.ne.s32.totalorder %s139, %s141
    %p148 = scmp.eq.s32.totalorder %s21, 1
    %p149 = por %p147, %p148
    %p150 = scmp.ne.s32.totalorder %s141, %s142
    %p151 = scmp.eq.s32.totalorder %s21, 0
    %p152 = por %p150, %p151
    %p153 = scmp.ne.s32.totalorder %s141, %s142
    %p154 = scmp.eq.s32.totalorder %s22, 1
    %p155 = por %p153, %p154
    %p157 = scmp.ne.s32.totalorder %s142, %s156
    %p158 = scmp.eq.s32.totalorder %s22, 0
    %p159 = por %p157, %p158
    %s161 = sadd.s32 %s160, 1
    %p164 = scmp.eq.s32.totalorder %s16, 1
    %p165 = scmp.ne.s32.totalorder %s160, %s162
    %p166 = scmp.eq.s32.totalorder %s16, 0
    %p167 = por %p165, %p166
    %p168 = scmp.ne.s32.totalorder %s160, %s162
    %p169 = scmp.eq.s32.totalorder %s21, 1
    %p170 = por %p168, %p169
    %p171 = scmp.ne.s32.totalorder %s162, %s163
    %p172 = scmp.eq.s32.totalorder %s21, 0
    %p173 = por %p171, %p172
    %p174 = scmp.ne.s32.totalorder %s162, %s163
    %p175 = scmp.eq.s32.totalorder %s22, 1
    %p176 = por %p174, %p175
    %p178 = scmp.ne.s32.totalorder %s163, %s177
    %p179 = scmp.eq.s32.totalorder %s22, 0
    %p180 = por %p178, %p179
    %s182 = sadd.s32 %s181, 1
    %p185 = scmp.eq.s32.totalorder %s16, 1
    %p186 = scmp.ne.s32.totalorder %s181, %s183
    %p187 = scmp.eq.s32.totalorder %s16, 0
    %p188 = por %p186, %p187
    %p189 = scmp.ne.s32.totalorder %s181, %s183
    %p190 = scmp.eq.s32.totalorder %s21, 1
    %p191 = por %p189, %p190
    %p192 = scmp.ne.s32.totalorder %s183, %s184
    %p193 = scmp.eq.s32.totalorder %s21, 0
    %p194 = por %p192, %p193
    %p195 = scmp.ne.s32.totalorder %s183, %s184
    %p196 = scmp.eq.s32.totalorder %s22, 1
    %p197 = por %p195, %p196
    %p199 = scmp.ne.s32.totalorder %s184, %s198
    %p200 = scmp.eq.s32.totalorder %s22, 0
    %p201 = por %p199, %p200
    %s203 = sadd.s32 %s202, 1
    %p206 = scmp.eq.s32.totalorder %s16, 1
    %p207 = scmp.ne.s32.totalorder %s202, %s204
    %p208 = scmp.eq.s32.totalorder %s16, 0
    %p209 = por %p207, %p208
    %p210 = scmp.ne.s32.totalorder %s202, %s204
    %p211 = scmp.eq.s32.totalorder %s21, 1
    %p212 = por %p210, %p211
    %p213 = scmp.ne.s32.totalorder %s204, %s205
    %p214 = scmp.eq.s32.totalorder %s21, 0
    %p215 = por %p213, %p214
    %p216 = scmp.ne.s32.totalorder %s204, %s205
    %p217 = scmp.eq.s32.totalorder %s22, 1
    %p218 = por %p216, %p217
    %p220 = scmp.ne.s32.totalorder %s205, %s219
    %p221 = scmp.eq.s32.totalorder %s22, 0
    %p222 = por %p220, %p221
    %s224 = sadd.s32 %s223, 1
    %p227 = scmp.eq.s32.totalorder %s16, 1
    %p228 = scmp.ne.s32.totalorder %s223, %s225
    %p229 = scmp.eq.s32.totalorder %s16, 0
    %p230 = por %p228, %p229
    %p231 = scmp.ne.s32.totalorder %s223, %s225
    %p232 = scmp.eq.s32.totalorder %s21, 1
    %p233 = por %p231, %p232
    %p234 = scmp.ne.s32.totalorder %s225, %s226
    %p235 = scmp.eq.s32.totalorder %s21, 0
    %p236 = por %p234, %p235
    %p237 = scmp.ne.s32.totalorder %s225, %s226
    %p238 = scmp.eq.s32.totalorder %s22, 1
    %p239 = por %p237, %p238
    %p241 = scmp.ne.s32.totalorder %s226, %s240
    %p242 = scmp.eq.s32.totalorder %s22, 0
    %p243 = por %p241, %p242
    %s244 = ssub.s32 %s16, %s23
    %p245 = scmp.eq.s32.totalorder %s244, 0
    %s247 = sadd.s32 %s246, 1
    %s248 = scalar_select %p245, %s246, %s247
    %p251 = pneg %p245
    %p252 = scmp.eq.s32.totalorder %s16, 1
    %p253 = por %p251, %p252
    %p254 = scmp.ne.s32.totalorder %s246, %s249
    %p255 = scmp.eq.s32.totalorder %s16, 0
    %p256 = por %p254, %p255
    %p257 = scmp.ne.s32.totalorder %s246, %s249
    %p258 = scmp.eq.s32.totalorder %s21, 1
    %p259 = por %p257, %p258
    %p260 = scmp.ne.s32.totalorder %s249, %s250
    %p261 = scmp.eq.s32.totalorder %s21, 0
    %p262 = por %p260, %p261
    %p263 = scmp.ne.s32.totalorder %s249, %s250
    %p264 = scmp.eq.s32.totalorder %s22, 1
    %p265 = por %p263, %p264
    %p267 = scmp.ne.s32.totalorder %s250, %s266
    %p268 = scmp.eq.s32.totalorder %s22, 0
    %p269 = por %p267, %p268
    %p270 = scmp.le.s32.totalorder 1, %s16
    %p271 = scmp.lt.s32.totalorder %s16, 3
    %p272 = pnand %p270, %p271
    %p273 = pneg %p272
    // Predicated region
    $region9: #{decoder_forward.11} parent=5 // pred_check
      _
    $region10: #{decoder_forward.11} parent=5 // pred_check_branch
      %275 = sbr.rel (%p272) target = $region12
    $region11: #{decoder_forward.11} parent=5 // pred_region
      %s276 = ssub.s32 %s16, 1
      // Predicated region
      $region13: #{decoder_forward.11} parent=11 // pred_check
        %p277 = pneg %p89
      $region14: #{decoder_forward.11} parent=11 // pred_check_branch
        %279 = sbr.rel (%p277) target = $region16
      $region15: #{decoder_forward.11} parent=11 // pred_region
        _
      $region16: #{decoder_forward.11} parent=11 // pred_fallthru
        _
      // Predicated region
      $region17: #{decoder_forward.11} parent=11 // pred_check
        %p280 = pneg %p110
      $region18: #{decoder_forward.11} parent=11 // pred_check_branch
        %282 = sbr.rel (%p280) target = $region20
      $region19: #{decoder_forward.11} parent=11 // pred_region
        _
      $region20: #{decoder_forward.11} parent=11 // pred_fallthru
        _
      // Predicated region
      $region21: #{decoder_forward.11} parent=11 // pred_check
        %p283 = pneg %p131
      $region22: #{decoder_forward.11} parent=11 // pred_check_branch
        %285 = sbr.rel (%p283) target = $region24
      $region23: #{decoder_forward.11} parent=11 // pred_region
        _
      $region24: #{decoder_forward.11} parent=11 // pred_fallthru
        _
      // Predicated region
      $region25: #{decoder_forward.11} parent=11 // pred_check
        %p286 = pneg %p152
      $region26: #{decoder_forward.11} parent=11 // pred_check_branch
        %288 = sbr.rel (%p286) target = $region28
      $region27: #{decoder_forward.11} parent=11 // pred_region
        _
      $region28: #{decoder_forward.11} parent=11 // pred_fallthru
        _
      // Predicated region
      $region29: #{decoder_forward.11} parent=11 // pred_check
        %p289 = pneg %p173
      $region30: #{decoder_forward.11} parent=11 // pred_check_branch
        %291 = sbr.rel (%p289) target = $region32
      $region31: #{decoder_forward.11} parent=11 // pred_region
        _
      $region32: #{decoder_forward.11} parent=11 // pred_fallthru
        _
      // Predicated region
      $region33: #{decoder_forward.11} parent=11 // pred_check
        %p292 = pneg %p194
      $region34: #{decoder_forward.11} parent=11 // pred_check_branch
        %294 = sbr.rel (%p292) target = $region36
      $region35: #{decoder_forward.11} parent=11 // pred_region
        _
      $region36: #{decoder_forward.11} parent=11 // pred_fallthru
        _
      // Predicated region
      $region37: #{decoder_forward.11} parent=11 // pred_check
        %p295 = pneg %p215
      $region38: #{decoder_forward.11} parent=11 // pred_check_branch
        %297 = sbr.rel (%p295) target = $region40
      $region39: #{decoder_forward.11} parent=11 // pred_region
        _
      $region40: #{decoder_forward.11} parent=11 // pred_fallthru
        _
      // Predicated region
      $region41: #{decoder_forward.11} parent=11 // pred_check
        %p298 = pneg %p236
      $region42: #{decoder_forward.11} parent=11 // pred_check_branch
        %300 = sbr.rel (%p298) target = $region44
      $region43: #{decoder_forward.11} parent=11 // pred_region
        _
      $region44: #{decoder_forward.11} parent=11 // pred_fallthru
        _
    $region12: #{decoder_forward.11} parent=5 // pred_fallthru
      _
    %p301 = scmp.lt.s32.totalorder %s16, 2
    // Predicated region
    $region45: #{decoder_forward.11} parent=5 // pred_check
      %p302 = pneg %p301
    $region46: #{decoder_forward.11} parent=5 // pred_check_branch
      %304 = sbr.rel (%p302) target = $region48
    $region47: #{decoder_forward.11} parent=5 // pred_region
      // Predicated region
      $region49: #{decoder_forward.11} parent=47 // pred_check
        %p305 = pneg %p36
      $region50: #{decoder_forward.11} parent=47 // pred_check_branch
        %307 = sbr.rel (%p305) target = $region52
      $region51: #{decoder_forward.11} parent=47 // pred_region
        %p308 = scmp.lt.s32.totalorder %s16, 1
        %s309 = scalar_select %p308, %s16, 1
        %s310 = smul.addr %s309, 4
        %s311 = scalar_lea.vmem %s0, %s310
      $region52: #{decoder_forward.11} parent=47 // pred_fallthru
        _
      // Predicated region
      $region53: #{decoder_forward.11} parent=47 // pred_check
        %p312 = pneg %p62
      $region54: #{decoder_forward.11} parent=47 // pred_check_branch
        %314 = sbr.rel (%p312) target = $region56
      $region55: #{decoder_forward.11} parent=47 // pred_region
        %p315 = scmp.lt.s32.totalorder %s16, 1
        %s316 = scalar_select %p315, %s16, 1
        %s317 = smul.addr %s316, 4
        %s318 = scalar_lea.vmem %s1, %s317
      $region56: #{decoder_forward.11} parent=47 // pred_fallthru
        _
    $region48: #{decoder_forward.11} parent=5 // pred_fallthru
      _
    %p319 = scmp.le.s32.totalorder 1, %s16
    %p320 = scmp.lt.s32.totalorder %s16, 3
    %p321 = pnand %p319, %p320
    %p322 = pneg %p321
    // Predicated region
    $region57: #{decoder_forward.11} parent=5 // pred_check
      _
    $region58: #{decoder_forward.11} parent=5 // pred_check_branch
      %324 = sbr.rel (%p321) target = $region60
    $region59: #{decoder_forward.11} parent=5 // pred_region
      %s325 = ssub.s32 %s16, 1
      %p326 = scmp.lt.s32.totalorder %s21, 1
      %s327 = scalar_select %p326, %s21, 1
      %s328 = smul.addr %s327, 4
      %s329 = scalar_lea.vmem %s0, %s328
      %p330 = pneg %p42
      %p331 = pneg %p39
      %p332 = scmp.lt.s32.totalorder %s21, 1
      %s333 = scalar_select %p332, %s21, 1
      %s334 = smul.addr %s333, 4
      %s335 = scalar_lea.vmem %s1, %s334
      %p336 = pneg %p68
      %p337 = pneg %p65
      %p338 = pneg %p89
      %p339 = pneg %p86
      %p340 = pneg %p110
      %p341 = pneg %p107
      %p342 = pneg %p131
      %p343 = pneg %p128
      %p344 = pneg %p152
      %p345 = pneg %p149
      %p346 = pneg %p173
      %p347 = pneg %p170
      %p348 = pneg %p194
      %p349 = pneg %p191
      %p350 = pneg %p215
      %p351 = pneg %p212
      %p352 = pneg %p236
      %p353 = pneg %p233
      %p354 = pneg %p262
      %p355 = pneg %p259
      %p356 = scmp.lt.s32.totalorder %s21, 1
      %s357 = scalar_select %p356, %s21, 1
      %s358 = smul.addr %s357, 4
      %s359 = scalar_lea.vmem %s10, %s358
      %p360 = scmp.lt.s32.totalorder %s21, 1
      %s361 = scalar_select %p360, %s21, 1
      %s362 = smul.addr %s361, 4
      %s363 = scalar_lea.vmem %s0, %s362
      %p364 = scmp.lt.s32.totalorder %s21, 1
      %s365 = scalar_select %p364, %s21, 1
      %s366 = smul.addr %s365, 4
      %s367 = scalar_lea.vmem %s1, %s366
      %p368 = scmp.lt.s32.totalorder %s21, 1
      %s369 = scalar_select %p368, %s21, 1
      %s370 = smul.addr %s369, 4
      %s371 = scalar_lea.vmem %s10, %s370
      %v373 = vld [vmem:[%s363] sm:$0xf]
      %v374 = vunpack.c.l.bf16 %v373
      %v375 = vld [vmem:[%s367] sm:$0xf]
      %v376 = vld [vmem:[%s2] sm:$0xf]
      %v377 = vld [vmem:[%s2 + $0x4] sm:$0xf]
      %v378 = vld [vmem:[%s2 + $0x8] sm:$0xf]
      %v379 = vld [vmem:[%s2 + $0xc] sm:$0xf]
      %v380 = vld [vmem:[%s2 + $0x10] sm:$0xf]
      %v381 = vld [vmem:[%s2 + $0x14] sm:$0xf]
      %v382 = vld [vmem:[%s2 + $0x18] sm:$0xf]
      %v383 = vld [vmem:[%s2 + $0x1c] sm:$0xf]
      %v384 = vld [vmem:[%s2 + $0x20] sm:$0xf]
      %v385 = vld [vmem:[%s2 + $0x24] sm:$0xf]
      %v386 = vld [vmem:[%s2 + $0x28] sm:$0xf]
      %v387 = vld [vmem:[%s2 + $0x2c] sm:$0xf]
      %v388 = vld [vmem:[%s2 + $0x30] sm:$0xf]
      %v389 = vld [vmem:[%s2 + $0x34] sm:$0xf]
      %v390 = vld [vmem:[%s2 + $0x38] sm:$0xf]
      %v391 = vld [vmem:[%s2 + $0x3c] sm:$0xf]
      %v392 = vld [vmem:[%s3] sm:$0x1]
      %v394 = vlaneseq
      %v395 = vshrl.u32 %v394, 7
      %v396 = vsub.s32 0, %v395
      %v397 = vrot.slane %v392, %v396
      %v415 = vunpack.c.l.b16 %v376
      %v416 = vunpack.c.l.b16 %v377
      %v417 = vunpack.c.l.b16 %v378
      %v418 = vunpack.c.l.b16 %v379
      %v419 = vunpack.c.l.b16 %v380
      %v420 = vunpack.c.l.b16 %v381
      %v421 = vunpack.c.l.b16 %v382
      %v422 = vunpack.c.l.b16 %v383
      %v423 = vunpack.c.l.b16 %v384
      %v424 = vunpack.c.l.b16 %v385
      %v425 = vunpack.c.l.b16 %v386
      %v426 = vunpack.c.l.b16 %v387
      %v427 = vunpack.c.l.b16 %v388
      %v428 = vunpack.c.l.b16 %v389
      %v429 = vunpack.c.l.b16 %v390
      %v430 = vunpack.c.l.b16 %v391
      %v431 = vpack.c.b16 %v416, %v415
      %v432 = vpack.c.b16 %v418, %v417
      %v433 = vpack.c.b16 %v420, %v419
      %v434 = vpack.c.b16 %v422, %v421
      %v435 = vpack.c.b16 %v424, %v423
      %v436 = vpack.c.b16 %v426, %v425
      %v437 = vpack.c.b16 %v428, %v427
      %v438 = vpack.c.b16 %v430, %v429
      %447 = vmatprep.subr.bf16.mxu0 0
      %448 = vmatpush1.bf16.msra.mxu0 %v438
      %449 = vmatprep.subr.bf16.mxu0 0
      %450 = vmatpush1.bf16.msra.mxu0 %v437
      %451 = vmatprep.subr.bf16.mxu0 0
      %452 = vmatpush1.bf16.msra.mxu0 %v436
      %453 = vmatprep.subr.bf16.mxu0 0
      %454 = vmatpush1.bf16.msra.mxu0 %v435
      %455 = vmatprep.subr.bf16.mxu0 0
      %456 = vmatpush1.bf16.msra.mxu0 %v434
      %457 = vmatprep.subr.bf16.mxu0 0
      %458 = vmatpush1.bf16.msra.mxu0 %v433
      %459 = vmatprep.subr.bf16.mxu0 0
      %460 = vmatpush1.bf16.msra.mxu0 %v432
      %461 = vmatprep.subr.bf16.mxu0 0
      %462 = vmatpush1.bf16.msra.mxu0 %v431
      %463 = vmatprep.subr.bf16.mxu0 0
      %464 = vmatpush2.bf16.msra.mxu0 0
      %465 = vmatprep.subr.bf16.mxu0 0
      %466 = vmatpush2.bf16.msra.mxu0 0
      %467 = vmatprep.subr.bf16.mxu0 0
      %468 = vmatpush2.bf16.msra.mxu0 0
      %469 = vmatprep.subr.bf16.mxu0 0
      %470 = vmatpush2.bf16.msra.mxu0 0
      %471 = vmatprep.subr.bf16.mxu0 0
      %472 = vmatpush2.bf16.msra.mxu0 0
      %473 = vmatprep.subr.bf16.mxu0 0
      %474 = vmatpush2.bf16.msra.mxu0 0
      %475 = vmatprep.subr.bf16.mxu0 0
      %476 = vmatpush2.bf16.msra.mxu0 0
      %477 = vmatprep.subr.bf16.mxu0 0
      %478 = vmatpush2.bf16.msra.mxu0 0
      %479 = vmatprep.mubr.bf16.mxu0 0
      %480 = vmatmul.mubr.bf16.gmra.mxu0 %v373
      %v481 = vpop.f32.mrf.mxu0
      %v482 = vadd.f32 %v397, %v481
      %v483 = vpop.f32.mrf.mxu0
      %v484 = vpop.f32.mrf.mxu0
      %v485 = vpop.f32.mrf.mxu0
      %486 = vdwg.mxu0
      %v487 = vld [vmem:[%s4] sm:$0xff]
      %v488 = vld [vmem:[%s4 + $0x8] sm:$0xff]
      %v489 = vld [vmem:[%s4 + $0x10] sm:$0xff]
      %v490 = vld [vmem:[%s4 + $0x18] sm:$0xff]
      %v491 = vld [vmem:[%s4 + $0x20] sm:$0xff]
      %v492 = vld [vmem:[%s4 + $0x28] sm:$0xff]
      %v493 = vld [vmem:[%s4 + $0x30] sm:$0xff]
      %v494 = vld [vmem:[%s4 + $0x38] sm:$0xff]
      %v495 = vld [vmem:[%s4 + $0x40] sm:$0xff]
      %v496 = vld [vmem:[%s4 + $0x48] sm:$0xff]
      %v497 = vld [vmem:[%s4 + $0x50] sm:$0xff]
      %v498 = vld [vmem:[%s4 + $0x58] sm:$0xff]
      %v499 = vld [vmem:[%s4 + $0x60] sm:$0xff]
      %v500 = vld [vmem:[%s4 + $0x68] sm:$0xff]
      %v501 = vld [vmem:[%s4 + $0x70] sm:$0xff]
      %v502 = vld [vmem:[%s4 + $0x78] sm:$0xff]
      %v503 = vld [vmem:[%s5] sm:$0x3]
      %v505 = vlaneseq
      %v506 = vshrl.u32 %v505, 7
      %v507 = vsub.s32 0, %v506
      %v508 = vrot.slane %v503, %v507
      %v509 = vlaneseq
      %v510 = vshrl.u32 %v509, 7
      %v511 = vsub.s32 1, %v510
      %v512 = vrot.slane %v503, %v511
      %v531 = vunpack.c.l.b16 %v487
      %v532 = vunpack.c.h.b16 %v487
      %v533 = vunpack.c.l.b16 %v488
      %v534 = vunpack.c.h.b16 %v488
      %v535 = vunpack.c.l.b16 %v489
      %v536 = vunpack.c.h.b16 %v489
      %v537 = vunpack.c.l.b16 %v490
      %v538 = vunpack.c.h.b16 %v490
      %v539 = vunpack.c.l.b16 %v491
      %v540 = vunpack.c.h.b16 %v491
      %v541 = vunpack.c.l.b16 %v492
      %v542 = vunpack.c.h.b16 %v492
      %v543 = vunpack.c.l.b16 %v493
      %v544 = vunpack.c.h.b16 %v493
      %v545 = vunpack.c.l.b16 %v494
      %v546 = vunpack.c.h.b16 %v494
      %v547 = vunpack.c.l.b16 %v495
      %v548 = vunpack.c.h.b16 %v495
      %v549 = vunpack.c.l.b16 %v496
      %v550 = vunpack.c.h.b16 %v496
      %v551 = vunpack.c.l.b16 %v497
      %v552 = vunpack.c.h.b16 %v497
      %v553 = vunpack.c.l.b16 %v498
      %v554 = vunpack.c.h.b16 %v498
      %v555 = vunpack.c.l.b16 %v499
      %v556 = vunpack.c.h.b16 %v499
      %v557 = vunpack.c.l.b16 %v500
      %v558 = vunpack.c.h.b16 %v500
      %v559 = vunpack.c.l.b16 %v501
      %v560 = vunpack.c.h.b16 %v501
      %v561 = vunpack.c.l.b16 %v502
      %v562 = vunpack.c.h.b16 %v502
      %v563 = vpack.c.b16 %v533, %v531
      %v564 = vpack.c.b16 %v534, %v532
      %v565 = vpack.c.b16 %v537, %v535
      %v566 = vpack.c.b16 %v538, %v536
      %v567 = vpack.c.b16 %v541, %v539
      %v568 = vpack.c.b16 %v542, %v540
      %v569 = vpack.c.b16 %v545, %v543
      %v570 = vpack.c.b16 %v546, %v544
      %v571 = vpack.c.b16 %v549, %v547
      %v572 = vpack.c.b16 %v550, %v548
      %v573 = vpack.c.b16 %v553, %v551
      %v574 = vpack.c.b16 %v554, %v552
      %v575 = vpack.c.b16 %v557, %v555
      %v576 = vpack.c.b16 %v558, %v556
      %v577 = vpack.c.b16 %v561, %v559
      %v578 = vpack.c.b16 %v562, %v560
      %595 = vmatprep.subr.bf16.mxu0 %v578
      %596 = vmatpush1.bf16.msra.mxu0 %v577
      %597 = vmatprep.subr.bf16.mxu0 %v576
      %598 = vmatpush1.bf16.msra.mxu0 %v575
      %599 = vmatprep.subr.bf16.mxu0 %v574
      %600 = vmatpush1.bf16.msra.mxu0 %v573
      %601 = vmatprep.subr.bf16.mxu0 %v572
      %602 = vmatpush1.bf16.msra.mxu0 %v571
      %603 = vmatprep.subr.bf16.mxu0 %v570
      %604 = vmatpush1.bf16.msra.mxu0 %v569
      %605 = vmatprep.subr.bf16.mxu0 %v568
      %606 = vmatpush1.bf16.msra.mxu0 %v567
      %607 = vmatprep.subr.bf16.mxu0 %v566
      %608 = vmatpush1.bf16.msra.mxu0 %v565
      %609 = vmatprep.subr.bf16.mxu0 %v564
      %610 = vmatpush1.bf16.msra.mxu0 %v563
      %611 = vmatprep.subr.bf16.mxu0 0
      %612 = vmatpush2.bf16.msra.mxu0 0
      %613 = vmatprep.subr.bf16.mxu0 0
      %614 = vmatpush2.bf16.msra.mxu0 0
      %615 = vmatprep.subr.bf16.mxu0 0
      %616 = vmatpush2.bf16.msra.mxu0 0
      %617 = vmatprep.subr.bf16.mxu0 0
      %618 = vmatpush2.bf16.msra.mxu0 0
      %619 = vmatprep.subr.bf16.mxu0 0
      %620 = vmatpush2.bf16.msra.mxu0 0
      %621 = vmatprep.subr.bf16.mxu0 0
      %622 = vmatpush2.bf16.msra.mxu0 0
      %623 = vmatprep.subr.bf16.mxu0 0
      %624 = vmatpush2.bf16.msra.mxu0 0
      %625 = vmatprep.subr.bf16.mxu0 0
      %626 = vmatpush2.bf16.msra.mxu0 0
      %627 = vmatprep.mubr.bf16.mxu0 0
      %628 = vmatmul.mubr.bf16.gmra.mxu0 %v375
      %v629 = vpop.f32.mrf.mxu0
      %v630 = vadd.f32 %v508, %v629
      %v631 = vpop.f32.mrf.mxu0
      %v632 = vadd.f32 %v512, %v631
      %v633 = vpop.f32.mrf.mxu0
      %v634 = vpop.f32.mrf.mxu0
      %635 = vdwg.mxu0
      %v636 = vpack.c.bf16 %v482, %v482
      %638 = vrot.lane.b32.xlu0 %v636, 112
      %v639 = vpop.permute.xlu0 %638
      %641 = vrot.lane.b32.xlu0 %v636, 96
      %v642 = vpop.permute.xlu0 %641
      %644 = vrot.lane.b32.xlu0 %v636, 80
      %v645 = vpop.permute.xlu0 %644
      %647 = vrot.lane.b32.xlu0 %v636, 64
      %v648 = vpop.permute.xlu0 %647
      %650 = vrot.lane.b32.xlu0 %v636, 48
      %v651 = vpop.permute.xlu0 %650
      %653 = vrot.lane.b32.xlu0 %v636, 32
      %v654 = vpop.permute.xlu0 %653
      %656 = vrot.lane.b32.xlu0 %v636, 16
      %v657 = vpop.permute.xlu0 %656
      %v659 = vcombine.low %v636, %v648
      %v661 = vunpack.c.l.s4 1983009808
      %v662 = vunpack.c.0.s8 %v661
      %v663 = vlaneseq
      %v664 = vshrl.u32 %v663, 7
      %v665 = vsub.s32 %v662, %v664
      %v666 = vrot.slane %v659, %v665
      %v667 = vcombine.low %v642, %v654
      %v669 = vunpack.c.l.s4 1983009808
      %v670 = vunpack.c.0.s8 %v669
      %v671 = vlaneseq
      %v672 = vshrl.u32 %v671, 7
      %v673 = vsub.s32 %v670, %v672
      %v674 = vrot.slane %v667, %v673
      %v675 = vcombine.low %v666, %v674
      %v676 = vcombine.high %v666, %v674
      %v678 = vunpack.c.l.s4 1934713408
      %v679 = vunpack.c.0.s8 %v678
      %v680 = vlaneseq
      %v681 = vshrl.u32 %v680, 7
      %v682 = vsub.s32 %v679, %v681
      %v683 = vrot.slane %v675, %v682
      %v685 = vunpack.c.l.s4 1934713408
      %v686 = vunpack.c.0.s8 %v685
      %v687 = vlaneseq
      %v688 = vshrl.u32 %v687, 7
      %v689 = vsub.s32 %v686, %v688
      %v690 = vrot.slane %v676, %v689
      %v691 = vcombine.high %v683, 0
      %v692 = vcombine.high %v690, 0
      %v693 = vcombine.low %v639, %v651
      %v695 = vunpack.c.l.s4 1983009808
      %v696 = vunpack.c.0.s8 %v695
      %v697 = vlaneseq
      %v698 = vshrl.u32 %v697, 7
      %v699 = vsub.s32 %v696, %v698
      %v700 = vrot.slane %v693, %v699
      %v701 = vcombine.low %v645, %v657
      %v703 = vunpack.c.l.s4 1983009808
      %v704 = vunpack.c.0.s8 %v703
      %v705 = vlaneseq
      %v706 = vshrl.u32 %v705, 7
      %v707 = vsub.s32 %v704, %v706
      %v708 = vrot.slane %v701, %v707
      %v709 = vcombine.low %v700, %v708
      %v710 = vcombine.high %v700, %v708
      %v712 = vunpack.c.l.s4 1934713408
      %v713 = vunpack.c.0.s8 %v712
      %v714 = vlaneseq
      %v715 = vshrl.u32 %v714, 7
      %v716 = vsub.s32 %v713, %v715
      %v717 = vrot.slane %v709, %v716
      %v719 = vunpack.c.l.s4 1934713408
      %v720 = vunpack.c.0.s8 %v719
      %v721 = vlaneseq
      %v722 = vshrl.u32 %v721, 7
      %v723 = vsub.s32 %v720, %v722
      %v724 = vrot.slane %v710, %v723
      %v725 = vcombine.high %v717, 0
      %v726 = vcombine.high %v724, 0
      %v729 = vpack.i.b16 %v717, %v683
      %v731 = vshrl.u32 %v683, 16
      %v732 = vshrl.u32 %v717, 16
      %v733 = vpack.i.b16 %v732, %v731
      %v737 = vpack.i.b16 %v725, %v691
      %v739 = vshrl.u32 %v691, 16
      %v740 = vshrl.u32 %v725, 16
      %v741 = vpack.i.b16 %v740, %v739
      %v745 = vpack.i.b16 %v724, %v690
      %v747 = vshrl.u32 %v690, 16
      %v748 = vshrl.u32 %v724, 16
      %v749 = vpack.i.b16 %v748, %v747
      %v753 = vpack.i.b16 %v726, %v692
      %v755 = vshrl.u32 %v692, 16
      %v756 = vshrl.u32 %v726, 16
      %v757 = vpack.i.b16 %v756, %v755
      %v759 = vcombine.low %v729, %v745
      %v761 = vunpack.c.l.s4 1983009808
      %v762 = vunpack.c.0.s8 %v761
      %v763 = vlaneseq
      %v764 = vshrl.u32 %v763, 7
      %v765 = vsub.s32 %v762, %v764
      %v766 = vrot.slane %v759, %v765
      %v767 = vcombine.low %v737, %v753
      %v769 = vunpack.c.l.s4 1983009808
      %v770 = vunpack.c.0.s8 %v769
      %v771 = vlaneseq
      %v772 = vshrl.u32 %v771, 7
      %v773 = vsub.s32 %v770, %v772
      %v774 = vrot.slane %v767, %v773
      %v775 = vcombine.low %v766, %v774
      %v776 = vcombine.high %v766, %v774
      %v778 = vunpack.c.l.s4 1934713408
      %v779 = vunpack.c.0.s8 %v778
      %v780 = vlaneseq
      %v781 = vshrl.u32 %v780, 7
      %v782 = vsub.s32 %v779, %v781
      %v783 = vrot.slane %v775, %v782
      %v785 = vunpack.c.l.s4 1934713408
      %v786 = vunpack.c.0.s8 %v785
      %v787 = vlaneseq
      %v788 = vshrl.u32 %v787, 7
      %v789 = vsub.s32 %v786, %v788
      %v790 = vrot.slane %v776, %v789
      %v791 = vcombine.high %v783, 0
      %v792 = vcombine.high %v790, 0
      %v793 = vcombine.low %v733, %v749
      %v795 = vunpack.c.l.s4 1983009808
      %v796 = vunpack.c.0.s8 %v795
      %v797 = vlaneseq
      %v798 = vshrl.u32 %v797, 7
      %v799 = vsub.s32 %v796, %v798
      %v800 = vrot.slane %v793, %v799
      %v801 = vcombine.low %v741, %v757
      %v803 = vunpack.c.l.s4 1983009808
      %v804 = vunpack.c.0.s8 %v803
      %v805 = vlaneseq
      %v806 = vshrl.u32 %v805, 7
      %v807 = vsub.s32 %v804, %v806
      %v808 = vrot.slane %v801, %v807
      %v809 = vcombine.low %v800, %v808
      %v810 = vcombine.high %v800, %v808
      %v812 = vunpack.c.l.s4 1934713408
      %v813 = vunpack.c.0.s8 %v812
      %v814 = vlaneseq
      %v815 = vshrl.u32 %v814, 7
      %v816 = vsub.s32 %v813, %v815
      %v817 = vrot.slane %v809, %v816
      %v819 = vunpack.c.l.s4 1934713408
      %v820 = vunpack.c.0.s8 %v819
      %v821 = vlaneseq
      %v822 = vshrl.u32 %v821, 7
      %v823 = vsub.s32 %v820, %v822
      %v824 = vrot.slane %v810, %v823
      %v825 = vcombine.high %v817, 0
      %v826 = vcombine.high %v824, 0
      %v829 = vpack.i.b16 %v817, %v783
      %v830 = vshrl.u32 %v783, 16
      %v831 = vshrl.u32 %v817, 16
      %v832 = vpack.i.b16 %v831, %v830
      %v835 = vpack.i.b16 %v825, %v791
      %v836 = vshrl.u32 %v791, 16
      %v837 = vshrl.u32 %v825, 16
      %v838 = vpack.i.b16 %v837, %v836
      %v841 = vpack.i.b16 %v824, %v790
      %v842 = vshrl.u32 %v790, 16
      %v843 = vshrl.u32 %v824, 16
      %v844 = vpack.i.b16 %v843, %v842
      %v847 = vpack.i.b16 %v826, %v792
      %v848 = vshrl.u32 %v792, 16
      %v849 = vshrl.u32 %v826, 16
      %v850 = vpack.i.b16 %v849, %v848
      %v851 = vpack.c.bf16 %v630, %v630
      %853 = vrot.lane.b32.xlu0 %v851, 112
      %v854 = vpop.permute.xlu0 %853
      %856 = vrot.lane.b32.xlu0 %v851, 96
      %v857 = vpop.permute.xlu0 %856
      %859 = vrot.lane.b32.xlu0 %v851, 80
      %v860 = vpop.permute.xlu0 %859
      %862 = vrot.lane.b32.xlu0 %v851, 64
      %v863 = vpop.permute.xlu0 %862
      %865 = vrot.lane.b32.xlu0 %v851, 48
      %v866 = vpop.permute.xlu0 %865
      %868 = vrot.lane.b32.xlu0 %v851, 32
      %v869 = vpop.permute.xlu0 %868
      %871 = vrot.lane.b32.xlu0 %v851, 16
      %v872 = vpop.permute.xlu0 %871
      %v874 = vcombine.low %v851, %v863
      %v876 = vunpack.c.l.s4 1983009808
      %v877 = vunpack.c.0.s8 %v876
      %v878 = vlaneseq
      %v879 = vshrl.u32 %v878, 7
      %v880 = vsub.s32 %v877, %v879
      %v881 = vrot.slane %v874, %v880
      %v882 = vcombine.low %v857, %v869
      %v884 = vunpack.c.l.s4 1983009808
      %v885 = vunpack.c.0.s8 %v884
      %v886 = vlaneseq
      %v887 = vshrl.u32 %v886, 7
      %v888 = vsub.s32 %v885, %v887
      %v889 = vrot.slane %v882, %v888
      %v890 = vcombine.low %v881, %v889
      %v891 = vcombine.high %v881, %v889
      %v893 = vunpack.c.l.s4 1934713408
      %v894 = vunpack.c.0.s8 %v893
      %v895 = vlaneseq
      %v896 = vshrl.u32 %v895, 7
      %v897 = vsub.s32 %v894, %v896
      %v898 = vrot.slane %v890, %v897
      %v900 = vunpack.c.l.s4 1934713408
      %v901 = vunpack.c.0.s8 %v900
      %v902 = vlaneseq
      %v903 = vshrl.u32 %v902, 7
      %v904 = vsub.s32 %v901, %v903
      %v905 = vrot.slane %v891, %v904
      %v906 = vcombine.high %v898, 0
      %v907 = vcombine.high %v905, 0
      %v908 = vcombine.low %v854, %v866
      %v910 = vunpack.c.l.s4 1983009808
      %v911 = vunpack.c.0.s8 %v910
      %v912 = vlaneseq
      %v913 = vshrl.u32 %v912, 7
      %v914 = vsub.s32 %v911, %v913
      %v915 = vrot.slane %v908, %v914
      %v916 = vcombine.low %v860, %v872
      %v918 = vunpack.c.l.s4 1983009808
      %v919 = vunpack.c.0.s8 %v918
      %v920 = vlaneseq
      %v921 = vshrl.u32 %v920, 7
      %v922 = vsub.s32 %v919, %v921
      %v923 = vrot.slane %v916, %v922
      %v924 = vcombine.low %v915, %v923
      %v925 = vcombine.high %v915, %v923
      %v927 = vunpack.c.l.s4 1934713408
      %v928 = vunpack.c.0.s8 %v927
      %v929 = vlaneseq
      %v930 = vshrl.u32 %v929, 7
      %v931 = vsub.s32 %v928, %v930
      %v932 = vrot.slane %v924, %v931
      %v934 = vunpack.c.l.s4 1934713408
      %v935 = vunpack.c.0.s8 %v934
      %v936 = vlaneseq
      %v937 = vshrl.u32 %v936, 7
      %v938 = vsub.s32 %v935, %v937
      %v939 = vrot.slane %v925, %v938
      %v940 = vcombine.high %v932, 0
      %v941 = vcombine.high %v939, 0
      %v944 = vpack.i.b16 %v932, %v898
      %v946 = vshrl.u32 %v898, 16
      %v947 = vshrl.u32 %v932, 16
      %v948 = vpack.i.b16 %v947, %v946
      %v952 = vpack.i.b16 %v940, %v906
      %v954 = vshrl.u32 %v906, 16
      %v955 = vshrl.u32 %v940, 16
      %v956 = vpack.i.b16 %v955, %v954
      %v960 = vpack.i.b16 %v939, %v905
      %v962 = vshrl.u32 %v905, 16
      %v963 = vshrl.u32 %v939, 16
      %v964 = vpack.i.b16 %v963, %v962
      %v968 = vpack.i.b16 %v941, %v907
      %v970 = vshrl.u32 %v907, 16
      %v971 = vshrl.u32 %v941, 16
      %v972 = vpack.i.b16 %v971, %v970
      %v974 = vcombine.low %v944, %v960
      %v976 = vunpack.c.l.s4 1983009808
      %v977 = vunpack.c.0.s8 %v976
      %v978 = vlaneseq
      %v979 = vshrl.u32 %v978, 7
      %v980 = vsub.s32 %v977, %v979
      %v981 = vrot.slane %v974, %v980
      %v982 = vcombine.low %v952, %v968
      %v984 = vunpack.c.l.s4 1983009808
      %v985 = vunpack.c.0.s8 %v984
      %v986 = vlaneseq
      %v987 = vshrl.u32 %v986, 7
      %v988 = vsub.s32 %v985, %v987
      %v989 = vrot.slane %v982, %v988
      %v990 = vcombine.low %v981, %v989
      %v991 = vcombine.high %v981, %v989
      %v993 = vunpack.c.l.s4 1934713408
      %v994 = vunpack.c.0.s8 %v993
      %v995 = vlaneseq
      %v996 = vshrl.u32 %v995, 7
      %v997 = vsub.s32 %v994, %v996
      %v998 = vrot.slane %v990, %v997
      %v1000 = vunpack.c.l.s4 1934713408
      %v1001 = vunpack.c.0.s8 %v1000
      %v1002 = vlaneseq
      %v1003 = vshrl.u32 %v1002, 7
      %v1004 = vsub.s32 %v1001, %v1003
      %v1005 = vrot.slane %v991, %v1004
      %v1006 = vcombine.high %v998, 0
      %v1007 = vcombine.high %v1005, 0
      %v1008 = vcombine.low %v948, %v964
      %v1010 = vunpack.c.l.s4 1983009808
      %v1011 = vunpack.c.0.s8 %v1010
      %v1012 = vlaneseq
      %v1013 = vshrl.u32 %v1012, 7
      %v1014 = vsub.s32 %v1011, %v1013
      %v1015 = vrot.slane %v1008, %v1014
      %v1016 = vcombine.low %v956, %v972
      %v1018 = vunpack.c.l.s4 1983009808
      %v1019 = vunpack.c.0.s8 %v1018
      %v1020 = vlaneseq
      %v1021 = vshrl.u32 %v1020, 7
      %v1022 = vsub.s32 %v1019, %v1021
      %v1023 = vrot.slane %v1016, %v1022
      %v1024 = vcombine.low %v1015, %v1023
      %v1025 = vcombine.high %v1015, %v1023
      %v1027 = vunpack.c.l.s4 1934713408
      %v1028 = vunpack.c.0.s8 %v1027
      %v1029 = vlaneseq
      %v1030 = vshrl.u32 %v1029, 7
      %v1031 = vsub.s32 %v1028, %v1030
      %v1032 = vrot.slane %v1024, %v1031
      %v1034 = vunpack.c.l.s4 1934713408
      %v1035 = vunpack.c.0.s8 %v1034
      %v1036 = vlaneseq
      %v1037 = vshrl.u32 %v1036, 7
      %v1038 = vsub.s32 %v1035, %v1037
      %v1039 = vrot.slane %v1025, %v1038
      %v1040 = vcombine.high %v1032, 0
      %v1041 = vcombine.high %v1039, 0
      %v1044 = vpack.i.b16 %v1032, %v998
      %v1045 = vshrl.u32 %v998, 16
      %v1046 = vshrl.u32 %v1032, 16
      %v1047 = vpack.i.b16 %v1046, %v1045
      %v1050 = vpack.i.b16 %v1040, %v1006
      %v1051 = vshrl.u32 %v1006, 16
      %v1052 = vshrl.u32 %v1040, 16
      %v1053 = vpack.i.b16 %v1052, %v1051
      %v1056 = vpack.i.b16 %v1039, %v1005
      %v1057 = vshrl.u32 %v1005, 16
      %v1058 = vshrl.u32 %v1039, 16
      %v1059 = vpack.i.b16 %v1058, %v1057
      %v1062 = vpack.i.b16 %v1041, %v1007
      %v1063 = vshrl.u32 %v1007, 16
      %v1064 = vshrl.u32 %v1041, 16
      %v1065 = vpack.i.b16 %v1064, %v1063
      %v1066 = vpack.c.bf16 %v632, %v632
      %1068 = vrot.lane.b32.xlu0 %v1066, 112
      %v1069 = vpop.permute.xlu0 %1068
      %1071 = vrot.lane.b32.xlu0 %v1066, 96
      %v1072 = vpop.permute.xlu0 %1071
      %1074 = vrot.lane.b32.xlu0 %v1066, 80
      %v1075 = vpop.permute.xlu0 %1074
      %1077 = vrot.lane.b32.xlu0 %v1066, 64
      %v1078 = vpop.permute.xlu0 %1077
      %1080 = vrot.lane.b32.xlu0 %v1066, 48
      %v1081 = vpop.permute.xlu0 %1080
      %1083 = vrot.lane.b32.xlu0 %v1066, 32
      %v1084 = vpop.permute.xlu0 %1083
      %1086 = vrot.lane.b32.xlu0 %v1066, 16
      %v1087 = vpop.permute.xlu0 %1086
      %v1089 = vcombine.low %v1066, %v1078
      %v1091 = vunpack.c.l.s4 1983009808
      %v1092 = vunpack.c.0.s8 %v1091
      %v1093 = vlaneseq
      %v1094 = vshrl.u32 %v1093, 7
      %v1095 = vsub.s32 %v1092, %v1094
      %v1096 = vrot.slane %v1089, %v1095
      %v1097 = vcombine.low %v1072, %v1084
      %v1099 = vunpack.c.l.s4 1983009808
      %v1100 = vunpack.c.0.s8 %v1099
      %v1101 = vlaneseq
      %v1102 = vshrl.u32 %v1101, 7
      %v1103 = vsub.s32 %v1100, %v1102
      %v1104 = vrot.slane %v1097, %v1103
      %v1105 = vcombine.low %v1096, %v1104
      %v1106 = vcombine.high %v1096, %v1104
      %v1108 = vunpack.c.l.s4 1934713408
      %v1109 = vunpack.c.0.s8 %v1108
      %v1110 = vlaneseq
      %v1111 = vshrl.u32 %v1110, 7
      %v1112 = vsub.s32 %v1109, %v1111
      %v1113 = vrot.slane %v1105, %v1112
      %v1115 = vunpack.c.l.s4 1934713408
      %v1116 = vunpack.c.0.s8 %v1115
      %v1117 = vlaneseq
      %v1118 = vshrl.u32 %v1117, 7
      %v1119 = vsub.s32 %v1116, %v1118
      %v1120 = vrot.slane %v1106, %v1119
      %v1121 = vcombine.high %v1113, 0
      %v1122 = vcombine.high %v1120, 0
      %v1123 = vcombine.low %v1069, %v1081
      %v1125 = vunpack.c.l.s4 1983009808
      %v1126 = vunpack.c.0.s8 %v1125
      %v1127 = vlaneseq
      %v1128 = vshrl.u32 %v1127, 7
      %v1129 = vsub.s32 %v1126, %v1128
      %v1130 = vrot.slane %v1123, %v1129
      %v1131 = vcombine.low %v1075, %v1087
      %v1133 = vunpack.c.l.s4 1983009808
      %v1134 = vunpack.c.0.s8 %v1133
      %v1135 = vlaneseq
      %v1136 = vshrl.u32 %v1135, 7
      %v1137 = vsub.s32 %v1134, %v1136
      %v1138 = vrot.slane %v1131, %v1137
      %v1139 = vcombine.low %v1130, %v1138
      %v1140 = vcombine.high %v1130, %v1138
      %v1142 = vunpack.c.l.s4 1934713408
      %v1143 = vunpack.c.0.s8 %v1142
      %v1144 = vlaneseq
      %v1145 = vshrl.u32 %v1144, 7
      %v1146 = vsub.s32 %v1143, %v1145
      %v1147 = vrot.slane %v1139, %v1146
      %v1149 = vunpack.c.l.s4 1934713408
      %v1150 = vunpack.c.0.s8 %v1149
      %v1151 = vlaneseq
      %v1152 = vshrl.u32 %v1151, 7
      %v1153 = vsub.s32 %v1150, %v1152
      %v1154 = vrot.slane %v1140, %v1153
      %v1155 = vcombine.high %v1147, 0
      %v1156 = vcombine.high %v1154, 0
      %v1159 = vpack.i.b16 %v1147, %v1113
      %v1161 = vshrl.u32 %v1113, 16
      %v1162 = vshrl.u32 %v1147, 16
      %v1163 = vpack.i.b16 %v1162, %v1161
      %v1167 = vpack.i.b16 %v1155, %v1121
      %v1169 = vshrl.u32 %v1121, 16
      %v1170 = vshrl.u32 %v1155, 16
      %v1171 = vpack.i.b16 %v1170, %v1169
      %v1175 = vpack.i.b16 %v1154, %v1120
      %v1177 = vshrl.u32 %v1120, 16
      %v1178 = vshrl.u32 %v1154, 16
      %v1179 = vpack.i.b16 %v1178, %v1177
      %v1183 = vpack.i.b16 %v1156, %v1122
      %v1185 = vshrl.u32 %v1122, 16
      %v1186 = vshrl.u32 %v1156, 16
      %v1187 = vpack.i.b16 %v1186, %v1185
      %v1189 = vcombine.low %v1159, %v1175
      %v1191 = vunpack.c.l.s4 1983009808
      %v1192 = vunpack.c.0.s8 %v1191
      %v1193 = vlaneseq
      %v1194 = vshrl.u32 %v1193, 7
      %v1195 = vsub.s32 %v1192, %v1194
      %v1196 = vrot.slane %v1189, %v1195
      %v1197 = vcombine.low %v1167, %v1183
      %v1199 = vunpack.c.l.s4 1983009808
      %v1200 = vunpack.c.0.s8 %v1199
      %v1201 = vlaneseq
      %v1202 = vshrl.u32 %v1201, 7
      %v1203 = vsub.s32 %v1200, %v1202
      %v1204 = vrot.slane %v1197, %v1203
      %v1205 = vcombine.low %v1196, %v1204
      %v1206 = vcombine.high %v1196, %v1204
      %v1208 = vunpack.c.l.s4 1934713408
      %v1209 = vunpack.c.0.s8 %v1208
      %v1210 = vlaneseq
      %v1211 = vshrl.u32 %v1210, 7
      %v1212 = vsub.s32 %v1209, %v1211
      %v1213 = vrot.slane %v1205, %v1212
      %v1215 = vunpack.c.l.s4 1934713408
      %v1216 = vunpack.c.0.s8 %v1215
      %v1217 = vlaneseq
      %v1218 = vshrl.u32 %v1217, 7
      %v1219 = vsub.s32 %v1216, %v1218
      %v1220 = vrot.slane %v1206, %v1219
      %v1221 = vcombine.high %v1213, 0
      %v1222 = vcombine.high %v1220, 0
      %v1223 = vcombine.low %v1163, %v1179
      %v1225 = vunpack.c.l.s4 1983009808
      %v1226 = vunpack.c.0.s8 %v1225
      %v1227 = vlaneseq
      %v1228 = vshrl.u32 %v1227, 7
      %v1229 = vsub.s32 %v1226, %v1228
      %v1230 = vrot.slane %v1223, %v1229
      %v1231 = vcombine.low %v1171, %v1187
      %v1233 = vunpack.c.l.s4 1983009808
      %v1234 = vunpack.c.0.s8 %v1233
      %v1235 = vlaneseq
      %v1236 = vshrl.u32 %v1235, 7
      %v1237 = vsub.s32 %v1234, %v1236
      %v1238 = vrot.slane %v1231, %v1237
      %v1239 = vcombine.low %v1230, %v1238
      %v1240 = vcombine.high %v1230, %v1238
      %v1242 = vunpack.c.l.s4 1934713408
      %v1243 = vunpack.c.0.s8 %v1242
      %v1244 = vlaneseq
      %v1245 = vshrl.u32 %v1244, 7
      %v1246 = vsub.s32 %v1243, %v1245
      %v1247 = vrot.slane %v1239, %v1246
      %v1249 = vunpack.c.l.s4 1934713408
      %v1250 = vunpack.c.0.s8 %v1249
      %v1251 = vlaneseq
      %v1252 = vshrl.u32 %v1251, 7
      %v1253 = vsub.s32 %v1250, %v1252
      %v1254 = vrot.slane %v1240, %v1253
      %v1255 = vcombine.high %v1247, 0
      %v1256 = vcombine.high %v1254, 0
      %v1259 = vpack.i.b16 %v1247, %v1213
      %v1260 = vshrl.u32 %v1213, 16
      %v1261 = vshrl.u32 %v1247, 16
      %v1262 = vpack.i.b16 %v1261, %v1260
      %v1265 = vpack.i.b16 %v1255, %v1221
      %v1266 = vshrl.u32 %v1221, 16
      %v1267 = vshrl.u32 %v1255, 16
      %v1268 = vpack.i.b16 %v1267, %v1266
      %v1271 = vpack.i.b16 %v1254, %v1220
      %v1272 = vshrl.u32 %v1220, 16
      %v1273 = vshrl.u32 %v1254, 16
      %v1274 = vpack.i.b16 %v1273, %v1272
      %v1277 = vpack.i.b16 %v1256, %v1222
      %v1278 = vshrl.u32 %v1222, 16
      %v1279 = vshrl.u32 %v1256, 16
      %v1280 = vpack.i.b16 %v1279, %v1278
      %vm1281 = vcmask 130048
      %v1283 = vsel %vm1281, %v829, 0
      %v1286 = vsel %vm1281, %v1044, 0
      %1288 = vmatprep.subr.bf16.mxu0 0
      %1289 = vmatpush1.bf16.xpose.msra.mxu0 0
      %1290 = vmatprep.subr.bf16.mxu0 0
      %1291 = vmatpush1.bf16.xpose.msra.mxu0 0
      %1292 = vmatprep.subr.bf16.mxu0 0
      %1293 = vmatpush1.bf16.xpose.msra.mxu0 0
      %1294 = vmatprep.subr.bf16.mxu0 0
      %1295 = vmatpush1.bf16.xpose.msra.mxu0 0
      %1296 = vmatprep.subr.bf16.mxu0 0
      %1297 = vmatpush1.bf16.xpose.msra.mxu0 0
      %1298 = vmatprep.subr.bf16.mxu0 0
      %1299 = vmatpush1.bf16.xpose.msra.mxu0 0
      %1300 = vmatprep.subr.bf16.mxu0 0
      %1301 = vmatpush1.bf16.xpose.msra.mxu0 0
      %1302 = vmatprep.subr.bf16.mxu0 0
      %1303 = vmatpush1.bf16.xpose.msra.mxu0 %v1286
      %1304 = vmatprep.subr.bf16.mxu0 0
      %1305 = vmatpush2.bf16.xpose.msra.mxu0 0
      %1306 = vmatprep.subr.bf16.mxu0 0
      %1307 = vmatpush2.bf16.xpose.msra.mxu0 0
      %1308 = vmatprep.subr.bf16.mxu0 0
      %1309 = vmatpush2.bf16.xpose.msra.mxu0 0
      %1310 = vmatprep.subr.bf16.mxu0 0
      %1311 = vmatpush2.bf16.xpose.msra.mxu0 0
      %1312 = vmatprep.subr.bf16.mxu0 0
      %1313 = vmatpush2.bf16.xpose.msra.mxu0 0
      %1314 = vmatprep.subr.bf16.mxu0 0
      %1315 = vmatpush2.bf16.xpose.msra.mxu0 0
      %1316 = vmatprep.subr.bf16.mxu0 0
      %1317 = vmatpush2.bf16.xpose.msra.mxu0 0
      %1318 = vmatprep.subr.bf16.mxu0 0
      %1319 = vmatpush2.bf16.xpose.msra.mxu0 0
      %1320 = vmatprep.mubr.bf16.mxu0 0
      %1321 = vmatmul.mubr.bf16.gmra.mxu0 %v1283
      %v1322 = vpop.f32.mrf.mxu0
      %v1323 = vadd.f32 0.0, %v1322
      %v1324 = vpop.f32.mrf.mxu0
      %v1325 = vpop.f32.mrf.mxu0
      %v1326 = vpop.f32.mrf.mxu0
      %1327 = vdwg.mxu0
      %v1329 = vsel %vm1281, %v832, 0
      %v1332 = vsel %vm1281, %v1047, 0
      %1334 = vmatprep.subr.bf16.mxu0 0
      %1335 = vmatpush1.bf16.xpose.msra.mxu0 0
      %1336 = vmatprep.subr.bf16.mxu0 0
      %1337 = vmatpush1.bf16.xpose.msra.mxu0 0
      %1338 = vmatprep.subr.bf16.mxu0 0
      %1339 = vmatpush1.bf16.xpose.msra.mxu0 0
      %1340 = vmatprep.subr.bf16.mxu0 0
      %1341 = vmatpush1.bf16.xpose.msra.mxu0 0
      %1342 = vmatprep.subr.bf16.mxu0 0
      %1343 = vmatpush1.bf16.xpose.msra.mxu0 0
      %1344 = vmatprep.subr.bf16.mxu0 0
      %1345 = vmatpush1.bf16.xpose.msra.mxu0 0
      %1346 = vmatprep.subr.bf16.mxu0 0
      %1347 = vmatpush1.bf16.xpose.msra.mxu0 0
      %1348 = vmatprep.subr.bf16.mxu0 0
      %1349 = vmatpush1.bf16.xpose.msra.mxu0 %v1332
      %1350 = vmatprep.subr.bf16.mxu0 0
      %1351 = vmatpush2.bf16.xpose.msra.mxu0 0
      %1352 = vmatprep.subr.bf16.mxu0 0
      %1353 = vmatpush2.bf16.xpose.msra.mxu0 0
      %1354 = vmatprep.subr.bf16.mxu0 0
      %1355 = vmatpush2.bf16.xpose.msra.mxu0 0
      %1356 = vmatprep.subr.bf16.mxu0 0
      %1357 = vmatpush2.bf16.xpose.msra.mxu0 0
      %1358 = vmatprep.subr.bf16.mxu0 0
      %1359 = vmatpush2.bf16.xpose.msra.mxu0 0
      %1360 = vmatprep.subr.bf16.mxu0 0
      %1361 = vmatpush2.bf16.xpose.msra.mxu0 0
      %1362 = vmatprep.subr.bf16.mxu0 0
      %1363 = vmatpush2.bf16.xpose.msra.mxu0 0
      %1364 = vmatprep.subr.bf16.mxu0 0
      %1365 = vmatpush2.bf16.xpose.msra.mxu0 0
      %1366 = vmatprep.mubr.bf16.mxu0 0
      %1367 = vmatmul.mubr.bf16.gmra.mxu0 %v1329
      %v1368 = vpop.f32.mrf.mxu0
      %v1369 = vadd.f32 0.0, %v1368
      %v1370 = vpop.f32.mrf.mxu0
      %v1371 = vpop.f32.mrf.mxu0
      %v1372 = vpop.f32.mrf.mxu0
      %1373 = vdwg.mxu0
      %v1375 = vsel %vm1281, %v835, 0
      %v1378 = vsel %vm1281, %v1050, 0
      %1380 = vmatprep.subr.bf16.mxu0 0
      %1381 = vmatpush1.bf16.xpose.msra.mxu0 0
      %1382 = vmatprep.subr.bf16.mxu0 0
      %1383 = vmatpush1.bf16.xpose.msra.mxu0 0
      %1384 = vmatprep.subr.bf16.mxu0 0
      %1385 = vmatpush1.bf16.xpose.msra.mxu0 0
      %1386 = vmatprep.subr.bf16.mxu0 0
      %1387 = vmatpush1.bf16.xpose.msra.mxu0 0
      %1388 = vmatprep.subr.bf16.mxu0 0
      %1389 = vmatpush1.bf16.xpose.msra.mxu0 0
      %1390 = vmatprep.subr.bf16.mxu0 0
      %1391 = vmatpush1.bf16.xpose.msra.mxu0 0
      %1392 = vmatprep.subr.bf16.mxu0 0
      %1393 = vmatpush1.bf16.xpose.msra.mxu0 0
      %1394 = vmatprep.subr.bf16.mxu0 0
      %1395 = vmatpush1.bf16.xpose.msra.mxu0 %v1378
      %1396 = vmatprep.subr.bf16.mxu0 0
      %1397 = vmatpush2.bf16.xpose.msra.mxu0 0
      %1398 = vmatprep.subr.bf16.mxu0 0
      %1399 = vmatpush2.bf16.xpose.msra.mxu0 0
      %1400 = vmatprep.subr.bf16.mxu0 0
      %1401 = vmatpush2.bf16.xpose.msra.mxu0 0
      %1402 = vmatprep.subr.bf16.mxu0 0
      %1403 = vmatpush2.bf16.xpose.msra.mxu0 0
      %1404 = vmatprep.subr.bf16.mxu0 0
      %1405 = vmatpush2.bf16.xpose.msra.mxu0 0
      %1406 = vmatprep.subr.bf16.mxu0 0
      %1407 = vmatpush2.bf16.xpose.msra.mxu0 0
      %1408 = vmatprep.subr.bf16.mxu0 0
      %1409 = vmatpush2.bf16.xpose.msra.mxu0 0
      %1410 = vmatprep.subr.bf16.mxu0 0
      %1411 = vmatpush2.bf16.xpose.msra.mxu0 0
      %1412 = vmatprep.mubr.bf16.mxu0 0
      %1413 = vmatmul.mubr.bf16.gmra.mxu0 %v1375
      %v1414 = vpop.f32.mrf.mxu0
      %v1415 = vadd.f32 0.0, %v1414
      %v1416 = vpop.f32.mrf.mxu0
      %v1417 = vpop.f32.mrf.mxu0
      %v1418 = vpop.f32.mrf.mxu0
      %1419 = vdwg.mxu0
      %v1421 = vsel %vm1281, %v838, 0
      %v1424 = vsel %vm1281, %v1053, 0
      %1426 = vmatprep.subr.bf16.mxu0 0
      %1427 = vmatpush1.bf16.xpose.msra.mxu0 0
      %1428 = vmatprep.subr.bf16.mxu0 0
      %1429 = vmatpush1.bf16.xpose.msra.mxu0 0
      %1430 = vmatprep.subr.bf16.mxu0 0
      %1431 = vmatpush1.bf16.xpose.msra.mxu0 0
      %1432 = vmatprep.subr.bf16.mxu0 0
      %1433 = vmatpush1.bf16.xpose.msra.mxu0 0
      %1434 = vmatprep.subr.bf16.mxu0 0
      %1435 = vmatpush1.bf16.xpose.msra.mxu0 0
      %1436 = vmatprep.subr.bf16.mxu0 0
      %1437 = vmatpush1.bf16.xpose.msra.mxu0 0
      %1438 = vmatprep.subr.bf16.mxu0 0
      %1439 = vmatpush1.bf16.xpose.msra.mxu0 0
      %1440 = vmatprep.subr.bf16.mxu0 0
      %1441 = vmatpush1.bf16.xpose.msra.mxu0 %v1424
      %1442 = vmatprep.subr.bf16.mxu0 0
      %1443 = vmatpush2.bf16.xpose.msra.mxu0 0
      %1444 = vmatprep.subr.bf16.mxu0 0
      %1445 = vmatpush2.bf16.xpose.msra.mxu0 0
      %1446 = vmatprep.subr.bf16.mxu0 0
      %1447 = vmatpush2.bf16.xpose.msra.mxu0 0
      %1448 = vmatprep.subr.bf16.mxu0 0
      %1449 = vmatpush2.bf16.xpose.msra.mxu0 0
      %1450 = vmatprep.subr.bf16.mxu0 0
      %1451 = vmatpush2.bf16.xpose.msra.mxu0 0
      %1452 = vmatprep.subr.bf16.mxu0 0
      %1453 = vmatpush2.bf16.xpose.msra.mxu0 0
      %1454 = vmatprep.subr.bf16.mxu0 0
      %1455 = vmatpush2.bf16.xpose.msra.mxu0 0
      %1456 = vmatprep.subr.bf16.mxu0 0
      %1457 = vmatpush2.bf16.xpose.msra.mxu0 0
      %1458 = vmatprep.mubr.bf16.mxu0 0
      %1459 = vmatmul.mubr.bf16.gmra.mxu0 %v1421
      %v1460 = vpop.f32.mrf.mxu0
      %v1461 = vadd.f32 0.0, %v1460
      %v1462 = vpop.f32.mrf.mxu0
      %v1463 = vpop.f32.mrf.mxu0
      %v1464 = vpop.f32.mrf.mxu0
      %1465 = vdwg.mxu0
      %v1467 = vsel %vm1281, %v841, 0
      %v1470 = vsel %vm1281, %v1056, 0
      %1472 = vmatprep.subr.bf16.mxu0 0
      %1473 = vmatpush1.bf16.xpose.msra.mxu0 0
      %1474 = vmatprep.subr.bf16.mxu0 0
      %1475 = vmatpush1.bf16.xpose.msra.mxu0 0
      %1476 = vmatprep.subr.bf16.mxu0 0
      %1477 = vmatpush1.bf16.xpose.msra.mxu0 0
      %1478 = vmatprep.subr.bf16.mxu0 0
      %1479 = vmatpush1.bf16.xpose.msra.mxu0 0
      %1480 = vmatprep.subr.bf16.mxu0 0
      %1481 = vmatpush1.bf16.xpose.msra.mxu0 0
      %1482 = vmatprep.subr.bf16.mxu0 0
      %1483 = vmatpush1.bf16.xpose.msra.mxu0 0
      %1484 = vmatprep.subr.bf16.mxu0 0
      %1485 = vmatpush1.bf16.xpose.msra.mxu0 0
      %1486 = vmatprep.subr.bf16.mxu0 0
      %1487 = vmatpush1.bf16.xpose.msra.mxu0 %v1470
      %1488 = vmatprep.subr.bf16.mxu0 0
      %1489 = vmatpush2.bf16.xpose.msra.mxu0 0
      %1490 = vmatprep.subr.bf16.mxu0 0
      %1491 = vmatpush2.bf16.xpose.msra.mxu0 0
      %1492 = vmatprep.subr.bf16.mxu0 0
      %1493 = vmatpush2.bf16.xpose.msra.mxu0 0
      %1494 = vmatprep.subr.bf16.mxu0 0
      %1495 = vmatpush2.bf16.xpose.msra.mxu0 0
      %1496 = vmatprep.subr.bf16.mxu0 0
      %1497 = vmatpush2.bf16.xpose.msra.mxu0 0
      %1498 = vmatprep.subr.bf16.mxu0 0
      %1499 = vmatpush2.bf16.xpose.msra.mxu0 0
      %1500 = vmatprep.subr.bf16.mxu0 0
      %1501 = vmatpush2.bf16.xpose.msra.mxu0 0
      %1502 = vmatprep.subr.bf16.mxu0 0
      %1503 = vmatpush2.bf16.xpose.msra.mxu0 0
      %1504 = vmatprep.mubr.bf16.mxu0 0
      %1505 = vmatmul.mubr.bf16.gmra.mxu0 %v1467
      %v1506 = vpop.f32.mrf.mxu0
      %v1507 = vadd.f32 0.0, %v1506
      %v1508 = vpop.f32.mrf.mxu0
      %v1509 = vpop.f32.mrf.mxu0
      %v1510 = vpop.f32.mrf.mxu0
      %1511 = vdwg.mxu0
      %v1513 = vsel %vm1281, %v844, 0
      %v1516 = vsel %vm1281, %v1059, 0
      %1518 = vmatprep.subr.bf16.mxu0 0
      %1519 = vmatpush1.bf16.xpose.msra.mxu0 0
      %1520 = vmatprep.subr.bf16.mxu0 0
      %1521 = vmatpush1.bf16.xpose.msra.mxu0 0
      %1522 = vmatprep.subr.bf16.mxu0 0
      %1523 = vmatpush1.bf16.xpose.msra.mxu0 0
      %1524 = vmatprep.subr.bf16.mxu0 0
      %1525 = vmatpush1.bf16.xpose.msra.mxu0 0
      %1526 = vmatprep.subr.bf16.mxu0 0
      %1527 = vmatpush1.bf16.xpose.msra.mxu0 0
      %1528 = vmatprep.subr.bf16.mxu0 0
      %1529 = vmatpush1.bf16.xpose.msra.mxu0 0
      %1530 = vmatprep.subr.bf16.mxu0 0
      %1531 = vmatpush1.bf16.xpose.msra.mxu0 0
      %1532 = vmatprep.subr.bf16.mxu0 0
      %1533 = vmatpush1.bf16.xpose.msra.mxu0 %v1516
      %1534 = vmatprep.subr.bf16.mxu0 0
      %1535 = vmatpush2.bf16.xpose.msra.mxu0 0
      %1536 = vmatprep.subr.bf16.mxu0 0
      %1537 = vmatpush2.bf16.xpose.msra.mxu0 0
      %1538 = vmatprep.subr.bf16.mxu0 0
      %1539 = vmatpush2.bf16.xpose.msra.mxu0 0
      %1540 = vmatprep.subr.bf16.mxu0 0
      %1541 = vmatpush2.bf16.xpose.msra.mxu0 0
      %1542 = vmatprep.subr.bf16.mxu0 0
      %1543 = vmatpush2.bf16.xpose.msra.mxu0 0
      %1544 = vmatprep.subr.bf16.mxu0 0
      %1545 = vmatpush2.bf16.xpose.msra.mxu0 0
      %1546 = vmatprep.subr.bf16.mxu0 0
      %1547 = vmatpush2.bf16.xpose.msra.mxu0 0
      %1548 = vmatprep.subr.bf16.mxu0 0
      %1549 = vmatpush2.bf16.xpose.msra.mxu0 0
      %1550 = vmatprep.mubr.bf16.mxu0 0
      %1551 = vmatmul.mubr.bf16.gmra.mxu0 %v1513
      %v1552 = vpop.f32.mrf.mxu0
      %v1553 = vadd.f32 0.0, %v1552
      %v1554 = vpop.f32.mrf.mxu0
      %v1555 = vpop.f32.mrf.mxu0
      %v1556 = vpop.f32.mrf.mxu0
      %1557 = vdwg.mxu0
      %v1559 = vsel %vm1281, %v847, 0
      %v1562 = vsel %vm1281, %v1062, 0
      %1564 = vmatprep.subr.bf16.mxu0 0
      %1565 = vmatpush1.bf16.xpose.msra.mxu0 0
      %1566 = vmatprep.subr.bf16.mxu0 0
      %1567 = vmatpush1.bf16.xpose.msra.mxu0 0
      %1568 = vmatprep.subr.bf16.mxu0 0
      %1569 = vmatpush1.bf16.xpose.msra.mxu0 0
      %1570 = vmatprep.subr.bf16.mxu0 0
      %1571 = vmatpush1.bf16.xpose.msra.mxu0 0
      %1572 = vmatprep.subr.bf16.mxu0 0
      %1573 = vmatpush1.bf16.xpose.msra.mxu0 0
      %1574 = vmatprep.subr.bf16.mxu0 0
      %1575 = vmatpush1.bf16.xpose.msra.mxu0 0
      %1576 = vmatprep.subr.bf16.mxu0 0
      %1577 = vmatpush1.bf16.xpose.msra.mxu0 0
      %1578 = vmatprep.subr.bf16.mxu0 0
      %1579 = vmatpush1.bf16.xpose.msra.mxu0 %v1562
      %1580 = vmatprep.subr.bf16.mxu0 0
      %1581 = vmatpush2.bf16.xpose.msra.mxu0 0
      %1582 = vmatprep.subr.bf16.mxu0 0
      %1583 = vmatpush2.bf16.xpose.msra.mxu0 0
      %1584 = vmatprep.subr.bf16.mxu0 0
      %1585 = vmatpush2.bf16.xpose.msra.mxu0 0
      %1586 = vmatprep.subr.bf16.mxu0 0
      %1587 = vmatpush2.bf16.xpose.msra.mxu0 0
      %1588 = vmatprep.subr.bf16.mxu0 0
      %1589 = vmatpush2.bf16.xpose.msra.mxu0 0
      %1590 = vmatprep.subr.bf16.mxu0 0
      %1591 = vmatpush2.bf16.xpose.msra.mxu0 0
      %1592 = vmatprep.subr.bf16.mxu0 0
      %1593 = vmatpush2.bf16.xpose.msra.mxu0 0
      %1594 = vmatprep.subr.bf16.mxu0 0
      %1595 = vmatpush2.bf16.xpose.msra.mxu0 0
      %1596 = vmatprep.mubr.bf16.mxu0 0
      %1597 = vmatmul.mubr.bf16.gmra.mxu0 %v1559
      %v1598 = vpop.f32.mrf.mxu0
      %v1599 = vadd.f32 0.0, %v1598
      %v1600 = vpop.f32.mrf.mxu0
      %v1601 = vpop.f32.mrf.mxu0
      %v1602 = vpop.f32.mrf.mxu0
      %1603 = vdwg.mxu0
      %v1605 = vsel %vm1281, %v850, 0
      %v1608 = vsel %vm1281, %v1065, 0
      %1610 = vmatprep.subr.bf16.mxu0 0
      %1611 = vmatpush1.bf16.xpose.msra.mxu0 0
      %1612 = vmatprep.subr.bf16.mxu0 0
      %1613 = vmatpush1.bf16.xpose.msra.mxu0 0
      %1614 = vmatprep.subr.bf16.mxu0 0
      %1615 = vmatpush1.bf16.xpose.msra.mxu0 0
      %1616 = vmatprep.subr.bf16.mxu0 0
      %1617 = vmatpush1.bf16.xpose.msra.mxu0 0
      %1618 = vmatprep.subr.bf16.mxu0 0
      %1619 = vmatpush1.bf16.xpose.msra.mxu0 0
      %1620 = vmatprep.subr.bf16.mxu0 0
      %1621 = vmatpush1.bf16.xpose.msra.mxu0 0
      %1622 = vmatprep.subr.bf16.mxu0 0
      %1623 = vmatpush1.bf16.xpose.msra.mxu0 0
      %1624 = vmatprep.subr.bf16.mxu0 0
      %1625 = vmatpush1.bf16.xpose.msra.mxu0 %v1608
      %1626 = vmatprep.subr.bf16.mxu0 0
      %1627 = vmatpush2.bf16.xpose.msra.mxu0 0
      %1628 = vmatprep.subr.bf16.mxu0 0
      %1629 = vmatpush2.bf16.xpose.msra.mxu0 0
      %1630 = vmatprep.subr.bf16.mxu0 0
      %1631 = vmatpush2.bf16.xpose.msra.mxu0 0
      %1632 = vmatprep.subr.bf16.mxu0 0
      %1633 = vmatpush2.bf16.xpose.msra.mxu0 0
      %1634 = vmatprep.subr.bf16.mxu0 0
      %1635 = vmatpush2.bf16.xpose.msra.mxu0 0
      %1636 = vmatprep.subr.bf16.mxu0 0
      %1637 = vmatpush2.bf16.xpose.msra.mxu0 0
      %1638 = vmatprep.subr.bf16.mxu0 0
      %1639 = vmatpush2.bf16.xpose.msra.mxu0 0
      %1640 = vmatprep.subr.bf16.mxu0 0
      %1641 = vmatpush2.bf16.xpose.msra.mxu0 0
      %1642 = vmatprep.mubr.bf16.mxu0 0
      %1643 = vmatmul.mubr.bf16.gmra.mxu0 %v1605
      %v1644 = vpop.f32.mrf.mxu0
      %v1645 = vadd.f32 0.0, %v1644
      %v1646 = vpop.f32.mrf.mxu0
      %v1647 = vpop.f32.mrf.mxu0
      %v1648 = vpop.f32.mrf.mxu0
      %1649 = vdwg.mxu0
      %v1650 = vmul.f32 %v1323, 0.25
      %v1651 = vmul.f32 %v1369, 0.25
      %v1652 = vmul.f32 %v1415, 0.25
      %v1653 = vmul.f32 %v1461, 0.25
      %v1654 = vmul.f32 %v1507, 0.25
      %v1655 = vmul.f32 %v1553, 0.25
      %v1656 = vmul.f32 %v1599, 0.25
      %v1657 = vmul.f32 %v1645, 0.25
      %vm1658 = vcmask 64512
      %v1659 = vsel %vm1658, %v1650, -inf
      %1660 = vmax.xlane.f32.xlu0 %v1659
      %v1661 = vpop.xlane.xlu0 %1660
      %v1662 = vsel %vm1658, %v1651, -inf
      %1663 = vmax.xlane.f32.xlu0 %v1662
      %v1664 = vpop.xlane.xlu0 %1663
      %v1665 = vsel %vm1658, %v1652, -inf
      %1666 = vmax.xlane.f32.xlu0 %v1665
      %v1667 = vpop.xlane.xlu0 %1666
      %v1668 = vsel %vm1658, %v1653, -inf
      %1669 = vmax.xlane.f32.xlu0 %v1668
      %v1670 = vpop.xlane.xlu0 %1669
      %v1671 = vsel %vm1658, %v1654, -inf
      %1672 = vmax.xlane.f32.xlu0 %v1671
      %v1673 = vpop.xlane.xlu0 %1672
      %v1674 = vsel %vm1658, %v1655, -inf
      %1675 = vmax.xlane.f32.xlu0 %v1674
      %v1676 = vpop.xlane.xlu0 %1675
      %v1677 = vsel %vm1658, %v1656, -inf
      %1678 = vmax.xlane.f32.xlu0 %v1677
      %v1679 = vpop.xlane.xlu0 %1678
      %v1680 = vsel %vm1658, %v1657, -inf
      %1681 = vmax.xlane.f32.xlu0 %v1680
      %v1682 = vpop.xlane.xlu0 %1681
      %v1683 = vsub.f32 %v1650, %v1661
      %v1684 = vsub.f32 %v1651, %v1664
      %v1685 = vsub.f32 %v1652, %v1667
      %v1686 = vsub.f32 %v1653, %v1670
      %v1687 = vsub.f32 %v1654, %v1673
      %v1688 = vsub.f32 %v1655, %v1676
      %v1689 = vsub.f32 %v1656, %v1679
      %v1690 = vsub.f32 %v1657, %v1682
      %v1691 = vmul.f32 %v1683, 1.442695
      %v1692 = vpow.pop %v1691
      %v1693 = vmul.f32 %v1684, 1.442695
      %v1694 = vpow.pop %v1693
      %v1695 = vmul.f32 %v1685, 1.442695
      %v1696 = vpow.pop %v1695
      %v1697 = vmul.f32 %v1686, 1.442695
      %v1698 = vpow.pop %v1697
      %v1699 = vmul.f32 %v1687, 1.442695
      %v1700 = vpow.pop %v1699
      %v1701 = vmul.f32 %v1688, 1.442695
      %v1702 = vpow.pop %v1701
      %v1703 = vmul.f32 %v1689, 1.442695
      %v1704 = vpow.pop %v1703
      %v1705 = vmul.f32 %v1690, 1.442695
      %v1706 = vpow.pop %v1705
      %v1707 = vsel %vm1658, %v1692, 0.0
      %1708 = vadd.xlane.f32.xlu0 %v1707
      %v1709 = vpop.xlane.xlu0 %1708
      %v1710 = vsel %vm1658, %v1694, 0.0
      %1711 = vadd.xlane.f32.xlu0 %v1710
      %v1712 = vpop.xlane.xlu0 %1711
      %v1713 = vsel %vm1658, %v1696, 0.0
      %1714 = vadd.xlane.f32.xlu0 %v1713
      %v1715 = vpop.xlane.xlu0 %1714
      %v1716 = vsel %vm1658, %v1698, 0.0
      %1717 = vadd.xlane.f32.xlu0 %v1716
      %v1718 = vpop.xlane.xlu0 %1717
      %v1719 = vsel %vm1658, %v1700, 0.0
      %1720 = vadd.xlane.f32.xlu0 %v1719
      %v1721 = vpop.xlane.xlu0 %1720
      %v1722 = vsel %vm1658, %v1702, 0.0
      %1723 = vadd.xlane.f32.xlu0 %v1722
      %v1724 = vpop.xlane.xlu0 %1723
      %v1725 = vsel %vm1658, %v1704, 0.0
      %1726 = vadd.xlane.f32.xlu0 %v1725
      %v1727 = vpop.xlane.xlu0 %1726
      %v1728 = vsel %vm1658, %v1706, 0.0
      %1729 = vadd.xlane.f32.xlu0 %v1728
      %v1730 = vpop.xlane.xlu0 %1729
      %v1731 = vrcp.pop %v1709
      %v1732 = vrcp.pop %v1712
      %v1733 = vrcp.pop %v1715
      %v1734 = vrcp.pop %v1718
      %v1735 = vrcp.pop %v1721
      %v1736 = vrcp.pop %v1724
      %v1737 = vrcp.pop %v1727
      %v1738 = vrcp.pop %v1730
      %v1739 = vmul.f32 %v1692, %v1731
      %v1740 = vmul.f32 %v1694, %v1732
      %v1741 = vmul.f32 %v1696, %v1733
      %v1742 = vmul.f32 %v1698, %v1734
      %v1743 = vmul.f32 %v1700, %v1735
      %v1744 = vmul.f32 %v1702, %v1736
      %v1745 = vmul.f32 %v1704, %v1737
      %v1746 = vmul.f32 %v1706, %v1738
      %v1747 = vpack.c.bf16 %v1739, %v1739
      %v1748 = vpack.c.bf16 %v1740, %v1740
      %v1749 = vpack.c.bf16 %v1741, %v1741
      %v1750 = vpack.c.bf16 %v1742, %v1742
      %v1751 = vpack.c.bf16 %v1743, %v1743
      %v1752 = vpack.c.bf16 %v1744, %v1744
      %v1753 = vpack.c.bf16 %v1745, %v1745
      %v1754 = vpack.c.bf16 %v1746, %v1746
      %v1756 = vsel %vm1658, %v1747, 0
      %vm1758 = vcmask 1043456
      %v1760 = vsel %vm1758, %v1259, 0
      %1762 = vmatprep.subr.bf16.mxu0 0
      %1763 = vmatpush1.bf16.msra.mxu0 0
      %1764 = vmatprep.subr.bf16.mxu0 0
      %1765 = vmatpush1.bf16.msra.mxu0 0
      %1766 = vmatprep.subr.bf16.mxu0 0
      %1767 = vmatpush1.bf16.msra.mxu0 0
      %1768 = vmatprep.subr.bf16.mxu0 0
      %1769 = vmatpush1.bf16.msra.mxu0 0
      %1770 = vmatprep.subr.bf16.mxu0 0
      %1771 = vmatpush1.bf16.msra.mxu0 0
      %1772 = vmatprep.subr.bf16.mxu0 0
      %1773 = vmatpush1.bf16.msra.mxu0 0
      %1774 = vmatprep.subr.bf16.mxu0 0
      %1775 = vmatpush1.bf16.msra.mxu0 0
      %1776 = vmatprep.subr.bf16.mxu0 0
      %1777 = vmatpush1.bf16.msra.mxu0 %v1760
      %1778 = vmatprep.subr.bf16.mxu0 0
      %1779 = vmatpush2.bf16.msra.mxu0 0
      %1780 = vmatprep.subr.bf16.mxu0 0
      %1781 = vmatpush2.bf16.msra.mxu0 0
      %1782 = vmatprep.subr.bf16.mxu0 0
      %1783 = vmatpush2.bf16.msra.mxu0 0
      %1784 = vmatprep.subr.bf16.mxu0 0
      %1785 = vmatpush2.bf16.msra.mxu0 0
      %1786 = vmatprep.subr.bf16.mxu0 0
      %1787 = vmatpush2.bf16.msra.mxu0 0
      %1788 = vmatprep.subr.bf16.mxu0 0
      %1789 = vmatpush2.bf16.msra.mxu0 0
      %1790 = vmatprep.subr.bf16.mxu0 0
      %1791 = vmatpush2.bf16.msra.mxu0 0
      %1792 = vmatprep.subr.bf16.mxu0 0
      %1793 = vmatpush2.bf16.msra.mxu0 0
      %1794 = vmatprep.mubr.bf16.mxu0 0
      %1795 = vmatmul.mubr.bf16.gmra.mxu0 %v1756
      %v1796 = vpop.f32.mrf.mxu0
      %v1797 = vadd.f32 0.0, %v1796
      %v1798 = vpop.f32.mrf.mxu0
      %v1799 = vpop.f32.mrf.mxu0
      %v1800 = vpop.f32.mrf.mxu0
      %1801 = vdwg.mxu0
      %v1803 = vsel %vm1658, %v1748, 0
      %v1806 = vsel %vm1758, %v1262, 0
      %1808 = vmatprep.subr.bf16.mxu0 0
      %1809 = vmatpush1.bf16.msra.mxu0 0
      %1810 = vmatprep.subr.bf16.mxu0 0
      %1811 = vmatpush1.bf16.msra.mxu0 0
      %1812 = vmatprep.subr.bf16.mxu0 0
      %1813 = vmatpush1.bf16.msra.mxu0 0
      %1814 = vmatprep.subr.bf16.mxu0 0
      %1815 = vmatpush1.bf16.msra.mxu0 0
      %1816 = vmatprep.subr.bf16.mxu0 0
      %1817 = vmatpush1.bf16.msra.mxu0 0
      %1818 = vmatprep.subr.bf16.mxu0 0
      %1819 = vmatpush1.bf16.msra.mxu0 0
      %1820 = vmatprep.subr.bf16.mxu0 0
      %1821 = vmatpush1.bf16.msra.mxu0 0
      %1822 = vmatprep.subr.bf16.mxu0 0
      %1823 = vmatpush1.bf16.msra.mxu0 %v1806
      %1824 = vmatprep.subr.bf16.mxu0 0
      %1825 = vmatpush2.bf16.msra.mxu0 0
      %1826 = vmatprep.subr.bf16.mxu0 0
      %1827 = vmatpush2.bf16.msra.mxu0 0
      %1828 = vmatprep.subr.bf16.mxu0 0
      %1829 = vmatpush2.bf16.msra.mxu0 0
      %1830 = vmatprep.subr.bf16.mxu0 0
      %1831 = vmatpush2.bf16.msra.mxu0 0
      %1832 = vmatprep.subr.bf16.mxu0 0
      %1833 = vmatpush2.bf16.msra.mxu0 0
      %1834 = vmatprep.subr.bf16.mxu0 0
      %1835 = vmatpush2.bf16.msra.mxu0 0
      %1836 = vmatprep.subr.bf16.mxu0 0
      %1837 = vmatpush2.bf16.msra.mxu0 0
      %1838 = vmatprep.subr.bf16.mxu0 0
      %1839 = vmatpush2.bf16.msra.mxu0 0
      %1840 = vmatprep.mubr.bf16.mxu0 0
      %1841 = vmatmul.mubr.bf16.gmra.mxu0 %v1803
      %v1842 = vpop.f32.mrf.mxu0
      %v1843 = vadd.f32 0.0, %v1842
      %v1844 = vpop.f32.mrf.mxu0
      %v1845 = vpop.f32.mrf.mxu0
      %v1846 = vpop.f32.mrf.mxu0
      %1847 = vdwg.mxu0
      %v1849 = vsel %vm1658, %v1749, 0
      %v1852 = vsel %vm1758, %v1265, 0
      %1854 = vmatprep.subr.bf16.mxu0 0
      %1855 = vmatpush1.bf16.msra.mxu0 0
      %1856 = vmatprep.subr.bf16.mxu0 0
      %1857 = vmatpush1.bf16.msra.mxu0 0
      %1858 = vmatprep.subr.bf16.mxu0 0
      %1859 = vmatpush1.bf16.msra.mxu0 0
      %1860 = vmatprep.subr.bf16.mxu0 0
      %1861 = vmatpush1.bf16.msra.mxu0 0
      %1862 = vmatprep.subr.bf16.mxu0 0
      %1863 = vmatpush1.bf16.msra.mxu0 0
      %1864 = vmatprep.subr.bf16.mxu0 0
      %1865 = vmatpush1.bf16.msra.mxu0 0
      %1866 = vmatprep.subr.bf16.mxu0 0
      %1867 = vmatpush1.bf16.msra.mxu0 0
      %1868 = vmatprep.subr.bf16.mxu0 0
      %1869 = vmatpush1.bf16.msra.mxu0 %v1852
      %1870 = vmatprep.subr.bf16.mxu0 0
      %1871 = vmatpush2.bf16.msra.mxu0 0
      %1872 = vmatprep.subr.bf16.mxu0 0
      %1873 = vmatpush2.bf16.msra.mxu0 0
      %1874 = vmatprep.subr.bf16.mxu0 0
      %1875 = vmatpush2.bf16.msra.mxu0 0
      %1876 = vmatprep.subr.bf16.mxu0 0
      %1877 = vmatpush2.bf16.msra.mxu0 0
      %1878 = vmatprep.subr.bf16.mxu0 0
      %1879 = vmatpush2.bf16.msra.mxu0 0
      %1880 = vmatprep.subr.bf16.mxu0 0
      %1881 = vmatpush2.bf16.msra.mxu0 0
      %1882 = vmatprep.subr.bf16.mxu0 0
      %1883 = vmatpush2.bf16.msra.mxu0 0
      %1884 = vmatprep.subr.bf16.mxu0 0
      %1885 = vmatpush2.bf16.msra.mxu0 0
      %1886 = vmatprep.mubr.bf16.mxu0 0
      %1887 = vmatmul.mubr.bf16.gmra.mxu0 %v1849
      %v1888 = vpop.f32.mrf.mxu0
      %v1889 = vadd.f32 0.0, %v1888
      %v1890 = vpop.f32.mrf.mxu0
      %v1891 = vpop.f32.mrf.mxu0
      %v1892 = vpop.f32.mrf.mxu0
      %1893 = vdwg.mxu0
      %v1895 = vsel %vm1658, %v1750, 0
      %v1898 = vsel %vm1758, %v1268, 0
      %1900 = vmatprep.subr.bf16.mxu0 0
      %1901 = vmatpush1.bf16.msra.mxu0 0
      %1902 = vmatprep.subr.bf16.mxu0 0
      %1903 = vmatpush1.bf16.msra.mxu0 0
      %1904 = vmatprep.subr.bf16.mxu0 0
      %1905 = vmatpush1.bf16.msra.mxu0 0
      %1906 = vmatprep.subr.bf16.mxu0 0
      %1907 = vmatpush1.bf16.msra.mxu0 0
      %1908 = vmatprep.subr.bf16.mxu0 0
      %1909 = vmatpush1.bf16.msra.mxu0 0
      %1910 = vmatprep.subr.bf16.mxu0 0
      %1911 = vmatpush1.bf16.msra.mxu0 0
      %1912 = vmatprep.subr.bf16.mxu0 0
      %1913 = vmatpush1.bf16.msra.mxu0 0
      %1914 = vmatprep.subr.bf16.mxu0 0
      %1915 = vmatpush1.bf16.msra.mxu0 %v1898
      %1916 = vmatprep.subr.bf16.mxu0 0
      %1917 = vmatpush2.bf16.msra.mxu0 0
      %1918 = vmatprep.subr.bf16.mxu0 0
      %1919 = vmatpush2.bf16.msra.mxu0 0
      %1920 = vmatprep.subr.bf16.mxu0 0
      %1921 = vmatpush2.bf16.msra.mxu0 0
      %1922 = vmatprep.subr.bf16.mxu0 0
      %1923 = vmatpush2.bf16.msra.mxu0 0
      %1924 = vmatprep.subr.bf16.mxu0 0
      %1925 = vmatpush2.bf16.msra.mxu0 0
      %1926 = vmatprep.subr.bf16.mxu0 0
      %1927 = vmatpush2.bf16.msra.mxu0 0
      %1928 = vmatprep.subr.bf16.mxu0 0
      %1929 = vmatpush2.bf16.msra.mxu0 0
      %1930 = vmatprep.subr.bf16.mxu0 0
      %1931 = vmatpush2.bf16.msra.mxu0 0
      %1932 = vmatprep.mubr.bf16.mxu0 0
      %1933 = vmatmul.mubr.bf16.gmra.mxu0 %v1895
      %v1934 = vpop.f32.mrf.mxu0
      %v1935 = vadd.f32 0.0, %v1934
      %v1936 = vpop.f32.mrf.mxu0
      %v1937 = vpop.f32.mrf.mxu0
      %v1938 = vpop.f32.mrf.mxu0
      %1939 = vdwg.mxu0
      %v1941 = vsel %vm1658, %v1751, 0
      %v1944 = vsel %vm1758, %v1271, 0
      %1946 = vmatprep.subr.bf16.mxu0 0
      %1947 = vmatpush1.bf16.msra.mxu0 0
      %1948 = vmatprep.subr.bf16.mxu0 0
      %1949 = vmatpush1.bf16.msra.mxu0 0
      %1950 = vmatprep.subr.bf16.mxu0 0
      %1951 = vmatpush1.bf16.msra.mxu0 0
      %1952 = vmatprep.subr.bf16.mxu0 0
      %1953 = vmatpush1.bf16.msra.mxu0 0
      %1954 = vmatprep.subr.bf16.mxu0 0
      %1955 = vmatpush1.bf16.msra.mxu0 0
      %1956 = vmatprep.subr.bf16.mxu0 0
      %1957 = vmatpush1.bf16.msra.mxu0 0
      %1958 = vmatprep.subr.bf16.mxu0 0
      %1959 = vmatpush1.bf16.msra.mxu0 0
      %1960 = vmatprep.subr.bf16.mxu0 0
      %1961 = vmatpush1.bf16.msra.mxu0 %v1944
      %1962 = vmatprep.subr.bf16.mxu0 0
      %1963 = vmatpush2.bf16.msra.mxu0 0
      %1964 = vmatprep.subr.bf16.mxu0 0
      %1965 = vmatpush2.bf16.msra.mxu0 0
      %1966 = vmatprep.subr.bf16.mxu0 0
      %1967 = vmatpush2.bf16.msra.mxu0 0
      %1968 = vmatprep.subr.bf16.mxu0 0
      %1969 = vmatpush2.bf16.msra.mxu0 0
      %1970 = vmatprep.subr.bf16.mxu0 0
      %1971 = vmatpush2.bf16.msra.mxu0 0
      %1972 = vmatprep.subr.bf16.mxu0 0
      %1973 = vmatpush2.bf16.msra.mxu0 0
      %1974 = vmatprep.subr.bf16.mxu0 0
      %1975 = vmatpush2.bf16.msra.mxu0 0
      %1976 = vmatprep.subr.bf16.mxu0 0
      %1977 = vmatpush2.bf16.msra.mxu0 0
      %1978 = vmatprep.mubr.bf16.mxu0 0
      %1979 = vmatmul.mubr.bf16.gmra.mxu0 %v1941
      %v1980 = vpop.f32.mrf.mxu0
      %v1981 = vadd.f32 0.0, %v1980
      %v1982 = vpop.f32.mrf.mxu0
      %v1983 = vpop.f32.mrf.mxu0
      %v1984 = vpop.f32.mrf.mxu0
      %1985 = vdwg.mxu0
      %v1987 = vsel %vm1658, %v1752, 0
      %v1990 = vsel %vm1758, %v1274, 0
      %1992 = vmatprep.subr.bf16.mxu0 0
      %1993 = vmatpush1.bf16.msra.mxu0 0
      %1994 = vmatprep.subr.bf16.mxu0 0
      %1995 = vmatpush1.bf16.msra.mxu0 0
      %1996 = vmatprep.subr.bf16.mxu0 0
      %1997 = vmatpush1.bf16.msra.mxu0 0
      %1998 = vmatprep.subr.bf16.mxu0 0
      %1999 = vmatpush1.bf16.msra.mxu0 0
      %2000 = vmatprep.subr.bf16.mxu0 0
      %2001 = vmatpush1.bf16.msra.mxu0 0
      %2002 = vmatprep.subr.bf16.mxu0 0
      %2003 = vmatpush1.bf16.msra.mxu0 0
      %2004 = vmatprep.subr.bf16.mxu0 0
      %2005 = vmatpush1.bf16.msra.mxu0 0
      %2006 = vmatprep.subr.bf16.mxu0 0
      %2007 = vmatpush1.bf16.msra.mxu0 %v1990
      %2008 = vmatprep.subr.bf16.mxu0 0
      %2009 = vmatpush2.bf16.msra.mxu0 0
      %2010 = vmatprep.subr.bf16.mxu0 0
      %2011 = vmatpush2.bf16.msra.mxu0 0
      %2012 = vmatprep.subr.bf16.mxu0 0
      %2013 = vmatpush2.bf16.msra.mxu0 0
      %2014 = vmatprep.subr.bf16.mxu0 0
      %2015 = vmatpush2.bf16.msra.mxu0 0
      %2016 = vmatprep.subr.bf16.mxu0 0
      %2017 = vmatpush2.bf16.msra.mxu0 0
      %2018 = vmatprep.subr.bf16.mxu0 0
      %2019 = vmatpush2.bf16.msra.mxu0 0
      %2020 = vmatprep.subr.bf16.mxu0 0
      %2021 = vmatpush2.bf16.msra.mxu0 0
      %2022 = vmatprep.subr.bf16.mxu0 0
      %2023 = vmatpush2.bf16.msra.mxu0 0
      %2024 = vmatprep.mubr.bf16.mxu0 0
      %2025 = vmatmul.mubr.bf16.gmra.mxu0 %v1987
      %v2026 = vpop.f32.mrf.mxu0
      %v2027 = vadd.f32 0.0, %v2026
      %v2028 = vpop.f32.mrf.mxu0
      %v2029 = vpop.f32.mrf.mxu0
      %v2030 = vpop.f32.mrf.mxu0
      %2031 = vdwg.mxu0
      %v2033 = vsel %vm1658, %v1753, 0
      %v2036 = vsel %vm1758, %v1277, 0
      %2038 = vmatprep.subr.bf16.mxu0 0
      %2039 = vmatpush1.bf16.msra.mxu0 0
      %2040 = vmatprep.subr.bf16.mxu0 0
      %2041 = vmatpush1.bf16.msra.mxu0 0
      %2042 = vmatprep.subr.bf16.mxu0 0
      %2043 = vmatpush1.bf16.msra.mxu0 0
      %2044 = vmatprep.subr.bf16.mxu0 0
      %2045 = vmatpush1.bf16.msra.mxu0 0
      %2046 = vmatprep.subr.bf16.mxu0 0
      %2047 = vmatpush1.bf16.msra.mxu0 0
      %2048 = vmatprep.subr.bf16.mxu0 0
      %2049 = vmatpush1.bf16.msra.mxu0 0
      %2050 = vmatprep.subr.bf16.mxu0 0
      %2051 = vmatpush1.bf16.msra.mxu0 0
      %2052 = vmatprep.subr.bf16.mxu0 0
      %2053 = vmatpush1.bf16.msra.mxu0 %v2036
      %2054 = vmatprep.subr.bf16.mxu0 0
      %2055 = vmatpush2.bf16.msra.mxu0 0
      %2056 = vmatprep.subr.bf16.mxu0 0
      %2057 = vmatpush2.bf16.msra.mxu0 0
      %2058 = vmatprep.subr.bf16.mxu0 0
      %2059 = vmatpush2.bf16.msra.mxu0 0
      %2060 = vmatprep.subr.bf16.mxu0 0
      %2061 = vmatpush2.bf16.msra.mxu0 0
      %2062 = vmatprep.subr.bf16.mxu0 0
      %2063 = vmatpush2.bf16.msra.mxu0 0
      %2064 = vmatprep.subr.bf16.mxu0 0
      %2065 = vmatpush2.bf16.msra.mxu0 0
      %2066 = vmatprep.subr.bf16.mxu0 0
      %2067 = vmatpush2.bf16.msra.mxu0 0
      %2068 = vmatprep.subr.bf16.mxu0 0
      %2069 = vmatpush2.bf16.msra.mxu0 0
      %2070 = vmatprep.mubr.bf16.mxu0 0
      %2071 = vmatmul.mubr.bf16.gmra.mxu0 %v2033
      %v2072 = vpop.f32.mrf.mxu0
      %v2073 = vadd.f32 0.0, %v2072
      %v2074 = vpop.f32.mrf.mxu0
      %v2075 = vpop.f32.mrf.mxu0
      %v2076 = vpop.f32.mrf.mxu0
      %2077 = vdwg.mxu0
      %v2079 = vsel %vm1658, %v1754, 0
      %v2082 = vsel %vm1758, %v1280, 0
      %2084 = vmatprep.subr.bf16.mxu0 0
      %2085 = vmatpush1.bf16.msra.mxu0 0
      %2086 = vmatprep.subr.bf16.mxu0 0
      %2087 = vmatpush1.bf16.msra.mxu0 0
      %2088 = vmatprep.subr.bf16.mxu0 0
      %2089 = vmatpush1.bf16.msra.mxu0 0
      %2090 = vmatprep.subr.bf16.mxu0 0
      %2091 = vmatpush1.bf16.msra.mxu0 0
      %2092 = vmatprep.subr.bf16.mxu0 0
      %2093 = vmatpush1.bf16.msra.mxu0 0
      %2094 = vmatprep.subr.bf16.mxu0 0
      %2095 = vmatpush1.bf16.msra.mxu0 0
      %2096 = vmatprep.subr.bf16.mxu0 0
      %2097 = vmatpush1.bf16.msra.mxu0 0
      %2098 = vmatprep.subr.bf16.mxu0 0
      %2099 = vmatpush1.bf16.msra.mxu0 %v2082
      %2100 = vmatprep.subr.bf16.mxu0 0
      %2101 = vmatpush2.bf16.msra.mxu0 0
      %2102 = vmatprep.subr.bf16.mxu0 0
      %2103 = vmatpush2.bf16.msra.mxu0 0
      %2104 = vmatprep.subr.bf16.mxu0 0
      %2105 = vmatpush2.bf16.msra.mxu0 0
      %2106 = vmatprep.subr.bf16.mxu0 0
      %2107 = vmatpush2.bf16.msra.mxu0 0
      %2108 = vmatprep.subr.bf16.mxu0 0
      %2109 = vmatpush2.bf16.msra.mxu0 0
      %2110 = vmatprep.subr.bf16.mxu0 0
      %2111 = vmatpush2.bf16.msra.mxu0 0
      %2112 = vmatprep.subr.bf16.mxu0 0
      %2113 = vmatpush2.bf16.msra.mxu0 0
      %2114 = vmatprep.subr.bf16.mxu0 0
      %2115 = vmatpush2.bf16.msra.mxu0 0
      %2116 = vmatprep.mubr.bf16.mxu0 0
      %2117 = vmatmul.mubr.bf16.gmra.mxu0 %v2079
      %v2118 = vpop.f32.mrf.mxu0
      %v2119 = vadd.f32 0.0, %v2118
      %v2120 = vpop.f32.mrf.mxu0
      %v2121 = vpop.f32.mrf.mxu0
      %v2122 = vpop.f32.mrf.mxu0
      %2123 = vdwg.mxu0
      %v2124 = vpack.c.bf16 %v1797, %v1797
      %v2125 = vpack.c.bf16 %v1843, %v1843
      %v2126 = vpack.c.bf16 %v1889, %v1889
      %v2127 = vpack.c.bf16 %v1935, %v1935
      %v2128 = vpack.c.bf16 %v1981, %v1981
      %v2129 = vpack.c.bf16 %v2027, %v2027
      %v2130 = vpack.c.bf16 %v2073, %v2073
      %v2131 = vpack.c.bf16 %v2119, %v2119
      %v2132 = vcombine.low %v2124, %v2128
      %v2134 = vunpack.c.l.s4 1983009808
      %v2135 = vunpack.c.0.s8 %v2134
      %v2136 = vlaneseq
      %v2137 = vshrl.u32 %v2136, 7
      %v2138 = vsub.s32 %v2135, %v2137
      %v2139 = vrot.slane %v2132, %v2138
      %v2140 = vcombine.low %v2126, %v2130
      %v2142 = vunpack.c.l.s4 1983009808
      %v2143 = vunpack.c.0.s8 %v2142
      %v2144 = vlaneseq
      %v2145 = vshrl.u32 %v2144, 7
      %v2146 = vsub.s32 %v2143, %v2145
      %v2147 = vrot.slane %v2140, %v2146
      %v2148 = vcombine.low %v2139, %v2147
      %v2149 = vcombine.high %v2139, %v2147
      %v2151 = vunpack.c.l.s4 1934713408
      %v2152 = vunpack.c.0.s8 %v2151
      %v2153 = vlaneseq
      %v2154 = vshrl.u32 %v2153, 7
      %v2155 = vsub.s32 %v2152, %v2154
      %v2156 = vrot.slane %v2148, %v2155
      %v2158 = vunpack.c.l.s4 1934713408
      %v2159 = vunpack.c.0.s8 %v2158
      %v2160 = vlaneseq
      %v2161 = vshrl.u32 %v2160, 7
      %v2162 = vsub.s32 %v2159, %v2161
      %v2163 = vrot.slane %v2149, %v2162
      %v2164 = vcombine.high %v2156, 0
      %v2165 = vcombine.high %v2163, 0
      %v2166 = vcombine.low %v2125, %v2129
      %v2168 = vunpack.c.l.s4 1983009808
      %v2169 = vunpack.c.0.s8 %v2168
      %v2170 = vlaneseq
      %v2171 = vshrl.u32 %v2170, 7
      %v2172 = vsub.s32 %v2169, %v2171
      %v2173 = vrot.slane %v2166, %v2172
      %v2174 = vcombine.low %v2127, %v2131
      %v2176 = vunpack.c.l.s4 1983009808
      %v2177 = vunpack.c.0.s8 %v2176
      %v2178 = vlaneseq
      %v2179 = vshrl.u32 %v2178, 7
      %v2180 = vsub.s32 %v2177, %v2179
      %v2181 = vrot.slane %v2174, %v2180
      %v2182 = vcombine.low %v2173, %v2181
      %v2183 = vcombine.high %v2173, %v2181
      %v2185 = vunpack.c.l.s4 1934713408
      %v2186 = vunpack.c.0.s8 %v2185
      %v2187 = vlaneseq
      %v2188 = vshrl.u32 %v2187, 7
      %v2189 = vsub.s32 %v2186, %v2188
      %v2190 = vrot.slane %v2182, %v2189
      %v2192 = vunpack.c.l.s4 1934713408
      %v2193 = vunpack.c.0.s8 %v2192
      %v2194 = vlaneseq
      %v2195 = vshrl.u32 %v2194, 7
      %v2196 = vsub.s32 %v2193, %v2195
      %v2197 = vrot.slane %v2183, %v2196
      %v2198 = vcombine.high %v2190, 0
      %v2199 = vcombine.high %v2197, 0
      %v2202 = vpack.i.b16 %v2190, %v2156
      %v2204 = vshrl.u32 %v2156, 16
      %v2205 = vshrl.u32 %v2190, 16
      %v2206 = vpack.i.b16 %v2205, %v2204
      %v2210 = vpack.i.b16 %v2198, %v2164
      %v2212 = vshrl.u32 %v2164, 16
      %v2213 = vshrl.u32 %v2198, 16
      %v2214 = vpack.i.b16 %v2213, %v2212
      %v2218 = vpack.i.b16 %v2197, %v2163
      %v2220 = vshrl.u32 %v2163, 16
      %v2221 = vshrl.u32 %v2197, 16
      %v2222 = vpack.i.b16 %v2221, %v2220
      %v2226 = vpack.i.b16 %v2199, %v2165
      %v2228 = vshrl.u32 %v2165, 16
      %v2229 = vshrl.u32 %v2199, 16
      %v2230 = vpack.i.b16 %v2229, %v2228
      %v2232 = vcombine.low %v2202, %v2218
      %v2234 = vunpack.c.l.s4 1983009808
      %v2235 = vunpack.c.0.s8 %v2234
      %v2236 = vlaneseq
      %v2237 = vshrl.u32 %v2236, 7
      %v2238 = vsub.s32 %v2235, %v2237
      %v2239 = vrot.slane %v2232, %v2238
      %v2240 = vcombine.low %v2210, %v2226
      %v2242 = vunpack.c.l.s4 1983009808
      %v2243 = vunpack.c.0.s8 %v2242
      %v2244 = vlaneseq
      %v2245 = vshrl.u32 %v2244, 7
      %v2246 = vsub.s32 %v2243, %v2245
      %v2247 = vrot.slane %v2240, %v2246
      %v2248 = vcombine.low %v2239, %v2247
      %v2249 = vcombine.high %v2239, %v2247
      %v2251 = vunpack.c.l.s4 1934713408
      %v2252 = vunpack.c.0.s8 %v2251
      %v2253 = vlaneseq
      %v2254 = vshrl.u32 %v2253, 7
      %v2255 = vsub.s32 %v2252, %v2254
      %v2256 = vrot.slane %v2248, %v2255
      %v2258 = vunpack.c.l.s4 1934713408
      %v2259 = vunpack.c.0.s8 %v2258
      %v2260 = vlaneseq
      %v2261 = vshrl.u32 %v2260, 7
      %v2262 = vsub.s32 %v2259, %v2261
      %v2263 = vrot.slane %v2249, %v2262
      %v2264 = vcombine.high %v2256, 0
      %v2265 = vcombine.high %v2263, 0
      %v2266 = vcombine.low %v2206, %v2222
      %v2268 = vunpack.c.l.s4 1983009808
      %v2269 = vunpack.c.0.s8 %v2268
      %v2270 = vlaneseq
      %v2271 = vshrl.u32 %v2270, 7
      %v2272 = vsub.s32 %v2269, %v2271
      %v2273 = vrot.slane %v2266, %v2272
      %v2274 = vcombine.low %v2214, %v2230
      %v2276 = vunpack.c.l.s4 1983009808
      %v2277 = vunpack.c.0.s8 %v2276
      %v2278 = vlaneseq
      %v2279 = vshrl.u32 %v2278, 7
      %v2280 = vsub.s32 %v2277, %v2279
      %v2281 = vrot.slane %v2274, %v2280
      %v2282 = vcombine.low %v2273, %v2281
      %v2283 = vcombine.high %v2273, %v2281
      %v2285 = vunpack.c.l.s4 1934713408
      %v2286 = vunpack.c.0.s8 %v2285
      %v2287 = vlaneseq
      %v2288 = vshrl.u32 %v2287, 7
      %v2289 = vsub.s32 %v2286, %v2288
      %v2290 = vrot.slane %v2282, %v2289
      %v2292 = vunpack.c.l.s4 1934713408
      %v2293 = vunpack.c.0.s8 %v2292
      %v2294 = vlaneseq
      %v2295 = vshrl.u32 %v2294, 7
      %v2296 = vsub.s32 %v2293, %v2295
      %v2297 = vrot.slane %v2283, %v2296
      %v2298 = vcombine.high %v2290, 0
      %v2299 = vcombine.high %v2297, 0
      %v2302 = vpack.i.b16 %v2290, %v2256
      %v2303 = vshrl.u32 %v2256, 16
      %v2304 = vshrl.u32 %v2290, 16
      %v2305 = vpack.i.b16 %v2304, %v2303
      %v2308 = vpack.i.b16 %v2298, %v2264
      %v2309 = vshrl.u32 %v2264, 16
      %v2310 = vshrl.u32 %v2298, 16
      %v2311 = vpack.i.b16 %v2310, %v2309
      %v2314 = vpack.i.b16 %v2297, %v2263
      %v2315 = vshrl.u32 %v2263, 16
      %v2316 = vshrl.u32 %v2297, 16
      %v2317 = vpack.i.b16 %v2316, %v2315
      %v2320 = vpack.i.b16 %v2299, %v2265
      %v2321 = vshrl.u32 %v2265, 16
      %v2322 = vshrl.u32 %v2299, 16
      %v2323 = vpack.i.b16 %v2322, %v2321
      %2324 = vrot.lane.b32.xlu0 %v2305, 16
      %v2325 = vpop.permute.xlu0 %2324
      %2326 = vrot.lane.b32.xlu0 %v2308, 32
      %v2327 = vpop.permute.xlu0 %2326
      %2328 = vrot.lane.b32.xlu0 %v2311, 48
      %v2329 = vpop.permute.xlu0 %2328
      %2330 = vrot.lane.b32.xlu0 %v2314, 64
      %v2331 = vpop.permute.xlu0 %2330
      %2332 = vrot.lane.b32.xlu0 %v2317, 80
      %v2333 = vpop.permute.xlu0 %2332
      %2334 = vrot.lane.b32.xlu0 %v2320, 96
      %v2335 = vpop.permute.xlu0 %2334
      %2336 = vrot.lane.b32.xlu0 %v2323, 112
      %v2337 = vpop.permute.xlu0 %2336
      %v2340 = vsel %vm1281, %v2302, %v2325
      %vm2341 = vcmask 261120
      %v2343 = vsel %vm2341, %v2340, %v2327
      %vm2344 = vcmask 392192
      %v2346 = vsel %vm2344, %v2343, %v2329
      %vm2347 = vcmask 523264
      %v2349 = vsel %vm2347, %v2346, %v2331
      %vm2350 = vcmask 654336
      %v2352 = vsel %vm2350, %v2349, %v2333
      %vm2353 = vcmask 785408
      %v2355 = vsel %vm2353, %v2352, %v2335
      %vm2356 = vcmask 916480
      %v2358 = vsel %vm2356, %v2355, %v2337
      %v2360 = vld [vmem:[%s6] sm:$0xf]
      %v2361 = vld [vmem:[%s6 + $0x4] sm:$0xf]
      %v2362 = vld [vmem:[%s6 + $0x8] sm:$0xf]
      %v2363 = vld [vmem:[%s6 + $0xc] sm:$0xf]
      %v2364 = vld [vmem:[%s6 + $0x10] sm:$0xf]
      %v2365 = vld [vmem:[%s6 + $0x14] sm:$0xf]
      %v2366 = vld [vmem:[%s6 + $0x18] sm:$0xf]
      %v2367 = vld [vmem:[%s6 + $0x1c] sm:$0xf]
      %v2368 = vld [vmem:[%s6 + $0x20] sm:$0xf]
      %v2369 = vld [vmem:[%s6 + $0x24] sm:$0xf]
      %v2370 = vld [vmem:[%s6 + $0x28] sm:$0xf]
      %v2371 = vld [vmem:[%s6 + $0x2c] sm:$0xf]
      %v2372 = vld [vmem:[%s6 + $0x30] sm:$0xf]
      %v2373 = vld [vmem:[%s6 + $0x34] sm:$0xf]
      %v2374 = vld [vmem:[%s6 + $0x38] sm:$0xf]
      %v2375 = vld [vmem:[%s6 + $0x3c] sm:$0xf]
      %v2376 = vld [vmem:[%s7] sm:$0x1]
      %v2378 = vlaneseq
      %v2379 = vshrl.u32 %v2378, 7
      %v2380 = vsub.s32 0, %v2379
      %v2381 = vrot.slane %v2376, %v2380
      %v2399 = vunpack.c.l.b16 %v2360
      %v2400 = vunpack.c.l.b16 %v2361
      %v2401 = vunpack.c.l.b16 %v2362
      %v2402 = vunpack.c.l.b16 %v2363
      %v2403 = vunpack.c.l.b16 %v2364
      %v2404 = vunpack.c.l.b16 %v2365
      %v2405 = vunpack.c.l.b16 %v2366
      %v2406 = vunpack.c.l.b16 %v2367
      %v2407 = vunpack.c.l.b16 %v2368
      %v2408 = vunpack.c.l.b16 %v2369
      %v2409 = vunpack.c.l.b16 %v2370
      %v2410 = vunpack.c.l.b16 %v2371
      %v2411 = vunpack.c.l.b16 %v2372
      %v2412 = vunpack.c.l.b16 %v2373
      %v2413 = vunpack.c.l.b16 %v2374
      %v2414 = vunpack.c.l.b16 %v2375
      %v2415 = vpack.c.b16 %v2400, %v2399
      %v2416 = vpack.c.b16 %v2402, %v2401
      %v2417 = vpack.c.b16 %v2404, %v2403
      %v2418 = vpack.c.b16 %v2406, %v2405
      %v2419 = vpack.c.b16 %v2408, %v2407
      %v2420 = vpack.c.b16 %v2410, %v2409
      %v2421 = vpack.c.b16 %v2412, %v2411
      %v2422 = vpack.c.b16 %v2414, %v2413
      %2431 = vmatprep.subr.bf16.mxu0 0
      %2432 = vmatpush1.bf16.msra.mxu0 %v2422
      %2433 = vmatprep.subr.bf16.mxu0 0
      %2434 = vmatpush1.bf16.msra.mxu0 %v2421
      %2435 = vmatprep.subr.bf16.mxu0 0
      %2436 = vmatpush1.bf16.msra.mxu0 %v2420
      %2437 = vmatprep.subr.bf16.mxu0 0
      %2438 = vmatpush1.bf16.msra.mxu0 %v2419
      %2439 = vmatprep.subr.bf16.mxu0 0
      %2440 = vmatpush1.bf16.msra.mxu0 %v2418
      %2441 = vmatprep.subr.bf16.mxu0 0
      %2442 = vmatpush1.bf16.msra.mxu0 %v2417
      %2443 = vmatprep.subr.bf16.mxu0 0
      %2444 = vmatpush1.bf16.msra.mxu0 %v2416
      %2445 = vmatprep.subr.bf16.mxu0 0
      %2446 = vmatpush1.bf16.msra.mxu0 %v2415
      %2447 = vmatprep.subr.bf16.mxu0 0
      %2448 = vmatpush2.bf16.msra.mxu0 0
      %2449 = vmatprep.subr.bf16.mxu0 0
      %2450 = vmatpush2.bf16.msra.mxu0 0
      %2451 = vmatprep.subr.bf16.mxu0 0
      %2452 = vmatpush2.bf16.msra.mxu0 0
      %2453 = vmatprep.subr.bf16.mxu0 0
      %2454 = vmatpush2.bf16.msra.mxu0 0
      %2455 = vmatprep.subr.bf16.mxu0 0
      %2456 = vmatpush2.bf16.msra.mxu0 0
      %2457 = vmatprep.subr.bf16.mxu0 0
      %2458 = vmatpush2.bf16.msra.mxu0 0
      %2459 = vmatprep.subr.bf16.mxu0 0
      %2460 = vmatpush2.bf16.msra.mxu0 0
      %2461 = vmatprep.subr.bf16.mxu0 0
      %2462 = vmatpush2.bf16.msra.mxu0 0
      %2463 = vmatprep.mubr.bf16.mxu0 0
      %2464 = vmatmul.mubr.bf16.gmra.mxu0 %v2358
      %v2465 = vpop.f32.mrf.mxu0
      %v2466 = vadd.f32 %v2381, %v2465
      %v2467 = vpop.f32.mrf.mxu0
      %v2468 = vpop.f32.mrf.mxu0
      %v2469 = vpop.f32.mrf.mxu0
      %2470 = vdwg.mxu0
      %v2471 = vadd.f32 %v374, %v2466
      %2472 = vadd.xlane.f32.xlu0 %v2471
      %v2473 = vpop.xlane.xlu0 %2472
      %v2474 = vrcp.pop 128.0
      %v2475 = vmul.f32 %v2473, %v2474
      %v2476 = vsub.f32 %v2471, %v2475
      %v2477 = vmul.f32 %v2476, %v2476
      %2478 = vadd.xlane.f32.xlu0 %v2477
      %v2479 = vpop.xlane.xlu0 %2478
      %v2480 = vmul.f32 %v2479, %v2474
      %v2481 = vadd.f32 %v2480, 1e-05
      %v2482 = vrsqrt.pop %v2481
      %v2483 = vmul.f32 %v2476, %v2482
      %v2484 = vld [vmem:[%s8] sm:$0x1]
      %v2486 = vlaneseq
      %v2487 = vshrl.u32 %v2486, 7
      %v2488 = vsub.s32 0, %v2487
      %v2489 = vrot.slane %v2484, %v2488
      %v2491 = vmul.f32 %v2483, %v2489
      %v2492 = vld [vmem:[%s9] sm:$0x1]
      %v2494 = vlaneseq
      %v2495 = vshrl.u32 %v2494, 7
      %v2496 = vsub.s32 0, %v2495
      %v2497 = vrot.slane %v2492, %v2496
      %v2499 = vadd.f32 %v2491, %v2497
      %v2500 = vpack.c.bf16 %v2499, %v2499
      %2501 = vst [vmem:[%s371] sm:$0xf] %v2500
      %p2502 = scmp.lt.s32.totalorder %s21, 1
      %s2503 = scalar_select %p2502, %s21, 1
      %s2504 = smul.addr %s2503, 4
      %s2505 = scalar_lea.vmem %s10, %s2504
      // Predicated region
      $region61: #{decoder_forward.11} parent=59 // pred_check
        %p2506 = pneg %p259
      $region62: #{decoder_forward.11} parent=59 // pred_check_branch
        %2508 = sbr.rel (%p2506) target = $region64
      $region63: #{decoder_forward.11} parent=59 // pred_region
        _
      $region64: #{decoder_forward.11} parent=59 // pred_fallthru
        _
    $region60: #{decoder_forward.11} parent=5 // pred_fallthru
      _
    %p2509 = scmp.le.s32.totalorder 2, %s16
    // Predicated region
    $region65: #{decoder_forward.11} parent=5 // pred_check
      %p2510 = pneg %p2509
    $region66: #{decoder_forward.11} parent=5 // pred_check_branch
      %2512 = sbr.rel (%p2510) target = $region68
    $region67: #{decoder_forward.11} parent=5 // pred_region
      %s2513 = ssub.s32 %s16, 2
      // Predicated region
      $region69: #{decoder_forward.11} parent=67 // pred_check
        %p2514 = pneg %p265
      $region70: #{decoder_forward.11} parent=67 // pred_check_branch
        %2516 = sbr.rel (%p2514) target = $region72
      $region71: #{decoder_forward.11} parent=67 // pred_region
        %p2517 = scmp.lt.s32.totalorder %s22, 1
        %s2518 = scalar_select %p2517, %s22, 1
        %s2519 = smul.addr %s2518, 4
        %s2520 = scalar_lea.vmem %s10, %s2519
      $region72: #{decoder_forward.11} parent=67 // pred_fallthru
        _
    $region68: #{decoder_forward.11} parent=5 // pred_fallthru
      _
  $region6: #{decoder_forward.11} parent=0 // loop_footer
    %s20 = sadd.s32 1, %s16
  $region7: #{decoder_forward.11} parent=0 // loop_footer_branch
    %15 = sbr.rel target = $region3
  $region8: #{decoder_forward.11} parent=0 // loop_exit
    _

</llo_original>
